<compile_context>
chip_gen: v5e
topology: v5e:2x2
jax: 0.10.0
libtpu: 0.0.40
codegen_flags: <defaults>
</compile_context>

<pallas_src>
import math
from functools import partial

import jax
import jax.numpy as jnp
from jax import lax
from jax.experimental import pallas as pl
from jax.experimental.pallas import tpu as pltpu

LN_EPS = 1e-5  # nn.LayerNorm default


def _vmem_limit_bytes():
    """Generation-aware scoped-VMEM limit: v2-v6 have 128 MiB physical VMEM per core,
    v7x only 64 MiB -- keep double-buffering headroom there / on unknown chips."""
    try:
        kind = jax.devices()[0].device_kind.lower()
    except Exception:
        kind = ""
    if any(f"v{g}" in kind for g in (2, 3, 4, 5, 6)):
        return 100 * 1024 * 1024
    return 48 * 1024 * 1024


_VMEM_LIMIT = _vmem_limit_bytes()


def _pick_tile(dim, preferred, multiple):
    """Largest tile <= preferred that is a multiple of `multiple` and divides dim.
    Falls back to the full dim (block == array extent is always layout-legal)."""
    if dim <= preferred:
        return dim
    t = (preferred // multiple) * multiple
    while t >= multiple:
        if dim % t == 0:
            return t
        t -= multiple
    # TODO(synk): pad odd dims (e.g. vocab 50257) instead of a single full-size block.
    return dim


# ------------------- fused (LayerNorm?) + Linear (+bias, +residual) -------------------
def _ln_linear_kernel(*refs, fuse_ln, has_residual):
    if has_residual:
        x_ref, g_ref, bln_ref, w_ref, b_ref, r_ref, o_ref, xn_ref = refs
    else:
        x_ref, g_ref, bln_ref, w_ref, b_ref, o_ref, xn_ref = refs
        r_ref = None

    # LayerNorm (or plain bf16 cast) of the row tile is computed once per row tile,
    # at the first output-column tile, and cached in VMEM scratch for all other j.
    @pl.when(pl.program_id(1) == 0)
    def _():
        x = x_ref[...].astype(jnp.float32)
        if fuse_ln:
            mean = jnp.mean(x, axis=-1, keepdims=True)
            var = jnp.mean(jnp.square(x - mean), axis=-1, keepdims=True)
            x = (x - mean) * lax.rsqrt(var + LN_EPS) * g_ref[...] + bln_ref[...]
        xn_ref[...] = x.astype(jnp.bfloat16)

    acc = lax.dot_general(
        xn_ref[...],
        w_ref[...].astype(jnp.bfloat16),          # W is (N, K): contract last dims
        dimension_numbers=(((1,), (1,)), ((), ())),
        preferred_element_type=jnp.float32,
    ) + b_ref[...]
    if has_residual:
        acc = acc + r_ref[...].astype(jnp.float32)
    o_ref[...] = acc.astype(o_ref.dtype)


def ln_linear(x2d, W, b=None, ln_g=None, ln_b=None, residual=None, *,
              tm=512, tn=256, out_dtype=None):
    """y = [x + ] (LN?(x) @ W.T + b).  x2d: (M, K); W: (N, K) PyTorch layout."""
    M, K = x2d.shape
    N, Kw = W.shape
    assert K == Kw
    fuse_ln = ln_g is not None
    if ln_g is None:
        ln_g = jnp.ones((K,), jnp.float32)
        ln_b = jnp.zeros((K,), jnp.float32)
    if b is None:
        b = jnp.zeros((N,), jnp.float32)
    has_residual = residual is not None
    out_dtype = x2d.dtype if out_dtype is None else out_dtype

    tm = _pick_tile(M, tm, 8)
    tn = _pick_tile(N, tn, 128)
    grid = (M // tm, N // tn)

    in_specs = [
        pl.BlockSpec((tm, K), lambda i, j: (i, 0)),   # x (re-used across j, no re-DMA)
        pl.BlockSpec((1, K), lambda i, j: (0, 0)),    # ln gamma
        pl.BlockSpec((1, K), lambda i, j: (0, 0)),    # ln beta
        pl.BlockSpec((tn, K), lambda i, j: (j, 0)),   # W tile
        pl.BlockSpec((1, tn), lambda i, j: (0, j)),   # bias tile
    ]
    args = [x2d, ln_g.reshape(1, K), ln_b.reshape(1, K), W, b.reshape(1, N)]
    if has_residual:
        in_specs.append(pl.BlockSpec((tm, tn), lambda i, j: (i, j)))
        args.append(residual)

    return pl.pallas_call(
        partial(_ln_linear_kernel, fuse_ln=fuse_ln, has_residual=has_residual),
        out_shape=jax.ShapeDtypeStruct((M, N), out_dtype),
        grid_spec=pltpu.PrefetchScalarGridSpec(
            num_scalar_prefetch=0,
            grid=grid,
            in_specs=in_specs,
            out_specs=pl.BlockSpec((tm, tn), lambda i, j: (i, j)),
            scratch_shapes=[pltpu.VMEM((tm, K), jnp.bfloat16)],   # cached LN(x) row tile
        ),
        compiler_params=pltpu.CompilerParams(
            # j must stay on one core (scratch reuse across j) -> "arbitrary"
            dimension_semantics=("parallel", "arbitrary"),
            vmem_limit_bytes=_VMEM_LIMIT,
        ),
    )(*args)


# ----------------- fused LayerNorm + MLP (fc -> GELU -> proj) + residual -----------------
def _ln_mlp_kernel(x_ref, g_ref, bln_ref, wf_ref, bf_ref, wp_ref, bp_ref, o_ref):
    x0 = x_ref[...].astype(jnp.float32)
    mean = jnp.mean(x0, axis=-1, keepdims=True)
    var = jnp.mean(jnp.square(x0 - mean), axis=-1, keepdims=True)
    xn = (x0 - mean) * lax.rsqrt(var + LN_EPS) * g_ref[...] + bln_ref[...]
    h = lax.dot_general(
        xn.astype(jnp.bfloat16), wf_ref[...].astype(jnp.bfloat16),
        dimension_numbers=(((1,), (1,)), ((), ())),
        preferred_element_type=jnp.float32,
    ) + bf_ref[...]
    # exact GELU (nn.GELU default, erf-based), kept in f32
    h = 0.5 * h * (1.0 + lax.erf(h * (1.0 / math.sqrt(2.0))))
    out = lax.dot_general(
        h.astype(jnp.bfloat16), wp_ref[...].astype(jnp.bfloat16),
        dimension_numbers=(((1,), (1,)), ((), ())),
        preferred_element_type=jnp.float32,
    ) + bp_ref[...]
    o_ref[...] = (x0 + out).astype(o_ref.dtype)     # fused residual add


def ln_mlp(x2d, ln_g, ln_b, w_fc, b_fc, w_proj, b_proj, *, tm=512):
    M, D = x2d.shape
    H4 = w_fc.shape[0]
    tm = _pick_tile(M, tm, 8)
    # TODO(synk): for v7x at GPT-2 L/XL sizes, mark the resident weight blocks with
    # pipeline_mode=pl.Buffered(1) and tile the 4D hidden dim to bound VMEM footprint.
    return pl.pallas_call(
        _ln_mlp_kernel,
        out_shape=jax.ShapeDtypeStruct((M, D), x2d.dtype),
        grid_spec=pltpu.PrefetchScalarGridSpec(
            num_scalar_prefetch=0,
            grid=(M // tm,),
            in_specs=[
                pl.BlockSpec((tm, D), lambda i: (i, 0)),
                pl.BlockSpec((1, D), lambda i: (0, 0)),
                pl.BlockSpec((1, D), lambda i: (0, 0)),
                pl.BlockSpec((H4, D), lambda i: (0, 0)),   # weights resident
                pl.BlockSpec((1, H4), lambda i: (0, 0)),
                pl.BlockSpec((D, H4), lambda i: (0, 0)),
                pl.BlockSpec((1, D), lambda i: (0, 0)),
            ],
            out_specs=pl.BlockSpec((tm, D), lambda i: (i, 0)),
        ),
        compiler_params=pltpu.CompilerParams(
            dimension_semantics=("parallel",),
            vmem_limit_bytes=_VMEM_LIMIT,
        ),
    )(x2d, ln_g.reshape(1, D), ln_b.reshape(1, D),
      w_fc, b_fc.reshape(1, H4), w_proj, b_proj.reshape(1, D))


# ----------------------- flash-style causal attention -----------------------
def _flash_kernel(qi_ref, ki_ref, q_ref, k_ref, v_ref, o_ref,
                  m_ref, l_ref, acc_ref, *, tq, tk, scale):
    step = pl.program_id(1)
    qi = qi_ref[step]
    ki = ki_ref[step]

    @pl.when(ki == 0)
    def _():
        m_ref[...] = jnp.full(m_ref.shape, -jnp.inf, dtype=jnp.float32)
        l_ref[...] = jnp.zeros(l_ref.shape, jnp.float32)
        acc_ref[...] = jnp.zeros(acc_ref.shape, jnp.float32)

    q = q_ref[...].astype(jnp.bfloat16)
    k = k_ref[...].astype(jnp.bfloat16)
    s = lax.dot_general(                      # (G, tq, tk), no explicit k.T
        q, k, dimension_numbers=(((2,), (2,)), ((0,), (0,))),
        preferred_element_type=jnp.float32,
    ) * scale
    row = qi * tq + lax.broadcasted_iota(jnp.int32, s.shape, 1)
    col = ki * tk + lax.broadcasted_iota(jnp.int32, s.shape, 2)
    s = jnp.where(col <= row, s, -jnp.inf)

    m_prev = m_ref[...]
    m_new = jnp.maximum(m_prev, jnp.max(s, axis=-1, keepdims=True))
    alpha = jnp.exp(m_prev - m_new)
    p = jnp.exp(s - m_new)
    l_ref[...] = alpha * l_ref[...] + jnp.sum(p, axis=-1, keepdims=True)
    acc_ref[...] = alpha * acc_ref[...] + lax.dot_general(
        p.astype(jnp.bfloat16), v_ref[...].astype(jnp.bfloat16),
        dimension_numbers=(((2,), (1,)), ((0,), (0,))),
        preferred_element_type=jnp.float32,
    )
    m_ref[...] = m_new

    @pl.when(ki == qi)   # diagonal tile is the last KV tile for this q tile (tq == tk)
    def _():
        inv = pl.reciprocal(l_ref[...], approx=True)
        o_ref[...] = (acc_ref[...] * inv).astype(o_ref.dtype)


def causal_attention(q, k, v, *, tq=256, heads_per_step=8):
    """q, k, v: (B*H, T, dh) -> (B*H, T, dh), causal, online softmax.

    A scalar-prefetched lower-triangular (qi, ki) schedule drives the grid, so
    fully-masked KV tiles are neither DMA'd nor executed."""
    BH, T, dh = q.shape
    G = 1
    for g in (heads_per_step, 8, 4, 2, 1):
        if g <= BH and BH % g == 0:
            G = g
            break
    tq = _pick_tile(T, tq, 128)   # lane-dense / MXU-filling score tiles
    tk = tq                       # square tiles so the diagonal tile closes each q row
    nq = T // tq
    qs, ks = [], []
    for i in range(nq):
        for j in range(i + 1):
            qs.append(i)
            ks.append(j)
    q_idx = jnp.asarray(qs, jnp.int32)
    k_idx = jnp.asarray(ks, jnp.int32)
    scale = 1.0 / math.sqrt(dh)

    q_spec = pl.BlockSpec((G, tq, dh), lambda g, s, qi, ki: (g, qi[s], 0))
    kv_spec = pl.BlockSpec((G, tk, dh), lambda g, s, qi, ki: (g, ki[s], 0))
    o_spec = pl.BlockSpec((G, tq, dh), lambda g, s, qi, ki: (g, qi[s], 0))

    return pl.pallas_call(
        partial(_flash_kernel, tq=tq, tk=tk, scale=scale),
        out_shape=jax.ShapeDtypeStruct((BH, T, dh), q.dtype),
        grid_spec=pltpu.PrefetchScalarGridSpec(
            num_scalar_prefetch=2,
            grid=(BH // G, len(qs)),
            in_specs=[q_spec, kv_spec, kv_spec],
            out_specs=o_spec,
            scratch_shapes=[
                pltpu.VMEM((G, tq, 1), jnp.float32),   # running max
                pltpu.VMEM((G, tq, 1), jnp.float32),   # running sum
                pltpu.VMEM((G, tq, dh), jnp.float32),  # output accumulator
            ],
        ),
        compiler_params=pltpu.CompilerParams(
            dimension_semantics=("parallel", "arbitrary"),
            vmem_limit_bytes=_VMEM_LIMIT,
        ),
    )(q_idx, k_idx, q, k, v)


# ------------------------------- GPT forward ----------------------------------
def decoder_layer(x2, layer, B, T, D, n_heads):
    dh = D // n_heads
    # LN1 + QKV projection (no bias), fused into one kernel; bf16 activations out
    qkv = ln_linear(x2, layer["w_qkv"], None, layer["ln1_g"], layer["ln1_b"])  # (B*T, 3D)
    # TODO(synk): fold the head split/merge into the attention BlockSpecs (per-head
    # column offsets on the qkv / y buffers) to kill these XLA transpose copies.
    qkv = qkv.reshape(B, T, 3, n_heads, dh).transpose(2, 0, 3, 1, 4)   # (3, B, H, T, dh)
    q = qkv[0].reshape(B * n_heads, T, dh)
    k = qkv[1].reshape(B * n_heads, T, dh)
    v = qkv[2].reshape(B * n_heads, T, dh)
    y = causal_attention(q, k, v)                                      # (B*H, T, dh)
    y = y.reshape(B, n_heads, T, dh).transpose(0, 2, 1, 3).reshape(B * T, D)
    # out-projection + bias + residual, fused
    x2 = ln_linear(y, layer["w_proj"], layer["b_proj"], residual=x2)
    # LN2 + MLP + residual, fused
    x2 = ln_mlp(x2, layer["ln2_g"], layer["ln2_b"],
                layer["w_fc"], layer["b_fc"], layer["w_mproj"], layer["b_mproj"])
    return x2


def gpt_forward(idx, params, cfg):
    B, T = idx.shape
    D, n_heads, V = cfg["d_model"], cfg["n_heads"], cfg["vocab_size"]
    assert T <= cfg["n_ctx"]

    # embedding gather + positional add (glue, plain JAX); residual stream in bf16
    x = params["wte"][idx].astype(jnp.float32) + params["wpe"][:T][None, :, :]
    x2 = x.astype(jnp.bfloat16).reshape(B * T, D)

    for layer in params["layers"]:
        x2 = decoder_layer(x2, layer, B, T, D, n_heads)

    # final LayerNorm fused into the tied lm_head; wte is already (V, D) = (N, K),
    # so no transpose copy is materialized.  Large row tile: wte streamed fewer times.
    logits = ln_linear(x2, params["wte"], None, params["lnf_g"], params["lnf_b"],
                       tm=1024, out_dtype=jnp.float32)
    # TODO(synk): cross-entropy loss path (targets is not None) not implemented;
    # matches forward(idx, targets=None) which returns (logits, None).
    return logits.reshape(B, T, V), None


# ------------------------------- Param init -----------------------------------
def init_params(key, cfg):
    V, D, L, C = cfg["vocab_size"], cfg["d_model"], cfg["n_layers"], cfg["n_ctx"]
    resid_scale = (2 * L) ** (-0.5)
    keys = list(jax.random.split(key, 2 + 4 * L))
    kit = iter(keys)
    wdt = jnp.bfloat16   # matmul weights stored bf16; LN params / biases stay f32

    def normal(k, shape, std):
        return jax.random.normal(k, shape, jnp.float32) * std

    params = {
        "wte": normal(next(kit), (V, D), 0.02).astype(wdt),     # tied embedding / lm_head
        "wpe": normal(next(kit), (C, D), 0.01),
        "lnf_g": jnp.ones((D,), jnp.float32),
        "lnf_b": jnp.zeros((D,), jnp.float32),
        "layers": [],
    }
    for _ in range(L):
        layer = {
            "ln1_g": jnp.ones((D,), jnp.float32),
            "ln1_b": jnp.zeros((D,), jnp.float32),
            # PyTorch (out_features, in_features) layout
            "w_qkv": normal(next(kit), (3 * D, D), 0.02).astype(wdt),
            "w_proj": (normal(next(kit), (D, D), 0.02) * resid_scale).astype(wdt),
            "b_proj": jnp.zeros((D,), jnp.float32),
            "ln2_g": jnp.ones((D,), jnp.float32),
            "ln2_b": jnp.zeros((D,), jnp.float32),
            "w_fc": normal(next(kit), (4 * D, D), 0.02).astype(wdt),
            "b_fc": jnp.zeros((4 * D,), jnp.float32),
            "w_mproj": (normal(next(kit), (D, 4 * D), 0.02) * resid_scale).astype(wdt),
            "b_mproj": jnp.zeros((D,), jnp.float32),
        }
        params["layers"].append(layer)
    return params


# ---------------------------------- main ---------------------------------------
if __name__ == "__main__":
    # small GPTConfig-like settings
    cfg = dict(vocab_size=512, n_ctx=64, n_layers=2, d_model=128, n_heads=4)
    B, T = 2, 32

    key = jax.random.PRNGKey(0)
    pkey, ikey = jax.random.split(key)
    params = init_params(pkey, cfg)
    idx = jax.random.randint(ikey, (B, T), 0, cfg["vocab_size"], dtype=jnp.int32)

    fwd = jax.jit(partial(gpt_forward, cfg=cfg))
    logits, loss = fwd(idx, params)
    jax.block_until_ready(logits)

    assert logits.shape == (B, T, cfg["vocab_size"])
    assert logits.dtype == jnp.float32
    assert bool(jnp.all(jnp.isfinite(logits)))
    print("KERNEL_OK")
</pallas_src>

<mosaic_0001>
module attributes {stable_mosaic.version = 11 : i64} {
  func.func @_ln_linear_kernel(%arg0: i32, %arg1: i32, %arg2: memref<64x128xbf16, #tpu.memory_space<vmem>>, %arg3: memref<1x128xf32, #tpu.memory_space<vmem>>, %arg4: memref<1x128xf32, #tpu.memory_space<vmem>>, %arg5: memref<128x128xbf16, #tpu.memory_space<vmem>>, %arg6: memref<1x128xf32, #tpu.memory_space<vmem>>, %arg7: memref<64x128xbf16, #tpu.memory_space<vmem>>, %arg8: memref<64x128xbf16, #tpu.memory_space<vmem>>) attributes {dimension_semantics = [#tpu.dimension_semantics<parallel>, #tpu.dimension_semantics<arbitrary>], iteration_bounds = array<i64: 1, 3>, scalar_prefetch = 0 : i64, scratch_operands = 1 : i64, tpu.core_type = #tpu.core_type<tc>, window_params = [{transform_indices = @transform_0, window_bounds = array<i64: 64, 128>}, {pipeline_mode = #tpu.pipeline_mode<synchronous>, transform_indices = @transform_1, window_bounds = array<i64: 1, 128>}, {pipeline_mode = #tpu.pipeline_mode<synchronous>, transform_indices = @transform_2, window_bounds = array<i64: 1, 128>}, {transform_indices = @transform_3, window_bounds = array<i64: 128, 128>}, {transform_indices = @transform_4, window_bounds = array<i64: 1, 128>}, {transform_indices = @transform_5, window_bounds = array<i64: 64, 128>}]} {
    %c0_i32 = arith.constant 0 : i32
    %0 = arith.cmpi eq, %arg1, %c0_i32 : i32
    %1 = arith.extui %0 : i1 to i32
    %c0_i32_0 = arith.constant 0 : i32
    %2 = arith.cmpi ne, %1, %c0_i32_0 : i32
    scf.if %2 {
      %c0_8 = arith.constant 0 : index
      %c0_9 = arith.constant 0 : index
      %11 = vector.load %arg2[%c0_8, %c0_9] : memref<64x128xbf16, #tpu.memory_space<vmem>>, vector<64x128xbf16>
      %12 = arith.extf %11 : vector<64x128xbf16> to vector<64x128xf32>
      %cst_10 = arith.constant dense<0.000000e+00> : vector<64xf32>
      %13 = vector.multi_reduction <add>, %12, %cst_10 [1] : vector<64x128xf32> to vector<64xf32>
      %14 = vector.shape_cast %13 : vector<64xf32> to vector<64x1xf32>
      %cst_11 = arith.constant 1.280000e+02 : f32
      %15 = vector.broadcast %cst_11 : f32 to vector<64x1xf32>
      %16 = arith.divf %14, %15 : vector<64x1xf32>
      %17 = vector.broadcast %16 : vector<64x1xf32> to vector<64x128xf32>
      %18 = arith.subf %12, %17 : vector<64x128xf32>
      %19 = arith.mulf %18, %18 : vector<64x128xf32>
      %cst_12 = arith.constant dense<0.000000e+00> : vector<64xf32>
      %20 = vector.multi_reduction <add>, %19, %cst_12 [1] : vector<64x128xf32> to vector<64xf32>
      %21 = vector.shape_cast %20 : vector<64xf32> to vector<64x1xf32>
      %cst_13 = arith.constant 1.280000e+02 : f32
      %22 = vector.broadcast %cst_13 : f32 to vector<64x1xf32>
      %23 = arith.divf %21, %22 : vector<64x1xf32>
      %24 = vector.broadcast %16 : vector<64x1xf32> to vector<64x128xf32>
      %25 = arith.subf %12, %24 : vector<64x128xf32>
      %cst_14 = arith.constant 9.99999974E-6 : f32
      %26 = vector.broadcast %cst_14 : f32 to vector<64x1xf32>
      %27 = arith.addf %23, %26 : vector<64x1xf32>
      %28 = math.rsqrt %27 : vector<64x1xf32>
      %29 = vector.broadcast %28 : vector<64x1xf32> to vector<64x128xf32>
      %30 = arith.mulf %25, %29 : vector<64x128xf32>
      %c0_15 = arith.constant 0 : index
      %c0_16 = arith.constant 0 : index
      %31 = vector.load %arg3[%c0_15, %c0_16] : memref<1x128xf32, #tpu.memory_space<vmem>>, vector<1x128xf32>
      %32 = vector.broadcast %31 : vector<1x128xf32> to vector<64x128xf32>
      %33 = arith.mulf %30, %32 : vector<64x128xf32>
      %c0_17 = arith.constant 0 : index
      %c0_18 = arith.constant 0 : index
      %34 = vector.load %arg4[%c0_17, %c0_18] : memref<1x128xf32, #tpu.memory_space<vmem>>, vector<1x128xf32>
      %35 = vector.broadcast %34 : vector<1x128xf32> to vector<64x128xf32>
      %36 = arith.addf %33, %35 : vector<64x128xf32>
      %37 = arith.truncf %36 : vector<64x128xf32> to vector<64x128xbf16>
      %c0_19 = arith.constant 0 : index
      %c0_20 = arith.constant 0 : index
      %38 = vector.load %arg8[%c0_19, %c0_20] : memref<64x128xbf16, #tpu.memory_space<vmem>>, vector<64x128xbf16>
      tpu.vector_store %arg8[%c0_19, %c0_20], %37 {strides = array<i32>} : memref<64x128xbf16, #tpu.memory_space<vmem>>, vector<64x128xbf16>,
    } else {
    }
    %c0 = arith.constant 0 : index
    %c0_1 = arith.constant 0 : index
    %3 = vector.load %arg8[%c0, %c0_1] : memref<64x128xbf16, #tpu.memory_space<vmem>>, vector<64x128xbf16>
    %c0_2 = arith.constant 0 : index
    %c0_3 = arith.constant 0 : index
    %4 = vector.load %arg5[%c0_2, %c0_3] : memref<128x128xbf16, #tpu.memory_space<vmem>>, vector<128x128xbf16>
    %cst = arith.constant dense<0.000000e+00> : vector<64x128xf32>
    %5 = tpu.matmul %3, %4, %cst {dimension_numbers = #tpu.dot_dimension_numbers<[1], [1], [0], [0], [0, 0, 1, 0], [], []>} : vector<64x128xbf16>, vector<128x128xbf16>, vector<64x128xf32> -> vector<64x128xf32>
    %c0_4 = arith.constant 0 : index
    %c0_5 = arith.constant 0 : index
    %6 = vector.load %arg6[%c0_4, %c0_5] : memref<1x128xf32, #tpu.memory_space<vmem>>, vector<1x128xf32>
    %7 = vector.broadcast %6 : vector<1x128xf32> to vector<64x128xf32>
    %8 = arith.addf %5, %7 : vector<64x128xf32>
    %9 = arith.truncf %8 : vector<64x128xf32> to vector<64x128xbf16>
    %c0_6 = arith.constant 0 : index
    %c0_7 = arith.constant 0 : index
    %10 = vector.load %arg7[%c0_6, %c0_7] : memref<64x128xbf16, #tpu.memory_space<vmem>>, vector<64x128xbf16>
    tpu.vector_store %arg7[%c0_6, %c0_7], %9 {strides = array<i32>} : memref<64x128xbf16, #tpu.memory_space<vmem>>, vector<64x128xbf16>,
    return
  }
  func.func @transform_0(%arg0: i32, %arg1: i32) -> (i32, i32) {
    %c0_i32 = arith.constant 0 : i32
    %c0_i32_0 = arith.constant 0 : i32
    return %arg0, %c0_i32 : i32, i32
  }
  func.func @transform_1(%arg0: i32, %arg1: i32) -> (i32, i32) {
    %c0_i32 = arith.constant 0 : i32
    %c0_i32_0 = arith.constant 0 : i32
    %c0_i32_1 = arith.constant 0 : i32
    return %c0_i32, %c0_i32_0 : i32, i32
  }
  func.func @transform_2(%arg0: i32, %arg1: i32) -> (i32, i32) {
    %c0_i32 = arith.constant 0 : i32
    %c0_i32_0 = arith.constant 0 : i32
    %c0_i32_1 = arith.constant 0 : i32
    return %c0_i32, %c0_i32_0 : i32, i32
  }
  func.func @transform_3(%arg0: i32, %arg1: i32) -> (i32, i32) {
    %c0_i32 = arith.constant 0 : i32
    %c0_i32_0 = arith.constant 0 : i32
    return %arg1, %c0_i32 : i32, i32
  }
  func.func @transform_4(%arg0: i32, %arg1: i32) -> (i32, i32) {
    %c0_i32 = arith.constant 0 : i32
    %c0_i32_0 = arith.constant 0 : i32
    return %c0_i32, %arg1 : i32, i32
  }
  func.func @transform_5(%arg0: i32, %arg1: i32) -> (i32, i32) {
    %c0_i32 = arith.constant 0 : i32
    return %arg0, %arg1 : i32, i32
  }
}

module attributes {stable_mosaic.version = 11 : i64} {
  func.func @_flash_kernel(%arg0: i32, %arg1: i32, %arg2: memref<1xi32, #tpu.memory_space<smem>>, %arg3: memref<1xi32, #tpu.memory_space<smem>>, %arg4: memref<8x32x32xbf16, #tpu.memory_space<vmem>>, %arg5: memref<8x32x32xbf16, #tpu.memory_space<vmem>>, %arg6: memref<8x32x32xbf16, #tpu.memory_space<vmem>>, %arg7: memref<8x32x32xbf16, #tpu.memory_space<vmem>>, %arg8: memref<8x32x1xf32, #tpu.memory_space<vmem>>, %arg9: memref<8x32x1xf32, #tpu.memory_space<vmem>>, %arg10: memref<8x32x32xf32, #tpu.memory_space<vmem>>) attributes {dimension_semantics = [#tpu.dimension_semantics<parallel>, #tpu.dimension_semantics<arbitrary>], iteration_bounds = array<i64: 1, 1>, scalar_prefetch = 2 : i64, scratch_operands = 3 : i64, tpu.core_type = #tpu.core_type<tc>, window_params = [{transform_indices = @transform_0, window_bounds = array<i64: 8, 32, 32>}, {transform_indices = @transform_1, window_bounds = array<i64: 8, 32, 32>}, {transform_indices = @transform_2, window_bounds = array<i64: 8, 32, 32>}, {transform_indices = @transform_3, window_bounds = array<i64: 8, 32, 32>}]} {
    %0 = arith.index_cast %arg1 : i32 to index
    %1 = memref.load %arg2[%0] : memref<1xi32, #tpu.memory_space<smem>>
    %2 = arith.index_cast %arg1 : i32 to index
    %3 = memref.load %arg3[%2] : memref<1xi32, #tpu.memory_space<smem>>
    %c0_i32 = arith.constant 0 : i32
    %4 = arith.cmpi eq, %3, %c0_i32 : i32
    %5 = arith.extui %4 : i1 to i32
    %c0_i32_0 = arith.constant 0 : i32
    %6 = arith.cmpi ne, %5, %c0_i32_0 : i32
    scf.if %6 {
      %cst_34 = arith.constant 0xFF800000 : f32
      %50 = vector.broadcast %cst_34 : f32 to vector<8x32x1xf32>
      %c0_35 = arith.constant 0 : index
      %c0_36 = arith.constant 0 : index
      %c0_37 = arith.constant 0 : index
      %51 = vector.load %arg8[%c0_35, %c0_36, %c0_37] : memref<8x32x1xf32, #tpu.memory_space<vmem>>, vector<8x32x1xf32>
      tpu.vector_store %arg8[%c0_35, %c0_36, %c0_37], %50 {strides = array<i32>} : memref<8x32x1xf32, #tpu.memory_space<vmem>>, vector<8x32x1xf32>,
      %cst_38 = arith.constant 0.000000e+00 : f32
      %52 = vector.broadcast %cst_38 : f32 to vector<8x32x1xf32>
      %c0_39 = arith.constant 0 : index
      %c0_40 = arith.constant 0 : index
      %c0_41 = arith.constant 0 : index
      %53 = vector.load %arg9[%c0_39, %c0_40, %c0_41] : memref<8x32x1xf32, #tpu.memory_space<vmem>>, vector<8x32x1xf32>
      tpu.vector_store %arg9[%c0_39, %c0_40, %c0_41], %52 {strides = array<i32>} : memref<8x32x1xf32, #tpu.memory_space<vmem>>, vector<8x32x1xf32>,
      %cst_42 = arith.constant 0.000000e+00 : f32
      %54 = vector.broadcast %cst_42 : f32 to vector<8x32x32xf32>
      %c0_43 = arith.constant 0 : index
      %c0_44 = arith.constant 0 : index
      %c0_45 = arith.constant 0 : index
      %55 = vector.load %arg10[%c0_43, %c0_44, %c0_45] : memref<8x32x32xf32, #tpu.memory_space<vmem>>, vector<8x32x32xf32>
      tpu.vector_store %arg10[%c0_43, %c0_44, %c0_45], %54 {strides = array<i32>} : memref<8x32x32xf32, #tpu.memory_space<vmem>>, vector<8x32x32xf32>,
    } else {
    }
    %c0 = arith.constant 0 : index
    %c0_1 = arith.constant 0 : index
    %c0_2 = arith.constant 0 : index
    %7 = vector.load %arg4[%c0, %c0_1, %c0_2] : memref<8x32x32xbf16, #tpu.memory_space<vmem>>, vector<8x32x32xbf16>
    %c0_3 = arith.constant 0 : index
    %c0_4 = arith.constant 0 : index
    %c0_5 = arith.constant 0 : index
    %8 = vector.load %arg5[%c0_3, %c0_4, %c0_5] : memref<8x32x32xbf16, #tpu.memory_space<vmem>>, vector<8x32x32xbf16>
    %cst = arith.constant dense<0.000000e+00> : vector<8x32x32xf32>
    %9 = tpu.matmul %7, %8, %cst {dimension_numbers = #tpu.dot_dimension_numbers<[2], [2], [1], [1], [0, 0, 0, 1, 1, 1], [0], [0]>} : vector<8x32x32xbf16>, vector<8x32x32xbf16>, vector<8x32x32xf32> -> vector<8x32x32xf32>
    %cst_6 = arith.constant 0.176776692 : f32
    %10 = vector.broadcast %cst_6 : f32 to vector<8x32x32xf32>
    %11 = arith.mulf %9, %10 : vector<8x32x32xf32>
    %c32_i32 = arith.constant 32 : i32
    %12 = arith.muli %1, %c32_i32 : i32
    %13 = tpu.iota {dimensions = array<i32: 1>} : vector<8x32x32xi32>
    %14 = vector.broadcast %12 : i32 to vector<8x32x32xi32>
    %15 = arith.addi %14, %13 : vector<8x32x32xi32>
    %c32_i32_7 = arith.constant 32 : i32
    %16 = arith.muli %3, %c32_i32_7 : i32
    %17 = tpu.iota {dimensions = array<i32: 2>} : vector<8x32x32xi32>
    %18 = vector.broadcast %16 : i32 to vector<8x32x32xi32>
    %19 = arith.addi %18, %17 : vector<8x32x32xi32>
    %20 = arith.cmpi sle, %19, %15 : vector<8x32x32xi32>
    %cst_8 = arith.constant 0xFF800000 : f32
    %21 = vector.broadcast %cst_8 : f32 to vector<8x32x32xf32>
    %22 = arith.select %20, %11, %21 : vector<8x32x32xi1>, vector<8x32x32xf32>
    %c0_9 = arith.constant 0 : index
    %c0_10 = arith.constant 0 : index
    %c0_11 = arith.constant 0 : index
    %23 = vector.load %arg8[%c0_9, %c0_10, %c0_11] : memref<8x32x1xf32, #tpu.memory_space<vmem>>, vector<8x32x1xf32>
    %cst_12 = arith.constant dense<0xFF800000> : vector<8x32xf32>
    %24 = vector.multi_reduction <maximumf>, %22, %cst_12 [2] : vector<8x32x32xf32> to vector<8x32xf32>
    %25 = vector.shape_cast %24 : vector<8x32xf32> to vector<8x32x1xf32>
    %26 = arith.maximumf %23, %25 : vector<8x32x1xf32>
    %27 = arith.subf %23, %26 : vector<8x32x1xf32>
    %28 = math.exp %27 : vector<8x32x1xf32>
    %29 = vector.broadcast %26 : vector<8x32x1xf32> to vector<8x32x32xf32>
    %30 = arith.subf %22, %29 : vector<8x32x32xf32>
    %31 = math.exp %30 : vector<8x32x32xf32>
    %c0_13 = arith.constant 0 : index
    %c0_14 = arith.constant 0 : index
    %c0_15 = arith.constant 0 : index
    %32 = vector.load %arg9[%c0_13, %c0_14, %c0_15] : memref<8x32x1xf32, #tpu.memory_space<vmem>>, vector<8x32x1xf32>
    %33 = arith.mulf %28, %32 : vector<8x32x1xf32>
    %cst_16 = arith.constant dense<0.000000e+00> : vector<8x32xf32>
    %34 = vector.multi_reduction <add>, %31, %cst_16 [2] : vector<8x32x32xf32> to vector<8x32xf32>
    %35 = vector.shape_cast %34 : vector<8x32xf32> to vector<8x32x1xf32>
    %36 = arith.addf %33, %35 : vector<8x32x1xf32>
    %c0_17 = arith.constant 0 : index
    %c0_18 = arith.constant 0 : index
    %c0_19 = arith.constant 0 : index
    %37 = vector.load %arg9[%c0_17, %c0_18, %c0_19] : memref<8x32x1xf32, #tpu.memory_space<vmem>>, vector<8x32x1xf32>
    tpu.vector_store %arg9[%c0_17, %c0_18, %c0_19], %36 {strides = array<i32>} : memref<8x32x1xf32, #tpu.memory_space<vmem>>, vector<8x32x1xf32>,
    %c0_20 = arith.constant 0 : index
    %c0_21 = arith.constant 0 : index
    %c0_22 = arith.constant 0 : index
    %38 = vector.load %arg10[%c0_20, %c0_21, %c0_22] : memref<8x32x32xf32, #tpu.memory_space<vmem>>, vector<8x32x32xf32>
    %39 = vector.broadcast %28 : vector<8x32x1xf32> to vector<8x32x32xf32>
    %40 = arith.mulf %39, %38 : vector<8x32x32xf32>
    %41 = arith.truncf %31 : vector<8x32x32xf32> to vector<8x32x32xbf16>
    %c0_23 = arith.constant 0 : index
    %c0_24 = arith.constant 0 : index
    %c0_25 = arith.constant 0 : index
    %42 = vector.load %arg6[%c0_23, %c0_24, %c0_25] : memref<8x32x32xbf16, #tpu.memory_space<vmem>>, vector<8x32x32xbf16>
    %cst_26 = arith.constant dense<0.000000e+00> : vector<8x32x32xf32>
    %43 = tpu.matmul %41, %42, %cst_26 {dimension_numbers = #tpu.dot_dimension_numbers<[2], [1], [1], [2], [0, 0, 0, 1, 1, 2], [0], [0]>} : vector<8x32x32xbf16>, vector<8x32x32xbf16>, vector<8x32x32xf32> -> vector<8x32x32xf32>
    %44 = arith.addf %40, %43 : vector<8x32x32xf32>
    %c0_27 = arith.constant 0 : index
    %c0_28 = arith.constant 0 : index
    %c0_29 = arith.constant 0 : index
    %45 = vector.load %arg10[%c0_27, %c0_28, %c0_29] : memref<8x32x32xf32, #tpu.memory_space<vmem>>, vector<8x32x32xf32>
    tpu.vector_store %arg10[%c0_27, %c0_28, %c0_29], %44 {strides = array<i32>} : memref<8x32x32xf32, #tpu.memory_space<vmem>>, vector<8x32x32xf32>,
    %c0_30 = arith.constant 0 : index
    %c0_31 = arith.constant 0 : index
    %c0_32 = arith.constant 0 : index
    %46 = vector.load %arg8[%c0_30, %c0_31, %c0_32] : memref<8x32x1xf32, #tpu.memory_space<vmem>>, vector<8x32x1xf32>
    tpu.vector_store %arg8[%c0_30, %c0_31, %c0_32], %26 {strides = array<i32>} : memref<8x32x1xf32, #tpu.memory_space<vmem>>, vector<8x32x1xf32>,
    %47 = arith.cmpi eq, %3, %1 : i32
    %48 = arith.extui %47 : i1 to i32
    %c0_i32_33 = arith.constant 0 : i32
    %49 = arith.cmpi ne, %48, %c0_i32_33 : i32
    scf.if %49 {
      %c0_34 = arith.constant 0 : index
      %c0_35 = arith.constant 0 : index
      %c0_36 = arith.constant 0 : index
      %50 = vector.load %arg9[%c0_34, %c0_35, %c0_36] : memref<8x32x1xf32, #tpu.memory_space<vmem>>, vector<8x32x1xf32>
      %51 = tpu.reciprocal %50 {approx = true} : vector<8x32x1xf32> -> vector<8x32x1xf32>
      %c0_37 = arith.constant 0 : index
      %c0_38 = arith.constant 0 : index
      %c0_39 = arith.constant 0 : index
      %52 = vector.load %arg10[%c0_37, %c0_38, %c0_39] : memref<8x32x32xf32, #tpu.memory_space<vmem>>, vector<8x32x32xf32>
      %53 = vector.broadcast %51 : vector<8x32x1xf32> to vector<8x32x32xf32>
      %54 = arith.mulf %52, %53 : vector<8x32x32xf32>
      %55 = arith.truncf %54 : vector<8x32x32xf32> to vector<8x32x32xbf16>
      %c0_40 = arith.constant 0 : index
      %c0_41 = arith.constant 0 : index
      %c0_42 = arith.constant 0 : index
      %56 = vector.load %arg7[%c0_40, %c0_41, %c0_42] : memref<8x32x32xbf16, #tpu.memory_space<vmem>>, vector<8x32x32xbf16>
      tpu.vector_store %arg7[%c0_40, %c0_41, %c0_42], %55 {strides = array<i32>} : memref<8x32x32xbf16, #tpu.memory_space<vmem>>, vector<8x32x32xbf16>,
    } else {
    }
    return
  }
  func.func @transform_0(%arg0: i32, %arg1: i32, %arg2: memref<1xi32, #tpu.memory_space<smem>>, %arg3: memref<1xi32, #tpu.memory_space<smem>>) -> (i32, i32, i32) {
    %0 = arith.index_cast %arg1 : i32 to index
    %1 = memref.load %arg2[%0] : memref<1xi32, #tpu.memory_space<smem>>
    %c0_i32 = arith.constant 0 : i32
    %c0_i32_0 = arith.constant 0 : i32
    return %arg0, %1, %c0_i32 : i32, i32, i32
  }
  func.func @transform_1(%arg0: i32, %arg1: i32, %arg2: memref<1xi32, #tpu.memory_space<smem>>, %arg3: memref<1xi32, #tpu.memory_space<smem>>) -> (i32, i32, i32) {
    %0 = arith.index_cast %arg1 : i32 to index
    %1 = memref.load %arg3[%0] : memref<1xi32, #tpu.memory_space<smem>>
    %c0_i32 = arith.constant 0 : i32
    %c0_i32_0 = arith.constant 0 : i32
    return %arg0, %1, %c0_i32 : i32, i32, i32
  }
  func.func @transform_2(%arg0: i32, %arg1: i32, %arg2: memref<1xi32, #tpu.memory_space<smem>>, %arg3: memref<1xi32, #tpu.memory_space<smem>>) -> (i32, i32, i32) {
    %0 = arith.index_cast %arg1 : i32 to index
    %1 = memref.load %arg3[%0] : memref<1xi32, #tpu.memory_space<smem>>
    %c0_i32 = arith.constant 0 : i32
    %c0_i32_0 = arith.constant 0 : i32
    return %arg0, %1, %c0_i32 : i32, i32, i32
  }
  func.func @transform_3(%arg0: i32, %arg1: i32, %arg2: memref<1xi32, #tpu.memory_space<smem>>, %arg3: memref<1xi32, #tpu.memory_space<smem>>) -> (i32, i32, i32) {
    %0 = arith.index_cast %arg1 : i32 to index
    %1 = memref.load %arg2[%0] : memref<1xi32, #tpu.memory_space<smem>>
    %c0_i32 = arith.constant 0 : i32
    %c0_i32_0 = arith.constant 0 : i32
    return %arg0, %1, %c0_i32 : i32, i32, i32
  }
}

module attributes {stable_mosaic.version = 11 : i64} {
  func.func @_ln_linear_kernel(%arg0: i32, %arg1: i32, %arg2: memref<64x128xbf16, #tpu.memory_space<vmem>>, %arg3: memref<1x128xf32, #tpu.memory_space<vmem>>, %arg4: memref<1x128xf32, #tpu.memory_space<vmem>>, %arg5: memref<128x128xbf16, #tpu.memory_space<vmem>>, %arg6: memref<1x128xf32, #tpu.memory_space<vmem>>, %arg7: memref<64x128xbf16, #tpu.memory_space<vmem>>, %arg8: memref<64x128xbf16, #tpu.memory_space<vmem>>, %arg9: memref<64x128xbf16, #tpu.memory_space<vmem>>) attributes {dimension_semantics = [#tpu.dimension_semantics<parallel>, #tpu.dimension_semantics<arbitrary>], iteration_bounds = array<i64: 1, 1>, scalar_prefetch = 0 : i64, scratch_operands = 1 : i64, tpu.core_type = #tpu.core_type<tc>, window_params = [{transform_indices = @transform_0, window_bounds = array<i64: 64, 128>}, {pipeline_mode = #tpu.pipeline_mode<synchronous>, transform_indices = @transform_1, window_bounds = array<i64: 1, 128>}, {pipeline_mode = #tpu.pipeline_mode<synchronous>, transform_indices = @transform_2, window_bounds = array<i64: 1, 128>}, {transform_indices = @transform_3, window_bounds = array<i64: 128, 128>}, {transform_indices = @transform_4, window_bounds = array<i64: 1, 128>}, {transform_indices = @transform_5, window_bounds = array<i64: 64, 128>}, {transform_indices = @transform_6, window_bounds = array<i64: 64, 128>}]} {
    %c0_i32 = arith.constant 0 : i32
    %0 = arith.cmpi eq, %arg1, %c0_i32 : i32
    %1 = arith.extui %0 : i1 to i32
    %c0_i32_0 = arith.constant 0 : i32
    %2 = arith.cmpi ne, %1, %c0_i32_0 : i32
    scf.if %2 {
      %c0_10 = arith.constant 0 : index
      %c0_11 = arith.constant 0 : index
      %14 = vector.load %arg2[%c0_10, %c0_11] : memref<64x128xbf16, #tpu.memory_space<vmem>>, vector<64x128xbf16>
      %15 = arith.extf %14 : vector<64x128xbf16> to vector<64x128xf32>
      %16 = arith.truncf %15 : vector<64x128xf32> to vector<64x128xbf16>
      %c0_12 = arith.constant 0 : index
      %c0_13 = arith.constant 0 : index
      %17 = vector.load %arg9[%c0_12, %c0_13] : memref<64x128xbf16, #tpu.memory_space<vmem>>, vector<64x128xbf16>
      tpu.vector_store %arg9[%c0_12, %c0_13], %16 {strides = array<i32>} : memref<64x128xbf16, #tpu.memory_space<vmem>>, vector<64x128xbf16>,
    } else {
    }
    %c0 = arith.constant 0 : index
    %c0_1 = arith.constant 0 : index
    %3 = vector.load %arg9[%c0, %c0_1] : memref<64x128xbf16, #tpu.memory_space<vmem>>, vector<64x128xbf16>
    %c0_2 = arith.constant 0 : index
    %c0_3 = arith.constant 0 : index
    %4 = vector.load %arg5[%c0_2, %c0_3] : memref<128x128xbf16, #tpu.memory_space<vmem>>, vector<128x128xbf16>
    %cst = arith.constant dense<0.000000e+00> : vector<64x128xf32>
    %5 = tpu.matmul %3, %4, %cst {dimension_numbers = #tpu.dot_dimension_numbers<[1], [1], [0], [0], [0, 0, 1, 0], [], []>} : vector<64x128xbf16>, vector<128x128xbf16>, vector<64x128xf32> -> vector<64x128xf32>
    %c0_4 = arith.constant 0 : index
    %c0_5 = arith.constant 0 : index
    %6 = vector.load %arg6[%c0_4, %c0_5] : memref<1x128xf32, #tpu.memory_space<vmem>>, vector<1x128xf32>
    %7 = vector.broadcast %6 : vector<1x128xf32> to vector<64x128xf32>
    %8 = arith.addf %5, %7 : vector<64x128xf32>
    %c0_6 = arith.constant 0 : index
    %c0_7 = arith.constant 0 : index
    %9 = vector.load %arg7[%c0_6, %c0_7] : memref<64x128xbf16, #tpu.memory_space<vmem>>, vector<64x128xbf16>
    %10 = arith.extf %9 : vector<64x128xbf16> to vector<64x128xf32>
    %11 = arith.addf %8, %10 : vector<64x128xf32>
    %12 = arith.truncf %11 : vector<64x128xf32> to vector<64x128xbf16>
    %c0_8 = arith.constant 0 : index
    %c0_9 = arith.constant 0 : index
    %13 = vector.load %arg8[%c0_8, %c0_9] : memref<64x128xbf16, #tpu.memory_space<vmem>>, vector<64x128xbf16>
    tpu.vector_store %arg8[%c0_8, %c0_9], %12 {strides = array<i32>} : memref<64x128xbf16, #tpu.memory_space<vmem>>, vector<64x128xbf16>,
    return
  }
  func.func @transform_0(%arg0: i32, %arg1: i32) -> (i32, i32) {
    %c0_i32 = arith.constant 0 : i32
    %c0_i32_0 = arith.constant 0 : i32
    return %arg0, %c0_i32 : i32, i32
  }
  func.func @transform_1(%arg0: i32, %arg1: i32) -> (i32, i32) {
    %c0_i32 = arith.constant 0 : i32
    %c0_i32_0 = arith.constant 0 : i32
    %c0_i32_1 = arith.constant 0 : i32
    return %c0_i32, %c0_i32_0 : i32, i32
  }
  func.func @transform_2(%arg0: i32, %arg1: i32) -> (i32, i32) {
    %c0_i32 = arith.constant 0 : i32
    %c0_i32_0 = arith.constant 0 : i32
    %c0_i32_1 = arith.constant 0 : i32
    return %c0_i32, %c0_i32_0 : i32, i32
  }
  func.func @transform_3(%arg0: i32, %arg1: i32) -> (i32, i32) {
    %c0_i32 = arith.constant 0 : i32
    %c0_i32_0 = arith.constant 0 : i32
    return %arg1, %c0_i32 : i32, i32
  }
  func.func @transform_4(%arg0: i32, %arg1: i32) -> (i32, i32) {
    %c0_i32 = arith.constant 0 : i32
    %c0_i32_0 = arith.constant 0 : i32
    return %c0_i32, %arg1 : i32, i32
  }
  func.func @transform_5(%arg0: i32, %arg1: i32) -> (i32, i32) {
    %c0_i32 = arith.constant 0 : i32
    return %arg0, %arg1 : i32, i32
  }
  func.func @transform_6(%arg0: i32, %arg1: i32) -> (i32, i32) {
    %c0_i32 = arith.constant 0 : i32
    return %arg0, %arg1 : i32, i32
  }
}

module attributes {stable_mosaic.version = 11 : i64} {
  func.func @_ln_mlp_kernel(%arg0: i32, %arg1: memref<64x128xbf16, #tpu.memory_space<vmem>>, %arg2: memref<1x128xf32, #tpu.memory_space<vmem>>, %arg3: memref<1x128xf32, #tpu.memory_space<vmem>>, %arg4: memref<512x128xbf16, #tpu.memory_space<vmem>>, %arg5: memref<1x512xf32, #tpu.memory_space<vmem>>, %arg6: memref<128x512xbf16, #tpu.memory_space<vmem>>, %arg7: memref<1x128xf32, #tpu.memory_space<vmem>>, %arg8: memref<64x128xbf16, #tpu.memory_space<vmem>>) attributes {dimension_semantics = [#tpu.dimension_semantics<parallel>], iteration_bounds = array<i64: 1>, scalar_prefetch = 0 : i64, scratch_operands = 0 : i64, tpu.core_type = #tpu.core_type<tc>, window_params = [{transform_indices = @transform_0, window_bounds = array<i64: 64, 128>}, {pipeline_mode = #tpu.pipeline_mode<synchronous>, transform_indices = @transform_1, window_bounds = array<i64: 1, 128>}, {pipeline_mode = #tpu.pipeline_mode<synchronous>, transform_indices = @transform_2, window_bounds = array<i64: 1, 128>}, {pipeline_mode = #tpu.pipeline_mode<synchronous>, transform_indices = @transform_3, window_bounds = array<i64: 512, 128>}, {pipeline_mode = #tpu.pipeline_mode<synchronous>, transform_indices = @transform_4, window_bounds = array<i64: 1, 512>}, {pipeline_mode = #tpu.pipeline_mode<synchronous>, transform_indices = @transform_5, window_bounds = array<i64: 128, 512>}, {pipeline_mode = #tpu.pipeline_mode<synchronous>, transform_indices = @transform_6, window_bounds = array<i64: 1, 128>}, {transform_indices = @transform_7, window_bounds = array<i64: 64, 128>}]} {
    %c0 = arith.constant 0 : index
    %c0_0 = arith.constant 0 : index
    %0 = vector.load %arg1[%c0, %c0_0] : memref<64x128xbf16, #tpu.memory_space<vmem>>, vector<64x128xbf16>
    %1 = arith.extf %0 : vector<64x128xbf16> to vector<64x128xf32>
    %cst = arith.constant dense<0.000000e+00> : vector<64xf32>
    %2 = vector.multi_reduction <add>, %1, %cst [1] : vector<64x128xf32> to vector<64xf32>
    %3 = vector.shape_cast %2 : vector<64xf32> to vector<64x1xf32>
    %cst_1 = arith.constant 1.280000e+02 : f32
    %4 = vector.broadcast %cst_1 : f32 to vector<64x1xf32>
    %5 = arith.divf %3, %4 : vector<64x1xf32>
    %6 = vector.broadcast %5 : vector<64x1xf32> to vector<64x128xf32>
    %7 = arith.subf %1, %6 : vector<64x128xf32>
    %8 = arith.mulf %7, %7 : vector<64x128xf32>
    %cst_2 = arith.constant dense<0.000000e+00> : vector<64xf32>
    %9 = vector.multi_reduction <add>, %8, %cst_2 [1] : vector<64x128xf32> to vector<64xf32>
    %10 = vector.shape_cast %9 : vector<64xf32> to vector<64x1xf32>
    %cst_3 = arith.constant 1.280000e+02 : f32
    %11 = vector.broadcast %cst_3 : f32 to vector<64x1xf32>
    %12 = arith.divf %10, %11 : vector<64x1xf32>
    %13 = vector.broadcast %5 : vector<64x1xf32> to vector<64x128xf32>
    %14 = arith.subf %1, %13 : vector<64x128xf32>
    %cst_4 = arith.constant 9.99999974E-6 : f32
    %15 = vector.broadcast %cst_4 : f32 to vector<64x1xf32>
    %16 = arith.addf %12, %15 : vector<64x1xf32>
    %17 = math.rsqrt %16 : vector<64x1xf32>
    %18 = vector.broadcast %17 : vector<64x1xf32> to vector<64x128xf32>
    %19 = arith.mulf %14, %18 : vector<64x128xf32>
    %c0_5 = arith.constant 0 : index
    %c0_6 = arith.constant 0 : index
    %20 = vector.load %arg2[%c0_5, %c0_6] : memref<1x128xf32, #tpu.memory_space<vmem>>, vector<1x128xf32>
    %21 = vector.broadcast %20 : vector<1x128xf32> to vector<64x128xf32>
    %22 = arith.mulf %19, %21 : vector<64x128xf32>
    %c0_7 = arith.constant 0 : index
    %c0_8 = arith.constant 0 : index
    %23 = vector.load %arg3[%c0_7, %c0_8] : memref<1x128xf32, #tpu.memory_space<vmem>>, vector<1x128xf32>
    %24 = vector.broadcast %23 : vector<1x128xf32> to vector<64x128xf32>
    %25 = arith.addf %22, %24 : vector<64x128xf32>
    %26 = arith.truncf %25 : vector<64x128xf32> to vector<64x128xbf16>
    %c0_9 = arith.constant 0 : index
    %c0_10 = arith.constant 0 : index
    %27 = vector.load %arg4[%c0_9, %c0_10] : memref<512x128xbf16, #tpu.memory_space<vmem>>, vector<512x128xbf16>
    %cst_11 = arith.constant dense<0.000000e+00> : vector<64x512xf32>
    %28 = tpu.matmul %26, %27, %cst_11 {dimension_numbers = #tpu.dot_dimension_numbers<[1], [1], [0], [0], [0, 0, 1, 0], [], []>} : vector<64x128xbf16>, vector<512x128xbf16>, vector<64x512xf32> -> vector<64x512xf32>
    %c0_12 = arith.constant 0 : index
    %c0_13 = arith.constant 0 : index
    %29 = vector.load %arg5[%c0_12, %c0_13] : memref<1x512xf32, #tpu.memory_space<vmem>>, vector<1x512xf32>
    %30 = vector.broadcast %29 : vector<1x512xf32> to vector<64x512xf32>
    %31 = arith.addf %28, %30 : vector<64x512xf32>
    %cst_14 = arith.constant 5.000000e-01 : f32
    %32 = vector.broadcast %cst_14 : f32 to vector<64x512xf32>
    %33 = arith.mulf %32, %31 : vector<64x512xf32>
    %cst_15 = arith.constant 0.707106769 : f32
    %34 = vector.broadcast %cst_15 : f32 to vector<64x512xf32>
    %35 = arith.mulf %31, %34 : vector<64x512xf32>
    %36 = math.erf %35 : vector<64x512xf32>
    %cst_16 = arith.constant 1.000000e+00 : f32
    %37 = vector.broadcast %cst_16 : f32 to vector<64x512xf32>
    %38 = arith.addf %37, %36 : vector<64x512xf32>
    %39 = arith.mulf %33, %38 : vector<64x512xf32>
    %40 = arith.truncf %39 : vector<64x512xf32> to vector<64x512xbf16>
    %c0_17 = arith.constant 0 : index
    %c0_18 = arith.constant 0 : index
    %41 = vector.load %arg6[%c0_17, %c0_18] : memref<128x512xbf16, #tpu.memory_space<vmem>>, vector<128x512xbf16>
    %cst_19 = arith.constant dense<0.000000e+00> : vector<64x128xf32>
    %42 = tpu.matmul %40, %41, %cst_19 {dimension_numbers = #tpu.dot_dimension_numbers<[1], [1], [0], [0], [0, 0, 1, 0], [], []>} : vector<64x512xbf16>, vector<128x512xbf16>, vector<64x128xf32> -> vector<64x128xf32>
    %c0_20 = arith.constant 0 : index
    %c0_21 = arith.constant 0 : index
    %43 = vector.load %arg7[%c0_20, %c0_21] : memref<1x128xf32, #tpu.memory_space<vmem>>, vector<1x128xf32>
    %44 = vector.broadcast %43 : vector<1x128xf32> to vector<64x128xf32>
    %45 = arith.addf %42, %44 : vector<64x128xf32>
    %46 = arith.addf %1, %45 : vector<64x128xf32>
    %47 = arith.truncf %46 : vector<64x128xf32> to vector<64x128xbf16>
    %c0_22 = arith.constant 0 : index
    %c0_23 = arith.constant 0 : index
    %48 = vector.load %arg8[%c0_22, %c0_23] : memref<64x128xbf16, #tpu.memory_space<vmem>>, vector<64x128xbf16>
    tpu.vector_store %arg8[%c0_22, %c0_23], %47 {strides = array<i32>} : memref<64x128xbf16, #tpu.memory_space<vmem>>, vector<64x128xbf16>,
    return
  }
  func.func @transform_0(%arg0: i32) -> (i32, i32) {
    %c0_i32 = arith.constant 0 : i32
    %c0_i32_0 = arith.constant 0 : i32
    return %arg0, %c0_i32 : i32, i32
  }
  func.func @transform_1(%arg0: i32) -> (i32, i32) {
    %c0_i32 = arith.constant 0 : i32
    %c0_i32_0 = arith.constant 0 : i32
    %c0_i32_1 = arith.constant 0 : i32
    return %c0_i32, %c0_i32_0 : i32, i32
  }
  func.func @transform_2(%arg0: i32) -> (i32, i32) {
    %c0_i32 = arith.constant 0 : i32
    %c0_i32_0 = arith.constant 0 : i32
    %c0_i32_1 = arith.constant 0 : i32
    return %c0_i32, %c0_i32_0 : i32, i32
  }
  func.func @transform_3(%arg0: i32) -> (i32, i32) {
    %c0_i32 = arith.constant 0 : i32
    %c0_i32_0 = arith.constant 0 : i32
    %c0_i32_1 = arith.constant 0 : i32
    return %c0_i32, %c0_i32_0 : i32, i32
  }
  func.func @transform_4(%arg0: i32) -> (i32, i32) {
    %c0_i32 = arith.constant 0 : i32
    %c0_i32_0 = arith.constant 0 : i32
    %c0_i32_1 = arith.constant 0 : i32
    return %c0_i32, %c0_i32_0 : i32, i32
  }
  func.func @transform_5(%arg0: i32) -> (i32, i32) {
    %c0_i32 = arith.constant 0 : i32
    %c0_i32_0 = arith.constant 0 : i32
    %c0_i32_1 = arith.constant 0 : i32
    return %c0_i32, %c0_i32_0 : i32, i32
  }
  func.func @transform_6(%arg0: i32) -> (i32, i32) {
    %c0_i32 = arith.constant 0 : i32
    %c0_i32_0 = arith.constant 0 : i32
    %c0_i32_1 = arith.constant 0 : i32
    return %c0_i32, %c0_i32_0 : i32, i32
  }
  func.func @transform_7(%arg0: i32) -> (i32, i32) {
    %c0_i32 = arith.constant 0 : i32
    %c0_i32_0 = arith.constant 0 : i32
    return %arg0, %c0_i32 : i32, i32
  }
}

module attributes {stable_mosaic.version = 11 : i64} {
  func.func @_ln_linear_kernel(%arg0: i32, %arg1: i32, %arg2: memref<64x128xbf16, #tpu.memory_space<vmem>>, %arg3: memref<1x128xf32, #tpu.memory_space<vmem>>, %arg4: memref<1x128xf32, #tpu.memory_space<vmem>>, %arg5: memref<256x128xbf16, #tpu.memory_space<vmem>>, %arg6: memref<1x256xf32, #tpu.memory_space<vmem>>, %arg7: memref<64x256xf32, #tpu.memory_space<vmem>>, %arg8: memref<64x128xbf16, #tpu.memory_space<vmem>>) attributes {dimension_semantics = [#tpu.dimension_semantics<parallel>, #tpu.dimension_semantics<arbitrary>], iteration_bounds = array<i64: 1, 2>, scalar_prefetch = 0 : i64, scratch_operands = 1 : i64, tpu.core_type = #tpu.core_type<tc>, window_params = [{transform_indices = @transform_0, window_bounds = array<i64: 64, 128>}, {pipeline_mode = #tpu.pipeline_mode<synchronous>, transform_indices = @transform_1, window_bounds = array<i64: 1, 128>}, {pipeline_mode = #tpu.pipeline_mode<synchronous>, transform_indices = @transform_2, window_bounds = array<i64: 1, 128>}, {transform_indices = @transform_3, window_bounds = array<i64: 256, 128>}, {transform_indices = @transform_4, window_bounds = array<i64: 1, 256>}, {transform_indices = @transform_5, window_bounds = array<i64: 64, 256>}]} {
    %c0_i32 = arith.constant 0 : i32
    %0 = arith.cmpi eq, %arg1, %c0_i32 : i32
    %1 = arith.extui %0 : i1 to i32
    %c0_i32_0 = arith.constant 0 : i32
    %2 = arith.cmpi ne, %1, %c0_i32_0 : i32
    scf.if %2 {
      %c0_8 = arith.constant 0 : index
      %c0_9 = arith.constant 0 : index
      %10 = vector.load %arg2[%c0_8, %c0_9] : memref<64x128xbf16, #tpu.memory_space<vmem>>, vector<64x128xbf16>
      %11 = arith.extf %10 : vector<64x128xbf16> to vector<64x128xf32>
      %cst_10 = arith.constant dense<0.000000e+00> : vector<64xf32>
      %12 = vector.multi_reduction <add>, %11, %cst_10 [1] : vector<64x128xf32> to vector<64xf32>
      %13 = vector.shape_cast %12 : vector<64xf32> to vector<64x1xf32>
      %cst_11 = arith.constant 1.280000e+02 : f32
      %14 = vector.broadcast %cst_11 : f32 to vector<64x1xf32>
      %15 = arith.divf %13, %14 : vector<64x1xf32>
      %16 = vector.broadcast %15 : vector<64x1xf32> to vector<64x128xf32>
      %17 = arith.subf %11, %16 : vector<64x128xf32>
      %18 = arith.mulf %17, %17 : vector<64x128xf32>
      %cst_12 = arith.constant dense<0.000000e+00> : vector<64xf32>
      %19 = vector.multi_reduction <add>, %18, %cst_12 [1] : vector<64x128xf32> to vector<64xf32>
      %20 = vector.shape_cast %19 : vector<64xf32> to vector<64x1xf32>
      %cst_13 = arith.constant 1.280000e+02 : f32
      %21 = vector.broadcast %cst_13 : f32 to vector<64x1xf32>
      %22 = arith.divf %20, %21 : vector<64x1xf32>
      %23 = vector.broadcast %15 : vector<64x1xf32> to vector<64x128xf32>
      %24 = arith.subf %11, %23 : vector<64x128xf32>
      %cst_14 = arith.constant 9.99999974E-6 : f32
      %25 = vector.broadcast %cst_14 : f32 to vector<64x1xf32>
      %26 = arith.addf %22, %25 : vector<64x1xf32>
      %27 = math.rsqrt %26 : vector<64x1xf32>
      %28 = vector.broadcast %27 : vector<64x1xf32> to vector<64x128xf32>
      %29 = arith.mulf %24, %28 : vector<64x128xf32>
      %c0_15 = arith.constant 0 : index
      %c0_16 = arith.constant 0 : index
      %30 = vector.load %arg3[%c0_15, %c0_16] : memref<1x128xf32, #tpu.memory_space<vmem>>, vector<1x128xf32>
      %31 = vector.broadcast %30 : vector<1x128xf32> to vector<64x128xf32>
      %32 = arith.mulf %29, %31 : vector<64x128xf32>
      %c0_17 = arith.constant 0 : index
      %c0_18 = arith.constant 0 : index
      %33 = vector.load %arg4[%c0_17, %c0_18] : memref<1x128xf32, #tpu.memory_space<vmem>>, vector<1x128xf32>
      %34 = vector.broadcast %33 : vector<1x128xf32> to vector<64x128xf32>
      %35 = arith.addf %32, %34 : vector<64x128xf32>
      %36 = arith.truncf %35 : vector<64x128xf32> to vector<64x128xbf16>
      %c0_19 = arith.constant 0 : index
      %c0_20 = arith.constant 0 : index
      %37 = vector.load %arg8[%c0_19, %c0_20] : memref<64x128xbf16, #tpu.memory_space<vmem>>, vector<64x128xbf16>
      tpu.vector_store %arg8[%c0_19, %c0_20], %36 {strides = array<i32>} : memref<64x128xbf16, #tpu.memory_space<vmem>>, vector<64x128xbf16>,
    } else {
    }
    %c0 = arith.constant 0 : index
    %c0_1 = arith.constant 0 : index
    %3 = vector.load %arg8[%c0, %c0_1] : memref<64x128xbf16, #tpu.memory_space<vmem>>, vector<64x128xbf16>
    %c0_2 = arith.constant 0 : index
    %c0_3 = arith.constant 0 : index
    %4 = vector.load %arg5[%c0_2, %c0_3] : memref<256x128xbf16, #tpu.memory_space<vmem>>, vector<256x128xbf16>
    %cst = arith.constant dense<0.000000e+00> : vector<64x256xf32>
    %5 = tpu.matmul %3, %4, %cst {dimension_numbers = #tpu.dot_dimension_numbers<[1], [1], [0], [0], [0, 0, 1, 0], [], []>} : vector<64x128xbf16>, vector<256x128xbf16>, vector<64x256xf32> -> vector<64x256xf32>
    %c0_4 = arith.constant 0 : index
    %c0_5 = arith.constant 0 : index
    %6 = vector.load %arg6[%c0_4, %c0_5] : memref<1x256xf32, #tpu.memory_space<vmem>>, vector<1x256xf32>
    %7 = vector.broadcast %6 : vector<1x256xf32> to vector<64x256xf32>
    %8 = arith.addf %5, %7 : vector<64x256xf32>
    %c0_6 = arith.constant 0 : index
    %c0_7 = arith.constant 0 : index
    %9 = vector.load %arg7[%c0_6, %c0_7] : memref<64x256xf32, #tpu.memory_space<vmem>>, vector<64x256xf32>
    tpu.vector_store %arg7[%c0_6, %c0_7], %8 {strides = array<i32>} : memref<64x256xf32, #tpu.memory_space<vmem>>, vector<64x256xf32>,
    return
  }
  func.func @transform_0(%arg0: i32, %arg1: i32) -> (i32, i32) {
    %c0_i32 = arith.constant 0 : i32
    %c0_i32_0 = arith.constant 0 : i32
    return %arg0, %c0_i32 : i32, i32
  }
  func.func @transform_1(%arg0: i32, %arg1: i32) -> (i32, i32) {
    %c0_i32 = arith.constant 0 : i32
    %c0_i32_0 = arith.constant 0 : i32
    %c0_i32_1 = arith.constant 0 : i32
    return %c0_i32, %c0_i32_0 : i32, i32
  }
  func.func @transform_2(%arg0: i32, %arg1: i32) -> (i32, i32) {
    %c0_i32 = arith.constant 0 : i32
    %c0_i32_0 = arith.constant 0 : i32
    %c0_i32_1 = arith.constant 0 : i32
    return %c0_i32, %c0_i32_0 : i32, i32
  }
  func.func @transform_3(%arg0: i32, %arg1: i32) -> (i32, i32) {
    %c0_i32 = arith.constant 0 : i32
    %c0_i32_0 = arith.constant 0 : i32
    return %arg1, %c0_i32 : i32, i32
  }
  func.func @transform_4(%arg0: i32, %arg1: i32) -> (i32, i32) {
    %c0_i32 = arith.constant 0 : i32
    %c0_i32_0 = arith.constant 0 : i32
    return %c0_i32, %arg1 : i32, i32
  }
  func.func @transform_5(%arg0: i32, %arg1: i32) -> (i32, i32) {
    %c0_i32 = arith.constant 0 : i32
    return %arg0, %arg1 : i32, i32
  }
}

</mosaic_0001>

<llo_original>
// kernel: gpt_forward.9
$region0: #{gpt_forward.9}
  #allocation0 [shape = 'u32[]', space=smem, size = 0x4, offset = 0x4, fixed_abs, tag = 'smem constant byte address 0x4 - core index']
  #allocation1 [shape = 'u32[72,128]{1,0:T(1,128)}', space=vmem, size = 0x9000, scoped, tag = 'internal scratch']
  #allocation2 [shape = 'bf16[64,128]{1,0:T(8,128)(2,1)}', space=vmem, size = 0x4000, scoped, tag = 'scratch operand']
  %s0 = inlined_call_operand.vmem [shape: bf16[64,128], index: 0, kind: input, shape index: {}]
  %s1 = inlined_call_operand.vmem [shape: f32[1,128], index: 1, kind: input, shape index: {}]
  %s2 = inlined_call_operand.vmem [shape: f32[1,128], index: 2, kind: input, shape index: {}]
  %s3 = inlined_call_operand.vmem [shape: bf16[384,128], index: 3, kind: input, shape index: {}]
  %s4 = inlined_call_operand.vmem [shape: f32[1,384], index: 4, kind: input, shape index: {}]
  %s5 = inlined_call_operand.vmem [shape: bf16[64,384], index: 5, kind: output, shape index: {}]
  %s6 = sld [smem:[#allocation0]]
  $region94: #{gpt_forward.9} parent=0
    _
  %s8 = ssub.s32 1, %s6
  %s9 = scalar_select 0, %s8, %s6
  $region1: #{gpt_forward.9} parent=0
    #allocation3 [shape = 'u8[32768]{0}', space=vmem, size = 0x8000, scoped, tag = 'output window, operand 0']
    loop: start=0, step=1, limit=5
    $region2: #{gpt_forward.9} parent=1 // loop_pre_header
      _
    $region3: #{gpt_forward.9} parent=1 // loop_header
      %s11 = sphi 0, %s15
      %p12 = scmp.ge.s32.totalorder %s11, 5
      %s18 = sphi 0, %s30
      %s19 = sphi 0, %s26
      %s20 = sphi 0, %s18
      %s21 = sphi 0, %s19
      %s22 = sphi 0, %s20
      %s23 = sphi 0, %s21
      %s33 = sphi 0, %s35
      %s36 = sphi 0, %s33
      %s37 = sphi 0, %s36
      %s53 = sphi 0, %s37
      %s57 = sphi 0, %s57
      %s59 = sphi 0, %s57
      %s60 = sphi 0, %s59
      %s74 = sphi 0, %s60
      %s78 = sphi 0, %s78
      %s80 = sphi 0, %s78
      %s81 = sphi 0, %s80
      %s95 = sphi 0, %s81
      %s101 = sphi 0, %s103
      %s104 = sphi 0, %s101
      %s105 = sphi 0, %s104
      %s121 = sphi 0, %s105
      %s127 = sphi 0, %s129
      %s130 = sphi 0, %s127
      %s131 = sphi 0, %s130
      %s147 = sphi 0, %s131
      %s155 = sphi 0, %s157
      %s158 = sphi 0, %s155
      %s159 = sphi 0, %s158
      %s175 = sphi 0, %s159
    $region4: #{gpt_forward.9} parent=1 // loop_header_branch
      %14 = sbr.rel (%p12) target = $region8
    $region5: #{gpt_forward.9} parent=1 // loop_body
      %s16 = ssub.s32 %s11, 1
      %s17 = ssub.s32 %s11, 2
      %s24 = sadd.s32 1, %s19
      %p25 = scmp.ge.s32.totalorder %s24, 3
      %s26 = scalar_select %p25, 0, %s24
      %s27 = sadd.s32 1, %s18
      %s28 = scalar_select %p25, %s27, %s18
      %p29 = scmp.ge.s32.totalorder %s28, 1
      %s30 = scalar_select %p29, 0, %s28
      %s31 = ssub.s32 %s18, %s30
      %p32 = scmp.eq.s32.totalorder %s31, 0
      %s34 = sadd.s32 %s33, 1
      %s35 = scalar_select %p32, %s33, %s34
      %p38 = pneg %p32
      %p39 = scmp.eq.s32.totalorder %s11, 2
      %p40 = por %p38, %p39
      %p41 = scmp.ne.s32.totalorder %s33, %s36
      %p42 = scmp.eq.s32.totalorder %s11, 0
      %p43 = por %p41, %p42
      %p44 = scmp.ne.s32.totalorder %s33, %s36
      %p45 = scmp.eq.s32.totalorder %s16, 2
      %p46 = por %p44, %p45
      %p47 = scmp.ne.s32.totalorder %s36, %s37
      %p48 = scmp.eq.s32.totalorder %s16, 0
      %p49 = por %p47, %p48
      %p50 = scmp.ne.s32.totalorder %s36, %s37
      %p51 = scmp.eq.s32.totalorder %s17, 2
      %p52 = por %p50, %p51
      %p54 = scmp.ne.s32.totalorder %s37, %s53
      %p55 = scmp.eq.s32.totalorder %s17, 0
      %p56 = por %p54, %p55
      %s58 = sadd.s32 %s57, 1
      %p61 = scmp.eq.s32.totalorder %s11, 2
      %p62 = scmp.ne.s32.totalorder %s57, %s59
      %p63 = scmp.eq.s32.totalorder %s11, 0
      %p64 = por %p62, %p63
      %p65 = scmp.ne.s32.totalorder %s57, %s59
      %p66 = scmp.eq.s32.totalorder %s16, 2
      %p67 = por %p65, %p66
      %p68 = scmp.ne.s32.totalorder %s59, %s60
      %p69 = scmp.eq.s32.totalorder %s16, 0
      %p70 = por %p68, %p69
      %p71 = scmp.ne.s32.totalorder %s59, %s60
      %p72 = scmp.eq.s32.totalorder %s17, 2
      %p73 = por %p71, %p72
      %p75 = scmp.ne.s32.totalorder %s60, %s74
      %p76 = scmp.eq.s32.totalorder %s17, 0
      %p77 = por %p75, %p76
      %s79 = sadd.s32 %s78, 1
      %p82 = scmp.eq.s32.totalorder %s11, 2
      %p83 = scmp.ne.s32.totalorder %s78, %s80
      %p84 = scmp.eq.s32.totalorder %s11, 0
      %p85 = por %p83, %p84
      %p86 = scmp.ne.s32.totalorder %s78, %s80
      %p87 = scmp.eq.s32.totalorder %s16, 2
      %p88 = por %p86, %p87
      %p89 = scmp.ne.s32.totalorder %s80, %s81
      %p90 = scmp.eq.s32.totalorder %s16, 0
      %p91 = por %p89, %p90
      %p92 = scmp.ne.s32.totalorder %s80, %s81
      %p93 = scmp.eq.s32.totalorder %s17, 2
      %p94 = por %p92, %p93
      %p96 = scmp.ne.s32.totalorder %s81, %s95
      %p97 = scmp.eq.s32.totalorder %s17, 0
      %p98 = por %p96, %p97
      %s99 = ssub.s32 %s19, %s26
      %p100 = scmp.eq.s32.totalorder %s99, 0
      %s102 = sadd.s32 %s101, 1
      %s103 = scalar_select %p100, %s101, %s102
      %p106 = pneg %p100
      %p107 = scmp.eq.s32.totalorder %s11, 2
      %p108 = por %p106, %p107
      %p109 = scmp.ne.s32.totalorder %s101, %s104
      %p110 = scmp.eq.s32.totalorder %s11, 0
      %p111 = por %p109, %p110
      %p112 = scmp.ne.s32.totalorder %s101, %s104
      %p113 = scmp.eq.s32.totalorder %s16, 2
      %p114 = por %p112, %p113
      %p115 = scmp.ne.s32.totalorder %s104, %s105
      %p116 = scmp.eq.s32.totalorder %s16, 0
      %p117 = por %p115, %p116
      %p118 = scmp.ne.s32.totalorder %s104, %s105
      %p119 = scmp.eq.s32.totalorder %s17, 2
      %p120 = por %p118, %p119
      %p122 = scmp.ne.s32.totalorder %s105, %s121
      %p123 = scmp.eq.s32.totalorder %s17, 0
      %p124 = por %p122, %p123
      %s125 = ssub.s32 %s19, %s26
      %p126 = scmp.eq.s32.totalorder %s125, 0
      %s128 = sadd.s32 %s127, 1
      %s129 = scalar_select %p126, %s127, %s128
      %p132 = pneg %p126
      %p133 = scmp.eq.s32.totalorder %s11, 2
      %p134 = por %p132, %p133
      %p135 = scmp.ne.s32.totalorder %s127, %s130
      %p136 = scmp.eq.s32.totalorder %s11, 0
      %p137 = por %p135, %p136
      %p138 = scmp.ne.s32.totalorder %s127, %s130
      %p139 = scmp.eq.s32.totalorder %s16, 2
      %p140 = por %p138, %p139
      %p141 = scmp.ne.s32.totalorder %s130, %s131
      %p142 = scmp.eq.s32.totalorder %s16, 0
      %p143 = por %p141, %p142
      %p144 = scmp.ne.s32.totalorder %s130, %s131
      %p145 = scmp.eq.s32.totalorder %s17, 2
      %p146 = por %p144, %p145
      %p148 = scmp.ne.s32.totalorder %s131, %s147
      %p149 = scmp.eq.s32.totalorder %s17, 0
      %p150 = por %p148, %p149
      %s151 = ssub.s32 %s18, %s30
      %s152 = ssub.s32 %s19, %s26
      %s153 = sor.u32 %s151, %s152
      %p154 = scmp.eq.s32.totalorder %s153, 0
      %s156 = sadd.s32 %s155, 1
      %s157 = scalar_select %p154, %s155, %s156
      %p160 = pneg %p154
      %p161 = scmp.eq.s32.totalorder %s11, 2
      %p162 = por %p160, %p161
      %p163 = scmp.ne.s32.totalorder %s155, %s158
      %p164 = scmp.eq.s32.totalorder %s11, 0
      %p165 = por %p163, %p164
      %p166 = scmp.ne.s32.totalorder %s155, %s158
      %p167 = scmp.eq.s32.totalorder %s16, 2
      %p168 = por %p166, %p167
      %p169 = scmp.ne.s32.totalorder %s158, %s159
      %p170 = scmp.eq.s32.totalorder %s16, 0
      %p171 = por %p169, %p170
      %p172 = scmp.ne.s32.totalorder %s158, %s159
      %p173 = scmp.eq.s32.totalorder %s17, 2
      %p174 = por %p172, %p173
      %p176 = scmp.ne.s32.totalorder %s159, %s175
      %p177 = scmp.eq.s32.totalorder %s17, 0
      %p178 = por %p176, %p177
      %p179 = scmp.le.s32.totalorder 1, %s11
      %p180 = scmp.lt.s32.totalorder %s11, 4
      %p181 = pnand %p179, %p180
      %p182 = pneg %p181
      // Predicated region
      $region9: #{gpt_forward.9} parent=5 // pred_check
        _
      $region10: #{gpt_forward.9} parent=5 // pred_check_branch
        %184 = sbr.rel (%p181) target = $region12
      $region11: #{gpt_forward.9} parent=5 // pred_region
        %s185 = ssub.s32 %s11, 1
        // Predicated region
        $region13: #{gpt_forward.9} parent=11 // pred_check
          %p186 = pneg %p49
        $region14: #{gpt_forward.9} parent=11 // pred_check_branch
          %188 = sbr.rel (%p186) target = $region16
        $region15: #{gpt_forward.9} parent=11 // pred_region
          %s189 = smul.u32 8, %s20
          %p190 = scmp.lt.s32.totalorder %s189, 7
          %s191 = scalar_select %p190, %s189, 7
          %s192 = smul.addr %s191, 4
          %s193 = scalar_lea.vmem %s0, %s192
          %s194 = smul.u32 8, %s20
        $region16: #{gpt_forward.9} parent=11 // pred_fallthru
          _
        // Predicated region
        $region17: #{gpt_forward.9} parent=11 // pred_check
          %p195 = pneg %p70
        $region18: #{gpt_forward.9} parent=11 // pred_check_branch
          %197 = sbr.rel (%p195) target = $region20
        $region19: #{gpt_forward.9} parent=11 // pred_region
          _
        $region20: #{gpt_forward.9} parent=11 // pred_fallthru
          _
        // Predicated region
        $region21: #{gpt_forward.9} parent=11 // pred_check
          %p198 = pneg %p91
        $region22: #{gpt_forward.9} parent=11 // pred_check_branch
          %200 = sbr.rel (%p198) target = $region24
        $region23: #{gpt_forward.9} parent=11 // pred_region
          _
        $region24: #{gpt_forward.9} parent=11 // pred_fallthru
          _
      $region12: #{gpt_forward.9} parent=5 // pred_fallthru
        _
      %p201 = scmp.lt.s32.totalorder %s11, 3
      // Predicated region
      $region25: #{gpt_forward.9} parent=5 // pred_check
        %p202 = pneg %p201
      $region26: #{gpt_forward.9} parent=5 // pred_check_branch
        %204 = sbr.rel (%p202) target = $region28
      $region27: #{gpt_forward.9} parent=5 // pred_region
        // Predicated region
        $region29: #{gpt_forward.9} parent=27 // pred_check
          %p205 = pneg %p111
        $region30: #{gpt_forward.9} parent=27 // pred_check_branch
          %207 = sbr.rel (%p205) target = $region32
        $region31: #{gpt_forward.9} parent=27 // pred_region
          %s208 = smul.u32 16, %s19
          %p209 = scmp.lt.s32.totalorder %s208, 47
          %s210 = scalar_select %p209, %s208, 47
          %s211 = smul.addr %s210, 4
          %s212 = scalar_lea.vmem %s3, %s211
          %s213 = smul.u32 16, %s19
        $region32: #{gpt_forward.9} parent=27 // pred_fallthru
          _
        // Predicated region
        $region33: #{gpt_forward.9} parent=27 // pred_check
          %p214 = pneg %p137
        $region34: #{gpt_forward.9} parent=27 // pred_check_branch
          %216 = sbr.rel (%p214) target = $region36
        $region35: #{gpt_forward.9} parent=27 // pred_region
          %p217 = scmp.lt.s32.totalorder %s19, 2
          %s218 = scalar_select %p217, %s19, 2
          %s219 = scalar_lea.vmem %s4, %s218
        $region36: #{gpt_forward.9} parent=27 // pred_fallthru
          _
      $region28: #{gpt_forward.9} parent=5 // pred_fallthru
        _
      %p220 = scmp.le.s32.totalorder 1, %s11
      %p221 = scmp.lt.s32.totalorder %s11, 4
      %p222 = pnand %p220, %p221
      %p223 = pneg %p222
      // Predicated region
      $region37: #{gpt_forward.9} parent=5 // pred_check
        _
      $region38: #{gpt_forward.9} parent=5 // pred_check_branch
        %225 = sbr.rel (%p222) target = $region40
      $region39: #{gpt_forward.9} parent=5 // pred_region
        %s226 = ssub.s32 %s11, 1
        %s227 = smul.u32 8, %s20
        %p228 = scmp.lt.s32.totalorder %s227, 7
        %s229 = scalar_select %p228, %s227, 7
        %s230 = smul.addr %s229, 4
        %s231 = scalar_lea.vmem %s0, %s230
        %p232 = pneg %p49
        %p233 = pneg %p46
        %p234 = pneg %p70
        %p235 = pneg %p67
        %p236 = pneg %p91
        %p237 = pneg %p88
        %s238 = smul.u32 16, %s21
        %p239 = scmp.lt.s32.totalorder %s238, 47
        %s240 = scalar_select %p239, %s238, 47
        %s241 = smul.addr %s240, 4
        %s242 = scalar_lea.vmem %s3, %s241
        %p243 = pneg %p117
        %p244 = pneg %p114
        %p245 = scmp.lt.s32.totalorder %s21, 2
        %s246 = scalar_select %p245, %s21, 2
        %s247 = scalar_lea.vmem %s4, %s246
        %p248 = pneg %p143
        %p249 = pneg %p140
        %p250 = pneg %p171
        %p251 = pneg %p168
        %s252 = sand.u32 %s158, 1
        %s253 = sand.u32 %s158, 1
        %s254 = smul.addr %s253, 32
        %s255 = scalar_lea.vmem [#allocation3], %s254
        %s256 = smul.u32 8, %s20
        %p257 = scmp.lt.s32.totalorder %s256, 7
        %s258 = scalar_select %p257, %s256, 7
        %s259 = smul.addr %s258, 4
        %s260 = scalar_lea.vmem %s0, %s259
        %s261 = smul.u32 8, %s20
        %s262 = smul.u32 16, %s21
        %p263 = scmp.lt.s32.totalorder %s262, 47
        %s264 = scalar_select %p263, %s262, 47
        %s265 = smul.addr %s264, 4
        %s266 = scalar_lea.vmem %s3, %s265
        %s267 = smul.u32 16, %s21
        %p268 = scmp.lt.s32.totalorder %s21, 2
        %s269 = scalar_select %p268, %s21, 2
        %s270 = scalar_lea.vmem %s4, %s269
        %s271 = smul.u32 8, %s20
        %p272 = scmp.eq.s32.totalorder %s21, 0
        // Predicated region
        $region41: #{gpt_forward.9} parent=39 // pred_check
          %p273 = pneg %p272
        $region42: #{gpt_forward.9} parent=39 // pred_check_branch
          %275 = sbr.rel (%p273) target = $region44
        $region43: #{gpt_forward.9} parent=39 // pred_region
          %v276 = vld [vmem:[%s260] sm:$0xf]
          %v277 = vld [vmem:[%s260 + $0x4] sm:$0xf]
          %v278 = vld [vmem:[%s260 + $0x8] sm:$0xf]
          %v279 = vld [vmem:[%s260 + $0xc] sm:$0xf]
          %v280 = vld [vmem:[%s260 + $0x10] sm:$0xf]
          %v281 = vld [vmem:[%s260 + $0x14] sm:$0xf]
          %v282 = vld [vmem:[%s260 + $0x18] sm:$0xf]
          %v283 = vld [vmem:[%s260 + $0x1c] sm:$0xf]
          %v284 = vunpack.c.l.bf16 %v276
          %v285 = vunpack.c.l.bf16 %v277
          %v286 = vunpack.c.l.bf16 %v278
          %v287 = vunpack.c.l.bf16 %v279
          %v288 = vunpack.c.l.bf16 %v280
          %v289 = vunpack.c.l.bf16 %v281
          %v290 = vunpack.c.l.bf16 %v282
          %v291 = vunpack.c.l.bf16 %v283
          %292 = vadd.xlane.f32.xlu0 %v284
          %v293 = vpop.xlane.xlu0 %292
          %294 = vadd.xlane.f32.xlu0 %v285
          %v295 = vpop.xlane.xlu0 %294
          %296 = vadd.xlane.f32.xlu0 %v286
          %v297 = vpop.xlane.xlu0 %296
          %298 = vadd.xlane.f32.xlu0 %v287
          %v299 = vpop.xlane.xlu0 %298
          %300 = vadd.xlane.f32.xlu0 %v288
          %v301 = vpop.xlane.xlu0 %300
          %302 = vadd.xlane.f32.xlu0 %v289
          %v303 = vpop.xlane.xlu0 %302
          %304 = vadd.xlane.f32.xlu0 %v290
          %v305 = vpop.xlane.xlu0 %304
          %306 = vadd.xlane.f32.xlu0 %v291
          %v307 = vpop.xlane.xlu0 %306
          %v308 = vrcp.pop 128.0
          %v309 = vmul.f32 128.0, %v308
          %v310 = vsub.f32 1.0, %v309
          %v311 = vmul.f32 %v308, %v310
          %v312 = vadd.f32 %v308, %v311
          %vm313 = vweird.f32 %v308
          %v314 = vsel %vm313, %v308, %v312
          %v315 = vmul.f32 %v293, %v314
          %v316 = vmul.f32 %v295, %v314
          %v317 = vmul.f32 %v297, %v314
          %v318 = vmul.f32 %v299, %v314
          %v319 = vmul.f32 %v301, %v314
          %v320 = vmul.f32 %v303, %v314
          %v321 = vmul.f32 %v305, %v314
          %v322 = vmul.f32 %v307, %v314
          %v323 = vsub.f32 %v284, %v315
          %v324 = vsub.f32 %v285, %v316
          %v325 = vsub.f32 %v286, %v317
          %v326 = vsub.f32 %v287, %v318
          %v327 = vsub.f32 %v288, %v319
          %v328 = vsub.f32 %v289, %v320
          %v329 = vsub.f32 %v290, %v321
          %v330 = vsub.f32 %v291, %v322
          %v331 = vmul.f32 %v323, %v323
          %v332 = vmul.f32 %v324, %v324
          %v333 = vmul.f32 %v325, %v325
          %v334 = vmul.f32 %v326, %v326
          %v335 = vmul.f32 %v327, %v327
          %v336 = vmul.f32 %v328, %v328
          %v337 = vmul.f32 %v329, %v329
          %v338 = vmul.f32 %v330, %v330
          %339 = vadd.xlane.f32.xlu0 %v331
          %v340 = vpop.xlane.xlu0 %339
          %341 = vadd.xlane.f32.xlu0 %v332
          %v342 = vpop.xlane.xlu0 %341
          %343 = vadd.xlane.f32.xlu0 %v333
          %v344 = vpop.xlane.xlu0 %343
          %345 = vadd.xlane.f32.xlu0 %v334
          %v346 = vpop.xlane.xlu0 %345
          %347 = vadd.xlane.f32.xlu0 %v335
          %v348 = vpop.xlane.xlu0 %347
          %349 = vadd.xlane.f32.xlu0 %v336
          %v350 = vpop.xlane.xlu0 %349
          %351 = vadd.xlane.f32.xlu0 %v337
          %v352 = vpop.xlane.xlu0 %351
          %353 = vadd.xlane.f32.xlu0 %v338
          %v354 = vpop.xlane.xlu0 %353
          %v355 = vmul.f32 %v340, %v314
          %v356 = vmul.f32 %v342, %v314
          %v357 = vmul.f32 %v344, %v314
          %v358 = vmul.f32 %v346, %v314
          %v359 = vmul.f32 %v348, %v314
          %v360 = vmul.f32 %v350, %v314
          %v361 = vmul.f32 %v352, %v314
          %v362 = vmul.f32 %v354, %v314
          %v363 = vadd.f32 %v355, 1e-05
          %v364 = vadd.f32 %v356, 1e-05
          %v365 = vadd.f32 %v357, 1e-05
          %v366 = vadd.f32 %v358, 1e-05
          %v367 = vadd.f32 %v359, 1e-05
          %v368 = vadd.f32 %v360, 1e-05
          %v369 = vadd.f32 %v361, 1e-05
          %v370 = vadd.f32 %v362, 1e-05
          %v371 = vrsqrt.pop %v363
          %v372 = vmul.f32 %v371, %v363
          %v373 = vmul.f32 %v372, %v371
          %v374 = vmul.f32 0.5, %v373
          %v375 = vsub.f32 1.5, %v374
          %v376 = vmul.f32 %v371, %v375
          %vm377 = vweird.f32 %v363
          %vm378 = vweird.f32 %v371
          %vm379 = vmor %vm377, %vm378
          %v380 = vsel %vm379, %v371, %v376
          %v381 = vrsqrt.pop %v364
          %v382 = vmul.f32 %v381, %v364
          %v383 = vmul.f32 %v382, %v381
          %v384 = vmul.f32 0.5, %v383
          %v385 = vsub.f32 1.5, %v384
          %v386 = vmul.f32 %v381, %v385
          %vm387 = vweird.f32 %v364
          %vm388 = vweird.f32 %v381
          %vm389 = vmor %vm387, %vm388
          %v390 = vsel %vm389, %v381, %v386
          %v391 = vrsqrt.pop %v365
          %v392 = vmul.f32 %v391, %v365
          %v393 = vmul.f32 %v392, %v391
          %v394 = vmul.f32 0.5, %v393
          %v395 = vsub.f32 1.5, %v394
          %v396 = vmul.f32 %v391, %v395
          %vm397 = vweird.f32 %v365
          %vm398 = vweird.f32 %v391
          %vm399 = vmor %vm397, %vm398
          %v400 = vsel %vm399, %v391, %v396
          %v401 = vrsqrt.pop %v366
          %v402 = vmul.f32 %v401, %v366
          %v403 = vmul.f32 %v402, %v401
          %v404 = vmul.f32 0.5, %v403
          %v405 = vsub.f32 1.5, %v404
          %v406 = vmul.f32 %v401, %v405
          %vm407 = vweird.f32 %v366
          %vm408 = vweird.f32 %v401
          %vm409 = vmor %vm407, %vm408
          %v410 = vsel %vm409, %v401, %v406
          %v411 = vrsqrt.pop %v367
          %v412 = vmul.f32 %v411, %v367
          %v413 = vmul.f32 %v412, %v411
          %v414 = vmul.f32 0.5, %v413
          %v415 = vsub.f32 1.5, %v414
          %v416 = vmul.f32 %v411, %v415
          %vm417 = vweird.f32 %v367
          %vm418 = vweird.f32 %v411
          %vm419 = vmor %vm417, %vm418
          %v420 = vsel %vm419, %v411, %v416
          %v421 = vrsqrt.pop %v368
          %v422 = vmul.f32 %v421, %v368
          %v423 = vmul.f32 %v422, %v421
          %v424 = vmul.f32 0.5, %v423
          %v425 = vsub.f32 1.5, %v424
          %v426 = vmul.f32 %v421, %v425
          %vm427 = vweird.f32 %v368
          %vm428 = vweird.f32 %v421
          %vm429 = vmor %vm427, %vm428
          %v430 = vsel %vm429, %v421, %v426
          %v431 = vrsqrt.pop %v369
          %v432 = vmul.f32 %v431, %v369
          %v433 = vmul.f32 %v432, %v431
          %v434 = vmul.f32 0.5, %v433
          %v435 = vsub.f32 1.5, %v434
          %v436 = vmul.f32 %v431, %v435
          %vm437 = vweird.f32 %v369
          %vm438 = vweird.f32 %v431
          %vm439 = vmor %vm437, %vm438
          %v440 = vsel %vm439, %v431, %v436
          %v441 = vrsqrt.pop %v370
          %v442 = vmul.f32 %v441, %v370
          %v443 = vmul.f32 %v442, %v441
          %v444 = vmul.f32 0.5, %v443
          %v445 = vsub.f32 1.5, %v444
          %v446 = vmul.f32 %v441, %v445
          %vm447 = vweird.f32 %v370
          %vm448 = vweird.f32 %v441
          %vm449 = vmor %vm447, %vm448
          %v450 = vsel %vm449, %v441, %v446
          %v451 = vmul.f32 %v323, %v380
          %v452 = vmul.f32 %v324, %v390
          %v453 = vmul.f32 %v325, %v400
          %v454 = vmul.f32 %v326, %v410
          %v455 = vmul.f32 %v327, %v420
          %v456 = vmul.f32 %v328, %v430
          %v457 = vmul.f32 %v329, %v440
          %v458 = vmul.f32 %v330, %v450
          %v459 = vld [vmem:[%s1] sm:$0x1]
          %v461 = vperm.slane %v459, 0
          %v463 = vmul.f32 %v451, %v461
          %v464 = vmul.f32 %v452, %v461
          %v465 = vmul.f32 %v453, %v461
          %v466 = vmul.f32 %v454, %v461
          %v467 = vmul.f32 %v455, %v461
          %v468 = vmul.f32 %v456, %v461
          %v469 = vmul.f32 %v457, %v461
          %v470 = vmul.f32 %v458, %v461
          %v471 = vld [vmem:[%s2] sm:$0x1]
          %v473 = vperm.slane %v471, 0
          %v475 = vadd.f32 %v463, %v473
          %v476 = vadd.f32 %v464, %v473
          %v477 = vadd.f32 %v465, %v473
          %v478 = vadd.f32 %v466, %v473
          %v479 = vadd.f32 %v467, %v473
          %v480 = vadd.f32 %v468, %v473
          %v481 = vadd.f32 %v469, %v473
          %v482 = vadd.f32 %v470, %v473
          %v483 = vpack.c.bf16 %v475, %v475
          %v484 = vpack.c.bf16 %v476, %v476
          %v485 = vpack.c.bf16 %v477, %v477
          %v486 = vpack.c.bf16 %v478, %v478
          %v487 = vpack.c.bf16 %v479, %v479
          %v488 = vpack.c.bf16 %v480, %v480
          %v489 = vpack.c.bf16 %v481, %v481
          %v490 = vpack.c.bf16 %v482, %v482
          %491 = vst [vmem:[#allocation2] sm:$0xf] %v483
          %492 = vst [vmem:[#allocation2 + $0x4] sm:$0xf] %v484
          %493 = vst [vmem:[#allocation2 + $0x8] sm:$0xf] %v485
          %494 = vst [vmem:[#allocation2 + $0xc] sm:$0xf] %v486
          %495 = vst [vmem:[#allocation2 + $0x10] sm:$0xf] %v487
          %496 = vst [vmem:[#allocation2 + $0x14] sm:$0xf] %v488
          %497 = vst [vmem:[#allocation2 + $0x18] sm:$0xf] %v489
          %498 = vst [vmem:[#allocation2 + $0x1c] sm:$0xf] %v490
        $region44: #{gpt_forward.9} parent=39 // pred_fallthru
          _
        %v499 = vld [vmem:[#allocation2] sm:$0xf]
        %v500 = vld [vmem:[#allocation2 + $0x4] sm:$0xf]
        %v501 = vld [vmem:[#allocation2 + $0x8] sm:$0xf]
        %v502 = vld [vmem:[#allocation2 + $0xc] sm:$0xf]
        %v503 = vld [vmem:[#allocation2 + $0x10] sm:$0xf]
        %v504 = vld [vmem:[#allocation2 + $0x14] sm:$0xf]
        %v505 = vld [vmem:[#allocation2 + $0x18] sm:$0xf]
        %v506 = vld [vmem:[#allocation2 + $0x1c] sm:$0xf]
        %v507 = vld [vmem:[%s266] sm:$0xf]
        %v508 = vld [vmem:[%s266 + $0x4] sm:$0xf]
        %v509 = vld [vmem:[%s266 + $0x8] sm:$0xf]
        %v510 = vld [vmem:[%s266 + $0xc] sm:$0xf]
        %v511 = vld [vmem:[%s266 + $0x10] sm:$0xf]
        %v512 = vld [vmem:[%s266 + $0x14] sm:$0xf]
        %v513 = vld [vmem:[%s266 + $0x18] sm:$0xf]
        %v514 = vld [vmem:[%s266 + $0x1c] sm:$0xf]
        %v515 = vld [vmem:[%s266 + $0x20] sm:$0xf]
        %v516 = vld [vmem:[%s266 + $0x24] sm:$0xf]
        %v517 = vld [vmem:[%s266 + $0x28] sm:$0xf]
        %v518 = vld [vmem:[%s266 + $0x2c] sm:$0xf]
        %v519 = vld [vmem:[%s266 + $0x30] sm:$0xf]
        %v520 = vld [vmem:[%s266 + $0x34] sm:$0xf]
        %v521 = vld [vmem:[%s266 + $0x38] sm:$0xf]
        %v522 = vld [vmem:[%s266 + $0x3c] sm:$0xf]
        %v523 = vld [vmem:[%s270] sm:$0x1]
        %v525 = vperm.slane %v523, 0
        %v535 = vunpack.c.l.b16 %v499
        %v536 = vunpack.c.l.b16 %v500
        %v537 = vunpack.c.l.b16 %v501
        %v538 = vunpack.c.l.b16 %v502
        %v539 = vunpack.c.l.b16 %v503
        %v540 = vunpack.c.l.b16 %v504
        %v541 = vunpack.c.l.b16 %v505
        %v542 = vunpack.c.l.b16 %v506
        %v543 = vpack.c.b16 %v536, %v535
        %v544 = vpack.c.b16 %v538, %v537
        %v545 = vpack.c.b16 %v540, %v539
        %v546 = vpack.c.b16 %v542, %v541
        %v567 = vunpack.c.l.b16 %v507
        %v568 = vunpack.c.l.b16 %v508
        %v569 = vunpack.c.l.b16 %v509
        %v570 = vunpack.c.l.b16 %v510
        %v571 = vunpack.c.l.b16 %v511
        %v572 = vunpack.c.l.b16 %v512
        %v573 = vunpack.c.l.b16 %v513
        %v574 = vunpack.c.l.b16 %v514
        %v575 = vunpack.c.l.b16 %v515
        %v576 = vunpack.c.l.b16 %v516
        %v577 = vunpack.c.l.b16 %v517
        %v578 = vunpack.c.l.b16 %v518
        %v579 = vunpack.c.l.b16 %v519
        %v580 = vunpack.c.l.b16 %v520
        %v581 = vunpack.c.l.b16 %v521
        %v582 = vunpack.c.l.b16 %v522
        %v583 = vpack.c.b16 %v568, %v567
        %v584 = vpack.c.b16 %v570, %v569
        %v585 = vpack.c.b16 %v572, %v571
        %v586 = vpack.c.b16 %v574, %v573
        %v587 = vpack.c.b16 %v576, %v575
        %v588 = vpack.c.b16 %v578, %v577
        %v589 = vpack.c.b16 %v580, %v579
        %v590 = vpack.c.b16 %v582, %v581
        %599 = vmatpush.bf16.xpose.msra.mxu0 %v590
        %600 = vmatpush.bf16.xpose.msra.mxu0 %v589
        %601 = vmatpush.bf16.xpose.msra.mxu0 %v588
        %602 = vmatpush.bf16.xpose.msra.mxu0 %v587
        %603 = vmatpush.bf16.xpose.msra.mxu0 %v586
        %604 = vmatpush.bf16.xpose.msra.mxu0 %v585
        %605 = vmatpush.bf16.xpose.msra.mxu0 %v584
        %606 = vmatpush.bf16.xpose.msra.mxu0 %v583
        %607 = vmatmul.bf16.gmra.mxu0 %v543
        %v608 = vpop.f32.mrf.mxu0
        %v609 = vadd.f32 %v525, %v608
        %v610 = vpop.f32.mrf.mxu0
        %v611 = vadd.f32 %v525, %v610
        %612 = vmatmul.bf16.gmra.mxu0 %v544
        %v613 = vpop.f32.mrf.mxu0
        %v614 = vadd.f32 %v525, %v613
        %v615 = vpop.f32.mrf.mxu0
        %v616 = vadd.f32 %v525, %v615
        %617 = vmatmul.bf16.gmra.mxu0 %v545
        %v618 = vpop.f32.mrf.mxu0
        %v619 = vadd.f32 %v525, %v618
        %v620 = vpop.f32.mrf.mxu0
        %v621 = vadd.f32 %v525, %v620
        %622 = vmatmul.bf16.gmra.mxu0 %v546
        %v623 = vpop.f32.mrf.mxu0
        %v624 = vadd.f32 %v525, %v623
        %v625 = vpop.f32.mrf.mxu0
        %v626 = vadd.f32 %v525, %v625
        %627 = vdwg.mxu0
        %v628 = vpack.c.bf16 %v609, %v609
        %v629 = vpack.c.bf16 %v611, %v611
        %v630 = vpack.c.bf16 %v614, %v614
        %v631 = vpack.c.bf16 %v616, %v616
        %v632 = vpack.c.bf16 %v619, %v619
        %v633 = vpack.c.bf16 %v621, %v621
        %v634 = vpack.c.bf16 %v624, %v624
        %v635 = vpack.c.bf16 %v626, %v626
        %636 = vst [vmem:[%s255] sm:$0xf] %v628
        %637 = vst [vmem:[%s255 + $0x4] sm:$0xf] %v629
        %638 = vst [vmem:[%s255 + $0x8] sm:$0xf] %v630
        %639 = vst [vmem:[%s255 + $0xc] sm:$0xf] %v631
        %640 = vst [vmem:[%s255 + $0x10] sm:$0xf] %v632
        %641 = vst [vmem:[%s255 + $0x14] sm:$0xf] %v633
        %642 = vst [vmem:[%s255 + $0x18] sm:$0xf] %v634
        %643 = vst [vmem:[%s255 + $0x1c] sm:$0xf] %v635
        %s644 = sand.u32 %s158, 1
        %s645 = sand.u32 %s158, 1
        %s646 = smul.addr %s645, 32
        %s647 = scalar_lea.vmem [#allocation3], %s646
        // Predicated region
        $region45: #{gpt_forward.9} parent=39 // pred_check
          %p648 = pneg %p168
        $region46: #{gpt_forward.9} parent=39 // pred_check_branch
          %650 = sbr.rel (%p648) target = $region48
        $region47: #{gpt_forward.9} parent=39 // pred_region
          %s651 = smul.u32 8, %s20
          %s652 = smul.addr %s651, 3
          %s653 = sadd.s32 %s21, %s652
          %s654 = smul.addr %s653, 4
          %s655 = scalar_lea.vmem %s5, %s654
          // Predicated region
          $region49: #{gpt_forward.9} parent=47 // pred_check
            _
          $region50: #{gpt_forward.9} parent=47 // pred_check_branch
            %657 = sbr.rel (0) target = $region52
          $region51: #{gpt_forward.9} parent=47 // pred_region
            // Predicated region
            $region53: #{gpt_forward.9} parent=51 // pred_check
              _
            $region54: #{gpt_forward.9} parent=51 // pred_check_branch
              %659 = sbr.rel target = $region56
            $region55: #{gpt_forward.9} parent=51 // pred_region
              // Predicated region
              $region68: #{gpt_forward.9} parent=55 // pred_check
                _
              $region69: #{gpt_forward.9} parent=55 // pred_check_branch
                %689 = sbr.rel (0) target = $region71
              $region70: #{gpt_forward.9} parent=55 // pred_region
                loop: start=0, step=1, limit=1
                $region72: #{gpt_forward.9} parent=70 // loop_pre_header
                  _
                $region73: #{gpt_forward.9} parent=70 // loop_header
                  %s691 = sphi 0, %s695
                  %p692 = scmp.ge.s32.totalorder %s691, 1
                  %s696 = sphi %s647, %s647
                  %s697 = sphi %s655, %s655
                $region74: #{gpt_forward.9} parent=70 // loop_header_branch
                  %694 = sbr.rel (%p692) target = $region78
                $region75: #{gpt_forward.9} parent=70 // loop_body
                  _
                $region76: #{gpt_forward.9} parent=70 // loop_footer
                  %s695 = sadd.s32 1, %s691
                $region77: #{gpt_forward.9} parent=70 // loop_footer_branch
                  %690 = sbr.rel target = $region73
                $region78: #{gpt_forward.9} parent=70 // loop_exit
                  _
                %s699 = ssub.s32 16, 1
                loop: start=0, step=1, limit=1
                $region79: #{gpt_forward.9} parent=70 // loop_pre_header
                  _
                $region80: #{gpt_forward.9} parent=70 // loop_header
                  %s701 = sphi 0, %s705
                  %p702 = scmp.ge.s32.totalorder %s701, 1
                  %s706 = sphi %s647, %s647
                  %s707 = sphi %s655, %s655
                $region81: #{gpt_forward.9} parent=70 // loop_header_branch
                  %704 = sbr.rel (%p702) target = $region85
                $region82: #{gpt_forward.9} parent=70 // loop_body
                  %v708 = vld [vmem:[%s706] sm:%s699]
                  %709 = vst [vmem:[%s707] sm:%s699] %v708
                  %v710 = vld [vmem:[%s706 + $0x4] sm:%s699]
                  %711 = vst [vmem:[%s707 + $0xc] sm:%s699] %v710
                  %v712 = vld [vmem:[%s706 + $0x8] sm:%s699]
                  %713 = vst [vmem:[%s707 + $0x18] sm:%s699] %v712
                  %v714 = vld [vmem:[%s706 + $0xc] sm:%s699]
                  %715 = vst [vmem:[%s707 + $0x24] sm:%s699] %v714
                  %v716 = vld [vmem:[%s706 + $0x10] sm:%s699]
                  %717 = vst [vmem:[%s707 + $0x30] sm:%s699] %v716
                  %v718 = vld [vmem:[%s706 + $0x14] sm:%s699]
                  %719 = vst [vmem:[%s707 + $0x3c] sm:%s699] %v718
                  %v720 = vld [vmem:[%s706 + $0x18] sm:%s699]
                  %721 = vst [vmem:[%s707 + $0x48] sm:%s699] %v720
                  %v722 = vld [vmem:[%s706 + $0x1c] sm:%s699]
                  %723 = vst [vmem:[%s707 + $0x54] sm:%s699] %v722
                $region83: #{gpt_forward.9} parent=70 // loop_footer
                  %s705 = sadd.s32 1, %s701
                $region84: #{gpt_forward.9} parent=70 // loop_footer_branch
                  %700 = sbr.rel target = $region80
                $region85: #{gpt_forward.9} parent=70 // loop_exit
                  _
              $region71: #{gpt_forward.9} parent=55 // pred_fallthru
                _
            $region56: #{gpt_forward.9} parent=51 // pred_fallthru
              _
            // Predicated region
            $region57: #{gpt_forward.9} parent=51 // pred_check
              _
            $region58: #{gpt_forward.9} parent=51 // pred_check_branch
              %661 = sbr.rel (0) target = $region60
            $region59: #{gpt_forward.9} parent=51 // pred_region
              %s663 = ssub.s32 16, 1
              loop: start=0, step=1, limit=1
              $region61: #{gpt_forward.9} parent=59 // loop_pre_header
                _
              $region62: #{gpt_forward.9} parent=59 // loop_header
                %s665 = sphi 0, %s669
                %p666 = scmp.ge.s32.totalorder %s665, 1
                %s670 = sphi %s647, %s647
                %s671 = sphi %s655, %s655
              $region63: #{gpt_forward.9} parent=59 // loop_header_branch
                %668 = sbr.rel (%p666) target = $region67
              $region64: #{gpt_forward.9} parent=59 // loop_body
                %v672 = vld [vmem:[%s670] sm:%s663]
                %673 = vst [vmem:[%s671] sm:%s663] %v672
                %v674 = vld [vmem:[%s670 + $0x4] sm:%s663]
                %675 = vst [vmem:[%s671 + $0xc] sm:%s663] %v674
                %v676 = vld [vmem:[%s670 + $0x8] sm:%s663]
                %677 = vst [vmem:[%s671 + $0x18] sm:%s663] %v676
                %v678 = vld [vmem:[%s670 + $0xc] sm:%s663]
                %679 = vst [vmem:[%s671 + $0x24] sm:%s663] %v678
                %v680 = vld [vmem:[%s670 + $0x10] sm:%s663]
                %681 = vst [vmem:[%s671 + $0x30] sm:%s663] %v680
                %v682 = vld [vmem:[%s670 + $0x14] sm:%s663]
                %683 = vst [vmem:[%s671 + $0x3c] sm:%s663] %v682
                %v684 = vld [vmem:[%s670 + $0x18] sm:%s663]
                %685 = vst [vmem:[%s671 + $0x48] sm:%s663] %v684
                %v686 = vld [vmem:[%s670 + $0x1c] sm:%s663]
                %687 = vst [vmem:[%s671 + $0x54] sm:%s663] %v686
              $region65: #{gpt_forward.9} parent=59 // loop_footer
                %s669 = sadd.s32 1, %s665
              $region66: #{gpt_forward.9} parent=59 // loop_footer_branch
                %664 = sbr.rel target = $region62
              $region67: #{gpt_forward.9} parent=59 // loop_exit
                _
            $region60: #{gpt_forward.9} parent=51 // pred_fallthru
              _
          $region52: #{gpt_forward.9} parent=47 // pred_fallthru
            _
          %724 = vnop
        $region48: #{gpt_forward.9} parent=39 // pred_fallthru
          _
      $region40: #{gpt_forward.9} parent=5 // pred_fallthru
        _
      %p725 = scmp.le.s32.totalorder 2, %s11
      // Predicated region
      $region86: #{gpt_forward.9} parent=5 // pred_check
        %p726 = pneg %p725
      $region87: #{gpt_forward.9} parent=5 // pred_check_branch
        %728 = sbr.rel (%p726) target = $region89
      $region88: #{gpt_forward.9} parent=5 // pred_region
        %s729 = ssub.s32 %s11, 2
        // Predicated region
        $region90: #{gpt_forward.9} parent=88 // pred_check
          %p730 = pneg %p174
        $region91: #{gpt_forward.9} parent=88 // pred_check_branch
          %732 = sbr.rel (%p730) target = $region93
        $region92: #{gpt_forward.9} parent=88 // pred_region
          %s733 = sand.u32 %s159, 1
          %s734 = sand.u32 %s159, 1
          %s735 = smul.addr %s734, 32
          %s736 = scalar_lea.vmem [#allocation3], %s735
        $region93: #{gpt_forward.9} parent=88 // pred_fallthru
          _
      $region89: #{gpt_forward.9} parent=5 // pred_fallthru
        _
    $region6: #{gpt_forward.9} parent=1 // loop_footer
      %s15 = sadd.s32 1, %s11
    $region7: #{gpt_forward.9} parent=1 // loop_footer_branch
      %10 = sbr.rel target = $region3
    $region8: #{gpt_forward.9} parent=1 // loop_exit
      _

// kernel: gpt_forward.11
$region0: #{gpt_forward.11}
  #allocation0 [shape = 'u32[]', space=smem, size = 0x4, offset = 0x4, fixed_abs, tag = 'smem constant byte address 0x4 - core index']
  #allocation1 [shape = 'u32[72,128]{1,0:T(1,128)}', space=vmem, size = 0x9000, scoped, tag = 'internal scratch']
  #allocation2 [shape = 'bf16[64,128]{1,0:T(8,128)(2,1)}', space=vmem, size = 0x4000, scoped, tag = 'scratch operand']
  %s0 = inlined_call_operand.vmem [shape: bf16[64,128], index: 0, kind: input, shape index: {}]
  %s1 = inlined_call_operand.vmem [shape: f32[1,128], index: 1, kind: input, shape index: {}]
  %s2 = inlined_call_operand.vmem [shape: f32[1,128], index: 2, kind: input, shape index: {}]
  %s3 = inlined_call_operand.vmem [shape: bf16[128,128], index: 3, kind: input, shape index: {}]
  %s4 = inlined_call_operand.vmem [shape: f32[1,128], index: 4, kind: input, shape index: {}]
  %s5 = inlined_call_operand.vmem [shape: bf16[64,128], index: 5, kind: input, shape index: {}]
  %s6 = inlined_call_operand.vmem [shape: bf16[64,128], index: 6, kind: output, shape index: {}]
  %s7 = sld [smem:[#allocation0]]
  $region38: #{gpt_forward.11} parent=0
    _
  %s9 = ssub.s32 1, %s7
  %s10 = scalar_select 0, %s9, %s7
  // Predicated region
  $region2: #{gpt_forward.11} parent=0 // pred_check
    _
  $region3: #{gpt_forward.11} parent=0 // pred_check_branch
    %12 = sbr.rel (0) target = $region5
  $region4: #{gpt_forward.11} parent=0 // pred_region
    _
  $region5: #{gpt_forward.11} parent=0 // pred_fallthru
    _
  // Predicated region
  $region6: #{gpt_forward.11} parent=0 // pred_check
    _
  $region7: #{gpt_forward.11} parent=0 // pred_check_branch
    %14 = sbr.rel (0) target = $region9
  $region8: #{gpt_forward.11} parent=0 // pred_region
    _
  $region9: #{gpt_forward.11} parent=0 // pred_fallthru
    _
  // Predicated region
  $region10: #{gpt_forward.11} parent=0 // pred_check
    _
  $region11: #{gpt_forward.11} parent=0 // pred_check_branch
    %16 = sbr.rel (0) target = $region13
  $region12: #{gpt_forward.11} parent=0 // pred_region
    _
  $region13: #{gpt_forward.11} parent=0 // pred_fallthru
    _
  // Predicated region
  $region14: #{gpt_forward.11} parent=0 // pred_check
    _
  $region15: #{gpt_forward.11} parent=0 // pred_check_branch
    %18 = sbr.rel (0) target = $region17
  $region16: #{gpt_forward.11} parent=0 // pred_region
    _
  $region17: #{gpt_forward.11} parent=0 // pred_fallthru
    _
  // Predicated region
  $region18: #{gpt_forward.11} parent=0 // pred_check
    _
  $region19: #{gpt_forward.11} parent=0 // pred_check_branch
    %20 = sbr.rel (0) target = $region21
  $region20: #{gpt_forward.11} parent=0 // pred_region
    _
  $region21: #{gpt_forward.11} parent=0 // pred_fallthru
    _
  // Predicated region
  $region22: #{gpt_forward.11} parent=0 // pred_check
    _
  $region23: #{gpt_forward.11} parent=0 // pred_check_branch
    %22 = sbr.rel (0) target = $region25
  $region24: #{gpt_forward.11} parent=0 // pred_region
    _
  $region25: #{gpt_forward.11} parent=0 // pred_fallthru
    _
  %p23 = scmp.eq.s32.totalorder 0, 0
  // Predicated region
  $region26: #{gpt_forward.11} parent=0 // pred_check
    %p24 = pneg %p23
  $region27: #{gpt_forward.11} parent=0 // pred_check_branch
    %26 = sbr.rel (%p24) target = $region29
  $region28: #{gpt_forward.11} parent=0 // pred_region
    %v27 = vld [vmem:[%s0] sm:$0xf]
    %v28 = vld [vmem:[%s0 + $0x4] sm:$0xf]
    %v29 = vld [vmem:[%s0 + $0x8] sm:$0xf]
    %v30 = vld [vmem:[%s0 + $0xc] sm:$0xf]
    %v31 = vld [vmem:[%s0 + $0x10] sm:$0xf]
    %v32 = vld [vmem:[%s0 + $0x14] sm:$0xf]
    %v33 = vld [vmem:[%s0 + $0x18] sm:$0xf]
    %v34 = vld [vmem:[%s0 + $0x1c] sm:$0xf]
    %35 = vst [vmem:[#allocation2] sm:$0xf] %v27
    %36 = vst [vmem:[#allocation2 + $0x4] sm:$0xf] %v28
    %37 = vst [vmem:[#allocation2 + $0x8] sm:$0xf] %v29
    %38 = vst [vmem:[#allocation2 + $0xc] sm:$0xf] %v30
    %39 = vst [vmem:[#allocation2 + $0x10] sm:$0xf] %v31
    %40 = vst [vmem:[#allocation2 + $0x14] sm:$0xf] %v32
    %41 = vst [vmem:[#allocation2 + $0x18] sm:$0xf] %v33
    %42 = vst [vmem:[#allocation2 + $0x1c] sm:$0xf] %v34
  $region29: #{gpt_forward.11} parent=0 // pred_fallthru
    _
  %v43 = vld [vmem:[#allocation2] sm:$0xf]
  %v44 = vld [vmem:[#allocation2 + $0x4] sm:$0xf]
  %v45 = vld [vmem:[#allocation2 + $0x8] sm:$0xf]
  %v46 = vld [vmem:[#allocation2 + $0xc] sm:$0xf]
  %v47 = vld [vmem:[#allocation2 + $0x10] sm:$0xf]
  %v48 = vld [vmem:[#allocation2 + $0x14] sm:$0xf]
  %v49 = vld [vmem:[#allocation2 + $0x18] sm:$0xf]
  %v50 = vld [vmem:[#allocation2 + $0x1c] sm:$0xf]
  %v51 = vld [vmem:[%s3] sm:$0xf]
  %v52 = vld [vmem:[%s3 + $0x4] sm:$0xf]
  %v53 = vld [vmem:[%s3 + $0x8] sm:$0xf]
  %v54 = vld [vmem:[%s3 + $0xc] sm:$0xf]
  %v55 = vld [vmem:[%s3 + $0x10] sm:$0xf]
  %v56 = vld [vmem:[%s3 + $0x14] sm:$0xf]
  %v57 = vld [vmem:[%s3 + $0x18] sm:$0xf]
  %v58 = vld [vmem:[%s3 + $0x1c] sm:$0xf]
  %v59 = vld [vmem:[%s3 + $0x20] sm:$0xf]
  %v60 = vld [vmem:[%s3 + $0x24] sm:$0xf]
  %v61 = vld [vmem:[%s3 + $0x28] sm:$0xf]
  %v62 = vld [vmem:[%s3 + $0x2c] sm:$0xf]
  %v63 = vld [vmem:[%s3 + $0x30] sm:$0xf]
  %v64 = vld [vmem:[%s3 + $0x34] sm:$0xf]
  %v65 = vld [vmem:[%s3 + $0x38] sm:$0xf]
  %v66 = vld [vmem:[%s3 + $0x3c] sm:$0xf]
  %v67 = vld [vmem:[%s4] sm:$0x1]
  %v69 = vperm.slane %v67, 0
  %v79 = vunpack.c.l.b16 %v43
  %v80 = vunpack.c.l.b16 %v44
  %v81 = vunpack.c.l.b16 %v45
  %v82 = vunpack.c.l.b16 %v46
  %v83 = vunpack.c.l.b16 %v47
  %v84 = vunpack.c.l.b16 %v48
  %v85 = vunpack.c.l.b16 %v49
  %v86 = vunpack.c.l.b16 %v50
  %v87 = vpack.c.b16 %v80, %v79
  %v88 = vpack.c.b16 %v82, %v81
  %v89 = vpack.c.b16 %v84, %v83
  %v90 = vpack.c.b16 %v86, %v85
  %v111 = vunpack.c.l.b16 %v51
  %v112 = vunpack.c.l.b16 %v52
  %v113 = vunpack.c.l.b16 %v53
  %v114 = vunpack.c.l.b16 %v54
  %v115 = vunpack.c.l.b16 %v55
  %v116 = vunpack.c.l.b16 %v56
  %v117 = vunpack.c.l.b16 %v57
  %v118 = vunpack.c.l.b16 %v58
  %v119 = vunpack.c.l.b16 %v59
  %v120 = vunpack.c.l.b16 %v60
  %v121 = vunpack.c.l.b16 %v61
  %v122 = vunpack.c.l.b16 %v62
  %v123 = vunpack.c.l.b16 %v63
  %v124 = vunpack.c.l.b16 %v64
  %v125 = vunpack.c.l.b16 %v65
  %v126 = vunpack.c.l.b16 %v66
  %v127 = vpack.c.b16 %v112, %v111
  %v128 = vpack.c.b16 %v114, %v113
  %v129 = vpack.c.b16 %v116, %v115
  %v130 = vpack.c.b16 %v118, %v117
  %v131 = vpack.c.b16 %v120, %v119
  %v132 = vpack.c.b16 %v122, %v121
  %v133 = vpack.c.b16 %v124, %v123
  %v134 = vpack.c.b16 %v126, %v125
  %143 = vmatpush.bf16.xpose.msra.mxu0 %v134
  %144 = vmatpush.bf16.xpose.msra.mxu0 %v133
  %145 = vmatpush.bf16.xpose.msra.mxu0 %v132
  %146 = vmatpush.bf16.xpose.msra.mxu0 %v131
  %147 = vmatpush.bf16.xpose.msra.mxu0 %v130
  %148 = vmatpush.bf16.xpose.msra.mxu0 %v129
  %149 = vmatpush.bf16.xpose.msra.mxu0 %v128
  %150 = vmatpush.bf16.xpose.msra.mxu0 %v127
  %151 = vmatmul.bf16.gmra.mxu0 %v87
  %v152 = vpop.f32.mrf.mxu0
  %v153 = vadd.f32 %v69, %v152
  %v154 = vpop.f32.mrf.mxu0
  %v155 = vadd.f32 %v69, %v154
  %156 = vmatmul.bf16.gmra.mxu0 %v88
  %v157 = vpop.f32.mrf.mxu0
  %v158 = vadd.f32 %v69, %v157
  %v159 = vpop.f32.mrf.mxu0
  %v160 = vadd.f32 %v69, %v159
  %161 = vmatmul.bf16.gmra.mxu0 %v89
  %v162 = vpop.f32.mrf.mxu0
  %v163 = vadd.f32 %v69, %v162
  %v164 = vpop.f32.mrf.mxu0
  %v165 = vadd.f32 %v69, %v164
  %166 = vmatmul.bf16.gmra.mxu0 %v90
  %v167 = vpop.f32.mrf.mxu0
  %v168 = vadd.f32 %v69, %v167
  %v169 = vpop.f32.mrf.mxu0
  %v170 = vadd.f32 %v69, %v169
  %171 = vdwg.mxu0
  %v172 = vld [vmem:[%s5] sm:$0xf]
  %v173 = vld [vmem:[%s5 + $0x4] sm:$0xf]
  %v174 = vld [vmem:[%s5 + $0x8] sm:$0xf]
  %v175 = vld [vmem:[%s5 + $0xc] sm:$0xf]
  %v176 = vld [vmem:[%s5 + $0x10] sm:$0xf]
  %v177 = vld [vmem:[%s5 + $0x14] sm:$0xf]
  %v178 = vld [vmem:[%s5 + $0x18] sm:$0xf]
  %v179 = vld [vmem:[%s5 + $0x1c] sm:$0xf]
  %v180 = vunpack.c.l.bf16 %v172
  %v181 = vunpack.c.l.bf16 %v173
  %v182 = vunpack.c.l.bf16 %v174
  %v183 = vunpack.c.l.bf16 %v175
  %v184 = vunpack.c.l.bf16 %v176
  %v185 = vunpack.c.l.bf16 %v177
  %v186 = vunpack.c.l.bf16 %v178
  %v187 = vunpack.c.l.bf16 %v179
  %v188 = vadd.f32 %v153, %v180
  %v189 = vadd.f32 %v155, %v181
  %v190 = vadd.f32 %v158, %v182
  %v191 = vadd.f32 %v160, %v183
  %v192 = vadd.f32 %v163, %v184
  %v193 = vadd.f32 %v165, %v185
  %v194 = vadd.f32 %v168, %v186
  %v195 = vadd.f32 %v170, %v187
  %v196 = vpack.c.bf16 %v188, %v188
  %v197 = vpack.c.bf16 %v189, %v189
  %v198 = vpack.c.bf16 %v190, %v190
  %v199 = vpack.c.bf16 %v191, %v191
  %v200 = vpack.c.bf16 %v192, %v192
  %v201 = vpack.c.bf16 %v193, %v193
  %v202 = vpack.c.bf16 %v194, %v194
  %v203 = vpack.c.bf16 %v195, %v195
  %204 = vst [vmem:[%s6] sm:$0xf] %v196
  %205 = vst [vmem:[%s6 + $0x4] sm:$0xf] %v197
  %206 = vst [vmem:[%s6 + $0x8] sm:$0xf] %v198
  %207 = vst [vmem:[%s6 + $0xc] sm:$0xf] %v199
  %208 = vst [vmem:[%s6 + $0x10] sm:$0xf] %v200
  %209 = vst [vmem:[%s6 + $0x14] sm:$0xf] %v201
  %210 = vst [vmem:[%s6 + $0x18] sm:$0xf] %v202
  %211 = vst [vmem:[%s6 + $0x1c] sm:$0xf] %v203
  // Predicated region
  $region30: #{gpt_forward.11} parent=0 // pred_check
    _
  $region31: #{gpt_forward.11} parent=0 // pred_check_branch
    %213 = sbr.rel (0) target = $region33
  $region32: #{gpt_forward.11} parent=0 // pred_region
    _
  $region33: #{gpt_forward.11} parent=0 // pred_fallthru
    _
  // Predicated region
  $region34: #{gpt_forward.11} parent=0 // pred_check
    _
  $region35: #{gpt_forward.11} parent=0 // pred_check_branch
    %215 = sbr.rel (0) target = $region37
  $region36: #{gpt_forward.11} parent=0 // pred_region
    _
  $region37: #{gpt_forward.11} parent=0 // pred_fallthru
    _

// kernel: gpt_forward.17
$region0: #{gpt_forward.17}
  #allocation0 [shape = 'u32[]', space=smem, size = 0x4, offset = 0x4, fixed_abs, tag = 'smem constant byte address 0x4 - core index']
  #allocation1 [shape = 'u32[72,128]{1,0:T(1,128)}', space=vmem, size = 0x9000, scoped, tag = 'internal scratch']
  #allocation2 [shape = 'bf16[64,128]{1,0:T(8,128)(2,1)}', space=vmem, size = 0x4000, scoped, tag = 'scratch operand']
  %s0 = inlined_call_operand.vmem [shape: bf16[64,128], index: 0, kind: input, shape index: {}]
  %s1 = inlined_call_operand.vmem [shape: f32[1,128], index: 1, kind: input, shape index: {}]
  %s2 = inlined_call_operand.vmem [shape: f32[1,128], index: 2, kind: input, shape index: {}]
  %s3 = inlined_call_operand.vmem [shape: bf16[512,128], index: 3, kind: input, shape index: {}]
  %s4 = inlined_call_operand.vmem [shape: f32[1,512], index: 4, kind: input, shape index: {}]
  %s5 = inlined_call_operand.hbm [shape: f32[64,512], index: 5, kind: output, shape index: {}]
  %s6 = sld [smem:[#allocation0]]
  $region57: #{gpt_forward.17} parent=0
    _
  %s8 = ssub.s32 1, %s6
  %s9 = scalar_select 0, %s8, %s6
  $region1: #{gpt_forward.17} parent=0
    #allocation3 [shape = 'u8[131072]{0}', space=vmem, size = 0x20000, scoped, tag = 'output window, operand 0']
    #allocation4 [shape = 's32[2]{0}', space=sflag, size = 0x8, scoped, tag = 'scoped memory for gpt_forward.17']
    %10 = vsyncpa [#allocation4], 0
    %s11 = scalar_lea.sflag [#allocation4], 1
    %12 = vsyncpa %s11, 0
    loop: start=0, step=1, limit=4
    $region2: #{gpt_forward.17} parent=1 // loop_pre_header
      _
    $region3: #{gpt_forward.17} parent=1 // loop_header
      %s14 = sphi 0, %s18
      %p15 = scmp.ge.s32.totalorder %s14, 4
      %s21 = sphi 0, %s33
      %s22 = sphi 0, %s29
      %s23 = sphi 0, %s21
      %s24 = sphi 0, %s22
      %s25 = sphi 0, %s23
      %s26 = sphi 0, %s24
      %s36 = sphi 0, %s38
      %s39 = sphi 0, %s36
      %s40 = sphi 0, %s39
      %s56 = sphi 0, %s40
      %s60 = sphi 0, %s60
      %s62 = sphi 0, %s60
      %s63 = sphi 0, %s62
      %s77 = sphi 0, %s63
      %s81 = sphi 0, %s81
      %s83 = sphi 0, %s81
      %s84 = sphi 0, %s83
      %s98 = sphi 0, %s84
      %s104 = sphi 0, %s106
      %s107 = sphi 0, %s104
      %s108 = sphi 0, %s107
      %s124 = sphi 0, %s108
      %s130 = sphi 0, %s132
      %s133 = sphi 0, %s130
      %s134 = sphi 0, %s133
      %s150 = sphi 0, %s134
      %s158 = sphi 0, %s160
      %s161 = sphi 0, %s158
      %s162 = sphi 0, %s161
      %s178 = sphi 0, %s162
    $region4: #{gpt_forward.17} parent=1 // loop_header_branch
      %17 = sbr.rel (%p15) target = $region8
    $region5: #{gpt_forward.17} parent=1 // loop_body
      %s19 = ssub.s32 %s14, 1
      %s20 = ssub.s32 %s14, 2
      %s27 = sadd.s32 1, %s22
      %p28 = scmp.ge.s32.totalorder %s27, 2
      %s29 = scalar_select %p28, 0, %s27
      %s30 = sadd.s32 1, %s21
      %s31 = scalar_select %p28, %s30, %s21
      %p32 = scmp.ge.s32.totalorder %s31, 1
      %s33 = scalar_select %p32, 0, %s31
      %s34 = ssub.s32 %s21, %s33
      %p35 = scmp.eq.s32.totalorder %s34, 0
      %s37 = sadd.s32 %s36, 1
      %s38 = scalar_select %p35, %s36, %s37
      %p41 = pneg %p35
      %p42 = scmp.eq.s32.totalorder %s14, 1
      %p43 = por %p41, %p42
      %p44 = scmp.ne.s32.totalorder %s36, %s39
      %p45 = scmp.eq.s32.totalorder %s14, 0
      %p46 = por %p44, %p45
      %p47 = scmp.ne.s32.totalorder %s36, %s39
      %p48 = scmp.eq.s32.totalorder %s19, 1
      %p49 = por %p47, %p48
      %p50 = scmp.ne.s32.totalorder %s39, %s40
      %p51 = scmp.eq.s32.totalorder %s19, 0
      %p52 = por %p50, %p51
      %p53 = scmp.ne.s32.totalorder %s39, %s40
      %p54 = scmp.eq.s32.totalorder %s20, 1
      %p55 = por %p53, %p54
      %p57 = scmp.ne.s32.totalorder %s40, %s56
      %p58 = scmp.eq.s32.totalorder %s20, 0
      %p59 = por %p57, %p58
      %s61 = sadd.s32 %s60, 1
      %p64 = scmp.eq.s32.totalorder %s14, 1
      %p65 = scmp.ne.s32.totalorder %s60, %s62
      %p66 = scmp.eq.s32.totalorder %s14, 0
      %p67 = por %p65, %p66
      %p68 = scmp.ne.s32.totalorder %s60, %s62
      %p69 = scmp.eq.s32.totalorder %s19, 1
      %p70 = por %p68, %p69
      %p71 = scmp.ne.s32.totalorder %s62, %s63
      %p72 = scmp.eq.s32.totalorder %s19, 0
      %p73 = por %p71, %p72
      %p74 = scmp.ne.s32.totalorder %s62, %s63
      %p75 = scmp.eq.s32.totalorder %s20, 1
      %p76 = por %p74, %p75
      %p78 = scmp.ne.s32.totalorder %s63, %s77
      %p79 = scmp.eq.s32.totalorder %s20, 0
      %p80 = por %p78, %p79
      %s82 = sadd.s32 %s81, 1
      %p85 = scmp.eq.s32.totalorder %s14, 1
      %p86 = scmp.ne.s32.totalorder %s81, %s83
      %p87 = scmp.eq.s32.totalorder %s14, 0
      %p88 = por %p86, %p87
      %p89 = scmp.ne.s32.totalorder %s81, %s83
      %p90 = scmp.eq.s32.totalorder %s19, 1
      %p91 = por %p89, %p90
      %p92 = scmp.ne.s32.totalorder %s83, %s84
      %p93 = scmp.eq.s32.totalorder %s19, 0
      %p94 = por %p92, %p93
      %p95 = scmp.ne.s32.totalorder %s83, %s84
      %p96 = scmp.eq.s32.totalorder %s20, 1
      %p97 = por %p95, %p96
      %p99 = scmp.ne.s32.totalorder %s84, %s98
      %p100 = scmp.eq.s32.totalorder %s20, 0
      %p101 = por %p99, %p100
      %s102 = ssub.s32 %s22, %s29
      %p103 = scmp.eq.s32.totalorder %s102, 0
      %s105 = sadd.s32 %s104, 1
      %s106 = scalar_select %p103, %s104, %s105
      %p109 = pneg %p103
      %p110 = scmp.eq.s32.totalorder %s14, 1
      %p111 = por %p109, %p110
      %p112 = scmp.ne.s32.totalorder %s104, %s107
      %p113 = scmp.eq.s32.totalorder %s14, 0
      %p114 = por %p112, %p113
      %p115 = scmp.ne.s32.totalorder %s104, %s107
      %p116 = scmp.eq.s32.totalorder %s19, 1
      %p117 = por %p115, %p116
      %p118 = scmp.ne.s32.totalorder %s107, %s108
      %p119 = scmp.eq.s32.totalorder %s19, 0
      %p120 = por %p118, %p119
      %p121 = scmp.ne.s32.totalorder %s107, %s108
      %p122 = scmp.eq.s32.totalorder %s20, 1
      %p123 = por %p121, %p122
      %p125 = scmp.ne.s32.totalorder %s108, %s124
      %p126 = scmp.eq.s32.totalorder %s20, 0
      %p127 = por %p125, %p126
      %s128 = ssub.s32 %s22, %s29
      %p129 = scmp.eq.s32.totalorder %s128, 0
      %s131 = sadd.s32 %s130, 1
      %s132 = scalar_select %p129, %s130, %s131
      %p135 = pneg %p129
      %p136 = scmp.eq.s32.totalorder %s14, 1
      %p137 = por %p135, %p136
      %p138 = scmp.ne.s32.totalorder %s130, %s133
      %p139 = scmp.eq.s32.totalorder %s14, 0
      %p140 = por %p138, %p139
      %p141 = scmp.ne.s32.totalorder %s130, %s133
      %p142 = scmp.eq.s32.totalorder %s19, 1
      %p143 = por %p141, %p142
      %p144 = scmp.ne.s32.totalorder %s133, %s134
      %p145 = scmp.eq.s32.totalorder %s19, 0
      %p146 = por %p144, %p145
      %p147 = scmp.ne.s32.totalorder %s133, %s134
      %p148 = scmp.eq.s32.totalorder %s20, 1
      %p149 = por %p147, %p148
      %p151 = scmp.ne.s32.totalorder %s134, %s150
      %p152 = scmp.eq.s32.totalorder %s20, 0
      %p153 = por %p151, %p152
      %s154 = ssub.s32 %s21, %s33
      %s155 = ssub.s32 %s22, %s29
      %s156 = sor.u32 %s154, %s155
      %p157 = scmp.eq.s32.totalorder %s156, 0
      %s159 = sadd.s32 %s158, 1
      %s160 = scalar_select %p157, %s158, %s159
      %p163 = pneg %p157
      %p164 = scmp.eq.s32.totalorder %s14, 1
      %p165 = por %p163, %p164
      %p166 = scmp.ne.s32.totalorder %s158, %s161
      %p167 = scmp.eq.s32.totalorder %s14, 0
      %p168 = por %p166, %p167
      %p169 = scmp.ne.s32.totalorder %s158, %s161
      %p170 = scmp.eq.s32.totalorder %s19, 1
      %p171 = por %p169, %p170
      %p172 = scmp.ne.s32.totalorder %s161, %s162
      %p173 = scmp.eq.s32.totalorder %s19, 0
      %p174 = por %p172, %p173
      %p175 = scmp.ne.s32.totalorder %s161, %s162
      %p176 = scmp.eq.s32.totalorder %s20, 1
      %p177 = por %p175, %p176
      %p179 = scmp.ne.s32.totalorder %s162, %s178
      %p180 = scmp.eq.s32.totalorder %s20, 0
      %p181 = por %p179, %p180
      %p182 = scmp.le.s32.totalorder 1, %s14
      %p183 = scmp.lt.s32.totalorder %s14, 3
      %p184 = pnand %p182, %p183
      %p185 = pneg %p184
      // Predicated region
      $region9: #{gpt_forward.17} parent=5 // pred_check
        _
      $region10: #{gpt_forward.17} parent=5 // pred_check_branch
        %187 = sbr.rel (%p184) target = $region12
      $region11: #{gpt_forward.17} parent=5 // pred_region
        %s188 = ssub.s32 %s14, 1
        // Predicated region
        $region13: #{gpt_forward.17} parent=11 // pred_check
          %p189 = pneg %p52
        $region14: #{gpt_forward.17} parent=11 // pred_check_branch
          %191 = sbr.rel (%p189) target = $region16
        $region15: #{gpt_forward.17} parent=11 // pred_region
          %s192 = smul.u32 8, %s23
          %p193 = scmp.lt.s32.totalorder %s192, 7
          %s194 = scalar_select %p193, %s192, 7
          %s195 = smul.addr %s194, 4
          %s196 = scalar_lea.vmem %s0, %s195
          %s197 = smul.u32 8, %s23
        $region16: #{gpt_forward.17} parent=11 // pred_fallthru
          _
        // Predicated region
        $region17: #{gpt_forward.17} parent=11 // pred_check
          %p198 = pneg %p73
        $region18: #{gpt_forward.17} parent=11 // pred_check_branch
          %200 = sbr.rel (%p198) target = $region20
        $region19: #{gpt_forward.17} parent=11 // pred_region
          _
        $region20: #{gpt_forward.17} parent=11 // pred_fallthru
          _
        // Predicated region
        $region21: #{gpt_forward.17} parent=11 // pred_check
          %p201 = pneg %p94
        $region22: #{gpt_forward.17} parent=11 // pred_check_branch
          %203 = sbr.rel (%p201) target = $region24
        $region23: #{gpt_forward.17} parent=11 // pred_region
          _
        $region24: #{gpt_forward.17} parent=11 // pred_fallthru
          _
      $region12: #{gpt_forward.17} parent=5 // pred_fallthru
        _
      %p204 = scmp.lt.s32.totalorder %s14, 2
      // Predicated region
      $region25: #{gpt_forward.17} parent=5 // pred_check
        %p205 = pneg %p204
      $region26: #{gpt_forward.17} parent=5 // pred_check_branch
        %207 = sbr.rel (%p205) target = $region28
      $region27: #{gpt_forward.17} parent=5 // pred_region
        // Predicated region
        $region29: #{gpt_forward.17} parent=27 // pred_check
          %p208 = pneg %p114
        $region30: #{gpt_forward.17} parent=27 // pred_check_branch
          %210 = sbr.rel (%p208) target = $region32
        $region31: #{gpt_forward.17} parent=27 // pred_region
          %s211 = smul.u32 32, %s22
          %p212 = scmp.lt.s32.totalorder %s211, 63
          %s213 = scalar_select %p212, %s211, 63
          %s214 = smul.addr %s213, 4
          %s215 = scalar_lea.vmem %s3, %s214
          %s216 = smul.u32 32, %s22
        $region32: #{gpt_forward.17} parent=27 // pred_fallthru
          _
        // Predicated region
        $region33: #{gpt_forward.17} parent=27 // pred_check
          %p217 = pneg %p140
        $region34: #{gpt_forward.17} parent=27 // pred_check_branch
          %219 = sbr.rel (%p217) target = $region36
        $region35: #{gpt_forward.17} parent=27 // pred_region
          %s220 = smul.u32 2, %s22
          %p221 = scmp.lt.s32.totalorder %s220, 3
          %s222 = scalar_select %p221, %s220, 3
          %s223 = scalar_lea.vmem %s4, %s222
          %s224 = smul.u32 2, %s22
        $region36: #{gpt_forward.17} parent=27 // pred_fallthru
          _
      $region28: #{gpt_forward.17} parent=5 // pred_fallthru
        _
      %p225 = scmp.le.s32.totalorder 1, %s14
      %p226 = scmp.lt.s32.totalorder %s14, 3
      %p227 = pnand %p225, %p226
      %p228 = pneg %p227
      // Predicated region
      $region37: #{gpt_forward.17} parent=5 // pred_check
        _
      $region38: #{gpt_forward.17} parent=5 // pred_check_branch
        %230 = sbr.rel (%p227) target = $region40
      $region39: #{gpt_forward.17} parent=5 // pred_region
        %s231 = ssub.s32 %s14, 1
        %s232 = smul.u32 8, %s23
        %p233 = scmp.lt.s32.totalorder %s232, 7
        %s234 = scalar_select %p233, %s232, 7
        %s235 = smul.addr %s234, 4
        %s236 = scalar_lea.vmem %s0, %s235
        %p237 = pneg %p52
        %p238 = pneg %p49
        %p239 = pneg %p73
        %p240 = pneg %p70
        %p241 = pneg %p94
        %p242 = pneg %p91
        %s243 = smul.u32 32, %s24
        %p244 = scmp.lt.s32.totalorder %s243, 63
        %s245 = scalar_select %p244, %s243, 63
        %s246 = smul.addr %s245, 4
        %s247 = scalar_lea.vmem %s3, %s246
        %p248 = pneg %p120
        %p249 = pneg %p117
        %s250 = smul.u32 2, %s24
        %p251 = scmp.lt.s32.totalorder %s250, 3
        %s252 = scalar_select %p251, %s250, 3
        %s253 = scalar_lea.vmem %s4, %s252
        %p254 = pneg %p146
        %p255 = pneg %p143
        %p256 = pneg %p174
        %p257 = pneg %p171
        %s258 = sand.u32 %s161, 1
        %s259 = scalar_lea.sflag [#allocation4], %s258
        %s260 = sand.u32 %s161, 1
        %s261 = smul.addr %s260, 128
        %s262 = scalar_lea.vmem [#allocation3], %s261
        %s263 = smul.u32 8, %s23
        %p264 = scmp.lt.s32.totalorder %s263, 7
        %s265 = scalar_select %p264, %s263, 7
        %s266 = smul.addr %s265, 4
        %s267 = scalar_lea.vmem %s0, %s266
        %s268 = smul.u32 8, %s23
        %s269 = smul.u32 32, %s24
        %p270 = scmp.lt.s32.totalorder %s269, 63
        %s271 = scalar_select %p270, %s269, 63
        %s272 = smul.addr %s271, 4
        %s273 = scalar_lea.vmem %s3, %s272
        %s274 = smul.u32 32, %s24
        %s275 = smul.u32 2, %s24
        %p276 = scmp.lt.s32.totalorder %s275, 3
        %s277 = scalar_select %p276, %s275, 3
        %s278 = scalar_lea.vmem %s4, %s277
        %s279 = smul.u32 2, %s24
        %s280 = smul.u32 8, %s23
        %s281 = smul.u32 2, %s24
        %p282 = scmp.eq.s32.totalorder %s24, 0
        // Predicated region
        $region41: #{gpt_forward.17} parent=39 // pred_check
          %p283 = pneg %p282
        $region42: #{gpt_forward.17} parent=39 // pred_check_branch
          %285 = sbr.rel (%p283) target = $region44
        $region43: #{gpt_forward.17} parent=39 // pred_region
          %v286 = vld [vmem:[%s267] sm:$0xf]
          %v287 = vld [vmem:[%s267 + $0x4] sm:$0xf]
          %v288 = vld [vmem:[%s267 + $0x8] sm:$0xf]
          %v289 = vld [vmem:[%s267 + $0xc] sm:$0xf]
          %v290 = vld [vmem:[%s267 + $0x10] sm:$0xf]
          %v291 = vld [vmem:[%s267 + $0x14] sm:$0xf]
          %v292 = vld [vmem:[%s267 + $0x18] sm:$0xf]
          %v293 = vld [vmem:[%s267 + $0x1c] sm:$0xf]
          %v294 = vunpack.c.l.bf16 %v286
          %v295 = vunpack.c.l.bf16 %v287
          %v296 = vunpack.c.l.bf16 %v288
          %v297 = vunpack.c.l.bf16 %v289
          %v298 = vunpack.c.l.bf16 %v290
          %v299 = vunpack.c.l.bf16 %v291
          %v300 = vunpack.c.l.bf16 %v292
          %v301 = vunpack.c.l.bf16 %v293
          %302 = vadd.xlane.f32.xlu0 %v294
          %v303 = vpop.xlane.xlu0 %302
          %304 = vadd.xlane.f32.xlu0 %v295
          %v305 = vpop.xlane.xlu0 %304
          %306 = vadd.xlane.f32.xlu0 %v296
          %v307 = vpop.xlane.xlu0 %306
          %308 = vadd.xlane.f32.xlu0 %v297
          %v309 = vpop.xlane.xlu0 %308
          %310 = vadd.xlane.f32.xlu0 %v298
          %v311 = vpop.xlane.xlu0 %310
          %312 = vadd.xlane.f32.xlu0 %v299
          %v313 = vpop.xlane.xlu0 %312
          %314 = vadd.xlane.f32.xlu0 %v300
          %v315 = vpop.xlane.xlu0 %314
          %316 = vadd.xlane.f32.xlu0 %v301
          %v317 = vpop.xlane.xlu0 %316
          %v318 = vrcp.pop 128.0
          %v319 = vmul.f32 128.0, %v318
          %v320 = vsub.f32 1.0, %v319
          %v321 = vmul.f32 %v318, %v320
          %v322 = vadd.f32 %v318, %v321
          %vm323 = vweird.f32 %v318
          %v324 = vsel %vm323, %v318, %v322
          %v325 = vmul.f32 %v303, %v324
          %v326 = vmul.f32 %v305, %v324
          %v327 = vmul.f32 %v307, %v324
          %v328 = vmul.f32 %v309, %v324
          %v329 = vmul.f32 %v311, %v324
          %v330 = vmul.f32 %v313, %v324
          %v331 = vmul.f32 %v315, %v324
          %v332 = vmul.f32 %v317, %v324
          %v333 = vsub.f32 %v294, %v325
          %v334 = vsub.f32 %v295, %v326
          %v335 = vsub.f32 %v296, %v327
          %v336 = vsub.f32 %v297, %v328
          %v337 = vsub.f32 %v298, %v329
          %v338 = vsub.f32 %v299, %v330
          %v339 = vsub.f32 %v300, %v331
          %v340 = vsub.f32 %v301, %v332
          %v341 = vmul.f32 %v333, %v333
          %v342 = vmul.f32 %v334, %v334
          %v343 = vmul.f32 %v335, %v335
          %v344 = vmul.f32 %v336, %v336
          %v345 = vmul.f32 %v337, %v337
          %v346 = vmul.f32 %v338, %v338
          %v347 = vmul.f32 %v339, %v339
          %v348 = vmul.f32 %v340, %v340
          %349 = vadd.xlane.f32.xlu0 %v341
          %v350 = vpop.xlane.xlu0 %349
          %351 = vadd.xlane.f32.xlu0 %v342
          %v352 = vpop.xlane.xlu0 %351
          %353 = vadd.xlane.f32.xlu0 %v343
          %v354 = vpop.xlane.xlu0 %353
          %355 = vadd.xlane.f32.xlu0 %v344
          %v356 = vpop.xlane.xlu0 %355
          %357 = vadd.xlane.f32.xlu0 %v345
          %v358 = vpop.xlane.xlu0 %357
          %359 = vadd.xlane.f32.xlu0 %v346
          %v360 = vpop.xlane.xlu0 %359
          %361 = vadd.xlane.f32.xlu0 %v347
          %v362 = vpop.xlane.xlu0 %361
          %363 = vadd.xlane.f32.xlu0 %v348
          %v364 = vpop.xlane.xlu0 %363
          %v365 = vmul.f32 %v350, %v324
          %v366 = vmul.f32 %v352, %v324
          %v367 = vmul.f32 %v354, %v324
          %v368 = vmul.f32 %v356, %v324
          %v369 = vmul.f32 %v358, %v324
          %v370 = vmul.f32 %v360, %v324
          %v371 = vmul.f32 %v362, %v324
          %v372 = vmul.f32 %v364, %v324
          %v373 = vadd.f32 %v365, 1e-05
          %v374 = vadd.f32 %v366, 1e-05
          %v375 = vadd.f32 %v367, 1e-05
          %v376 = vadd.f32 %v368, 1e-05
          %v377 = vadd.f32 %v369, 1e-05
          %v378 = vadd.f32 %v370, 1e-05
          %v379 = vadd.f32 %v371, 1e-05
          %v380 = vadd.f32 %v372, 1e-05
          %v381 = vrsqrt.pop %v373
          %v382 = vmul.f32 %v381, %v373
          %v383 = vmul.f32 %v382, %v381
          %v384 = vmul.f32 0.5, %v383
          %v385 = vsub.f32 1.5, %v384
          %v386 = vmul.f32 %v381, %v385
          %vm387 = vweird.f32 %v373
          %vm388 = vweird.f32 %v381
          %vm389 = vmor %vm387, %vm388
          %v390 = vsel %vm389, %v381, %v386
          %v391 = vrsqrt.pop %v374
          %v392 = vmul.f32 %v391, %v374
          %v393 = vmul.f32 %v392, %v391
          %v394 = vmul.f32 0.5, %v393
          %v395 = vsub.f32 1.5, %v394
          %v396 = vmul.f32 %v391, %v395
          %vm397 = vweird.f32 %v374
          %vm398 = vweird.f32 %v391
          %vm399 = vmor %vm397, %vm398
          %v400 = vsel %vm399, %v391, %v396
          %v401 = vrsqrt.pop %v375
          %v402 = vmul.f32 %v401, %v375
          %v403 = vmul.f32 %v402, %v401
          %v404 = vmul.f32 0.5, %v403
          %v405 = vsub.f32 1.5, %v404
          %v406 = vmul.f32 %v401, %v405
          %vm407 = vweird.f32 %v375
          %vm408 = vweird.f32 %v401
          %vm409 = vmor %vm407, %vm408
          %v410 = vsel %vm409, %v401, %v406
          %v411 = vrsqrt.pop %v376
          %v412 = vmul.f32 %v411, %v376
          %v413 = vmul.f32 %v412, %v411
          %v414 = vmul.f32 0.5, %v413
          %v415 = vsub.f32 1.5, %v414
          %v416 = vmul.f32 %v411, %v415
          %vm417 = vweird.f32 %v376
          %vm418 = vweird.f32 %v411
          %vm419 = vmor %vm417, %vm418
          %v420 = vsel %vm419, %v411, %v416
          %v421 = vrsqrt.pop %v377
          %v422 = vmul.f32 %v421, %v377
          %v423 = vmul.f32 %v422, %v421
          %v424 = vmul.f32 0.5, %v423
          %v425 = vsub.f32 1.5, %v424
          %v426 = vmul.f32 %v421, %v425
          %vm427 = vweird.f32 %v377
          %vm428 = vweird.f32 %v421
          %vm429 = vmor %vm427, %vm428
          %v430 = vsel %vm429, %v421, %v426
          %v431 = vrsqrt.pop %v378
          %v432 = vmul.f32 %v431, %v378
          %v433 = vmul.f32 %v432, %v431
          %v434 = vmul.f32 0.5, %v433
          %v435 = vsub.f32 1.5, %v434
          %v436 = vmul.f32 %v431, %v435
          %vm437 = vweird.f32 %v378
          %vm438 = vweird.f32 %v431
          %vm439 = vmor %vm437, %vm438
          %v440 = vsel %vm439, %v431, %v436
          %v441 = vrsqrt.pop %v379
          %v442 = vmul.f32 %v441, %v379
          %v443 = vmul.f32 %v442, %v441
          %v444 = vmul.f32 0.5, %v443
          %v445 = vsub.f32 1.5, %v444
          %v446 = vmul.f32 %v441, %v445
          %vm447 = vweird.f32 %v379
          %vm448 = vweird.f32 %v441
          %vm449 = vmor %vm447, %vm448
          %v450 = vsel %vm449, %v441, %v446
          %v451 = vrsqrt.pop %v380
          %v452 = vmul.f32 %v451, %v380
          %v453 = vmul.f32 %v452, %v451
          %v454 = vmul.f32 0.5, %v453
          %v455 = vsub.f32 1.5, %v454
          %v456 = vmul.f32 %v451, %v455
          %vm457 = vweird.f32 %v380
          %vm458 = vweird.f32 %v451
          %vm459 = vmor %vm457, %vm458
          %v460 = vsel %vm459, %v451, %v456
          %v461 = vmul.f32 %v333, %v390
          %v462 = vmul.f32 %v334, %v400
          %v463 = vmul.f32 %v335, %v410
          %v464 = vmul.f32 %v336, %v420
          %v465 = vmul.f32 %v337, %v430
          %v466 = vmul.f32 %v338, %v440
          %v467 = vmul.f32 %v339, %v450
          %v468 = vmul.f32 %v340, %v460
          %v469 = vld [vmem:[%s1] sm:$0x1]
          %v471 = vperm.slane %v469, 0
          %v473 = vmul.f32 %v461, %v471
          %v474 = vmul.f32 %v462, %v471
          %v475 = vmul.f32 %v463, %v471
          %v476 = vmul.f32 %v464, %v471
          %v477 = vmul.f32 %v465, %v471
          %v478 = vmul.f32 %v466, %v471
          %v479 = vmul.f32 %v467, %v471
          %v480 = vmul.f32 %v468, %v471
          %v481 = vld [vmem:[%s2] sm:$0x1]
          %v483 = vperm.slane %v481, 0
          %v485 = vadd.f32 %v473, %v483
          %v486 = vadd.f32 %v474, %v483
          %v487 = vadd.f32 %v475, %v483
          %v488 = vadd.f32 %v476, %v483
          %v489 = vadd.f32 %v477, %v483
          %v490 = vadd.f32 %v478, %v483
          %v491 = vadd.f32 %v479, %v483
          %v492 = vadd.f32 %v480, %v483
          %v493 = vpack.c.bf16 %v485, %v485
          %v494 = vpack.c.bf16 %v486, %v486
          %v495 = vpack.c.bf16 %v487, %v487
          %v496 = vpack.c.bf16 %v488, %v488
          %v497 = vpack.c.bf16 %v489, %v489
          %v498 = vpack.c.bf16 %v490, %v490
          %v499 = vpack.c.bf16 %v491, %v491
          %v500 = vpack.c.bf16 %v492, %v492
          %501 = vst [vmem:[#allocation2] sm:$0xf] %v493
          %502 = vst [vmem:[#allocation2 + $0x4] sm:$0xf] %v494
          %503 = vst [vmem:[#allocation2 + $0x8] sm:$0xf] %v495
          %504 = vst [vmem:[#allocation2 + $0xc] sm:$0xf] %v496
          %505 = vst [vmem:[#allocation2 + $0x10] sm:$0xf] %v497
          %506 = vst [vmem:[#allocation2 + $0x14] sm:$0xf] %v498
          %507 = vst [vmem:[#allocation2 + $0x18] sm:$0xf] %v499
          %508 = vst [vmem:[#allocation2 + $0x1c] sm:$0xf] %v500
        $region44: #{gpt_forward.17} parent=39 // pred_fallthru
          _
        %v509 = vld [vmem:[#allocation2] sm:$0xf]
        %v510 = vld [vmem:[#allocation2 + $0x4] sm:$0xf]
        %v511 = vld [vmem:[#allocation2 + $0x8] sm:$0xf]
        %v512 = vld [vmem:[#allocation2 + $0xc] sm:$0xf]
        %v513 = vld [vmem:[#allocation2 + $0x10] sm:$0xf]
        %v514 = vld [vmem:[#allocation2 + $0x14] sm:$0xf]
        %v515 = vld [vmem:[#allocation2 + $0x18] sm:$0xf]
        %v516 = vld [vmem:[#allocation2 + $0x1c] sm:$0xf]
        %v517 = vld [vmem:[%s273] sm:$0xf]
        %v518 = vld [vmem:[%s273 + $0x4] sm:$0xf]
        %v519 = vld [vmem:[%s273 + $0x8] sm:$0xf]
        %v520 = vld [vmem:[%s273 + $0xc] sm:$0xf]
        %v521 = vld [vmem:[%s273 + $0x10] sm:$0xf]
        %v522 = vld [vmem:[%s273 + $0x14] sm:$0xf]
        %v523 = vld [vmem:[%s273 + $0x18] sm:$0xf]
        %v524 = vld [vmem:[%s273 + $0x1c] sm:$0xf]
        %v525 = vld [vmem:[%s273 + $0x20] sm:$0xf]
        %v526 = vld [vmem:[%s273 + $0x24] sm:$0xf]
        %v527 = vld [vmem:[%s273 + $0x28] sm:$0xf]
        %v528 = vld [vmem:[%s273 + $0x2c] sm:$0xf]
        %v529 = vld [vmem:[%s273 + $0x30] sm:$0xf]
        %v530 = vld [vmem:[%s273 + $0x34] sm:$0xf]
        %v531 = vld [vmem:[%s273 + $0x38] sm:$0xf]
        %v532 = vld [vmem:[%s273 + $0x3c] sm:$0xf]
        %v533 = vld [vmem:[%s273 + $0x40] sm:$0xf]
        %v534 = vld [vmem:[%s273 + $0x44] sm:$0xf]
        %v535 = vld [vmem:[%s273 + $0x48] sm:$0xf]
        %v536 = vld [vmem:[%s273 + $0x4c] sm:$0xf]
        %v537 = vld [vmem:[%s273 + $0x50] sm:$0xf]
        %v538 = vld [vmem:[%s273 + $0x54] sm:$0xf]
        %v539 = vld [vmem:[%s273 + $0x58] sm:$0xf]
        %v540 = vld [vmem:[%s273 + $0x5c] sm:$0xf]
        %v541 = vld [vmem:[%s273 + $0x60] sm:$0xf]
        %v542 = vld [vmem:[%s273 + $0x64] sm:$0xf]
        %v543 = vld [vmem:[%s273 + $0x68] sm:$0xf]
        %v544 = vld [vmem:[%s273 + $0x6c] sm:$0xf]
        %v545 = vld [vmem:[%s273 + $0x70] sm:$0xf]
        %v546 = vld [vmem:[%s273 + $0x74] sm:$0xf]
        %v547 = vld [vmem:[%s273 + $0x78] sm:$0xf]
        %v548 = vld [vmem:[%s273 + $0x7c] sm:$0xf]
        %v549 = vld [vmem:[%s278] sm:$0x3]
        %v551 = vperm.slane %v549, 0
        %v552 = vperm.slane %v549, 1
        %v563 = vunpack.c.l.b16 %v509
        %v564 = vunpack.c.l.b16 %v510
        %v565 = vunpack.c.l.b16 %v511
        %v566 = vunpack.c.l.b16 %v512
        %v567 = vunpack.c.l.b16 %v513
        %v568 = vunpack.c.l.b16 %v514
        %v569 = vunpack.c.l.b16 %v515
        %v570 = vunpack.c.l.b16 %v516
        %v571 = vpack.c.b16 %v564, %v563
        %v572 = vpack.c.b16 %v566, %v565
        %v573 = vpack.c.b16 %v568, %v567
        %v574 = vpack.c.b16 %v570, %v569
        %v611 = vunpack.c.l.b16 %v517
        %v612 = vunpack.c.l.b16 %v518
        %v613 = vunpack.c.l.b16 %v519
        %v614 = vunpack.c.l.b16 %v520
        %v615 = vunpack.c.l.b16 %v521
        %v616 = vunpack.c.l.b16 %v522
        %v617 = vunpack.c.l.b16 %v523
        %v618 = vunpack.c.l.b16 %v524
        %v619 = vunpack.c.l.b16 %v525
        %v620 = vunpack.c.l.b16 %v526
        %v621 = vunpack.c.l.b16 %v527
        %v622 = vunpack.c.l.b16 %v528
        %v623 = vunpack.c.l.b16 %v529
        %v624 = vunpack.c.l.b16 %v530
        %v625 = vunpack.c.l.b16 %v531
        %v626 = vunpack.c.l.b16 %v532
        %v627 = vunpack.c.l.b16 %v533
        %v628 = vunpack.c.l.b16 %v534
        %v629 = vunpack.c.l.b16 %v535
        %v630 = vunpack.c.l.b16 %v536
        %v631 = vunpack.c.l.b16 %v537
        %v632 = vunpack.c.l.b16 %v538
        %v633 = vunpack.c.l.b16 %v539
        %v634 = vunpack.c.l.b16 %v540
        %v635 = vunpack.c.l.b16 %v541
        %v636 = vunpack.c.l.b16 %v542
        %v637 = vunpack.c.l.b16 %v543
        %v638 = vunpack.c.l.b16 %v544
        %v639 = vunpack.c.l.b16 %v545
        %v640 = vunpack.c.l.b16 %v546
        %v641 = vunpack.c.l.b16 %v547
        %v642 = vunpack.c.l.b16 %v548
        %v643 = vpack.c.b16 %v612, %v611
        %v644 = vpack.c.b16 %v614, %v613
        %v645 = vpack.c.b16 %v616, %v615
        %v646 = vpack.c.b16 %v618, %v617
        %v647 = vpack.c.b16 %v620, %v619
        %v648 = vpack.c.b16 %v622, %v621
        %v649 = vpack.c.b16 %v624, %v623
        %v650 = vpack.c.b16 %v626, %v625
        %v651 = vpack.c.b16 %v628, %v627
        %v652 = vpack.c.b16 %v630, %v629
        %v653 = vpack.c.b16 %v632, %v631
        %v654 = vpack.c.b16 %v634, %v633
        %v655 = vpack.c.b16 %v636, %v635
        %v656 = vpack.c.b16 %v638, %v637
        %v657 = vpack.c.b16 %v640, %v639
        %v658 = vpack.c.b16 %v642, %v641
        %675 = vmatpush.bf16.xpose.msra.mxu0 %v650
        %676 = vmatpush.bf16.xpose.msra.mxu0 %v649
        %677 = vmatpush.bf16.xpose.msra.mxu0 %v648
        %678 = vmatpush.bf16.xpose.msra.mxu0 %v647
        %679 = vmatpush.bf16.xpose.msra.mxu0 %v646
        %680 = vmatpush.bf16.xpose.msra.mxu0 %v645
        %681 = vmatpush.bf16.xpose.msra.mxu0 %v644
        %682 = vmatpush.bf16.xpose.msra.mxu0 %v643
        %683 = vmatmul.bf16.gmra.mxu0 %v571
        %v684 = vpop.f32.mrf.mxu0
        %v685 = vadd.f32 %v551, %v684
        %v686 = vpop.f32.mrf.mxu0
        %v687 = vadd.f32 %v551, %v686
        %688 = vmatmul.bf16.gmra.mxu0 %v572
        %v689 = vpop.f32.mrf.mxu0
        %v690 = vadd.f32 %v551, %v689
        %v691 = vpop.f32.mrf.mxu0
        %v692 = vadd.f32 %v551, %v691
        %693 = vmatmul.bf16.gmra.mxu0 %v573
        %v694 = vpop.f32.mrf.mxu0
        %v695 = vadd.f32 %v551, %v694
        %v696 = vpop.f32.mrf.mxu0
        %v697 = vadd.f32 %v551, %v696
        %698 = vmatmul.bf16.gmra.mxu0 %v574
        %v699 = vpop.f32.mrf.mxu0
        %v700 = vadd.f32 %v551, %v699
        %v701 = vpop.f32.mrf.mxu0
        %v702 = vadd.f32 %v551, %v701
        %703 = vdwg.mxu0
        %704 = vmatpush.bf16.xpose.msra.mxu0 %v658
        %705 = vmatpush.bf16.xpose.msra.mxu0 %v657
        %706 = vmatpush.bf16.xpose.msra.mxu0 %v656
        %707 = vmatpush.bf16.xpose.msra.mxu0 %v655
        %708 = vmatpush.bf16.xpose.msra.mxu0 %v654
        %709 = vmatpush.bf16.xpose.msra.mxu0 %v653
        %710 = vmatpush.bf16.xpose.msra.mxu0 %v652
        %711 = vmatpush.bf16.xpose.msra.mxu0 %v651
        %712 = vmatmul.bf16.gmra.mxu0 %v571
        %v713 = vpop.f32.mrf.mxu0
        %v714 = vadd.f32 %v552, %v713
        %v715 = vpop.f32.mrf.mxu0
        %v716 = vadd.f32 %v552, %v715
        %717 = vmatmul.bf16.gmra.mxu0 %v572
        %v718 = vpop.f32.mrf.mxu0
        %v719 = vadd.f32 %v552, %v718
        %v720 = vpop.f32.mrf.mxu0
        %v721 = vadd.f32 %v552, %v720
        %722 = vmatmul.bf16.gmra.mxu0 %v573
        %v723 = vpop.f32.mrf.mxu0
        %v724 = vadd.f32 %v552, %v723
        %v725 = vpop.f32.mrf.mxu0
        %v726 = vadd.f32 %v552, %v725
        %727 = vmatmul.bf16.gmra.mxu0 %v574
        %v728 = vpop.f32.mrf.mxu0
        %v729 = vadd.f32 %v552, %v728
        %v730 = vpop.f32.mrf.mxu0
        %v731 = vadd.f32 %v552, %v730
        %732 = vdwg.mxu0
        %733 = vst [vmem:[%s262] sm:$0xff] %v685
        %734 = vst [vmem:[%s262 + $0x8] sm:$0xff] %v714
        %735 = vst [vmem:[%s262 + $0x10] sm:$0xff] %v687
        %736 = vst [vmem:[%s262 + $0x18] sm:$0xff] %v716
        %737 = vst [vmem:[%s262 + $0x20] sm:$0xff] %v690
        %738 = vst [vmem:[%s262 + $0x28] sm:$0xff] %v719
        %739 = vst [vmem:[%s262 + $0x30] sm:$0xff] %v692
        %740 = vst [vmem:[%s262 + $0x38] sm:$0xff] %v721
        %741 = vst [vmem:[%s262 + $0x40] sm:$0xff] %v695
        %742 = vst [vmem:[%s262 + $0x48] sm:$0xff] %v724
        %743 = vst [vmem:[%s262 + $0x50] sm:$0xff] %v697
        %744 = vst [vmem:[%s262 + $0x58] sm:$0xff] %v726
        %745 = vst [vmem:[%s262 + $0x60] sm:$0xff] %v700
        %746 = vst [vmem:[%s262 + $0x68] sm:$0xff] %v729
        %747 = vst [vmem:[%s262 + $0x70] sm:$0xff] %v702
        %748 = vst [vmem:[%s262 + $0x78] sm:$0xff] %v731
        %s749 = sand.u32 %s161, 1
        %s750 = scalar_lea.sflag [#allocation4], %s749
        %s751 = sand.u32 %s161, 1
        %s752 = smul.addr %s751, 128
        %s753 = scalar_lea.vmem [#allocation3], %s752
        // Predicated region
        $region45: #{gpt_forward.17} parent=39 // pred_check
          %p754 = pneg %p171
        $region46: #{gpt_forward.17} parent=39 // pred_check_branch
          %756 = sbr.rel (%p754) target = $region48
        $region47: #{gpt_forward.17} parent=39 // pred_region
          %s757 = smul.u32 8, %s23
          %s758 = smul.u32 2, %s24
          %760 = vsyncadd %s750, 0
          %s761 = smul.addr %s757, 4
          %s762 = sadd.s32 %s758, %s761
          %s763 = smul.addr %s762, 8
          %s764 = scalar_lea.hbm %s5, %s763
          %s765 = sshll.u32 %s753, 4
          %s766 = int_to_ptr.vmem [resolvable:$true] %s765
          %s767 = sshll.u32 %s764, 4
          %s768 = int_to_ptr.hbm [resolvable:$true] %s767
          %773 = dma.vmem_to_hbm [thread:$0]  %s766, 2048, %s768, %s750, 256, 512, 16
        $region48: #{gpt_forward.17} parent=39 // pred_fallthru
          _
      $region40: #{gpt_forward.17} parent=5 // pred_fallthru
        _
      %p774 = scmp.le.s32.totalorder 2, %s14
      // Predicated region
      $region49: #{gpt_forward.17} parent=5 // pred_check
        %p775 = pneg %p774
      $region50: #{gpt_forward.17} parent=5 // pred_check_branch
        %777 = sbr.rel (%p775) target = $region52
      $region51: #{gpt_forward.17} parent=5 // pred_region
        %s778 = ssub.s32 %s14, 2
        // Predicated region
        $region53: #{gpt_forward.17} parent=51 // pred_check
          %p779 = pneg %p177
        $region54: #{gpt_forward.17} parent=51 // pred_check_branch
          %781 = sbr.rel (%p779) target = $region56
        $region55: #{gpt_forward.17} parent=51 // pred_region
          %s782 = sand.u32 %s162, 1
          %s783 = scalar_lea.sflag [#allocation4], %s782
          %s784 = sand.u32 %s162, 1
          %s785 = smul.addr %s784, 128
          %s786 = scalar_lea.vmem [#allocation3], %s785
          %788 = dma.done %s783, 2048
        $region56: #{gpt_forward.17} parent=51 // pred_fallthru
          _
      $region52: #{gpt_forward.17} parent=5 // pred_fallthru
        _
    $region6: #{gpt_forward.17} parent=1 // loop_footer
      %s18 = sadd.s32 1, %s14
    $region7: #{gpt_forward.17} parent=1 // loop_footer_branch
      %13 = sbr.rel target = $region3
    $region8: #{gpt_forward.17} parent=1 // loop_exit
      _
    %789 = vsyncpa [#allocation4], 1
    %s790 = scalar_lea.sflag [#allocation4], 1
    %791 = vsyncpa %s790, 1

// kernel: gpt_forward.12
$region0: #{gpt_forward.12}
  #allocation0 [shape = 'u32[]', space=smem, size = 0x4, offset = 0x4, fixed_abs, tag = 'smem constant byte address 0x4 - core index']
  #allocation1 [shape = 'u32[72,128]{1,0:T(1,128)}', space=vmem, size = 0x9000, scoped, tag = 'internal scratch']
  %s0 = inlined_call_operand.vmem [shape: bf16[64,128], index: 0, kind: input, shape index: {}]
  %s1 = inlined_call_operand.vmem [shape: f32[1,128], index: 1, kind: input, shape index: {}]
  %s2 = inlined_call_operand.vmem [shape: f32[1,128], index: 2, kind: input, shape index: {}]
  %s3 = inlined_call_operand.vmem [shape: bf16[512,128], index: 3, kind: input, shape index: {}]
  %s4 = inlined_call_operand.vmem [shape: f32[1,512], index: 4, kind: input, shape index: {}]
  %s5 = inlined_call_operand.vmem [shape: bf16[128,512], index: 5, kind: input, shape index: {}]
  %s6 = inlined_call_operand.vmem [shape: f32[1,128], index: 6, kind: input, shape index: {}]
  %s7 = inlined_call_operand.vmem [shape: bf16[64,128], index: 7, kind: output, shape index: {}]
  %s8 = sld [smem:[#allocation0]]
  $region38: #{gpt_forward.12} parent=0
    _
  %s10 = ssub.s32 1, %s8
  %s11 = scalar_select 0, %s10, %s8
  // Predicated region
  $region2: #{gpt_forward.12} parent=0 // pred_check
    _
  $region3: #{gpt_forward.12} parent=0 // pred_check_branch
    %13 = sbr.rel (0) target = $region5
  $region4: #{gpt_forward.12} parent=0 // pred_region
    _
  $region5: #{gpt_forward.12} parent=0 // pred_fallthru
    _
  // Predicated region
  $region6: #{gpt_forward.12} parent=0 // pred_check
    _
  $region7: #{gpt_forward.12} parent=0 // pred_check_branch
    %15 = sbr.rel (0) target = $region9
  $region8: #{gpt_forward.12} parent=0 // pred_region
    _
  $region9: #{gpt_forward.12} parent=0 // pred_fallthru
    _
  // Predicated region
  $region10: #{gpt_forward.12} parent=0 // pred_check
    _
  $region11: #{gpt_forward.12} parent=0 // pred_check_branch
    %17 = sbr.rel (0) target = $region13
  $region12: #{gpt_forward.12} parent=0 // pred_region
    _
  $region13: #{gpt_forward.12} parent=0 // pred_fallthru
    _
  // Predicated region
  $region14: #{gpt_forward.12} parent=0 // pred_check
    _
  $region15: #{gpt_forward.12} parent=0 // pred_check_branch
    %19 = sbr.rel (0) target = $region17
  $region16: #{gpt_forward.12} parent=0 // pred_region
    _
  $region17: #{gpt_forward.12} parent=0 // pred_fallthru
    _
  // Predicated region
  $region18: #{gpt_forward.12} parent=0 // pred_check
    _
  $region19: #{gpt_forward.12} parent=0 // pred_check_branch
    %21 = sbr.rel (0) target = $region21
  $region20: #{gpt_forward.12} parent=0 // pred_region
    _
  $region21: #{gpt_forward.12} parent=0 // pred_fallthru
    _
  // Predicated region
  $region22: #{gpt_forward.12} parent=0 // pred_check
    _
  $region23: #{gpt_forward.12} parent=0 // pred_check_branch
    %23 = sbr.rel (0) target = $region25
  $region24: #{gpt_forward.12} parent=0 // pred_region
    _
  $region25: #{gpt_forward.12} parent=0 // pred_fallthru
    _
  // Predicated region
  $region26: #{gpt_forward.12} parent=0 // pred_check
    _
  $region27: #{gpt_forward.12} parent=0 // pred_check_branch
    %25 = sbr.rel (0) target = $region29
  $region28: #{gpt_forward.12} parent=0 // pred_region
    _
  $region29: #{gpt_forward.12} parent=0 // pred_fallthru
    _
  %v26 = vld [vmem:[%s0] sm:$0xf]
  %v27 = vld [vmem:[%s0 + $0x4] sm:$0xf]
  %v28 = vld [vmem:[%s0 + $0x8] sm:$0xf]
  %v29 = vld [vmem:[%s0 + $0xc] sm:$0xf]
  %v30 = vld [vmem:[%s0 + $0x10] sm:$0xf]
  %v31 = vld [vmem:[%s0 + $0x14] sm:$0xf]
  %v32 = vld [vmem:[%s0 + $0x18] sm:$0xf]
  %v33 = vld [vmem:[%s0 + $0x1c] sm:$0xf]
  %v34 = vunpack.c.l.bf16 %v26
  %v35 = vunpack.c.l.bf16 %v27
  %v36 = vunpack.c.l.bf16 %v28
  %v37 = vunpack.c.l.bf16 %v29
  %v38 = vunpack.c.l.bf16 %v30
  %v39 = vunpack.c.l.bf16 %v31
  %v40 = vunpack.c.l.bf16 %v32
  %v41 = vunpack.c.l.bf16 %v33
  %42 = vadd.xlane.f32.xlu0 %v34
  %v43 = vpop.xlane.xlu0 %42
  %44 = vadd.xlane.f32.xlu0 %v35
  %v45 = vpop.xlane.xlu0 %44
  %46 = vadd.xlane.f32.xlu0 %v36
  %v47 = vpop.xlane.xlu0 %46
  %48 = vadd.xlane.f32.xlu0 %v37
  %v49 = vpop.xlane.xlu0 %48
  %50 = vadd.xlane.f32.xlu0 %v38
  %v51 = vpop.xlane.xlu0 %50
  %52 = vadd.xlane.f32.xlu0 %v39
  %v53 = vpop.xlane.xlu0 %52
  %54 = vadd.xlane.f32.xlu0 %v40
  %v55 = vpop.xlane.xlu0 %54
  %56 = vadd.xlane.f32.xlu0 %v41
  %v57 = vpop.xlane.xlu0 %56
  %v58 = vrcp.pop 128.0
  %v59 = vmul.f32 128.0, %v58
  %v60 = vsub.f32 1.0, %v59
  %v61 = vmul.f32 %v58, %v60
  %v62 = vadd.f32 %v58, %v61
  %vm63 = vweird.f32 %v58
  %v64 = vsel %vm63, %v58, %v62
  %v65 = vmul.f32 %v43, %v64
  %v66 = vmul.f32 %v45, %v64
  %v67 = vmul.f32 %v47, %v64
  %v68 = vmul.f32 %v49, %v64
  %v69 = vmul.f32 %v51, %v64
  %v70 = vmul.f32 %v53, %v64
  %v71 = vmul.f32 %v55, %v64
  %v72 = vmul.f32 %v57, %v64
  %v73 = vsub.f32 %v34, %v65
  %v74 = vsub.f32 %v35, %v66
  %v75 = vsub.f32 %v36, %v67
  %v76 = vsub.f32 %v37, %v68
  %v77 = vsub.f32 %v38, %v69
  %v78 = vsub.f32 %v39, %v70
  %v79 = vsub.f32 %v40, %v71
  %v80 = vsub.f32 %v41, %v72
  %v81 = vmul.f32 %v73, %v73
  %v82 = vmul.f32 %v74, %v74
  %v83 = vmul.f32 %v75, %v75
  %v84 = vmul.f32 %v76, %v76
  %v85 = vmul.f32 %v77, %v77
  %v86 = vmul.f32 %v78, %v78
  %v87 = vmul.f32 %v79, %v79
  %v88 = vmul.f32 %v80, %v80
  %89 = vadd.xlane.f32.xlu0 %v81
  %v90 = vpop.xlane.xlu0 %89
  %91 = vadd.xlane.f32.xlu0 %v82
  %v92 = vpop.xlane.xlu0 %91
  %93 = vadd.xlane.f32.xlu0 %v83
  %v94 = vpop.xlane.xlu0 %93
  %95 = vadd.xlane.f32.xlu0 %v84
  %v96 = vpop.xlane.xlu0 %95
  %97 = vadd.xlane.f32.xlu0 %v85
  %v98 = vpop.xlane.xlu0 %97
  %99 = vadd.xlane.f32.xlu0 %v86
  %v100 = vpop.xlane.xlu0 %99
  %101 = vadd.xlane.f32.xlu0 %v87
  %v102 = vpop.xlane.xlu0 %101
  %103 = vadd.xlane.f32.xlu0 %v88
  %v104 = vpop.xlane.xlu0 %103
  %v105 = vmul.f32 %v90, %v64
  %v106 = vmul.f32 %v92, %v64
  %v107 = vmul.f32 %v94, %v64
  %v108 = vmul.f32 %v96, %v64
  %v109 = vmul.f32 %v98, %v64
  %v110 = vmul.f32 %v100, %v64
  %v111 = vmul.f32 %v102, %v64
  %v112 = vmul.f32 %v104, %v64
  %v113 = vadd.f32 %v105, 1e-05
  %v114 = vadd.f32 %v106, 1e-05
  %v115 = vadd.f32 %v107, 1e-05
  %v116 = vadd.f32 %v108, 1e-05
  %v117 = vadd.f32 %v109, 1e-05
  %v118 = vadd.f32 %v110, 1e-05
  %v119 = vadd.f32 %v111, 1e-05
  %v120 = vadd.f32 %v112, 1e-05
  %v121 = vrsqrt.pop %v113
  %v122 = vmul.f32 %v121, %v113
  %v123 = vmul.f32 %v122, %v121
  %v124 = vmul.f32 0.5, %v123
  %v125 = vsub.f32 1.5, %v124
  %v126 = vmul.f32 %v121, %v125
  %vm127 = vweird.f32 %v113
  %vm128 = vweird.f32 %v121
  %vm129 = vmor %vm127, %vm128
  %v130 = vsel %vm129, %v121, %v126
  %v131 = vrsqrt.pop %v114
  %v132 = vmul.f32 %v131, %v114
  %v133 = vmul.f32 %v132, %v131
  %v134 = vmul.f32 0.5, %v133
  %v135 = vsub.f32 1.5, %v134
  %v136 = vmul.f32 %v131, %v135
  %vm137 = vweird.f32 %v114
  %vm138 = vweird.f32 %v131
  %vm139 = vmor %vm137, %vm138
  %v140 = vsel %vm139, %v131, %v136
  %v141 = vrsqrt.pop %v115
  %v142 = vmul.f32 %v141, %v115
  %v143 = vmul.f32 %v142, %v141
  %v144 = vmul.f32 0.5, %v143
  %v145 = vsub.f32 1.5, %v144
  %v146 = vmul.f32 %v141, %v145
  %vm147 = vweird.f32 %v115
  %vm148 = vweird.f32 %v141
  %vm149 = vmor %vm147, %vm148
  %v150 = vsel %vm149, %v141, %v146
  %v151 = vrsqrt.pop %v116
  %v152 = vmul.f32 %v151, %v116
  %v153 = vmul.f32 %v152, %v151
  %v154 = vmul.f32 0.5, %v153
  %v155 = vsub.f32 1.5, %v154
  %v156 = vmul.f32 %v151, %v155
  %vm157 = vweird.f32 %v116
  %vm158 = vweird.f32 %v151
  %vm159 = vmor %vm157, %vm158
  %v160 = vsel %vm159, %v151, %v156
  %v161 = vrsqrt.pop %v117
  %v162 = vmul.f32 %v161, %v117
  %v163 = vmul.f32 %v162, %v161
  %v164 = vmul.f32 0.5, %v163
  %v165 = vsub.f32 1.5, %v164
  %v166 = vmul.f32 %v161, %v165
  %vm167 = vweird.f32 %v117
  %vm168 = vweird.f32 %v161
  %vm169 = vmor %vm167, %vm168
  %v170 = vsel %vm169, %v161, %v166
  %v171 = vrsqrt.pop %v118
  %v172 = vmul.f32 %v171, %v118
  %v173 = vmul.f32 %v172, %v171
  %v174 = vmul.f32 0.5, %v173
  %v175 = vsub.f32 1.5, %v174
  %v176 = vmul.f32 %v171, %v175
  %vm177 = vweird.f32 %v118
  %vm178 = vweird.f32 %v171
  %vm179 = vmor %vm177, %vm178
  %v180 = vsel %vm179, %v171, %v176
  %v181 = vrsqrt.pop %v119
  %v182 = vmul.f32 %v181, %v119
  %v183 = vmul.f32 %v182, %v181
  %v184 = vmul.f32 0.5, %v183
  %v185 = vsub.f32 1.5, %v184
  %v186 = vmul.f32 %v181, %v185
  %vm187 = vweird.f32 %v119
  %vm188 = vweird.f32 %v181
  %vm189 = vmor %vm187, %vm188
  %v190 = vsel %vm189, %v181, %v186
  %v191 = vrsqrt.pop %v120
  %v192 = vmul.f32 %v191, %v120
  %v193 = vmul.f32 %v192, %v191
  %v194 = vmul.f32 0.5, %v193
  %v195 = vsub.f32 1.5, %v194
  %v196 = vmul.f32 %v191, %v195
  %vm197 = vweird.f32 %v120
  %vm198 = vweird.f32 %v191
  %vm199 = vmor %vm197, %vm198
  %v200 = vsel %vm199, %v191, %v196
  %v201 = vmul.f32 %v73, %v130
  %v202 = vmul.f32 %v74, %v140
  %v203 = vmul.f32 %v75, %v150
  %v204 = vmul.f32 %v76, %v160
  %v205 = vmul.f32 %v77, %v170
  %v206 = vmul.f32 %v78, %v180
  %v207 = vmul.f32 %v79, %v190
  %v208 = vmul.f32 %v80, %v200
  %v209 = vld [vmem:[%s1] sm:$0x1]
  %v211 = vperm.slane %v209, 0
  %v213 = vmul.f32 %v201, %v211
  %v214 = vmul.f32 %v202, %v211
  %v215 = vmul.f32 %v203, %v211
  %v216 = vmul.f32 %v204, %v211
  %v217 = vmul.f32 %v205, %v211
  %v218 = vmul.f32 %v206, %v211
  %v219 = vmul.f32 %v207, %v211
  %v220 = vmul.f32 %v208, %v211
  %v221 = vld [vmem:[%s2] sm:$0x1]
  %v223 = vperm.slane %v221, 0
  %v225 = vadd.f32 %v213, %v223
  %v226 = vadd.f32 %v214, %v223
  %v227 = vadd.f32 %v215, %v223
  %v228 = vadd.f32 %v216, %v223
  %v229 = vadd.f32 %v217, %v223
  %v230 = vadd.f32 %v218, %v223
  %v231 = vadd.f32 %v219, %v223
  %v232 = vadd.f32 %v220, %v223
  %v233 = vpack.c.bf16 %v226, %v225
  %v234 = vpack.c.bf16 %v228, %v227
  %v235 = vpack.c.bf16 %v230, %v229
  %v236 = vpack.c.bf16 %v232, %v231
  %v237 = vld [vmem:[%s3] sm:$0xf]
  %v238 = vld [vmem:[%s3 + $0x4] sm:$0xf]
  %v239 = vld [vmem:[%s3 + $0x8] sm:$0xf]
  %v240 = vld [vmem:[%s3 + $0xc] sm:$0xf]
  %v241 = vld [vmem:[%s3 + $0x10] sm:$0xf]
  %v242 = vld [vmem:[%s3 + $0x14] sm:$0xf]
  %v243 = vld [vmem:[%s3 + $0x18] sm:$0xf]
  %v244 = vld [vmem:[%s3 + $0x1c] sm:$0xf]
  %v245 = vld [vmem:[%s3 + $0x20] sm:$0xf]
  %v246 = vld [vmem:[%s3 + $0x24] sm:$0xf]
  %v247 = vld [vmem:[%s3 + $0x28] sm:$0xf]
  %v248 = vld [vmem:[%s3 + $0x2c] sm:$0xf]
  %v249 = vld [vmem:[%s3 + $0x30] sm:$0xf]
  %v250 = vld [vmem:[%s3 + $0x34] sm:$0xf]
  %v251 = vld [vmem:[%s3 + $0x38] sm:$0xf]
  %v252 = vld [vmem:[%s3 + $0x3c] sm:$0xf]
  %v253 = vld [vmem:[%s3 + $0x40] sm:$0xf]
  %v254 = vld [vmem:[%s3 + $0x44] sm:$0xf]
  %v255 = vld [vmem:[%s3 + $0x48] sm:$0xf]
  %v256 = vld [vmem:[%s3 + $0x4c] sm:$0xf]
  %v257 = vld [vmem:[%s3 + $0x50] sm:$0xf]
  %v258 = vld [vmem:[%s3 + $0x54] sm:$0xf]
  %v259 = vld [vmem:[%s3 + $0x58] sm:$0xf]
  %v260 = vld [vmem:[%s3 + $0x5c] sm:$0xf]
  %v261 = vld [vmem:[%s3 + $0x60] sm:$0xf]
  %v262 = vld [vmem:[%s3 + $0x64] sm:$0xf]
  %v263 = vld [vmem:[%s3 + $0x68] sm:$0xf]
  %v264 = vld [vmem:[%s3 + $0x6c] sm:$0xf]
  %v265 = vld [vmem:[%s3 + $0x70] sm:$0xf]
  %v266 = vld [vmem:[%s3 + $0x74] sm:$0xf]
  %v267 = vld [vmem:[%s3 + $0x78] sm:$0xf]
  %v268 = vld [vmem:[%s3 + $0x7c] sm:$0xf]
  %v269 = vld [vmem:[%s3 + $0x80] sm:$0xf]
  %v270 = vld [vmem:[%s3 + $0x84] sm:$0xf]
  %v271 = vld [vmem:[%s3 + $0x88] sm:$0xf]
  %v272 = vld [vmem:[%s3 + $0x8c] sm:$0xf]
  %v273 = vld [vmem:[%s3 + $0x90] sm:$0xf]
  %v274 = vld [vmem:[%s3 + $0x94] sm:$0xf]
  %v275 = vld [vmem:[%s3 + $0x98] sm:$0xf]
  %v276 = vld [vmem:[%s3 + $0x9c] sm:$0xf]
  %v277 = vld [vmem:[%s3 + $0xa0] sm:$0xf]
  %v278 = vld [vmem:[%s3 + $0xa4] sm:$0xf]
  %v279 = vld [vmem:[%s3 + $0xa8] sm:$0xf]
  %v280 = vld [vmem:[%s3 + $0xac] sm:$0xf]
  %v281 = vld [vmem:[%s3 + $0xb0] sm:$0xf]
  %v282 = vld [vmem:[%s3 + $0xb4] sm:$0xf]
  %v283 = vld [vmem:[%s3 + $0xb8] sm:$0xf]
  %v284 = vld [vmem:[%s3 + $0xbc] sm:$0xf]
  %v285 = vld [vmem:[%s3 + $0xc0] sm:$0xf]
  %v286 = vld [vmem:[%s3 + $0xc4] sm:$0xf]
  %v287 = vld [vmem:[%s3 + $0xc8] sm:$0xf]
  %v288 = vld [vmem:[%s3 + $0xcc] sm:$0xf]
  %v289 = vld [vmem:[%s3 + $0xd0] sm:$0xf]
  %v290 = vld [vmem:[%s3 + $0xd4] sm:$0xf]
  %v291 = vld [vmem:[%s3 + $0xd8] sm:$0xf]
  %v292 = vld [vmem:[%s3 + $0xdc] sm:$0xf]
  %v293 = vld [vmem:[%s3 + $0xe0] sm:$0xf]
  %v294 = vld [vmem:[%s3 + $0xe4] sm:$0xf]
  %v295 = vld [vmem:[%s3 + $0xe8] sm:$0xf]
  %v296 = vld [vmem:[%s3 + $0xec] sm:$0xf]
  %v297 = vld [vmem:[%s3 + $0xf0] sm:$0xf]
  %v298 = vld [vmem:[%s3 + $0xf4] sm:$0xf]
  %v299 = vld [vmem:[%s3 + $0xf8] sm:$0xf]
  %v300 = vld [vmem:[%s3 + $0xfc] sm:$0xf]
  %v301 = vld [vmem:[%s4] sm:$0xf]
  %v303 = vperm.slane %v301, 0
  %v304 = vperm.slane %v301, 1
  %v305 = vperm.slane %v301, 2
  %v306 = vperm.slane %v301, 3
  %v375 = vunpack.c.l.b16 %v237
  %v376 = vunpack.c.l.b16 %v238
  %v377 = vunpack.c.l.b16 %v239
  %v378 = vunpack.c.l.b16 %v240
  %v379 = vunpack.c.l.b16 %v241
  %v380 = vunpack.c.l.b16 %v242
  %v381 = vunpack.c.l.b16 %v243
  %v382 = vunpack.c.l.b16 %v244
  %v383 = vunpack.c.l.b16 %v245
  %v384 = vunpack.c.l.b16 %v246
  %v385 = vunpack.c.l.b16 %v247
  %v386 = vunpack.c.l.b16 %v248
  %v387 = vunpack.c.l.b16 %v249
  %v388 = vunpack.c.l.b16 %v250
  %v389 = vunpack.c.l.b16 %v251
  %v390 = vunpack.c.l.b16 %v252
  %v391 = vunpack.c.l.b16 %v253
  %v392 = vunpack.c.l.b16 %v254
  %v393 = vunpack.c.l.b16 %v255
  %v394 = vunpack.c.l.b16 %v256
  %v395 = vunpack.c.l.b16 %v257
  %v396 = vunpack.c.l.b16 %v258
  %v397 = vunpack.c.l.b16 %v259
  %v398 = vunpack.c.l.b16 %v260
  %v399 = vunpack.c.l.b16 %v261
  %v400 = vunpack.c.l.b16 %v262
  %v401 = vunpack.c.l.b16 %v263
  %v402 = vunpack.c.l.b16 %v264
  %v403 = vunpack.c.l.b16 %v265
  %v404 = vunpack.c.l.b16 %v266
  %v405 = vunpack.c.l.b16 %v267
  %v406 = vunpack.c.l.b16 %v268
  %v407 = vunpack.c.l.b16 %v269
  %v408 = vunpack.c.l.b16 %v270
  %v409 = vunpack.c.l.b16 %v271
  %v410 = vunpack.c.l.b16 %v272
  %v411 = vunpack.c.l.b16 %v273
  %v412 = vunpack.c.l.b16 %v274
  %v413 = vunpack.c.l.b16 %v275
  %v414 = vunpack.c.l.b16 %v276
  %v415 = vunpack.c.l.b16 %v277
  %v416 = vunpack.c.l.b16 %v278
  %v417 = vunpack.c.l.b16 %v279
  %v418 = vunpack.c.l.b16 %v280
  %v419 = vunpack.c.l.b16 %v281
  %v420 = vunpack.c.l.b16 %v282
  %v421 = vunpack.c.l.b16 %v283
  %v422 = vunpack.c.l.b16 %v284
  %v423 = vunpack.c.l.b16 %v285
  %v424 = vunpack.c.l.b16 %v286
  %v425 = vunpack.c.l.b16 %v287
  %v426 = vunpack.c.l.b16 %v288
  %v427 = vunpack.c.l.b16 %v289
  %v428 = vunpack.c.l.b16 %v290
  %v429 = vunpack.c.l.b16 %v291
  %v430 = vunpack.c.l.b16 %v292
  %v431 = vunpack.c.l.b16 %v293
  %v432 = vunpack.c.l.b16 %v294
  %v433 = vunpack.c.l.b16 %v295
  %v434 = vunpack.c.l.b16 %v296
  %v435 = vunpack.c.l.b16 %v297
  %v436 = vunpack.c.l.b16 %v298
  %v437 = vunpack.c.l.b16 %v299
  %v438 = vunpack.c.l.b16 %v300
  %v439 = vpack.c.b16 %v376, %v375
  %v440 = vpack.c.b16 %v378, %v377
  %v441 = vpack.c.b16 %v380, %v379
  %v442 = vpack.c.b16 %v382, %v381
  %v443 = vpack.c.b16 %v384, %v383
  %v444 = vpack.c.b16 %v386, %v385
  %v445 = vpack.c.b16 %v388, %v387
  %v446 = vpack.c.b16 %v390, %v389
  %v447 = vpack.c.b16 %v392, %v391
  %v448 = vpack.c.b16 %v394, %v393
  %v449 = vpack.c.b16 %v396, %v395
  %v450 = vpack.c.b16 %v398, %v397
  %v451 = vpack.c.b16 %v400, %v399
  %v452 = vpack.c.b16 %v402, %v401
  %v453 = vpack.c.b16 %v404, %v403
  %v454 = vpack.c.b16 %v406, %v405
  %v455 = vpack.c.b16 %v408, %v407
  %v456 = vpack.c.b16 %v410, %v409
  %v457 = vpack.c.b16 %v412, %v411
  %v458 = vpack.c.b16 %v414, %v413
  %v459 = vpack.c.b16 %v416, %v415
  %v460 = vpack.c.b16 %v418, %v417
  %v461 = vpack.c.b16 %v420, %v419
  %v462 = vpack.c.b16 %v422, %v421
  %v463 = vpack.c.b16 %v424, %v423
  %v464 = vpack.c.b16 %v426, %v425
  %v465 = vpack.c.b16 %v428, %v427
  %v466 = vpack.c.b16 %v430, %v429
  %v467 = vpack.c.b16 %v432, %v431
  %v468 = vpack.c.b16 %v434, %v433
  %v469 = vpack.c.b16 %v436, %v435
  %v470 = vpack.c.b16 %v438, %v437
  %503 = vmatpush.bf16.xpose.msra.mxu0 %v446
  %504 = vmatpush.bf16.xpose.msra.mxu0 %v445
  %505 = vmatpush.bf16.xpose.msra.mxu0 %v444
  %506 = vmatpush.bf16.xpose.msra.mxu0 %v443
  %507 = vmatpush.bf16.xpose.msra.mxu0 %v442
  %508 = vmatpush.bf16.xpose.msra.mxu0 %v441
  %509 = vmatpush.bf16.xpose.msra.mxu0 %v440
  %510 = vmatpush.bf16.xpose.msra.mxu0 %v439
  %511 = vmatmul.bf16.gmra.mxu0 %v233
  %v512 = vpop.f32.mrf.mxu0
  %v513 = vadd.f32 %v303, %v512
  %v514 = vpop.f32.mrf.mxu0
  %v515 = vadd.f32 %v303, %v514
  %516 = vmatmul.bf16.gmra.mxu0 %v234
  %v517 = vpop.f32.mrf.mxu0
  %v518 = vadd.f32 %v303, %v517
  %v519 = vpop.f32.mrf.mxu0
  %v520 = vadd.f32 %v303, %v519
  %521 = vmatmul.bf16.gmra.mxu0 %v235
  %v522 = vpop.f32.mrf.mxu0
  %v523 = vadd.f32 %v303, %v522
  %v524 = vpop.f32.mrf.mxu0
  %v525 = vadd.f32 %v303, %v524
  %526 = vmatmul.bf16.gmra.mxu0 %v236
  %v527 = vpop.f32.mrf.mxu0
  %v528 = vadd.f32 %v303, %v527
  %v529 = vpop.f32.mrf.mxu0
  %v530 = vadd.f32 %v303, %v529
  %531 = vdwg.mxu0
  %532 = vmatpush.bf16.xpose.msra.mxu0 %v454
  %533 = vmatpush.bf16.xpose.msra.mxu0 %v453
  %534 = vmatpush.bf16.xpose.msra.mxu0 %v452
  %535 = vmatpush.bf16.xpose.msra.mxu0 %v451
  %536 = vmatpush.bf16.xpose.msra.mxu0 %v450
  %537 = vmatpush.bf16.xpose.msra.mxu0 %v449
  %538 = vmatpush.bf16.xpose.msra.mxu0 %v448
  %539 = vmatpush.bf16.xpose.msra.mxu0 %v447
  %540 = vmatmul.bf16.gmra.mxu0 %v233
  %v541 = vpop.f32.mrf.mxu0
  %v542 = vadd.f32 %v304, %v541
  %v543 = vpop.f32.mrf.mxu0
  %v544 = vadd.f32 %v304, %v543
  %545 = vmatmul.bf16.gmra.mxu0 %v234
  %v546 = vpop.f32.mrf.mxu0
  %v547 = vadd.f32 %v304, %v546
  %v548 = vpop.f32.mrf.mxu0
  %v549 = vadd.f32 %v304, %v548
  %550 = vmatmul.bf16.gmra.mxu0 %v235
  %v551 = vpop.f32.mrf.mxu0
  %v552 = vadd.f32 %v304, %v551
  %v553 = vpop.f32.mrf.mxu0
  %v554 = vadd.f32 %v304, %v553
  %555 = vmatmul.bf16.gmra.mxu0 %v236
  %v556 = vpop.f32.mrf.mxu0
  %v557 = vadd.f32 %v304, %v556
  %v558 = vpop.f32.mrf.mxu0
  %v559 = vadd.f32 %v304, %v558
  %560 = vdwg.mxu0
  %561 = vmatpush.bf16.xpose.msra.mxu0 %v462
  %562 = vmatpush.bf16.xpose.msra.mxu0 %v461
  %563 = vmatpush.bf16.xpose.msra.mxu0 %v460
  %564 = vmatpush.bf16.xpose.msra.mxu0 %v459
  %565 = vmatpush.bf16.xpose.msra.mxu0 %v458
  %566 = vmatpush.bf16.xpose.msra.mxu0 %v457
  %567 = vmatpush.bf16.xpose.msra.mxu0 %v456
  %568 = vmatpush.bf16.xpose.msra.mxu0 %v455
  %569 = vmatmul.bf16.gmra.mxu0 %v233
  %v570 = vpop.f32.mrf.mxu0
  %v571 = vadd.f32 %v305, %v570
  %v572 = vpop.f32.mrf.mxu0
  %v573 = vadd.f32 %v305, %v572
  %574 = vmatmul.bf16.gmra.mxu0 %v234
  %v575 = vpop.f32.mrf.mxu0
  %v576 = vadd.f32 %v305, %v575
  %v577 = vpop.f32.mrf.mxu0
  %v578 = vadd.f32 %v305, %v577
  %579 = vmatmul.bf16.gmra.mxu0 %v235
  %v580 = vpop.f32.mrf.mxu0
  %v581 = vadd.f32 %v305, %v580
  %v582 = vpop.f32.mrf.mxu0
  %v583 = vadd.f32 %v305, %v582
  %584 = vmatmul.bf16.gmra.mxu0 %v236
  %v585 = vpop.f32.mrf.mxu0
  %v586 = vadd.f32 %v305, %v585
  %v587 = vpop.f32.mrf.mxu0
  %v588 = vadd.f32 %v305, %v587
  %589 = vdwg.mxu0
  %590 = vmatpush.bf16.xpose.msra.mxu0 %v470
  %591 = vmatpush.bf16.xpose.msra.mxu0 %v469
  %592 = vmatpush.bf16.xpose.msra.mxu0 %v468
  %593 = vmatpush.bf16.xpose.msra.mxu0 %v467
  %594 = vmatpush.bf16.xpose.msra.mxu0 %v466
  %595 = vmatpush.bf16.xpose.msra.mxu0 %v465
  %596 = vmatpush.bf16.xpose.msra.mxu0 %v464
  %597 = vmatpush.bf16.xpose.msra.mxu0 %v463
  %598 = vmatmul.bf16.gmra.mxu0 %v233
  %v599 = vpop.f32.mrf.mxu0
  %v600 = vadd.f32 %v306, %v599
  %v601 = vpop.f32.mrf.mxu0
  %v602 = vadd.f32 %v306, %v601
  %603 = vmatmul.bf16.gmra.mxu0 %v234
  %v604 = vpop.f32.mrf.mxu0
  %v605 = vadd.f32 %v306, %v604
  %v606 = vpop.f32.mrf.mxu0
  %v607 = vadd.f32 %v306, %v606
  %608 = vmatmul.bf16.gmra.mxu0 %v235
  %v609 = vpop.f32.mrf.mxu0
  %v610 = vadd.f32 %v306, %v609
  %v611 = vpop.f32.mrf.mxu0
  %v612 = vadd.f32 %v306, %v611
  %613 = vmatmul.bf16.gmra.mxu0 %v236
  %v614 = vpop.f32.mrf.mxu0
  %v615 = vadd.f32 %v306, %v614
  %v616 = vpop.f32.mrf.mxu0
  %v617 = vadd.f32 %v306, %v616
  %618 = vdwg.mxu0
  %v619 = vmul.f32 %v513, 0.5
  %v620 = vmul.f32 %v542, 0.5
  %v621 = vmul.f32 %v571, 0.5
  %v622 = vmul.f32 %v600, 0.5
  %v623 = vmul.f32 %v515, 0.5
  %v624 = vmul.f32 %v544, 0.5
  %v625 = vmul.f32 %v573, 0.5
  %v626 = vmul.f32 %v602, 0.5
  %v627 = vmul.f32 %v518, 0.5
  %v628 = vmul.f32 %v547, 0.5
  %v629 = vmul.f32 %v576, 0.5
  %v630 = vmul.f32 %v605, 0.5
  %v631 = vmul.f32 %v520, 0.5
  %v632 = vmul.f32 %v549, 0.5
  %v633 = vmul.f32 %v578, 0.5
  %v634 = vmul.f32 %v607, 0.5
  %v635 = vmul.f32 %v523, 0.5
  %v636 = vmul.f32 %v552, 0.5
  %v637 = vmul.f32 %v581, 0.5
  %v638 = vmul.f32 %v610, 0.5
  %v639 = vmul.f32 %v525, 0.5
  %v640 = vmul.f32 %v554, 0.5
  %v641 = vmul.f32 %v583, 0.5
  %v642 = vmul.f32 %v612, 0.5
  %v643 = vmul.f32 %v528, 0.5
  %v644 = vmul.f32 %v557, 0.5
  %v645 = vmul.f32 %v586, 0.5
  %v646 = vmul.f32 %v615, 0.5
  %v647 = vmul.f32 %v530, 0.5
  %v648 = vmul.f32 %v559, 0.5
  %v649 = vmul.f32 %v588, 0.5
  %v650 = vmul.f32 %v617, 0.5
  %v651 = vmul.f32 %v513, 0.70710677
  %v652 = vmul.f32 %v542, 0.70710677
  %v653 = vmul.f32 %v571, 0.70710677
  %v654 = vmul.f32 %v600, 0.70710677
  %v655 = vmul.f32 %v515, 0.70710677
  %v656 = vmul.f32 %v544, 0.70710677
  %v657 = vmul.f32 %v573, 0.70710677
  %v658 = vmul.f32 %v602, 0.70710677
  %v659 = vmul.f32 %v518, 0.70710677
  %v660 = vmul.f32 %v547, 0.70710677
  %v661 = vmul.f32 %v576, 0.70710677
  %v662 = vmul.f32 %v605, 0.70710677
  %v663 = vmul.f32 %v520, 0.70710677
  %v664 = vmul.f32 %v549, 0.70710677
  %v665 = vmul.f32 %v578, 0.70710677
  %v666 = vmul.f32 %v607, 0.70710677
  %v667 = vmul.f32 %v523, 0.70710677
  %v668 = vmul.f32 %v552, 0.70710677
  %v669 = vmul.f32 %v581, 0.70710677
  %v670 = vmul.f32 %v610, 0.70710677
  %v671 = vmul.f32 %v525, 0.70710677
  %v672 = vmul.f32 %v554, 0.70710677
  %v673 = vmul.f32 %v583, 0.70710677
  %v674 = vmul.f32 %v612, 0.70710677
  %v675 = vmul.f32 %v528, 0.70710677
  %v676 = vmul.f32 %v557, 0.70710677
  %v677 = vmul.f32 %v586, 0.70710677
  %v678 = vmul.f32 %v615, 0.70710677
  %v679 = vmul.f32 %v530, 0.70710677
  %v680 = vmul.f32 %v559, 0.70710677
  %v681 = vmul.f32 %v588, 0.70710677
  %v682 = vmul.f32 %v617, 0.70710677
  %v683 = vmul.f32 %v651, %v651
  %v684 = vmin.f32 16.0, %v683
  %v685 = vmul.f32 %v684, 2.1237322e-06
  %v686 = vadd.f32 %v685, 0.00028619796
  %v687 = vmul.f32 %v684, %v686
  %v688 = vadd.f32 %v687, 0.0036580483
  %v689 = vmul.f32 %v684, %v688
  %v690 = vadd.f32 %v689, 0.05243302
  %v691 = vmul.f32 %v684, %v690
  %v692 = vadd.f32 %v691, 0.18741608
  %v693 = vmul.f32 %v684, %v692
  %v694 = vadd.f32 %v693, 1.1283791
  %v695 = vmul.f32 %v651, %v694
  %v696 = vmul.f32 %v684, 3.8918573e-05
  %v697 = vadd.f32 %v696, 0.001143296
  %v698 = vmul.f32 %v684, %v697
  %v699 = vadd.f32 %v698, 0.014752088
  %v700 = vmul.f32 %v684, %v699
  %v701 = vadd.f32 %v700, 0.112945676
  %v702 = vmul.f32 %v684, %v701
  %v703 = vadd.f32 %v702, 0.4994258
  %v704 = vmul.f32 %v684, %v703
  %v705 = vadd.f32 %v704, 1.0
  %v706 = vrcp.pop %v705
  %v707 = vmul.f32 %v705, %v706
  %v708 = vsub.f32 1.0, %v707
  %v709 = vmul.f32 %v706, %v708
  %v710 = vadd.f32 %v706, %v709
  %vm711 = vweird.f32 %v705
  %vm712 = vweird.f32 %v706
  %vm713 = vmor %vm711, %vm712
  %v714 = vsel %vm713, %v706, %v710
  %v715 = vand.u32 2147483647, %v705
  %vm716 = vcmp.eq.f32.partialorder %v715, 8.507059e+37
  %v717 = vand.u32 %v705, 2147483648
  %v718 = vor.u32 1.1754944e-38, %v717
  %v719 = vsel %vm716, %v718, %v714
  %v720 = vmul.f32 %v695, %v719
  %v721 = vmin.f32 %v720, 1.0
  %v722 = vmax.f32 %v721, -1.0
  %v723 = vmul.f32 %v652, %v652
  %v724 = vmin.f32 16.0, %v723
  %v725 = vmul.f32 %v724, 2.1237322e-06
  %v726 = vadd.f32 %v725, 0.00028619796
  %v727 = vmul.f32 %v724, %v726
  %v728 = vadd.f32 %v727, 0.0036580483
  %v729 = vmul.f32 %v724, %v728
  %v730 = vadd.f32 %v729, 0.05243302
  %v731 = vmul.f32 %v724, %v730
  %v732 = vadd.f32 %v731, 0.18741608
  %v733 = vmul.f32 %v724, %v732
  %v734 = vadd.f32 %v733, 1.1283791
  %v735 = vmul.f32 %v652, %v734
  %v736 = vmul.f32 %v724, 3.8918573e-05
  %v737 = vadd.f32 %v736, 0.001143296
  %v738 = vmul.f32 %v724, %v737
  %v739 = vadd.f32 %v738, 0.014752088
  %v740 = vmul.f32 %v724, %v739
  %v741 = vadd.f32 %v740, 0.112945676
  %v742 = vmul.f32 %v724, %v741
  %v743 = vadd.f32 %v742, 0.4994258
  %v744 = vmul.f32 %v724, %v743
  %v745 = vadd.f32 %v744, 1.0
  %v746 = vrcp.pop %v745
  %v747 = vmul.f32 %v745, %v746
  %v748 = vsub.f32 1.0, %v747
  %v749 = vmul.f32 %v746, %v748
  %v750 = vadd.f32 %v746, %v749
  %vm751 = vweird.f32 %v745
  %vm752 = vweird.f32 %v746
  %vm753 = vmor %vm751, %vm752
  %v754 = vsel %vm753, %v746, %v750
  %v755 = vand.u32 2147483647, %v745
  %vm756 = vcmp.eq.f32.partialorder %v755, 8.507059e+37
  %v757 = vand.u32 %v745, 2147483648
  %v758 = vor.u32 1.1754944e-38, %v757
  %v759 = vsel %vm756, %v758, %v754
  %v760 = vmul.f32 %v735, %v759
  %v761 = vmin.f32 %v760, 1.0
  %v762 = vmax.f32 %v761, -1.0
  %v763 = vmul.f32 %v653, %v653
  %v764 = vmin.f32 16.0, %v763
  %v765 = vmul.f32 %v764, 2.1237322e-06
  %v766 = vadd.f32 %v765, 0.00028619796
  %v767 = vmul.f32 %v764, %v766
  %v768 = vadd.f32 %v767, 0.0036580483
  %v769 = vmul.f32 %v764, %v768
  %v770 = vadd.f32 %v769, 0.05243302
  %v771 = vmul.f32 %v764, %v770
  %v772 = vadd.f32 %v771, 0.18741608
  %v773 = vmul.f32 %v764, %v772
  %v774 = vadd.f32 %v773, 1.1283791
  %v775 = vmul.f32 %v653, %v774
  %v776 = vmul.f32 %v764, 3.8918573e-05
  %v777 = vadd.f32 %v776, 0.001143296
  %v778 = vmul.f32 %v764, %v777
  %v779 = vadd.f32 %v778, 0.014752088
  %v780 = vmul.f32 %v764, %v779
  %v781 = vadd.f32 %v780, 0.112945676
  %v782 = vmul.f32 %v764, %v781
  %v783 = vadd.f32 %v782, 0.4994258
  %v784 = vmul.f32 %v764, %v783
  %v785 = vadd.f32 %v784, 1.0
  %v786 = vrcp.pop %v785
  %v787 = vmul.f32 %v785, %v786
  %v788 = vsub.f32 1.0, %v787
  %v789 = vmul.f32 %v786, %v788
  %v790 = vadd.f32 %v786, %v789
  %vm791 = vweird.f32 %v785
  %vm792 = vweird.f32 %v786
  %vm793 = vmor %vm791, %vm792
  %v794 = vsel %vm793, %v786, %v790
  %v795 = vand.u32 2147483647, %v785
  %vm796 = vcmp.eq.f32.partialorder %v795, 8.507059e+37
  %v797 = vand.u32 %v785, 2147483648
  %v798 = vor.u32 1.1754944e-38, %v797
  %v799 = vsel %vm796, %v798, %v794
  %v800 = vmul.f32 %v775, %v799
  %v801 = vmin.f32 %v800, 1.0
  %v802 = vmax.f32 %v801, -1.0
  %v803 = vmul.f32 %v654, %v654
  %v804 = vmin.f32 16.0, %v803
  %v805 = vmul.f32 %v804, 2.1237322e-06
  %v806 = vadd.f32 %v805, 0.00028619796
  %v807 = vmul.f32 %v804, %v806
  %v808 = vadd.f32 %v807, 0.0036580483
  %v809 = vmul.f32 %v804, %v808
  %v810 = vadd.f32 %v809, 0.05243302
  %v811 = vmul.f32 %v804, %v810
  %v812 = vadd.f32 %v811, 0.18741608
  %v813 = vmul.f32 %v804, %v812
  %v814 = vadd.f32 %v813, 1.1283791
  %v815 = vmul.f32 %v654, %v814
  %v816 = vmul.f32 %v804, 3.8918573e-05
  %v817 = vadd.f32 %v816, 0.001143296
  %v818 = vmul.f32 %v804, %v817
  %v819 = vadd.f32 %v818, 0.014752088
  %v820 = vmul.f32 %v804, %v819
  %v821 = vadd.f32 %v820, 0.112945676
  %v822 = vmul.f32 %v804, %v821
  %v823 = vadd.f32 %v822, 0.4994258
  %v824 = vmul.f32 %v804, %v823
  %v825 = vadd.f32 %v824, 1.0
  %v826 = vrcp.pop %v825
  %v827 = vmul.f32 %v825, %v826
  %v828 = vsub.f32 1.0, %v827
  %v829 = vmul.f32 %v826, %v828
  %v830 = vadd.f32 %v826, %v829
  %vm831 = vweird.f32 %v825
  %vm832 = vweird.f32 %v826
  %vm833 = vmor %vm831, %vm832
  %v834 = vsel %vm833, %v826, %v830
  %v835 = vand.u32 2147483647, %v825
  %vm836 = vcmp.eq.f32.partialorder %v835, 8.507059e+37
  %v837 = vand.u32 %v825, 2147483648
  %v838 = vor.u32 1.1754944e-38, %v837
  %v839 = vsel %vm836, %v838, %v834
  %v840 = vmul.f32 %v815, %v839
  %v841 = vmin.f32 %v840, 1.0
  %v842 = vmax.f32 %v841, -1.0
  %v843 = vmul.f32 %v655, %v655
  %v844 = vmin.f32 16.0, %v843
  %v845 = vmul.f32 %v844, 2.1237322e-06
  %v846 = vadd.f32 %v845, 0.00028619796
  %v847 = vmul.f32 %v844, %v846
  %v848 = vadd.f32 %v847, 0.0036580483
  %v849 = vmul.f32 %v844, %v848
  %v850 = vadd.f32 %v849, 0.05243302
  %v851 = vmul.f32 %v844, %v850
  %v852 = vadd.f32 %v851, 0.18741608
  %v853 = vmul.f32 %v844, %v852
  %v854 = vadd.f32 %v853, 1.1283791
  %v855 = vmul.f32 %v655, %v854
  %v856 = vmul.f32 %v844, 3.8918573e-05
  %v857 = vadd.f32 %v856, 0.001143296
  %v858 = vmul.f32 %v844, %v857
  %v859 = vadd.f32 %v858, 0.014752088
  %v860 = vmul.f32 %v844, %v859
  %v861 = vadd.f32 %v860, 0.112945676
  %v862 = vmul.f32 %v844, %v861
  %v863 = vadd.f32 %v862, 0.4994258
  %v864 = vmul.f32 %v844, %v863
  %v865 = vadd.f32 %v864, 1.0
  %v866 = vrcp.pop %v865
  %v867 = vmul.f32 %v865, %v866
  %v868 = vsub.f32 1.0, %v867
  %v869 = vmul.f32 %v866, %v868
  %v870 = vadd.f32 %v866, %v869
  %vm871 = vweird.f32 %v865
  %vm872 = vweird.f32 %v866
  %vm873 = vmor %vm871, %vm872
  %v874 = vsel %vm873, %v866, %v870
  %v875 = vand.u32 2147483647, %v865
  %vm876 = vcmp.eq.f32.partialorder %v875, 8.507059e+37
  %v877 = vand.u32 %v865, 2147483648
  %v878 = vor.u32 1.1754944e-38, %v877
  %v879 = vsel %vm876, %v878, %v874
  %v880 = vmul.f32 %v855, %v879
  %v881 = vmin.f32 %v880, 1.0
  %v882 = vmax.f32 %v881, -1.0
  %v883 = vmul.f32 %v656, %v656
  %v884 = vmin.f32 16.0, %v883
  %v885 = vmul.f32 %v884, 2.1237322e-06
  %v886 = vadd.f32 %v885, 0.00028619796
  %v887 = vmul.f32 %v884, %v886
  %v888 = vadd.f32 %v887, 0.0036580483
  %v889 = vmul.f32 %v884, %v888
  %v890 = vadd.f32 %v889, 0.05243302
  %v891 = vmul.f32 %v884, %v890
  %v892 = vadd.f32 %v891, 0.18741608
  %v893 = vmul.f32 %v884, %v892
  %v894 = vadd.f32 %v893, 1.1283791
  %v895 = vmul.f32 %v656, %v894
  %v896 = vmul.f32 %v884, 3.8918573e-05
  %v897 = vadd.f32 %v896, 0.001143296
  %v898 = vmul.f32 %v884, %v897
  %v899 = vadd.f32 %v898, 0.014752088
  %v900 = vmul.f32 %v884, %v899
  %v901 = vadd.f32 %v900, 0.112945676
  %v902 = vmul.f32 %v884, %v901
  %v903 = vadd.f32 %v902, 0.4994258
  %v904 = vmul.f32 %v884, %v903
  %v905 = vadd.f32 %v904, 1.0
  %v906 = vrcp.pop %v905
  %v907 = vmul.f32 %v905, %v906
  %v908 = vsub.f32 1.0, %v907
  %v909 = vmul.f32 %v906, %v908
  %v910 = vadd.f32 %v906, %v909
  %vm911 = vweird.f32 %v905
  %vm912 = vweird.f32 %v906
  %vm913 = vmor %vm911, %vm912
  %v914 = vsel %vm913, %v906, %v910
  %v915 = vand.u32 2147483647, %v905
  %vm916 = vcmp.eq.f32.partialorder %v915, 8.507059e+37
  %v917 = vand.u32 %v905, 2147483648
  %v918 = vor.u32 1.1754944e-38, %v917
  %v919 = vsel %vm916, %v918, %v914
  %v920 = vmul.f32 %v895, %v919
  %v921 = vmin.f32 %v920, 1.0
  %v922 = vmax.f32 %v921, -1.0
  %v923 = vmul.f32 %v657, %v657
  %v924 = vmin.f32 16.0, %v923
  %v925 = vmul.f32 %v924, 2.1237322e-06
  %v926 = vadd.f32 %v925, 0.00028619796
  %v927 = vmul.f32 %v924, %v926
  %v928 = vadd.f32 %v927, 0.0036580483
  %v929 = vmul.f32 %v924, %v928
  %v930 = vadd.f32 %v929, 0.05243302
  %v931 = vmul.f32 %v924, %v930
  %v932 = vadd.f32 %v931, 0.18741608
  %v933 = vmul.f32 %v924, %v932
  %v934 = vadd.f32 %v933, 1.1283791
  %v935 = vmul.f32 %v657, %v934
  %v936 = vmul.f32 %v924, 3.8918573e-05
  %v937 = vadd.f32 %v936, 0.001143296
  %v938 = vmul.f32 %v924, %v937
  %v939 = vadd.f32 %v938, 0.014752088
  %v940 = vmul.f32 %v924, %v939
  %v941 = vadd.f32 %v940, 0.112945676
  %v942 = vmul.f32 %v924, %v941
  %v943 = vadd.f32 %v942, 0.4994258
  %v944 = vmul.f32 %v924, %v943
  %v945 = vadd.f32 %v944, 1.0
  %v946 = vrcp.pop %v945
  %v947 = vmul.f32 %v945, %v946
  %v948 = vsub.f32 1.0, %v947
  %v949 = vmul.f32 %v946, %v948
  %v950 = vadd.f32 %v946, %v949
  %vm951 = vweird.f32 %v945
  %vm952 = vweird.f32 %v946
  %vm953 = vmor %vm951, %vm952
  %v954 = vsel %vm953, %v946, %v950
  %v955 = vand.u32 2147483647, %v945
  %vm956 = vcmp.eq.f32.partialorder %v955, 8.507059e+37
  %v957 = vand.u32 %v945, 2147483648
  %v958 = vor.u32 1.1754944e-38, %v957
  %v959 = vsel %vm956, %v958, %v954
  %v960 = vmul.f32 %v935, %v959
  %v961 = vmin.f32 %v960, 1.0
  %v962 = vmax.f32 %v961, -1.0
  %v963 = vmul.f32 %v658, %v658
  %v964 = vmin.f32 16.0, %v963
  %v965 = vmul.f32 %v964, 2.1237322e-06
  %v966 = vadd.f32 %v965, 0.00028619796
  %v967 = vmul.f32 %v964, %v966
  %v968 = vadd.f32 %v967, 0.0036580483
  %v969 = vmul.f32 %v964, %v968
  %v970 = vadd.f32 %v969, 0.05243302
  %v971 = vmul.f32 %v964, %v970
  %v972 = vadd.f32 %v971, 0.18741608
  %v973 = vmul.f32 %v964, %v972
  %v974 = vadd.f32 %v973, 1.1283791
  %v975 = vmul.f32 %v658, %v974
  %v976 = vmul.f32 %v964, 3.8918573e-05
  %v977 = vadd.f32 %v976, 0.001143296
  %v978 = vmul.f32 %v964, %v977
  %v979 = vadd.f32 %v978, 0.014752088
  %v980 = vmul.f32 %v964, %v979
  %v981 = vadd.f32 %v980, 0.112945676
  %v982 = vmul.f32 %v964, %v981
  %v983 = vadd.f32 %v982, 0.4994258
  %v984 = vmul.f32 %v964, %v983
  %v985 = vadd.f32 %v984, 1.0
  %v986 = vrcp.pop %v985
  %v987 = vmul.f32 %v985, %v986
  %v988 = vsub.f32 1.0, %v987
  %v989 = vmul.f32 %v986, %v988
  %v990 = vadd.f32 %v986, %v989
  %vm991 = vweird.f32 %v985
  %vm992 = vweird.f32 %v986
  %vm993 = vmor %vm991, %vm992
  %v994 = vsel %vm993, %v986, %v990
  %v995 = vand.u32 2147483647, %v985
  %vm996 = vcmp.eq.f32.partialorder %v995, 8.507059e+37
  %v997 = vand.u32 %v985, 2147483648
  %v998 = vor.u32 1.1754944e-38, %v997
  %v999 = vsel %vm996, %v998, %v994
  %v1000 = vmul.f32 %v975, %v999
  %v1001 = vmin.f32 %v1000, 1.0
  %v1002 = vmax.f32 %v1001, -1.0
  %v1003 = vmul.f32 %v659, %v659
  %v1004 = vmin.f32 16.0, %v1003
  %v1005 = vmul.f32 %v1004, 2.1237322e-06
  %v1006 = vadd.f32 %v1005, 0.00028619796
  %v1007 = vmul.f32 %v1004, %v1006
  %v1008 = vadd.f32 %v1007, 0.0036580483
  %v1009 = vmul.f32 %v1004, %v1008
  %v1010 = vadd.f32 %v1009, 0.05243302
  %v1011 = vmul.f32 %v1004, %v1010
  %v1012 = vadd.f32 %v1011, 0.18741608
  %v1013 = vmul.f32 %v1004, %v1012
  %v1014 = vadd.f32 %v1013, 1.1283791
  %v1015 = vmul.f32 %v659, %v1014
  %v1016 = vmul.f32 %v1004, 3.8918573e-05
  %v1017 = vadd.f32 %v1016, 0.001143296
  %v1018 = vmul.f32 %v1004, %v1017
  %v1019 = vadd.f32 %v1018, 0.014752088
  %v1020 = vmul.f32 %v1004, %v1019
  %v1021 = vadd.f32 %v1020, 0.112945676
  %v1022 = vmul.f32 %v1004, %v1021
  %v1023 = vadd.f32 %v1022, 0.4994258
  %v1024 = vmul.f32 %v1004, %v1023
  %v1025 = vadd.f32 %v1024, 1.0
  %v1026 = vrcp.pop %v1025
  %v1027 = vmul.f32 %v1025, %v1026
  %v1028 = vsub.f32 1.0, %v1027
  %v1029 = vmul.f32 %v1026, %v1028
  %v1030 = vadd.f32 %v1026, %v1029
  %vm1031 = vweird.f32 %v1025
  %vm1032 = vweird.f32 %v1026
  %vm1033 = vmor %vm1031, %vm1032
  %v1034 = vsel %vm1033, %v1026, %v1030
  %v1035 = vand.u32 2147483647, %v1025
  %vm1036 = vcmp.eq.f32.partialorder %v1035, 8.507059e+37
  %v1037 = vand.u32 %v1025, 2147483648
  %v1038 = vor.u32 1.1754944e-38, %v1037
  %v1039 = vsel %vm1036, %v1038, %v1034
  %v1040 = vmul.f32 %v1015, %v1039
  %v1041 = vmin.f32 %v1040, 1.0
  %v1042 = vmax.f32 %v1041, -1.0
  %v1043 = vmul.f32 %v660, %v660
  %v1044 = vmin.f32 16.0, %v1043
  %v1045 = vmul.f32 %v1044, 2.1237322e-06
  %v1046 = vadd.f32 %v1045, 0.00028619796
  %v1047 = vmul.f32 %v1044, %v1046
  %v1048 = vadd.f32 %v1047, 0.0036580483
  %v1049 = vmul.f32 %v1044, %v1048
  %v1050 = vadd.f32 %v1049, 0.05243302
  %v1051 = vmul.f32 %v1044, %v1050
  %v1052 = vadd.f32 %v1051, 0.18741608
  %v1053 = vmul.f32 %v1044, %v1052
  %v1054 = vadd.f32 %v1053, 1.1283791
  %v1055 = vmul.f32 %v660, %v1054
  %v1056 = vmul.f32 %v1044, 3.8918573e-05
  %v1057 = vadd.f32 %v1056, 0.001143296
  %v1058 = vmul.f32 %v1044, %v1057
  %v1059 = vadd.f32 %v1058, 0.014752088
  %v1060 = vmul.f32 %v1044, %v1059
  %v1061 = vadd.f32 %v1060, 0.112945676
  %v1062 = vmul.f32 %v1044, %v1061
  %v1063 = vadd.f32 %v1062, 0.4994258
  %v1064 = vmul.f32 %v1044, %v1063
  %v1065 = vadd.f32 %v1064, 1.0
  %v1066 = vrcp.pop %v1065
  %v1067 = vmul.f32 %v1065, %v1066
  %v1068 = vsub.f32 1.0, %v1067
  %v1069 = vmul.f32 %v1066, %v1068
  %v1070 = vadd.f32 %v1066, %v1069
  %vm1071 = vweird.f32 %v1065
  %vm1072 = vweird.f32 %v1066
  %vm1073 = vmor %vm1071, %vm1072
  %v1074 = vsel %vm1073, %v1066, %v1070
  %v1075 = vand.u32 2147483647, %v1065
  %vm1076 = vcmp.eq.f32.partialorder %v1075, 8.507059e+37
  %v1077 = vand.u32 %v1065, 2147483648
  %v1078 = vor.u32 1.1754944e-38, %v1077
  %v1079 = vsel %vm1076, %v1078, %v1074
  %v1080 = vmul.f32 %v1055, %v1079
  %v1081 = vmin.f32 %v1080, 1.0
  %v1082 = vmax.f32 %v1081, -1.0
  %v1083 = vmul.f32 %v661, %v661
  %v1084 = vmin.f32 16.0, %v1083
  %v1085 = vmul.f32 %v1084, 2.1237322e-06
  %v1086 = vadd.f32 %v1085, 0.00028619796
  %v1087 = vmul.f32 %v1084, %v1086
  %v1088 = vadd.f32 %v1087, 0.0036580483
  %v1089 = vmul.f32 %v1084, %v1088
  %v1090 = vadd.f32 %v1089, 0.05243302
  %v1091 = vmul.f32 %v1084, %v1090
  %v1092 = vadd.f32 %v1091, 0.18741608
  %v1093 = vmul.f32 %v1084, %v1092
  %v1094 = vadd.f32 %v1093, 1.1283791
  %v1095 = vmul.f32 %v661, %v1094
  %v1096 = vmul.f32 %v1084, 3.8918573e-05
  %v1097 = vadd.f32 %v1096, 0.001143296
  %v1098 = vmul.f32 %v1084, %v1097
  %v1099 = vadd.f32 %v1098, 0.014752088
  %v1100 = vmul.f32 %v1084, %v1099
  %v1101 = vadd.f32 %v1100, 0.112945676
  %v1102 = vmul.f32 %v1084, %v1101
  %v1103 = vadd.f32 %v1102, 0.4994258
  %v1104 = vmul.f32 %v1084, %v1103
  %v1105 = vadd.f32 %v1104, 1.0
  %v1106 = vrcp.pop %v1105
  %v1107 = vmul.f32 %v1105, %v1106
  %v1108 = vsub.f32 1.0, %v1107
  %v1109 = vmul.f32 %v1106, %v1108
  %v1110 = vadd.f32 %v1106, %v1109
  %vm1111 = vweird.f32 %v1105
  %vm1112 = vweird.f32 %v1106
  %vm1113 = vmor %vm1111, %vm1112
  %v1114 = vsel %vm1113, %v1106, %v1110
  %v1115 = vand.u32 2147483647, %v1105
  %vm1116 = vcmp.eq.f32.partialorder %v1115, 8.507059e+37
  %v1117 = vand.u32 %v1105, 2147483648
  %v1118 = vor.u32 1.1754944e-38, %v1117
  %v1119 = vsel %vm1116, %v1118, %v1114
  %v1120 = vmul.f32 %v1095, %v1119
  %v1121 = vmin.f32 %v1120, 1.0
  %v1122 = vmax.f32 %v1121, -1.0
  %v1123 = vmul.f32 %v662, %v662
  %v1124 = vmin.f32 16.0, %v1123
  %v1125 = vmul.f32 %v1124, 2.1237322e-06
  %v1126 = vadd.f32 %v1125, 0.00028619796
  %v1127 = vmul.f32 %v1124, %v1126
  %v1128 = vadd.f32 %v1127, 0.0036580483
  %v1129 = vmul.f32 %v1124, %v1128
  %v1130 = vadd.f32 %v1129, 0.05243302
  %v1131 = vmul.f32 %v1124, %v1130
  %v1132 = vadd.f32 %v1131, 0.18741608
  %v1133 = vmul.f32 %v1124, %v1132
  %v1134 = vadd.f32 %v1133, 1.1283791
  %v1135 = vmul.f32 %v662, %v1134
  %v1136 = vmul.f32 %v1124, 3.8918573e-05
  %v1137 = vadd.f32 %v1136, 0.001143296
  %v1138 = vmul.f32 %v1124, %v1137
  %v1139 = vadd.f32 %v1138, 0.014752088
  %v1140 = vmul.f32 %v1124, %v1139
  %v1141 = vadd.f32 %v1140, 0.112945676
  %v1142 = vmul.f32 %v1124, %v1141
  %v1143 = vadd.f32 %v1142, 0.4994258
  %v1144 = vmul.f32 %v1124, %v1143
  %v1145 = vadd.f32 %v1144, 1.0
  %v1146 = vrcp.pop %v1145
  %v1147 = vmul.f32 %v1145, %v1146
  %v1148 = vsub.f32 1.0, %v1147
  %v1149 = vmul.f32 %v1146, %v1148
  %v1150 = vadd.f32 %v1146, %v1149
  %vm1151 = vweird.f32 %v1145
  %vm1152 = vweird.f32 %v1146
  %vm1153 = vmor %vm1151, %vm1152
  %v1154 = vsel %vm1153, %v1146, %v1150
  %v1155 = vand.u32 2147483647, %v1145
  %vm1156 = vcmp.eq.f32.partialorder %v1155, 8.507059e+37
  %v1157 = vand.u32 %v1145, 2147483648
  %v1158 = vor.u32 1.1754944e-38, %v1157
  %v1159 = vsel %vm1156, %v1158, %v1154
  %v1160 = vmul.f32 %v1135, %v1159
  %v1161 = vmin.f32 %v1160, 1.0
  %v1162 = vmax.f32 %v1161, -1.0
  %v1163 = vmul.f32 %v663, %v663
  %v1164 = vmin.f32 16.0, %v1163
  %v1165 = vmul.f32 %v1164, 2.1237322e-06
  %v1166 = vadd.f32 %v1165, 0.00028619796
  %v1167 = vmul.f32 %v1164, %v1166
  %v1168 = vadd.f32 %v1167, 0.0036580483
  %v1169 = vmul.f32 %v1164, %v1168
  %v1170 = vadd.f32 %v1169, 0.05243302
  %v1171 = vmul.f32 %v1164, %v1170
  %v1172 = vadd.f32 %v1171, 0.18741608
  %v1173 = vmul.f32 %v1164, %v1172
  %v1174 = vadd.f32 %v1173, 1.1283791
  %v1175 = vmul.f32 %v663, %v1174
  %v1176 = vmul.f32 %v1164, 3.8918573e-05
  %v1177 = vadd.f32 %v1176, 0.001143296
  %v1178 = vmul.f32 %v1164, %v1177
  %v1179 = vadd.f32 %v1178, 0.014752088
  %v1180 = vmul.f32 %v1164, %v1179
  %v1181 = vadd.f32 %v1180, 0.112945676
  %v1182 = vmul.f32 %v1164, %v1181
  %v1183 = vadd.f32 %v1182, 0.4994258
  %v1184 = vmul.f32 %v1164, %v1183
  %v1185 = vadd.f32 %v1184, 1.0
  %v1186 = vrcp.pop %v1185
  %v1187 = vmul.f32 %v1185, %v1186
  %v1188 = vsub.f32 1.0, %v1187
  %v1189 = vmul.f32 %v1186, %v1188
  %v1190 = vadd.f32 %v1186, %v1189
  %vm1191 = vweird.f32 %v1185
  %vm1192 = vweird.f32 %v1186
  %vm1193 = vmor %vm1191, %vm1192
  %v1194 = vsel %vm1193, %v1186, %v1190
  %v1195 = vand.u32 2147483647, %v1185
  %vm1196 = vcmp.eq.f32.partialorder %v1195, 8.507059e+37
  %v1197 = vand.u32 %v1185, 2147483648
  %v1198 = vor.u32 1.1754944e-38, %v1197
  %v1199 = vsel %vm1196, %v1198, %v1194
  %v1200 = vmul.f32 %v1175, %v1199
  %v1201 = vmin.f32 %v1200, 1.0
  %v1202 = vmax.f32 %v1201, -1.0
  %v1203 = vmul.f32 %v664, %v664
  %v1204 = vmin.f32 16.0, %v1203
  %v1205 = vmul.f32 %v1204, 2.1237322e-06
  %v1206 = vadd.f32 %v1205, 0.00028619796
  %v1207 = vmul.f32 %v1204, %v1206
  %v1208 = vadd.f32 %v1207, 0.0036580483
  %v1209 = vmul.f32 %v1204, %v1208
  %v1210 = vadd.f32 %v1209, 0.05243302
  %v1211 = vmul.f32 %v1204, %v1210
  %v1212 = vadd.f32 %v1211, 0.18741608
  %v1213 = vmul.f32 %v1204, %v1212
  %v1214 = vadd.f32 %v1213, 1.1283791
  %v1215 = vmul.f32 %v664, %v1214
  %v1216 = vmul.f32 %v1204, 3.8918573e-05
  %v1217 = vadd.f32 %v1216, 0.001143296
  %v1218 = vmul.f32 %v1204, %v1217
  %v1219 = vadd.f32 %v1218, 0.014752088
  %v1220 = vmul.f32 %v1204, %v1219
  %v1221 = vadd.f32 %v1220, 0.112945676
  %v1222 = vmul.f32 %v1204, %v1221
  %v1223 = vadd.f32 %v1222, 0.4994258
  %v1224 = vmul.f32 %v1204, %v1223
  %v1225 = vadd.f32 %v1224, 1.0
  %v1226 = vrcp.pop %v1225
  %v1227 = vmul.f32 %v1225, %v1226
  %v1228 = vsub.f32 1.0, %v1227
  %v1229 = vmul.f32 %v1226, %v1228
  %v1230 = vadd.f32 %v1226, %v1229
  %vm1231 = vweird.f32 %v1225
  %vm1232 = vweird.f32 %v1226
  %vm1233 = vmor %vm1231, %vm1232
  %v1234 = vsel %vm1233, %v1226, %v1230
  %v1235 = vand.u32 2147483647, %v1225
  %vm1236 = vcmp.eq.f32.partialorder %v1235, 8.507059e+37
  %v1237 = vand.u32 %v1225, 2147483648
  %v1238 = vor.u32 1.1754944e-38, %v1237
  %v1239 = vsel %vm1236, %v1238, %v1234
  %v1240 = vmul.f32 %v1215, %v1239
  %v1241 = vmin.f32 %v1240, 1.0
  %v1242 = vmax.f32 %v1241, -1.0
  %v1243 = vmul.f32 %v665, %v665
  %v1244 = vmin.f32 16.0, %v1243
  %v1245 = vmul.f32 %v1244, 2.1237322e-06
  %v1246 = vadd.f32 %v1245, 0.00028619796
  %v1247 = vmul.f32 %v1244, %v1246
  %v1248 = vadd.f32 %v1247, 0.0036580483
  %v1249 = vmul.f32 %v1244, %v1248
  %v1250 = vadd.f32 %v1249, 0.05243302
  %v1251 = vmul.f32 %v1244, %v1250
  %v1252 = vadd.f32 %v1251, 0.18741608
  %v1253 = vmul.f32 %v1244, %v1252
  %v1254 = vadd.f32 %v1253, 1.1283791
  %v1255 = vmul.f32 %v665, %v1254
  %v1256 = vmul.f32 %v1244, 3.8918573e-05
  %v1257 = vadd.f32 %v1256, 0.001143296
  %v1258 = vmul.f32 %v1244, %v1257
  %v1259 = vadd.f32 %v1258, 0.014752088
  %v1260 = vmul.f32 %v1244, %v1259
  %v1261 = vadd.f32 %v1260, 0.112945676
  %v1262 = vmul.f32 %v1244, %v1261
  %v1263 = vadd.f32 %v1262, 0.4994258
  %v1264 = vmul.f32 %v1244, %v1263
  %v1265 = vadd.f32 %v1264, 1.0
  %v1266 = vrcp.pop %v1265
  %v1267 = vmul.f32 %v1265, %v1266
  %v1268 = vsub.f32 1.0, %v1267
  %v1269 = vmul.f32 %v1266, %v1268
  %v1270 = vadd.f32 %v1266, %v1269
  %vm1271 = vweird.f32 %v1265
  %vm1272 = vweird.f32 %v1266
  %vm1273 = vmor %vm1271, %vm1272
  %v1274 = vsel %vm1273, %v1266, %v1270
  %v1275 = vand.u32 2147483647, %v1265
  %vm1276 = vcmp.eq.f32.partialorder %v1275, 8.507059e+37
  %v1277 = vand.u32 %v1265, 2147483648
  %v1278 = vor.u32 1.1754944e-38, %v1277
  %v1279 = vsel %vm1276, %v1278, %v1274
  %v1280 = vmul.f32 %v1255, %v1279
  %v1281 = vmin.f32 %v1280, 1.0
  %v1282 = vmax.f32 %v1281, -1.0
  %v1283 = vmul.f32 %v666, %v666
  %v1284 = vmin.f32 16.0, %v1283
  %v1285 = vmul.f32 %v1284, 2.1237322e-06
  %v1286 = vadd.f32 %v1285, 0.00028619796
  %v1287 = vmul.f32 %v1284, %v1286
  %v1288 = vadd.f32 %v1287, 0.0036580483
  %v1289 = vmul.f32 %v1284, %v1288
  %v1290 = vadd.f32 %v1289, 0.05243302
  %v1291 = vmul.f32 %v1284, %v1290
  %v1292 = vadd.f32 %v1291, 0.18741608
  %v1293 = vmul.f32 %v1284, %v1292
  %v1294 = vadd.f32 %v1293, 1.1283791
  %v1295 = vmul.f32 %v666, %v1294
  %v1296 = vmul.f32 %v1284, 3.8918573e-05
  %v1297 = vadd.f32 %v1296, 0.001143296
  %v1298 = vmul.f32 %v1284, %v1297
  %v1299 = vadd.f32 %v1298, 0.014752088
  %v1300 = vmul.f32 %v1284, %v1299
  %v1301 = vadd.f32 %v1300, 0.112945676
  %v1302 = vmul.f32 %v1284, %v1301
  %v1303 = vadd.f32 %v1302, 0.4994258
  %v1304 = vmul.f32 %v1284, %v1303
  %v1305 = vadd.f32 %v1304, 1.0
  %v1306 = vrcp.pop %v1305
  %v1307 = vmul.f32 %v1305, %v1306
  %v1308 = vsub.f32 1.0, %v1307
  %v1309 = vmul.f32 %v1306, %v1308
  %v1310 = vadd.f32 %v1306, %v1309
  %vm1311 = vweird.f32 %v1305
  %vm1312 = vweird.f32 %v1306
  %vm1313 = vmor %vm1311, %vm1312
  %v1314 = vsel %vm1313, %v1306, %v1310
  %v1315 = vand.u32 2147483647, %v1305
  %vm1316 = vcmp.eq.f32.partialorder %v1315, 8.507059e+37
  %v1317 = vand.u32 %v1305, 2147483648
  %v1318 = vor.u32 1.1754944e-38, %v1317
  %v1319 = vsel %vm1316, %v1318, %v1314
  %v1320 = vmul.f32 %v1295, %v1319
  %v1321 = vmin.f32 %v1320, 1.0
  %v1322 = vmax.f32 %v1321, -1.0
  %v1323 = vmul.f32 %v667, %v667
  %v1324 = vmin.f32 16.0, %v1323
  %v1325 = vmul.f32 %v1324, 2.1237322e-06
  %v1326 = vadd.f32 %v1325, 0.00028619796
  %v1327 = vmul.f32 %v1324, %v1326
  %v1328 = vadd.f32 %v1327, 0.0036580483
  %v1329 = vmul.f32 %v1324, %v1328
  %v1330 = vadd.f32 %v1329, 0.05243302
  %v1331 = vmul.f32 %v1324, %v1330
  %v1332 = vadd.f32 %v1331, 0.18741608
  %v1333 = vmul.f32 %v1324, %v1332
  %v1334 = vadd.f32 %v1333, 1.1283791
  %v1335 = vmul.f32 %v667, %v1334
  %v1336 = vmul.f32 %v1324, 3.8918573e-05
  %v1337 = vadd.f32 %v1336, 0.001143296
  %v1338 = vmul.f32 %v1324, %v1337
  %v1339 = vadd.f32 %v1338, 0.014752088
  %v1340 = vmul.f32 %v1324, %v1339
  %v1341 = vadd.f32 %v1340, 0.112945676
  %v1342 = vmul.f32 %v1324, %v1341
  %v1343 = vadd.f32 %v1342, 0.4994258
  %v1344 = vmul.f32 %v1324, %v1343
  %v1345 = vadd.f32 %v1344, 1.0
  %v1346 = vrcp.pop %v1345
  %v1347 = vmul.f32 %v1345, %v1346
  %v1348 = vsub.f32 1.0, %v1347
  %v1349 = vmul.f32 %v1346, %v1348
  %v1350 = vadd.f32 %v1346, %v1349
  %vm1351 = vweird.f32 %v1345
  %vm1352 = vweird.f32 %v1346
  %vm1353 = vmor %vm1351, %vm1352
  %v1354 = vsel %vm1353, %v1346, %v1350
  %v1355 = vand.u32 2147483647, %v1345
  %vm1356 = vcmp.eq.f32.partialorder %v1355, 8.507059e+37
  %v1357 = vand.u32 %v1345, 2147483648
  %v1358 = vor.u32 1.1754944e-38, %v1357
  %v1359 = vsel %vm1356, %v1358, %v1354
  %v1360 = vmul.f32 %v1335, %v1359
  %v1361 = vmin.f32 %v1360, 1.0
  %v1362 = vmax.f32 %v1361, -1.0
  %v1363 = vmul.f32 %v668, %v668
  %v1364 = vmin.f32 16.0, %v1363
  %v1365 = vmul.f32 %v1364, 2.1237322e-06
  %v1366 = vadd.f32 %v1365, 0.00028619796
  %v1367 = vmul.f32 %v1364, %v1366
  %v1368 = vadd.f32 %v1367, 0.0036580483
  %v1369 = vmul.f32 %v1364, %v1368
  %v1370 = vadd.f32 %v1369, 0.05243302
  %v1371 = vmul.f32 %v1364, %v1370
  %v1372 = vadd.f32 %v1371, 0.18741608
  %v1373 = vmul.f32 %v1364, %v1372
  %v1374 = vadd.f32 %v1373, 1.1283791
  %v1375 = vmul.f32 %v668, %v1374
  %v1376 = vmul.f32 %v1364, 3.8918573e-05
  %v1377 = vadd.f32 %v1376, 0.001143296
  %v1378 = vmul.f32 %v1364, %v1377
  %v1379 = vadd.f32 %v1378, 0.014752088
  %v1380 = vmul.f32 %v1364, %v1379
  %v1381 = vadd.f32 %v1380, 0.112945676
  %v1382 = vmul.f32 %v1364, %v1381
  %v1383 = vadd.f32 %v1382, 0.4994258
  %v1384 = vmul.f32 %v1364, %v1383
  %v1385 = vadd.f32 %v1384, 1.0
  %v1386 = vrcp.pop %v1385
  %v1387 = vmul.f32 %v1385, %v1386
  %v1388 = vsub.f32 1.0, %v1387
  %v1389 = vmul.f32 %v1386, %v1388
  %v1390 = vadd.f32 %v1386, %v1389
  %vm1391 = vweird.f32 %v1385
  %vm1392 = vweird.f32 %v1386
  %vm1393 = vmor %vm1391, %vm1392
  %v1394 = vsel %vm1393, %v1386, %v1390
  %v1395 = vand.u32 2147483647, %v1385
  %vm1396 = vcmp.eq.f32.partialorder %v1395, 8.507059e+37
  %v1397 = vand.u32 %v1385, 2147483648
  %v1398 = vor.u32 1.1754944e-38, %v1397
  %v1399 = vsel %vm1396, %v1398, %v1394
  %v1400 = vmul.f32 %v1375, %v1399
  %v1401 = vmin.f32 %v1400, 1.0
  %v1402 = vmax.f32 %v1401, -1.0
  %v1403 = vmul.f32 %v669, %v669
  %v1404 = vmin.f32 16.0, %v1403
  %v1405 = vmul.f32 %v1404, 2.1237322e-06
  %v1406 = vadd.f32 %v1405, 0.00028619796
  %v1407 = vmul.f32 %v1404, %v1406
  %v1408 = vadd.f32 %v1407, 0.0036580483
  %v1409 = vmul.f32 %v1404, %v1408
  %v1410 = vadd.f32 %v1409, 0.05243302
  %v1411 = vmul.f32 %v1404, %v1410
  %v1412 = vadd.f32 %v1411, 0.18741608
  %v1413 = vmul.f32 %v1404, %v1412
  %v1414 = vadd.f32 %v1413, 1.1283791
  %v1415 = vmul.f32 %v669, %v1414
  %v1416 = vmul.f32 %v1404, 3.8918573e-05
  %v1417 = vadd.f32 %v1416, 0.001143296
  %v1418 = vmul.f32 %v1404, %v1417
  %v1419 = vadd.f32 %v1418, 0.014752088
  %v1420 = vmul.f32 %v1404, %v1419
  %v1421 = vadd.f32 %v1420, 0.112945676
  %v1422 = vmul.f32 %v1404, %v1421
  %v1423 = vadd.f32 %v1422, 0.4994258
  %v1424 = vmul.f32 %v1404, %v1423
  %v1425 = vadd.f32 %v1424, 1.0
  %v1426 = vrcp.pop %v1425
  %v1427 = vmul.f32 %v1425, %v1426
  %v1428 = vsub.f32 1.0, %v1427
  %v1429 = vmul.f32 %v1426, %v1428
  %v1430 = vadd.f32 %v1426, %v1429
  %vm1431 = vweird.f32 %v1425
  %vm1432 = vweird.f32 %v1426
  %vm1433 = vmor %vm1431, %vm1432
  %v1434 = vsel %vm1433, %v1426, %v1430
  %v1435 = vand.u32 2147483647, %v1425
  %vm1436 = vcmp.eq.f32.partialorder %v1435, 8.507059e+37
  %v1437 = vand.u32 %v1425, 2147483648
  %v1438 = vor.u32 1.1754944e-38, %v1437
  %v1439 = vsel %vm1436, %v1438, %v1434
  %v1440 = vmul.f32 %v1415, %v1439
  %v1441 = vmin.f32 %v1440, 1.0
  %v1442 = vmax.f32 %v1441, -1.0
  %v1443 = vmul.f32 %v670, %v670
  %v1444 = vmin.f32 16.0, %v1443
  %v1445 = vmul.f32 %v1444, 2.1237322e-06
  %v1446 = vadd.f32 %v1445, 0.00028619796
  %v1447 = vmul.f32 %v1444, %v1446
  %v1448 = vadd.f32 %v1447, 0.0036580483
  %v1449 = vmul.f32 %v1444, %v1448
  %v1450 = vadd.f32 %v1449, 0.05243302
  %v1451 = vmul.f32 %v1444, %v1450
  %v1452 = vadd.f32 %v1451, 0.18741608
  %v1453 = vmul.f32 %v1444, %v1452
  %v1454 = vadd.f32 %v1453, 1.1283791
  %v1455 = vmul.f32 %v670, %v1454
  %v1456 = vmul.f32 %v1444, 3.8918573e-05
  %v1457 = vadd.f32 %v1456, 0.001143296
  %v1458 = vmul.f32 %v1444, %v1457
  %v1459 = vadd.f32 %v1458, 0.014752088
  %v1460 = vmul.f32 %v1444, %v1459
  %v1461 = vadd.f32 %v1460, 0.112945676
  %v1462 = vmul.f32 %v1444, %v1461
  %v1463 = vadd.f32 %v1462, 0.4994258
  %v1464 = vmul.f32 %v1444, %v1463
  %v1465 = vadd.f32 %v1464, 1.0
  %v1466 = vrcp.pop %v1465
  %v1467 = vmul.f32 %v1465, %v1466
  %v1468 = vsub.f32 1.0, %v1467
  %v1469 = vmul.f32 %v1466, %v1468
  %v1470 = vadd.f32 %v1466, %v1469
  %vm1471 = vweird.f32 %v1465
  %vm1472 = vweird.f32 %v1466
  %vm1473 = vmor %vm1471, %vm1472
  %v1474 = vsel %vm1473, %v1466, %v1470
  %v1475 = vand.u32 2147483647, %v1465
  %vm1476 = vcmp.eq.f32.partialorder %v1475, 8.507059e+37
  %v1477 = vand.u32 %v1465, 2147483648
  %v1478 = vor.u32 1.1754944e-38, %v1477
  %v1479 = vsel %vm1476, %v1478, %v1474
  %v1480 = vmul.f32 %v1455, %v1479
  %v1481 = vmin.f32 %v1480, 1.0
  %v1482 = vmax.f32 %v1481, -1.0
  %v1483 = vmul.f32 %v671, %v671
  %v1484 = vmin.f32 16.0, %v1483
  %v1485 = vmul.f32 %v1484, 2.1237322e-06
  %v1486 = vadd.f32 %v1485, 0.00028619796
  %v1487 = vmul.f32 %v1484, %v1486
  %v1488 = vadd.f32 %v1487, 0.0036580483
  %v1489 = vmul.f32 %v1484, %v1488
  %v1490 = vadd.f32 %v1489, 0.05243302
  %v1491 = vmul.f32 %v1484, %v1490
  %v1492 = vadd.f32 %v1491, 0.18741608
  %v1493 = vmul.f32 %v1484, %v1492
  %v1494 = vadd.f32 %v1493, 1.1283791
  %v1495 = vmul.f32 %v671, %v1494
  %v1496 = vmul.f32 %v1484, 3.8918573e-05
  %v1497 = vadd.f32 %v1496, 0.001143296
  %v1498 = vmul.f32 %v1484, %v1497
  %v1499 = vadd.f32 %v1498, 0.014752088
  %v1500 = vmul.f32 %v1484, %v1499
  %v1501 = vadd.f32 %v1500, 0.112945676
  %v1502 = vmul.f32 %v1484, %v1501
  %v1503 = vadd.f32 %v1502, 0.4994258
  %v1504 = vmul.f32 %v1484, %v1503
  %v1505 = vadd.f32 %v1504, 1.0
  %v1506 = vrcp.pop %v1505
  %v1507 = vmul.f32 %v1505, %v1506
  %v1508 = vsub.f32 1.0, %v1507
  %v1509 = vmul.f32 %v1506, %v1508
  %v1510 = vadd.f32 %v1506, %v1509
  %vm1511 = vweird.f32 %v1505
  %vm1512 = vweird.f32 %v1506
  %vm1513 = vmor %vm1511, %vm1512
  %v1514 = vsel %vm1513, %v1506, %v1510
  %v1515 = vand.u32 2147483647, %v1505
  %vm1516 = vcmp.eq.f32.partialorder %v1515, 8.507059e+37
  %v1517 = vand.u32 %v1505, 2147483648
  %v1518 = vor.u32 1.1754944e-38, %v1517
  %v1519 = vsel %vm1516, %v1518, %v1514
  %v1520 = vmul.f32 %v1495, %v1519
  %v1521 = vmin.f32 %v1520, 1.0
  %v1522 = vmax.f32 %v1521, -1.0
  %v1523 = vmul.f32 %v672, %v672
  %v1524 = vmin.f32 16.0, %v1523
  %v1525 = vmul.f32 %v1524, 2.1237322e-06
  %v1526 = vadd.f32 %v1525, 0.00028619796
  %v1527 = vmul.f32 %v1524, %v1526
  %v1528 = vadd.f32 %v1527, 0.0036580483
  %v1529 = vmul.f32 %v1524, %v1528
  %v1530 = vadd.f32 %v1529, 0.05243302
  %v1531 = vmul.f32 %v1524, %v1530
  %v1532 = vadd.f32 %v1531, 0.18741608
  %v1533 = vmul.f32 %v1524, %v1532
  %v1534 = vadd.f32 %v1533, 1.1283791
  %v1535 = vmul.f32 %v672, %v1534
  %v1536 = vmul.f32 %v1524, 3.8918573e-05
  %v1537 = vadd.f32 %v1536, 0.001143296
  %v1538 = vmul.f32 %v1524, %v1537
  %v1539 = vadd.f32 %v1538, 0.014752088
  %v1540 = vmul.f32 %v1524, %v1539
  %v1541 = vadd.f32 %v1540, 0.112945676
  %v1542 = vmul.f32 %v1524, %v1541
  %v1543 = vadd.f32 %v1542, 0.4994258
  %v1544 = vmul.f32 %v1524, %v1543
  %v1545 = vadd.f32 %v1544, 1.0
  %v1546 = vrcp.pop %v1545
  %v1547 = vmul.f32 %v1545, %v1546
  %v1548 = vsub.f32 1.0, %v1547
  %v1549 = vmul.f32 %v1546, %v1548
  %v1550 = vadd.f32 %v1546, %v1549
  %vm1551 = vweird.f32 %v1545
  %vm1552 = vweird.f32 %v1546
  %vm1553 = vmor %vm1551, %vm1552
  %v1554 = vsel %vm1553, %v1546, %v1550
  %v1555 = vand.u32 2147483647, %v1545
  %vm1556 = vcmp.eq.f32.partialorder %v1555, 8.507059e+37
  %v1557 = vand.u32 %v1545, 2147483648
  %v1558 = vor.u32 1.1754944e-38, %v1557
  %v1559 = vsel %vm1556, %v1558, %v1554
  %v1560 = vmul.f32 %v1535, %v1559
  %v1561 = vmin.f32 %v1560, 1.0
  %v1562 = vmax.f32 %v1561, -1.0
  %v1563 = vmul.f32 %v673, %v673
  %v1564 = vmin.f32 16.0, %v1563
  %v1565 = vmul.f32 %v1564, 2.1237322e-06
  %v1566 = vadd.f32 %v1565, 0.00028619796
  %v1567 = vmul.f32 %v1564, %v1566
  %v1568 = vadd.f32 %v1567, 0.0036580483
  %v1569 = vmul.f32 %v1564, %v1568
  %v1570 = vadd.f32 %v1569, 0.05243302
  %v1571 = vmul.f32 %v1564, %v1570
  %v1572 = vadd.f32 %v1571, 0.18741608
  %v1573 = vmul.f32 %v1564, %v1572
  %v1574 = vadd.f32 %v1573, 1.1283791
  %v1575 = vmul.f32 %v673, %v1574
  %v1576 = vmul.f32 %v1564, 3.8918573e-05
  %v1577 = vadd.f32 %v1576, 0.001143296
  %v1578 = vmul.f32 %v1564, %v1577
  %v1579 = vadd.f32 %v1578, 0.014752088
  %v1580 = vmul.f32 %v1564, %v1579
  %v1581 = vadd.f32 %v1580, 0.112945676
  %v1582 = vmul.f32 %v1564, %v1581
  %v1583 = vadd.f32 %v1582, 0.4994258
  %v1584 = vmul.f32 %v1564, %v1583
  %v1585 = vadd.f32 %v1584, 1.0
  %v1586 = vrcp.pop %v1585
  %v1587 = vmul.f32 %v1585, %v1586
  %v1588 = vsub.f32 1.0, %v1587
  %v1589 = vmul.f32 %v1586, %v1588
  %v1590 = vadd.f32 %v1586, %v1589
  %vm1591 = vweird.f32 %v1585
  %vm1592 = vweird.f32 %v1586
  %vm1593 = vmor %vm1591, %vm1592
  %v1594 = vsel %vm1593, %v1586, %v1590
  %v1595 = vand.u32 2147483647, %v1585
  %vm1596 = vcmp.eq.f32.partialorder %v1595, 8.507059e+37
  %v1597 = vand.u32 %v1585, 2147483648
  %v1598 = vor.u32 1.1754944e-38, %v1597
  %v1599 = vsel %vm1596, %v1598, %v1594
  %v1600 = vmul.f32 %v1575, %v1599
  %v1601 = vmin.f32 %v1600, 1.0
  %v1602 = vmax.f32 %v1601, -1.0
  %v1603 = vmul.f32 %v674, %v674
  %v1604 = vmin.f32 16.0, %v1603
  %v1605 = vmul.f32 %v1604, 2.1237322e-06
  %v1606 = vadd.f32 %v1605, 0.00028619796
  %v1607 = vmul.f32 %v1604, %v1606
  %v1608 = vadd.f32 %v1607, 0.0036580483
  %v1609 = vmul.f32 %v1604, %v1608
  %v1610 = vadd.f32 %v1609, 0.05243302
  %v1611 = vmul.f32 %v1604, %v1610
  %v1612 = vadd.f32 %v1611, 0.18741608
  %v1613 = vmul.f32 %v1604, %v1612
  %v1614 = vadd.f32 %v1613, 1.1283791
  %v1615 = vmul.f32 %v674, %v1614
  %v1616 = vmul.f32 %v1604, 3.8918573e-05
  %v1617 = vadd.f32 %v1616, 0.001143296
  %v1618 = vmul.f32 %v1604, %v1617
  %v1619 = vadd.f32 %v1618, 0.014752088
  %v1620 = vmul.f32 %v1604, %v1619
  %v1621 = vadd.f32 %v1620, 0.112945676
  %v1622 = vmul.f32 %v1604, %v1621
  %v1623 = vadd.f32 %v1622, 0.4994258
  %v1624 = vmul.f32 %v1604, %v1623
  %v1625 = vadd.f32 %v1624, 1.0
  %v1626 = vrcp.pop %v1625
  %v1627 = vmul.f32 %v1625, %v1626
  %v1628 = vsub.f32 1.0, %v1627
  %v1629 = vmul.f32 %v1626, %v1628
  %v1630 = vadd.f32 %v1626, %v1629
  %vm1631 = vweird.f32 %v1625
  %vm1632 = vweird.f32 %v1626
  %vm1633 = vmor %vm1631, %vm1632
  %v1634 = vsel %vm1633, %v1626, %v1630
  %v1635 = vand.u32 2147483647, %v1625
  %vm1636 = vcmp.eq.f32.partialorder %v1635, 8.507059e+37
  %v1637 = vand.u32 %v1625, 2147483648
  %v1638 = vor.u32 1.1754944e-38, %v1637
  %v1639 = vsel %vm1636, %v1638, %v1634
  %v1640 = vmul.f32 %v1615, %v1639
  %v1641 = vmin.f32 %v1640, 1.0
  %v1642 = vmax.f32 %v1641, -1.0
  %v1643 = vmul.f32 %v675, %v675
  %v1644 = vmin.f32 16.0, %v1643
  %v1645 = vmul.f32 %v1644, 2.1237322e-06
  %v1646 = vadd.f32 %v1645, 0.00028619796
  %v1647 = vmul.f32 %v1644, %v1646
  %v1648 = vadd.f32 %v1647, 0.0036580483
  %v1649 = vmul.f32 %v1644, %v1648
  %v1650 = vadd.f32 %v1649, 0.05243302
  %v1651 = vmul.f32 %v1644, %v1650
  %v1652 = vadd.f32 %v1651, 0.18741608
  %v1653 = vmul.f32 %v1644, %v1652
  %v1654 = vadd.f32 %v1653, 1.1283791
  %v1655 = vmul.f32 %v675, %v1654
  %v1656 = vmul.f32 %v1644, 3.8918573e-05
  %v1657 = vadd.f32 %v1656, 0.001143296
  %v1658 = vmul.f32 %v1644, %v1657
  %v1659 = vadd.f32 %v1658, 0.014752088
  %v1660 = vmul.f32 %v1644, %v1659
  %v1661 = vadd.f32 %v1660, 0.112945676
  %v1662 = vmul.f32 %v1644, %v1661
  %v1663 = vadd.f32 %v1662, 0.4994258
  %v1664 = vmul.f32 %v1644, %v1663
  %v1665 = vadd.f32 %v1664, 1.0
  %v1666 = vrcp.pop %v1665
  %v1667 = vmul.f32 %v1665, %v1666
  %v1668 = vsub.f32 1.0, %v1667
  %v1669 = vmul.f32 %v1666, %v1668
  %v1670 = vadd.f32 %v1666, %v1669
  %vm1671 = vweird.f32 %v1665
  %vm1672 = vweird.f32 %v1666
  %vm1673 = vmor %vm1671, %vm1672
  %v1674 = vsel %vm1673, %v1666, %v1670
  %v1675 = vand.u32 2147483647, %v1665
  %vm1676 = vcmp.eq.f32.partialorder %v1675, 8.507059e+37
  %v1677 = vand.u32 %v1665, 2147483648
  %v1678 = vor.u32 1.1754944e-38, %v1677
  %v1679 = vsel %vm1676, %v1678, %v1674
  %v1680 = vmul.f32 %v1655, %v1679
  %v1681 = vmin.f32 %v1680, 1.0
  %v1682 = vmax.f32 %v1681, -1.0
  %v1683 = vmul.f32 %v676, %v676
  %v1684 = vmin.f32 16.0, %v1683
  %v1685 = vmul.f32 %v1684, 2.1237322e-06
  %v1686 = vadd.f32 %v1685, 0.00028619796
  %v1687 = vmul.f32 %v1684, %v1686
  %v1688 = vadd.f32 %v1687, 0.0036580483
  %v1689 = vmul.f32 %v1684, %v1688
  %v1690 = vadd.f32 %v1689, 0.05243302
  %v1691 = vmul.f32 %v1684, %v1690
  %v1692 = vadd.f32 %v1691, 0.18741608
  %v1693 = vmul.f32 %v1684, %v1692
  %v1694 = vadd.f32 %v1693, 1.1283791
  %v1695 = vmul.f32 %v676, %v1694
  %v1696 = vmul.f32 %v1684, 3.8918573e-05
  %v1697 = vadd.f32 %v1696, 0.001143296
  %v1698 = vmul.f32 %v1684, %v1697
  %v1699 = vadd.f32 %v1698, 0.014752088
  %v1700 = vmul.f32 %v1684, %v1699
  %v1701 = vadd.f32 %v1700, 0.112945676
  %v1702 = vmul.f32 %v1684, %v1701
  %v1703 = vadd.f32 %v1702, 0.4994258
  %v1704 = vmul.f32 %v1684, %v1703
  %v1705 = vadd.f32 %v1704, 1.0
  %v1706 = vrcp.pop %v1705
  %v1707 = vmul.f32 %v1705, %v1706
  %v1708 = vsub.f32 1.0, %v1707
  %v1709 = vmul.f32 %v1706, %v1708
  %v1710 = vadd.f32 %v1706, %v1709
  %vm1711 = vweird.f32 %v1705
  %vm1712 = vweird.f32 %v1706
  %vm1713 = vmor %vm1711, %vm1712
  %v1714 = vsel %vm1713, %v1706, %v1710
  %v1715 = vand.u32 2147483647, %v1705
  %vm1716 = vcmp.eq.f32.partialorder %v1715, 8.507059e+37
  %v1717 = vand.u32 %v1705, 2147483648
  %v1718 = vor.u32 1.1754944e-38, %v1717
  %v1719 = vsel %vm1716, %v1718, %v1714
  %v1720 = vmul.f32 %v1695, %v1719
  %v1721 = vmin.f32 %v1720, 1.0
  %v1722 = vmax.f32 %v1721, -1.0
  %v1723 = vmul.f32 %v677, %v677
  %v1724 = vmin.f32 16.0, %v1723
  %v1725 = vmul.f32 %v1724, 2.1237322e-06
  %v1726 = vadd.f32 %v1725, 0.00028619796
  %v1727 = vmul.f32 %v1724, %v1726
  %v1728 = vadd.f32 %v1727, 0.0036580483
  %v1729 = vmul.f32 %v1724, %v1728
  %v1730 = vadd.f32 %v1729, 0.05243302
  %v1731 = vmul.f32 %v1724, %v1730
  %v1732 = vadd.f32 %v1731, 0.18741608
  %v1733 = vmul.f32 %v1724, %v1732
  %v1734 = vadd.f32 %v1733, 1.1283791
  %v1735 = vmul.f32 %v677, %v1734
  %v1736 = vmul.f32 %v1724, 3.8918573e-05
  %v1737 = vadd.f32 %v1736, 0.001143296
  %v1738 = vmul.f32 %v1724, %v1737
  %v1739 = vadd.f32 %v1738, 0.014752088
  %v1740 = vmul.f32 %v1724, %v1739
  %v1741 = vadd.f32 %v1740, 0.112945676
  %v1742 = vmul.f32 %v1724, %v1741
  %v1743 = vadd.f32 %v1742, 0.4994258
  %v1744 = vmul.f32 %v1724, %v1743
  %v1745 = vadd.f32 %v1744, 1.0
  %v1746 = vrcp.pop %v1745
  %v1747 = vmul.f32 %v1745, %v1746
  %v1748 = vsub.f32 1.0, %v1747
  %v1749 = vmul.f32 %v1746, %v1748
  %v1750 = vadd.f32 %v1746, %v1749
  %vm1751 = vweird.f32 %v1745
  %vm1752 = vweird.f32 %v1746
  %vm1753 = vmor %vm1751, %vm1752
  %v1754 = vsel %vm1753, %v1746, %v1750
  %v1755 = vand.u32 2147483647, %v1745
  %vm1756 = vcmp.eq.f32.partialorder %v1755, 8.507059e+37
  %v1757 = vand.u32 %v1745, 2147483648
  %v1758 = vor.u32 1.1754944e-38, %v1757
  %v1759 = vsel %vm1756, %v1758, %v1754
  %v1760 = vmul.f32 %v1735, %v1759
  %v1761 = vmin.f32 %v1760, 1.0
  %v1762 = vmax.f32 %v1761, -1.0
  %v1763 = vmul.f32 %v678, %v678
  %v1764 = vmin.f32 16.0, %v1763
  %v1765 = vmul.f32 %v1764, 2.1237322e-06
  %v1766 = vadd.f32 %v1765, 0.00028619796
  %v1767 = vmul.f32 %v1764, %v1766
  %v1768 = vadd.f32 %v1767, 0.0036580483
  %v1769 = vmul.f32 %v1764, %v1768
  %v1770 = vadd.f32 %v1769, 0.05243302
  %v1771 = vmul.f32 %v1764, %v1770
  %v1772 = vadd.f32 %v1771, 0.18741608
  %v1773 = vmul.f32 %v1764, %v1772
  %v1774 = vadd.f32 %v1773, 1.1283791
  %v1775 = vmul.f32 %v678, %v1774
  %v1776 = vmul.f32 %v1764, 3.8918573e-05
  %v1777 = vadd.f32 %v1776, 0.001143296
  %v1778 = vmul.f32 %v1764, %v1777
  %v1779 = vadd.f32 %v1778, 0.014752088
  %v1780 = vmul.f32 %v1764, %v1779
  %v1781 = vadd.f32 %v1780, 0.112945676
  %v1782 = vmul.f32 %v1764, %v1781
  %v1783 = vadd.f32 %v1782, 0.4994258
  %v1784 = vmul.f32 %v1764, %v1783
  %v1785 = vadd.f32 %v1784, 1.0
  %v1786 = vrcp.pop %v1785
  %v1787 = vmul.f32 %v1785, %v1786
  %v1788 = vsub.f32 1.0, %v1787
  %v1789 = vmul.f32 %v1786, %v1788
  %v1790 = vadd.f32 %v1786, %v1789
  %vm1791 = vweird.f32 %v1785
  %vm1792 = vweird.f32 %v1786
  %vm1793 = vmor %vm1791, %vm1792
  %v1794 = vsel %vm1793, %v1786, %v1790
  %v1795 = vand.u32 2147483647, %v1785
  %vm1796 = vcmp.eq.f32.partialorder %v1795, 8.507059e+37
  %v1797 = vand.u32 %v1785, 2147483648
  %v1798 = vor.u32 1.1754944e-38, %v1797
  %v1799 = vsel %vm1796, %v1798, %v1794
  %v1800 = vmul.f32 %v1775, %v1799
  %v1801 = vmin.f32 %v1800, 1.0
  %v1802 = vmax.f32 %v1801, -1.0
  %v1803 = vmul.f32 %v679, %v679
  %v1804 = vmin.f32 16.0, %v1803
  %v1805 = vmul.f32 %v1804, 2.1237322e-06
  %v1806 = vadd.f32 %v1805, 0.00028619796
  %v1807 = vmul.f32 %v1804, %v1806
  %v1808 = vadd.f32 %v1807, 0.0036580483
  %v1809 = vmul.f32 %v1804, %v1808
  %v1810 = vadd.f32 %v1809, 0.05243302
  %v1811 = vmul.f32 %v1804, %v1810
  %v1812 = vadd.f32 %v1811, 0.18741608
  %v1813 = vmul.f32 %v1804, %v1812
  %v1814 = vadd.f32 %v1813, 1.1283791
  %v1815 = vmul.f32 %v679, %v1814
  %v1816 = vmul.f32 %v1804, 3.8918573e-05
  %v1817 = vadd.f32 %v1816, 0.001143296
  %v1818 = vmul.f32 %v1804, %v1817
  %v1819 = vadd.f32 %v1818, 0.014752088
  %v1820 = vmul.f32 %v1804, %v1819
  %v1821 = vadd.f32 %v1820, 0.112945676
  %v1822 = vmul.f32 %v1804, %v1821
  %v1823 = vadd.f32 %v1822, 0.4994258
  %v1824 = vmul.f32 %v1804, %v1823
  %v1825 = vadd.f32 %v1824, 1.0
  %v1826 = vrcp.pop %v1825
  %v1827 = vmul.f32 %v1825, %v1826
  %v1828 = vsub.f32 1.0, %v1827
  %v1829 = vmul.f32 %v1826, %v1828
  %v1830 = vadd.f32 %v1826, %v1829
  %vm1831 = vweird.f32 %v1825
  %vm1832 = vweird.f32 %v1826
  %vm1833 = vmor %vm1831, %vm1832
  %v1834 = vsel %vm1833, %v1826, %v1830
  %v1835 = vand.u32 2147483647, %v1825
  %vm1836 = vcmp.eq.f32.partialorder %v1835, 8.507059e+37
  %v1837 = vand.u32 %v1825, 2147483648
  %v1838 = vor.u32 1.1754944e-38, %v1837
  %v1839 = vsel %vm1836, %v1838, %v1834
  %v1840 = vmul.f32 %v1815, %v1839
  %v1841 = vmin.f32 %v1840, 1.0
  %v1842 = vmax.f32 %v1841, -1.0
  %v1843 = vmul.f32 %v680, %v680
  %v1844 = vmin.f32 16.0, %v1843
  %v1845 = vmul.f32 %v1844, 2.1237322e-06
  %v1846 = vadd.f32 %v1845, 0.00028619796
  %v1847 = vmul.f32 %v1844, %v1846
  %v1848 = vadd.f32 %v1847, 0.0036580483
  %v1849 = vmul.f32 %v1844, %v1848
  %v1850 = vadd.f32 %v1849, 0.05243302
  %v1851 = vmul.f32 %v1844, %v1850
  %v1852 = vadd.f32 %v1851, 0.18741608
  %v1853 = vmul.f32 %v1844, %v1852
  %v1854 = vadd.f32 %v1853, 1.1283791
  %v1855 = vmul.f32 %v680, %v1854
  %v1856 = vmul.f32 %v1844, 3.8918573e-05
  %v1857 = vadd.f32 %v1856, 0.001143296
  %v1858 = vmul.f32 %v1844, %v1857
  %v1859 = vadd.f32 %v1858, 0.014752088
  %v1860 = vmul.f32 %v1844, %v1859
  %v1861 = vadd.f32 %v1860, 0.112945676
  %v1862 = vmul.f32 %v1844, %v1861
  %v1863 = vadd.f32 %v1862, 0.4994258
  %v1864 = vmul.f32 %v1844, %v1863
  %v1865 = vadd.f32 %v1864, 1.0
  %v1866 = vrcp.pop %v1865
  %v1867 = vmul.f32 %v1865, %v1866
  %v1868 = vsub.f32 1.0, %v1867
  %v1869 = vmul.f32 %v1866, %v1868
  %v1870 = vadd.f32 %v1866, %v1869
  %vm1871 = vweird.f32 %v1865
  %vm1872 = vweird.f32 %v1866
  %vm1873 = vmor %vm1871, %vm1872
  %v1874 = vsel %vm1873, %v1866, %v1870
  %v1875 = vand.u32 2147483647, %v1865
  %vm1876 = vcmp.eq.f32.partialorder %v1875, 8.507059e+37
  %v1877 = vand.u32 %v1865, 2147483648
  %v1878 = vor.u32 1.1754944e-38, %v1877
  %v1879 = vsel %vm1876, %v1878, %v1874
  %v1880 = vmul.f32 %v1855, %v1879
  %v1881 = vmin.f32 %v1880, 1.0
  %v1882 = vmax.f32 %v1881, -1.0
  %v1883 = vmul.f32 %v681, %v681
  %v1884 = vmin.f32 16.0, %v1883
  %v1885 = vmul.f32 %v1884, 2.1237322e-06
  %v1886 = vadd.f32 %v1885, 0.00028619796
  %v1887 = vmul.f32 %v1884, %v1886
  %v1888 = vadd.f32 %v1887, 0.0036580483
  %v1889 = vmul.f32 %v1884, %v1888
  %v1890 = vadd.f32 %v1889, 0.05243302
  %v1891 = vmul.f32 %v1884, %v1890
  %v1892 = vadd.f32 %v1891, 0.18741608
  %v1893 = vmul.f32 %v1884, %v1892
  %v1894 = vadd.f32 %v1893, 1.1283791
  %v1895 = vmul.f32 %v681, %v1894
  %v1896 = vmul.f32 %v1884, 3.8918573e-05
  %v1897 = vadd.f32 %v1896, 0.001143296
  %v1898 = vmul.f32 %v1884, %v1897
  %v1899 = vadd.f32 %v1898, 0.014752088
  %v1900 = vmul.f32 %v1884, %v1899
  %v1901 = vadd.f32 %v1900, 0.112945676
  %v1902 = vmul.f32 %v1884, %v1901
  %v1903 = vadd.f32 %v1902, 0.4994258
  %v1904 = vmul.f32 %v1884, %v1903
  %v1905 = vadd.f32 %v1904, 1.0
  %v1906 = vrcp.pop %v1905
  %v1907 = vmul.f32 %v1905, %v1906
  %v1908 = vsub.f32 1.0, %v1907
  %v1909 = vmul.f32 %v1906, %v1908
  %v1910 = vadd.f32 %v1906, %v1909
  %vm1911 = vweird.f32 %v1905
  %vm1912 = vweird.f32 %v1906
  %vm1913 = vmor %vm1911, %vm1912
  %v1914 = vsel %vm1913, %v1906, %v1910
  %v1915 = vand.u32 2147483647, %v1905
  %vm1916 = vcmp.eq.f32.partialorder %v1915, 8.507059e+37
  %v1917 = vand.u32 %v1905, 2147483648
  %v1918 = vor.u32 1.1754944e-38, %v1917
  %v1919 = vsel %vm1916, %v1918, %v1914
  %v1920 = vmul.f32 %v1895, %v1919
  %v1921 = vmin.f32 %v1920, 1.0
  %v1922 = vmax.f32 %v1921, -1.0
  %v1923 = vmul.f32 %v682, %v682
  %v1924 = vmin.f32 16.0, %v1923
  %v1925 = vmul.f32 %v1924, 2.1237322e-06
  %v1926 = vadd.f32 %v1925, 0.00028619796
  %v1927 = vmul.f32 %v1924, %v1926
  %v1928 = vadd.f32 %v1927, 0.0036580483
  %v1929 = vmul.f32 %v1924, %v1928
  %v1930 = vadd.f32 %v1929, 0.05243302
  %v1931 = vmul.f32 %v1924, %v1930
  %v1932 = vadd.f32 %v1931, 0.18741608
  %v1933 = vmul.f32 %v1924, %v1932
  %v1934 = vadd.f32 %v1933, 1.1283791
  %v1935 = vmul.f32 %v682, %v1934
  %v1936 = vmul.f32 %v1924, 3.8918573e-05
  %v1937 = vadd.f32 %v1936, 0.001143296
  %v1938 = vmul.f32 %v1924, %v1937
  %v1939 = vadd.f32 %v1938, 0.014752088
  %v1940 = vmul.f32 %v1924, %v1939
  %v1941 = vadd.f32 %v1940, 0.112945676
  %v1942 = vmul.f32 %v1924, %v1941
  %v1943 = vadd.f32 %v1942, 0.4994258
  %v1944 = vmul.f32 %v1924, %v1943
  %v1945 = vadd.f32 %v1944, 1.0
  %v1946 = vrcp.pop %v1945
  %v1947 = vmul.f32 %v1945, %v1946
  %v1948 = vsub.f32 1.0, %v1947
  %v1949 = vmul.f32 %v1946, %v1948
  %v1950 = vadd.f32 %v1946, %v1949
  %vm1951 = vweird.f32 %v1945
  %vm1952 = vweird.f32 %v1946
  %vm1953 = vmor %vm1951, %vm1952
  %v1954 = vsel %vm1953, %v1946, %v1950
  %v1955 = vand.u32 2147483647, %v1945
  %vm1956 = vcmp.eq.f32.partialorder %v1955, 8.507059e+37
  %v1957 = vand.u32 %v1945, 2147483648
  %v1958 = vor.u32 1.1754944e-38, %v1957
  %v1959 = vsel %vm1956, %v1958, %v1954
  %v1960 = vmul.f32 %v1935, %v1959
  %v1961 = vmin.f32 %v1960, 1.0
  %v1962 = vmax.f32 %v1961, -1.0
  %v1963 = vadd.f32 %v722, 1.0
  %v1964 = vadd.f32 %v762, 1.0
  %v1965 = vadd.f32 %v802, 1.0
  %v1966 = vadd.f32 %v842, 1.0
  %v1967 = vadd.f32 %v882, 1.0
  %v1968 = vadd.f32 %v922, 1.0
  %v1969 = vadd.f32 %v962, 1.0
  %v1970 = vadd.f32 %v1002, 1.0
  %v1971 = vadd.f32 %v1042, 1.0
  %v1972 = vadd.f32 %v1082, 1.0
  %v1973 = vadd.f32 %v1122, 1.0
  %v1974 = vadd.f32 %v1162, 1.0
  %v1975 = vadd.f32 %v1202, 1.0
  %v1976 = vadd.f32 %v1242, 1.0
  %v1977 = vadd.f32 %v1282, 1.0
  %v1978 = vadd.f32 %v1322, 1.0
  %v1979 = vadd.f32 %v1362, 1.0
  %v1980 = vadd.f32 %v1402, 1.0
  %v1981 = vadd.f32 %v1442, 1.0
  %v1982 = vadd.f32 %v1482, 1.0
  %v1983 = vadd.f32 %v1522, 1.0
  %v1984 = vadd.f32 %v1562, 1.0
  %v1985 = vadd.f32 %v1602, 1.0
  %v1986 = vadd.f32 %v1642, 1.0
  %v1987 = vadd.f32 %v1682, 1.0
  %v1988 = vadd.f32 %v1722, 1.0
  %v1989 = vadd.f32 %v1762, 1.0
  %v1990 = vadd.f32 %v1802, 1.0
  %v1991 = vadd.f32 %v1842, 1.0
  %v1992 = vadd.f32 %v1882, 1.0
  %v1993 = vadd.f32 %v1922, 1.0
  %v1994 = vadd.f32 %v1962, 1.0
  %v1995 = vmul.f32 %v619, %v1963
  %v1996 = vmul.f32 %v620, %v1964
  %v1997 = vmul.f32 %v621, %v1965
  %v1998 = vmul.f32 %v622, %v1966
  %v1999 = vmul.f32 %v623, %v1967
  %v2000 = vmul.f32 %v624, %v1968
  %v2001 = vmul.f32 %v625, %v1969
  %v2002 = vmul.f32 %v626, %v1970
  %v2003 = vmul.f32 %v627, %v1971
  %v2004 = vmul.f32 %v628, %v1972
  %v2005 = vmul.f32 %v629, %v1973
  %v2006 = vmul.f32 %v630, %v1974
  %v2007 = vmul.f32 %v631, %v1975
  %v2008 = vmul.f32 %v632, %v1976
  %v2009 = vmul.f32 %v633, %v1977
  %v2010 = vmul.f32 %v634, %v1978
  %v2011 = vmul.f32 %v635, %v1979
  %v2012 = vmul.f32 %v636, %v1980
  %v2013 = vmul.f32 %v637, %v1981
  %v2014 = vmul.f32 %v638, %v1982
  %v2015 = vmul.f32 %v639, %v1983
  %v2016 = vmul.f32 %v640, %v1984
  %v2017 = vmul.f32 %v641, %v1985
  %v2018 = vmul.f32 %v642, %v1986
  %v2019 = vmul.f32 %v643, %v1987
  %v2020 = vmul.f32 %v644, %v1988
  %v2021 = vmul.f32 %v645, %v1989
  %v2022 = vmul.f32 %v646, %v1990
  %v2023 = vmul.f32 %v647, %v1991
  %v2024 = vmul.f32 %v648, %v1992
  %v2025 = vmul.f32 %v649, %v1993
  %v2026 = vmul.f32 %v650, %v1994
  %v2027 = vpack.c.bf16 %v1999, %v1995
  %v2028 = vpack.c.bf16 %v2000, %v1996
  %v2029 = vpack.c.bf16 %v2001, %v1997
  %v2030 = vpack.c.bf16 %v2002, %v1998
  %v2031 = vpack.c.bf16 %v2007, %v2003
  %v2032 = vpack.c.bf16 %v2008, %v2004
  %v2033 = vpack.c.bf16 %v2009, %v2005
  %v2034 = vpack.c.bf16 %v2010, %v2006
  %v2035 = vpack.c.bf16 %v2015, %v2011
  %v2036 = vpack.c.bf16 %v2016, %v2012
  %v2037 = vpack.c.bf16 %v2017, %v2013
  %v2038 = vpack.c.bf16 %v2018, %v2014
  %v2039 = vpack.c.bf16 %v2023, %v2019
  %v2040 = vpack.c.bf16 %v2024, %v2020
  %v2041 = vpack.c.bf16 %v2025, %v2021
  %v2042 = vpack.c.bf16 %v2026, %v2022
  %v2043 = vld [vmem:[%s5] sm:$0xff]
  %v2044 = vld [vmem:[%s5 + $0x8] sm:$0xff]
  %v2045 = vld [vmem:[%s5 + $0x10] sm:$0xff]
  %v2046 = vld [vmem:[%s5 + $0x18] sm:$0xff]
  %v2047 = vld [vmem:[%s5 + $0x20] sm:$0xff]
  %v2048 = vld [vmem:[%s5 + $0x28] sm:$0xff]
  %v2049 = vld [vmem:[%s5 + $0x30] sm:$0xff]
  %v2050 = vld [vmem:[%s5 + $0x38] sm:$0xff]
  %v2051 = vld [vmem:[%s5 + $0x40] sm:$0xff]
  %v2052 = vld [vmem:[%s5 + $0x48] sm:$0xff]
  %v2053 = vld [vmem:[%s5 + $0x50] sm:$0xff]
  %v2054 = vld [vmem:[%s5 + $0x58] sm:$0xff]
  %v2055 = vld [vmem:[%s5 + $0x60] sm:$0xff]
  %v2056 = vld [vmem:[%s5 + $0x68] sm:$0xff]
  %v2057 = vld [vmem:[%s5 + $0x70] sm:$0xff]
  %v2058 = vld [vmem:[%s5 + $0x78] sm:$0xff]
  %v2059 = vld [vmem:[%s5 + $0x80] sm:$0xff]
  %v2060 = vld [vmem:[%s5 + $0x88] sm:$0xff]
  %v2061 = vld [vmem:[%s5 + $0x90] sm:$0xff]
  %v2062 = vld [vmem:[%s5 + $0x98] sm:$0xff]
  %v2063 = vld [vmem:[%s5 + $0xa0] sm:$0xff]
  %v2064 = vld [vmem:[%s5 + $0xa8] sm:$0xff]
  %v2065 = vld [vmem:[%s5 + $0xb0] sm:$0xff]
  %v2066 = vld [vmem:[%s5 + $0xb8] sm:$0xff]
  %v2067 = vld [vmem:[%s5 + $0xc0] sm:$0xff]
  %v2068 = vld [vmem:[%s5 + $0xc8] sm:$0xff]
  %v2069 = vld [vmem:[%s5 + $0xd0] sm:$0xff]
  %v2070 = vld [vmem:[%s5 + $0xd8] sm:$0xff]
  %v2071 = vld [vmem:[%s5 + $0xe0] sm:$0xff]
  %v2072 = vld [vmem:[%s5 + $0xe8] sm:$0xff]
  %v2073 = vld [vmem:[%s5 + $0xf0] sm:$0xff]
  %v2074 = vld [vmem:[%s5 + $0xf8] sm:$0xff]
  %v2075 = vld [vmem:[%s6] sm:$0x1]
  %v2077 = vperm.slane %v2075, 0
  %v2111 = vunpack.c.l.b16 %v2043
  %v2112 = vunpack.c.h.b16 %v2043
  %v2113 = vunpack.c.l.b16 %v2044
  %v2114 = vunpack.c.h.b16 %v2044
  %v2115 = vunpack.c.l.b16 %v2045
  %v2116 = vunpack.c.h.b16 %v2045
  %v2117 = vunpack.c.l.b16 %v2046
  %v2118 = vunpack.c.h.b16 %v2046
  %v2119 = vunpack.c.l.b16 %v2047
  %v2120 = vunpack.c.h.b16 %v2047
  %v2121 = vunpack.c.l.b16 %v2048
  %v2122 = vunpack.c.h.b16 %v2048
  %v2123 = vunpack.c.l.b16 %v2049
  %v2124 = vunpack.c.h.b16 %v2049
  %v2125 = vunpack.c.l.b16 %v2050
  %v2126 = vunpack.c.h.b16 %v2050
  %v2127 = vunpack.c.l.b16 %v2051
  %v2128 = vunpack.c.h.b16 %v2051
  %v2129 = vunpack.c.l.b16 %v2052
  %v2130 = vunpack.c.h.b16 %v2052
  %v2131 = vunpack.c.l.b16 %v2053
  %v2132 = vunpack.c.h.b16 %v2053
  %v2133 = vunpack.c.l.b16 %v2054
  %v2134 = vunpack.c.h.b16 %v2054
  %v2135 = vunpack.c.l.b16 %v2055
  %v2136 = vunpack.c.h.b16 %v2055
  %v2137 = vunpack.c.l.b16 %v2056
  %v2138 = vunpack.c.h.b16 %v2056
  %v2139 = vunpack.c.l.b16 %v2057
  %v2140 = vunpack.c.h.b16 %v2057
  %v2141 = vunpack.c.l.b16 %v2058
  %v2142 = vunpack.c.h.b16 %v2058
  %v2143 = vunpack.c.l.b16 %v2059
  %v2144 = vunpack.c.h.b16 %v2059
  %v2145 = vunpack.c.l.b16 %v2060
  %v2146 = vunpack.c.h.b16 %v2060
  %v2147 = vunpack.c.l.b16 %v2061
  %v2148 = vunpack.c.h.b16 %v2061
  %v2149 = vunpack.c.l.b16 %v2062
  %v2150 = vunpack.c.h.b16 %v2062
  %v2151 = vunpack.c.l.b16 %v2063
  %v2152 = vunpack.c.h.b16 %v2063
  %v2153 = vunpack.c.l.b16 %v2064
  %v2154 = vunpack.c.h.b16 %v2064
  %v2155 = vunpack.c.l.b16 %v2065
  %v2156 = vunpack.c.h.b16 %v2065
  %v2157 = vunpack.c.l.b16 %v2066
  %v2158 = vunpack.c.h.b16 %v2066
  %v2159 = vunpack.c.l.b16 %v2067
  %v2160 = vunpack.c.h.b16 %v2067
  %v2161 = vunpack.c.l.b16 %v2068
  %v2162 = vunpack.c.h.b16 %v2068
  %v2163 = vunpack.c.l.b16 %v2069
  %v2164 = vunpack.c.h.b16 %v2069
  %v2165 = vunpack.c.l.b16 %v2070
  %v2166 = vunpack.c.h.b16 %v2070
  %v2167 = vunpack.c.l.b16 %v2071
  %v2168 = vunpack.c.h.b16 %v2071
  %v2169 = vunpack.c.l.b16 %v2072
  %v2170 = vunpack.c.h.b16 %v2072
  %v2171 = vunpack.c.l.b16 %v2073
  %v2172 = vunpack.c.h.b16 %v2073
  %v2173 = vunpack.c.l.b16 %v2074
  %v2174 = vunpack.c.h.b16 %v2074
  %v2175 = vpack.c.b16 %v2115, %v2111
  %v2176 = vpack.c.b16 %v2116, %v2112
  %v2177 = vpack.c.b16 %v2117, %v2113
  %v2178 = vpack.c.b16 %v2118, %v2114
  %v2179 = vpack.c.b16 %v2123, %v2119
  %v2180 = vpack.c.b16 %v2124, %v2120
  %v2181 = vpack.c.b16 %v2125, %v2121
  %v2182 = vpack.c.b16 %v2126, %v2122
  %v2183 = vpack.c.b16 %v2131, %v2127
  %v2184 = vpack.c.b16 %v2132, %v2128
  %v2185 = vpack.c.b16 %v2133, %v2129
  %v2186 = vpack.c.b16 %v2134, %v2130
  %v2187 = vpack.c.b16 %v2139, %v2135
  %v2188 = vpack.c.b16 %v2140, %v2136
  %v2189 = vpack.c.b16 %v2141, %v2137
  %v2190 = vpack.c.b16 %v2142, %v2138
  %v2191 = vpack.c.b16 %v2147, %v2143
  %v2192 = vpack.c.b16 %v2148, %v2144
  %v2193 = vpack.c.b16 %v2149, %v2145
  %v2194 = vpack.c.b16 %v2150, %v2146
  %v2195 = vpack.c.b16 %v2155, %v2151
  %v2196 = vpack.c.b16 %v2156, %v2152
  %v2197 = vpack.c.b16 %v2157, %v2153
  %v2198 = vpack.c.b16 %v2158, %v2154
  %v2199 = vpack.c.b16 %v2163, %v2159
  %v2200 = vpack.c.b16 %v2164, %v2160
  %v2201 = vpack.c.b16 %v2165, %v2161
  %v2202 = vpack.c.b16 %v2166, %v2162
  %v2203 = vpack.c.b16 %v2171, %v2167
  %v2204 = vpack.c.b16 %v2172, %v2168
  %v2205 = vpack.c.b16 %v2173, %v2169
  %v2206 = vpack.c.b16 %v2174, %v2170
  %2239 = vmatpush.bf16.xpose.msra.mxu0 %v2203
  %2240 = vmatpush.bf16.xpose.msra.mxu0 %v2199
  %2241 = vmatpush.bf16.xpose.msra.mxu0 %v2195
  %2242 = vmatpush.bf16.xpose.msra.mxu0 %v2191
  %2243 = vmatpush.bf16.xpose.msra.mxu0 %v2187
  %2244 = vmatpush.bf16.xpose.msra.mxu0 %v2183
  %2245 = vmatpush.bf16.xpose.msra.mxu0 %v2179
  %2246 = vmatpush.bf16.xpose.msra.mxu0 %v2175
  %2247 = vmatmul.bf16.gmra.mxu0 %v2027
  %v2248 = vpop.f32.mrf.mxu0
  %v2249 = vadd.f32 %v2077, %v2248
  %v2250 = vpop.f32.mrf.mxu0
  %v2251 = vadd.f32 %v2077, %v2250
  %2252 = vmatmul.bf16.gmra.mxu0 %v2031
  %v2253 = vpop.f32.mrf.mxu0
  %v2254 = vadd.f32 %v2077, %v2253
  %v2255 = vpop.f32.mrf.mxu0
  %v2256 = vadd.f32 %v2077, %v2255
  %2257 = vmatmul.bf16.gmra.mxu0 %v2035
  %v2258 = vpop.f32.mrf.mxu0
  %v2259 = vadd.f32 %v2077, %v2258
  %v2260 = vpop.f32.mrf.mxu0
  %v2261 = vadd.f32 %v2077, %v2260
  %2262 = vmatmul.bf16.gmra.mxu0 %v2039
  %v2263 = vpop.f32.mrf.mxu0
  %v2264 = vadd.f32 %v2077, %v2263
  %v2265 = vpop.f32.mrf.mxu0
  %v2266 = vadd.f32 %v2077, %v2265
  %2267 = vdwg.mxu0
  %2268 = vmatpush.bf16.xpose.msra.mxu0 %v2204
  %2269 = vmatpush.bf16.xpose.msra.mxu0 %v2200
  %2270 = vmatpush.bf16.xpose.msra.mxu0 %v2196
  %2271 = vmatpush.bf16.xpose.msra.mxu0 %v2192
  %2272 = vmatpush.bf16.xpose.msra.mxu0 %v2188
  %2273 = vmatpush.bf16.xpose.msra.mxu0 %v2184
  %2274 = vmatpush.bf16.xpose.msra.mxu0 %v2180
  %2275 = vmatpush.bf16.xpose.msra.mxu0 %v2176
  %2276 = vmatmul.bf16.gmra.mxu0 %v2028
  %v2277 = vpop.f32.mrf.mxu0
  %v2278 = vadd.f32 %v2249, %v2277
  %v2279 = vpop.f32.mrf.mxu0
  %v2280 = vadd.f32 %v2251, %v2279
  %2281 = vmatmul.bf16.gmra.mxu0 %v2032
  %v2282 = vpop.f32.mrf.mxu0
  %v2283 = vadd.f32 %v2254, %v2282
  %v2284 = vpop.f32.mrf.mxu0
  %v2285 = vadd.f32 %v2256, %v2284
  %2286 = vmatmul.bf16.gmra.mxu0 %v2036
  %v2287 = vpop.f32.mrf.mxu0
  %v2288 = vadd.f32 %v2259, %v2287
  %v2289 = vpop.f32.mrf.mxu0
  %v2290 = vadd.f32 %v2261, %v2289
  %2291 = vmatmul.bf16.gmra.mxu0 %v2040
  %v2292 = vpop.f32.mrf.mxu0
  %v2293 = vadd.f32 %v2264, %v2292
  %v2294 = vpop.f32.mrf.mxu0
  %v2295 = vadd.f32 %v2266, %v2294
  %2296 = vdwg.mxu0
  %2297 = vmatpush.bf16.xpose.msra.mxu0 %v2205
  %2298 = vmatpush.bf16.xpose.msra.mxu0 %v2201
  %2299 = vmatpush.bf16.xpose.msra.mxu0 %v2197
  %2300 = vmatpush.bf16.xpose.msra.mxu0 %v2193
  %2301 = vmatpush.bf16.xpose.msra.mxu0 %v2189
  %2302 = vmatpush.bf16.xpose.msra.mxu0 %v2185
  %2303 = vmatpush.bf16.xpose.msra.mxu0 %v2181
  %2304 = vmatpush.bf16.xpose.msra.mxu0 %v2177
  %2305 = vmatmul.bf16.gmra.mxu0 %v2029
  %v2306 = vpop.f32.mrf.mxu0
  %v2307 = vadd.f32 %v2278, %v2306
  %v2308 = vpop.f32.mrf.mxu0
  %v2309 = vadd.f32 %v2280, %v2308
  %2310 = vmatmul.bf16.gmra.mxu0 %v2033
  %v2311 = vpop.f32.mrf.mxu0
  %v2312 = vadd.f32 %v2283, %v2311
  %v2313 = vpop.f32.mrf.mxu0
  %v2314 = vadd.f32 %v2285, %v2313
  %2315 = vmatmul.bf16.gmra.mxu0 %v2037
  %v2316 = vpop.f32.mrf.mxu0
  %v2317 = vadd.f32 %v2288, %v2316
  %v2318 = vpop.f32.mrf.mxu0
  %v2319 = vadd.f32 %v2290, %v2318
  %2320 = vmatmul.bf16.gmra.mxu0 %v2041
  %v2321 = vpop.f32.mrf.mxu0
  %v2322 = vadd.f32 %v2293, %v2321
  %v2323 = vpop.f32.mrf.mxu0
  %v2324 = vadd.f32 %v2295, %v2323
  %2325 = vdwg.mxu0
  %2326 = vmatpush.bf16.xpose.msra.mxu0 %v2206
  %2327 = vmatpush.bf16.xpose.msra.mxu0 %v2202
  %2328 = vmatpush.bf16.xpose.msra.mxu0 %v2198
  %2329 = vmatpush.bf16.xpose.msra.mxu0 %v2194
  %2330 = vmatpush.bf16.xpose.msra.mxu0 %v2190
  %2331 = vmatpush.bf16.xpose.msra.mxu0 %v2186
  %2332 = vmatpush.bf16.xpose.msra.mxu0 %v2182
  %2333 = vmatpush.bf16.xpose.msra.mxu0 %v2178
  %2334 = vmatmul.bf16.gmra.mxu0 %v2030
  %v2335 = vpop.f32.mrf.mxu0
  %v2336 = vadd.f32 %v2307, %v2335
  %v2337 = vpop.f32.mrf.mxu0
  %v2338 = vadd.f32 %v2309, %v2337
  %2339 = vmatmul.bf16.gmra.mxu0 %v2034
  %v2340 = vpop.f32.mrf.mxu0
  %v2341 = vadd.f32 %v2312, %v2340
  %v2342 = vpop.f32.mrf.mxu0
  %v2343 = vadd.f32 %v2314, %v2342
  %2344 = vmatmul.bf16.gmra.mxu0 %v2038
  %v2345 = vpop.f32.mrf.mxu0
  %v2346 = vadd.f32 %v2317, %v2345
  %v2347 = vpop.f32.mrf.mxu0
  %v2348 = vadd.f32 %v2319, %v2347
  %2349 = vmatmul.bf16.gmra.mxu0 %v2042
  %v2350 = vpop.f32.mrf.mxu0
  %v2351 = vadd.f32 %v2322, %v2350
  %v2352 = vpop.f32.mrf.mxu0
  %v2353 = vadd.f32 %v2324, %v2352
  %2354 = vdwg.mxu0
  %v2355 = vadd.f32 %v34, %v2336
  %v2356 = vadd.f32 %v35, %v2338
  %v2357 = vadd.f32 %v36, %v2341
  %v2358 = vadd.f32 %v37, %v2343
  %v2359 = vadd.f32 %v38, %v2346
  %v2360 = vadd.f32 %v39, %v2348
  %v2361 = vadd.f32 %v40, %v2351
  %v2362 = vadd.f32 %v41, %v2353
  %v2363 = vpack.c.bf16 %v2355, %v2355
  %v2364 = vpack.c.bf16 %v2356, %v2356
  %v2365 = vpack.c.bf16 %v2357, %v2357
  %v2366 = vpack.c.bf16 %v2358, %v2358
  %v2367 = vpack.c.bf16 %v2359, %v2359
  %v2368 = vpack.c.bf16 %v2360, %v2360
  %v2369 = vpack.c.bf16 %v2361, %v2361
  %v2370 = vpack.c.bf16 %v2362, %v2362
  %2371 = vst [vmem:[%s7] sm:$0xf] %v2363
  %2372 = vst [vmem:[%s7 + $0x4] sm:$0xf] %v2364
  %2373 = vst [vmem:[%s7 + $0x8] sm:$0xf] %v2365
  %2374 = vst [vmem:[%s7 + $0xc] sm:$0xf] %v2366
  %2375 = vst [vmem:[%s7 + $0x10] sm:$0xf] %v2367
  %2376 = vst [vmem:[%s7 + $0x14] sm:$0xf] %v2368
  %2377 = vst [vmem:[%s7 + $0x18] sm:$0xf] %v2369
  %2378 = vst [vmem:[%s7 + $0x1c] sm:$0xf] %v2370
  // Predicated region
  $region30: #{gpt_forward.12} parent=0 // pred_check
    _
  $region31: #{gpt_forward.12} parent=0 // pred_check_branch
    %2380 = sbr.rel (0) target = $region33
  $region32: #{gpt_forward.12} parent=0 // pred_region
    _
  $region33: #{gpt_forward.12} parent=0 // pred_fallthru
    _
  // Predicated region
  $region34: #{gpt_forward.12} parent=0 // pred_check
    _
  $region35: #{gpt_forward.12} parent=0 // pred_check_branch
    %2382 = sbr.rel (0) target = $region37
  $region36: #{gpt_forward.12} parent=0 // pred_region
    _
  $region37: #{gpt_forward.12} parent=0 // pred_fallthru
    _

// kernel: gpt_forward.10
$region0: #{gpt_forward.10}
  #allocation0 [shape = 'u32[]', space=smem, size = 0x4, offset = 0x4, fixed_abs, tag = 'smem constant byte address 0x4 - core index']
  #allocation1 [shape = 'u32[72,128]{1,0:T(1,128)}', space=vmem, size = 0x9000, scoped, tag = 'internal scratch']
  #allocation2 [shape = 'f32[8,32,1]{2,1,0:T(8,128)}', space=vmem, size = 0x20000, scoped, tag = 'scratch operand']
  #allocation3 [shape = 'f32[8,32,1]{2,1,0:T(8,128)}', space=vmem, size = 0x20000, scoped, tag = 'scratch operand']
  #allocation4 [shape = 'f32[8,32,32]{2,1,0:T(8,128)}', space=vmem, size = 0x20000, scoped, tag = 'scratch operand']
  #allocation5 [shape = 's32[1]{0}', space=sflag, size = 0x4, scoped, tag = 'scoped memory for gpt_forward.10']
  #allocation6 [shape = 's32[1]{0:T(128)S(6)}', space=smem, size = 0x200, scoped, tag = 'prefetched SMEM operand 0']
  #allocation7 [shape = 's32[1]{0:T(128)S(6)}', space=smem, size = 0x200, scoped, tag = 'prefetched SMEM operand 1']
  %s0 = inlined_call_operand.<no memory space> [shape: s32[1], index: 0, kind: input, shape index: {}, may-alias: {0,1}]
  %s1 = inlined_call_operand.<no memory space> [shape: s32[1], index: 1, kind: input, shape index: {}, may-alias: {0,1}]
  %s2 = inlined_call_operand.vmem [shape: bf16[8,32,32], index: 2, kind: input, shape index: {}]
  %s3 = inlined_call_operand.vmem [shape: bf16[8,32,32], index: 3, kind: input, shape index: {}]
  %s4 = inlined_call_operand.vmem [shape: bf16[8,32,32], index: 4, kind: input, shape index: {}]
  %s5 = inlined_call_operand.vmem [shape: bf16[8,32,32], index: 5, kind: output, shape index: {}]
  %s6 = sld [smem:[#allocation0]]
  $region30: #{gpt_forward.10} parent=0
    _
  %s8 = ssub.s32 1, %s6
  %s9 = scalar_select 0, %s8, %s6
  %10 = sst [smem:[#allocation6]] %s0
  %11 = sst [smem:[#allocation7]] %s1
  // Predicated region
  $region2: #{gpt_forward.10} parent=0 // pred_check
    _
  $region3: #{gpt_forward.10} parent=0 // pred_check_branch
    %13 = sbr.rel (0) target = $region5
  $region4: #{gpt_forward.10} parent=0 // pred_region
    %s14 = sld [smem:[#allocation6]]
    %s15 = smul.u32 4, %s14
    %p16 = scmp.lt.s32.totalorder %s15, 3
    %s17 = scalar_select %p16, %s15, 3
    %s18 = smul.addr %s17, 4
    %s19 = scalar_lea.vmem %s2, %s18
    %s20 = sld [smem:[#allocation6]]
    %s21 = smul.u32 4, %s20
  $region5: #{gpt_forward.10} parent=0 // pred_fallthru
    _
  // Predicated region
  $region6: #{gpt_forward.10} parent=0 // pred_check
    _
  $region7: #{gpt_forward.10} parent=0 // pred_check_branch
    %23 = sbr.rel (0) target = $region9
  $region8: #{gpt_forward.10} parent=0 // pred_region
    %s24 = sld [smem:[#allocation7]]
    %s25 = smul.u32 4, %s24
    %p26 = scmp.lt.s32.totalorder %s25, 3
    %s27 = scalar_select %p26, %s25, 3
    %s28 = smul.addr %s27, 4
    %s29 = scalar_lea.vmem %s3, %s28
    %s30 = sld [smem:[#allocation7]]
    %s31 = smul.u32 4, %s30
  $region9: #{gpt_forward.10} parent=0 // pred_fallthru
    _
  // Predicated region
  $region10: #{gpt_forward.10} parent=0 // pred_check
    _
  $region11: #{gpt_forward.10} parent=0 // pred_check_branch
    %33 = sbr.rel (0) target = $region13
  $region12: #{gpt_forward.10} parent=0 // pred_region
    %s34 = sld [smem:[#allocation7]]
    %s35 = smul.u32 4, %s34
    %p36 = scmp.lt.s32.totalorder %s35, 3
    %s37 = scalar_select %p36, %s35, 3
    %s38 = smul.addr %s37, 4
    %s39 = scalar_lea.vmem %s4, %s38
    %s40 = sld [smem:[#allocation7]]
    %s41 = smul.u32 4, %s40
  $region13: #{gpt_forward.10} parent=0 // pred_fallthru
    _
  %s42 = sld [smem:[#allocation6]]
  %s43 = smul.u32 4, %s42
  %p44 = scmp.lt.s32.totalorder %s43, 3
  %s45 = scalar_select %p44, %s43, 3
  %s46 = smul.addr %s45, 4
  %s47 = scalar_lea.vmem %s2, %s46
  %s48 = sld [smem:[#allocation7]]
  %s49 = smul.u32 4, %s48
  %p50 = scmp.lt.s32.totalorder %s49, 3
  %s51 = scalar_select %p50, %s49, 3
  %s52 = smul.addr %s51, 4
  %s53 = scalar_lea.vmem %s3, %s52
  %s54 = sld [smem:[#allocation7]]
  %s55 = smul.u32 4, %s54
  %p56 = scmp.lt.s32.totalorder %s55, 3
  %s57 = scalar_select %p56, %s55, 3
  %s58 = smul.addr %s57, 4
  %s59 = scalar_lea.vmem %s4, %s58
  %s60 = sld [smem:[#allocation6]]
  %s61 = smul.u32 4, %s60
  %p62 = scmp.lt.s32.totalorder %s61, 3
  %s63 = scalar_select %p62, %s61, 3
  %s64 = smul.addr %s63, 4
  %s65 = scalar_lea.vmem %s5, %s64
  %s66 = sld [smem:[#allocation6]]
  %s67 = smul.u32 4, %s66
  %p68 = scmp.lt.s32.totalorder %s67, 3
  %s69 = scalar_select %p68, %s67, 3
  %s70 = smul.addr %s69, 4
  %s71 = scalar_lea.vmem %s2, %s70
  %s72 = sld [smem:[#allocation6]]
  %s73 = smul.u32 4, %s72
  %s74 = sld [smem:[#allocation7]]
  %s75 = smul.u32 4, %s74
  %p76 = scmp.lt.s32.totalorder %s75, 3
  %s77 = scalar_select %p76, %s75, 3
  %s78 = smul.addr %s77, 4
  %s79 = scalar_lea.vmem %s3, %s78
  %s80 = sld [smem:[#allocation7]]
  %s81 = smul.u32 4, %s80
  %s82 = sld [smem:[#allocation7]]
  %s83 = smul.u32 4, %s82
  %p84 = scmp.lt.s32.totalorder %s83, 3
  %s85 = scalar_select %p84, %s83, 3
  %s86 = smul.addr %s85, 4
  %s87 = scalar_lea.vmem %s4, %s86
  %s88 = sld [smem:[#allocation7]]
  %s89 = smul.u32 4, %s88
  %s90 = sld [smem:[#allocation6]]
  %s91 = smul.u32 4, %s90
  %p92 = scmp.lt.s32.totalorder %s91, 3
  %s93 = scalar_select %p92, %s91, 3
  %s94 = smul.addr %s93, 4
  %s95 = scalar_lea.vmem %s5, %s94
  %s96 = sld [smem:[#allocation6]]
  %s97 = smul.u32 4, %s96
  %s99 = sld [smem:[#allocation6]]
  %s100 = sld [smem:[#allocation7]]
  %p101 = scmp.eq.s32.totalorder %s100, 0
  // Predicated region
  $region14: #{gpt_forward.10} parent=0 // pred_check
    %p102 = pneg %p101
  $region15: #{gpt_forward.10} parent=0 // pred_check_branch
    %104 = sbr.rel (%p102) target = $region17
  $region16: #{gpt_forward.10} parent=0 // pred_region
    %vm105 = vcmask 7168
    %106 = vst.msk [vmem:[#allocation2] sm:$0xff] %vm105, -inf
    %107 = vst.msk [vmem:[#allocation2 + $0x8] sm:$0xff] %vm105, -inf
    %108 = vst.msk [vmem:[#allocation2 + $0x10] sm:$0xff] %vm105, -inf
    %109 = vst.msk [vmem:[#allocation2 + $0x18] sm:$0xff] %vm105, -inf
    %110 = vst.msk [vmem:[#allocation2 + $0x20] sm:$0xff] %vm105, -inf
    %111 = vst.msk [vmem:[#allocation2 + $0x28] sm:$0xff] %vm105, -inf
    %112 = vst.msk [vmem:[#allocation2 + $0x30] sm:$0xff] %vm105, -inf
    %113 = vst.msk [vmem:[#allocation2 + $0x38] sm:$0xff] %vm105, -inf
    %114 = vst.msk [vmem:[#allocation2 + $0x40] sm:$0xff] %vm105, -inf
    %115 = vst.msk [vmem:[#allocation2 + $0x48] sm:$0xff] %vm105, -inf
    %116 = vst.msk [vmem:[#allocation2 + $0x50] sm:$0xff] %vm105, -inf
    %117 = vst.msk [vmem:[#allocation2 + $0x58] sm:$0xff] %vm105, -inf
    %118 = vst.msk [vmem:[#allocation2 + $0x60] sm:$0xff] %vm105, -inf
    %119 = vst.msk [vmem:[#allocation2 + $0x68] sm:$0xff] %vm105, -inf
    %120 = vst.msk [vmem:[#allocation2 + $0x70] sm:$0xff] %vm105, -inf
    %121 = vst.msk [vmem:[#allocation2 + $0x78] sm:$0xff] %vm105, -inf
    %122 = vst.msk [vmem:[#allocation2 + $0x80] sm:$0xff] %vm105, -inf
    %123 = vst.msk [vmem:[#allocation2 + $0x88] sm:$0xff] %vm105, -inf
    %124 = vst.msk [vmem:[#allocation2 + $0x90] sm:$0xff] %vm105, -inf
    %125 = vst.msk [vmem:[#allocation2 + $0x98] sm:$0xff] %vm105, -inf
    %126 = vst.msk [vmem:[#allocation2 + $0xa0] sm:$0xff] %vm105, -inf
    %127 = vst.msk [vmem:[#allocation2 + $0xa8] sm:$0xff] %vm105, -inf
    %128 = vst.msk [vmem:[#allocation2 + $0xb0] sm:$0xff] %vm105, -inf
    %129 = vst.msk [vmem:[#allocation2 + $0xb8] sm:$0xff] %vm105, -inf
    %130 = vst.msk [vmem:[#allocation2 + $0xc0] sm:$0xff] %vm105, -inf
    %131 = vst.msk [vmem:[#allocation2 + $0xc8] sm:$0xff] %vm105, -inf
    %132 = vst.msk [vmem:[#allocation2 + $0xd0] sm:$0xff] %vm105, -inf
    %133 = vst.msk [vmem:[#allocation2 + $0xd8] sm:$0xff] %vm105, -inf
    %134 = vst.msk [vmem:[#allocation2 + $0xe0] sm:$0xff] %vm105, -inf
    %135 = vst.msk [vmem:[#allocation2 + $0xe8] sm:$0xff] %vm105, -inf
    %136 = vst.msk [vmem:[#allocation2 + $0xf0] sm:$0xff] %vm105, -inf
    %137 = vst.msk [vmem:[#allocation2 + $0xf8] sm:$0xff] %vm105, -inf
    %138 = vst.msk [vmem:[#allocation3] sm:$0xff] %vm105, 0.0
    %139 = vst.msk [vmem:[#allocation3 + $0x8] sm:$0xff] %vm105, 0.0
    %140 = vst.msk [vmem:[#allocation3 + $0x10] sm:$0xff] %vm105, 0.0
    %141 = vst.msk [vmem:[#allocation3 + $0x18] sm:$0xff] %vm105, 0.0
    %142 = vst.msk [vmem:[#allocation3 + $0x20] sm:$0xff] %vm105, 0.0
    %143 = vst.msk [vmem:[#allocation3 + $0x28] sm:$0xff] %vm105, 0.0
    %144 = vst.msk [vmem:[#allocation3 + $0x30] sm:$0xff] %vm105, 0.0
    %145 = vst.msk [vmem:[#allocation3 + $0x38] sm:$0xff] %vm105, 0.0
    %146 = vst.msk [vmem:[#allocation3 + $0x40] sm:$0xff] %vm105, 0.0
    %147 = vst.msk [vmem:[#allocation3 + $0x48] sm:$0xff] %vm105, 0.0
    %148 = vst.msk [vmem:[#allocation3 + $0x50] sm:$0xff] %vm105, 0.0
    %149 = vst.msk [vmem:[#allocation3 + $0x58] sm:$0xff] %vm105, 0.0
    %150 = vst.msk [vmem:[#allocation3 + $0x60] sm:$0xff] %vm105, 0.0
    %151 = vst.msk [vmem:[#allocation3 + $0x68] sm:$0xff] %vm105, 0.0
    %152 = vst.msk [vmem:[#allocation3 + $0x70] sm:$0xff] %vm105, 0.0
    %153 = vst.msk [vmem:[#allocation3 + $0x78] sm:$0xff] %vm105, 0.0
    %154 = vst.msk [vmem:[#allocation3 + $0x80] sm:$0xff] %vm105, 0.0
    %155 = vst.msk [vmem:[#allocation3 + $0x88] sm:$0xff] %vm105, 0.0
    %156 = vst.msk [vmem:[#allocation3 + $0x90] sm:$0xff] %vm105, 0.0
    %157 = vst.msk [vmem:[#allocation3 + $0x98] sm:$0xff] %vm105, 0.0
    %158 = vst.msk [vmem:[#allocation3 + $0xa0] sm:$0xff] %vm105, 0.0
    %159 = vst.msk [vmem:[#allocation3 + $0xa8] sm:$0xff] %vm105, 0.0
    %160 = vst.msk [vmem:[#allocation3 + $0xb0] sm:$0xff] %vm105, 0.0
    %161 = vst.msk [vmem:[#allocation3 + $0xb8] sm:$0xff] %vm105, 0.0
    %162 = vst.msk [vmem:[#allocation3 + $0xc0] sm:$0xff] %vm105, 0.0
    %163 = vst.msk [vmem:[#allocation3 + $0xc8] sm:$0xff] %vm105, 0.0
    %164 = vst.msk [vmem:[#allocation3 + $0xd0] sm:$0xff] %vm105, 0.0
    %165 = vst.msk [vmem:[#allocation3 + $0xd8] sm:$0xff] %vm105, 0.0
    %166 = vst.msk [vmem:[#allocation3 + $0xe0] sm:$0xff] %vm105, 0.0
    %167 = vst.msk [vmem:[#allocation3 + $0xe8] sm:$0xff] %vm105, 0.0
    %168 = vst.msk [vmem:[#allocation3 + $0xf0] sm:$0xff] %vm105, 0.0
    %169 = vst.msk [vmem:[#allocation3 + $0xf8] sm:$0xff] %vm105, 0.0
    %vm170 = vcmask 261120
    %171 = vst.msk [vmem:[#allocation4] sm:$0xff] %vm170, 0.0
    %172 = vst.msk [vmem:[#allocation4 + $0x8] sm:$0xff] %vm170, 0.0
    %173 = vst.msk [vmem:[#allocation4 + $0x10] sm:$0xff] %vm170, 0.0
    %174 = vst.msk [vmem:[#allocation4 + $0x18] sm:$0xff] %vm170, 0.0
    %175 = vst.msk [vmem:[#allocation4 + $0x20] sm:$0xff] %vm170, 0.0
    %176 = vst.msk [vmem:[#allocation4 + $0x28] sm:$0xff] %vm170, 0.0
    %177 = vst.msk [vmem:[#allocation4 + $0x30] sm:$0xff] %vm170, 0.0
    %178 = vst.msk [vmem:[#allocation4 + $0x38] sm:$0xff] %vm170, 0.0
    %179 = vst.msk [vmem:[#allocation4 + $0x40] sm:$0xff] %vm170, 0.0
    %180 = vst.msk [vmem:[#allocation4 + $0x48] sm:$0xff] %vm170, 0.0
    %181 = vst.msk [vmem:[#allocation4 + $0x50] sm:$0xff] %vm170, 0.0
    %182 = vst.msk [vmem:[#allocation4 + $0x58] sm:$0xff] %vm170, 0.0
    %183 = vst.msk [vmem:[#allocation4 + $0x60] sm:$0xff] %vm170, 0.0
    %184 = vst.msk [vmem:[#allocation4 + $0x68] sm:$0xff] %vm170, 0.0
    %185 = vst.msk [vmem:[#allocation4 + $0x70] sm:$0xff] %vm170, 0.0
    %186 = vst.msk [vmem:[#allocation4 + $0x78] sm:$0xff] %vm170, 0.0
    %187 = vst.msk [vmem:[#allocation4 + $0x80] sm:$0xff] %vm170, 0.0
    %188 = vst.msk [vmem:[#allocation4 + $0x88] sm:$0xff] %vm170, 0.0
    %189 = vst.msk [vmem:[#allocation4 + $0x90] sm:$0xff] %vm170, 0.0
    %190 = vst.msk [vmem:[#allocation4 + $0x98] sm:$0xff] %vm170, 0.0
    %191 = vst.msk [vmem:[#allocation4 + $0xa0] sm:$0xff] %vm170, 0.0
    %192 = vst.msk [vmem:[#allocation4 + $0xa8] sm:$0xff] %vm170, 0.0
    %193 = vst.msk [vmem:[#allocation4 + $0xb0] sm:$0xff] %vm170, 0.0
    %194 = vst.msk [vmem:[#allocation4 + $0xb8] sm:$0xff] %vm170, 0.0
    %195 = vst.msk [vmem:[#allocation4 + $0xc0] sm:$0xff] %vm170, 0.0
    %196 = vst.msk [vmem:[#allocation4 + $0xc8] sm:$0xff] %vm170, 0.0
    %197 = vst.msk [vmem:[#allocation4 + $0xd0] sm:$0xff] %vm170, 0.0
    %198 = vst.msk [vmem:[#allocation4 + $0xd8] sm:$0xff] %vm170, 0.0
    %199 = vst.msk [vmem:[#allocation4 + $0xe0] sm:$0xff] %vm170, 0.0
    %200 = vst.msk [vmem:[#allocation4 + $0xe8] sm:$0xff] %vm170, 0.0
    %201 = vst.msk [vmem:[#allocation4 + $0xf0] sm:$0xff] %vm170, 0.0
    %202 = vst.msk [vmem:[#allocation4 + $0xf8] sm:$0xff] %vm170, 0.0
  $region17: #{gpt_forward.10} parent=0 // pred_fallthru
    _
  %v203 = vld [vmem:[%s71] sm:$0xf]
  %v204 = vld [vmem:[%s71 + $0x4] sm:$0xf]
  %v205 = vld [vmem:[%s71 + $0x8] sm:$0xf]
  %v206 = vld [vmem:[%s71 + $0xc] sm:$0xf]
  %v207 = vld [vmem:[%s71 + $0x10] sm:$0xf]
  %v208 = vld [vmem:[%s71 + $0x14] sm:$0xf]
  %v209 = vld [vmem:[%s71 + $0x18] sm:$0xf]
  %v210 = vld [vmem:[%s71 + $0x1c] sm:$0xf]
  %v211 = vld [vmem:[%s71 + $0x20] sm:$0xf]
  %v212 = vld [vmem:[%s71 + $0x24] sm:$0xf]
  %v213 = vld [vmem:[%s71 + $0x28] sm:$0xf]
  %v214 = vld [vmem:[%s71 + $0x2c] sm:$0xf]
  %v215 = vld [vmem:[%s71 + $0x30] sm:$0xf]
  %v216 = vld [vmem:[%s71 + $0x34] sm:$0xf]
  %v217 = vld [vmem:[%s71 + $0x38] sm:$0xf]
  %v218 = vld [vmem:[%s71 + $0x3c] sm:$0xf]
  %v219 = vld [vmem:[%s71 + $0x40] sm:$0xf]
  %v220 = vld [vmem:[%s71 + $0x44] sm:$0xf]
  %v221 = vld [vmem:[%s71 + $0x48] sm:$0xf]
  %v222 = vld [vmem:[%s71 + $0x4c] sm:$0xf]
  %v223 = vld [vmem:[%s71 + $0x50] sm:$0xf]
  %v224 = vld [vmem:[%s71 + $0x54] sm:$0xf]
  %v225 = vld [vmem:[%s71 + $0x58] sm:$0xf]
  %v226 = vld [vmem:[%s71 + $0x5c] sm:$0xf]
  %v227 = vld [vmem:[%s71 + $0x60] sm:$0xf]
  %v228 = vld [vmem:[%s71 + $0x64] sm:$0xf]
  %v229 = vld [vmem:[%s71 + $0x68] sm:$0xf]
  %v230 = vld [vmem:[%s71 + $0x6c] sm:$0xf]
  %v231 = vld [vmem:[%s71 + $0x70] sm:$0xf]
  %v232 = vld [vmem:[%s71 + $0x74] sm:$0xf]
  %v233 = vld [vmem:[%s71 + $0x78] sm:$0xf]
  %v234 = vld [vmem:[%s71 + $0x7c] sm:$0xf]
  %v235 = vld [vmem:[%s79] sm:$0xf]
  %v236 = vld [vmem:[%s79 + $0x4] sm:$0xf]
  %v237 = vld [vmem:[%s79 + $0x8] sm:$0xf]
  %v238 = vld [vmem:[%s79 + $0xc] sm:$0xf]
  %v239 = vld [vmem:[%s79 + $0x10] sm:$0xf]
  %v240 = vld [vmem:[%s79 + $0x14] sm:$0xf]
  %v241 = vld [vmem:[%s79 + $0x18] sm:$0xf]
  %v242 = vld [vmem:[%s79 + $0x1c] sm:$0xf]
  %v243 = vld [vmem:[%s79 + $0x20] sm:$0xf]
  %v244 = vld [vmem:[%s79 + $0x24] sm:$0xf]
  %v245 = vld [vmem:[%s79 + $0x28] sm:$0xf]
  %v246 = vld [vmem:[%s79 + $0x2c] sm:$0xf]
  %v247 = vld [vmem:[%s79 + $0x30] sm:$0xf]
  %v248 = vld [vmem:[%s79 + $0x34] sm:$0xf]
  %v249 = vld [vmem:[%s79 + $0x38] sm:$0xf]
  %v250 = vld [vmem:[%s79 + $0x3c] sm:$0xf]
  %v251 = vld [vmem:[%s79 + $0x40] sm:$0xf]
  %v252 = vld [vmem:[%s79 + $0x44] sm:$0xf]
  %v253 = vld [vmem:[%s79 + $0x48] sm:$0xf]
  %v254 = vld [vmem:[%s79 + $0x4c] sm:$0xf]
  %v255 = vld [vmem:[%s79 + $0x50] sm:$0xf]
  %v256 = vld [vmem:[%s79 + $0x54] sm:$0xf]
  %v257 = vld [vmem:[%s79 + $0x58] sm:$0xf]
  %v258 = vld [vmem:[%s79 + $0x5c] sm:$0xf]
  %v259 = vld [vmem:[%s79 + $0x60] sm:$0xf]
  %v260 = vld [vmem:[%s79 + $0x64] sm:$0xf]
  %v261 = vld [vmem:[%s79 + $0x68] sm:$0xf]
  %v262 = vld [vmem:[%s79 + $0x6c] sm:$0xf]
  %v263 = vld [vmem:[%s79 + $0x70] sm:$0xf]
  %v264 = vld [vmem:[%s79 + $0x74] sm:$0xf]
  %v265 = vld [vmem:[%s79 + $0x78] sm:$0xf]
  %v266 = vld [vmem:[%s79 + $0x7c] sm:$0xf]
  %v271 = vunpack.c.l.b16 %v203
  %v272 = vunpack.c.l.b16 %v204
  %v273 = vunpack.c.l.b16 %v205
  %v274 = vunpack.c.l.b16 %v206
  %v275 = vpack.c.b16 %v272, %v271
  %v276 = vpack.c.b16 %v274, %v273
  %v281 = vunpack.c.l.b16 %v235
  %v282 = vunpack.c.l.b16 %v236
  %v283 = vunpack.c.l.b16 %v237
  %v284 = vunpack.c.l.b16 %v238
  %v285 = vpack.c.b16 %v282, %v281
  %v286 = vpack.c.b16 %v284, %v283
  %vm287 = vcmask 261120
  %v289 = vsel %vm287, %v275, 0
  %v292 = vsel %vm287, %v276, 0
  %v295 = vsel %vm287, %v285, 0
  %v298 = vsel %vm287, %v286, 0
  %300 = vmatpush.bf16.xpose.msra.mxu0 0
  %301 = vmatpush.bf16.xpose.msra.mxu0 0
  %302 = vmatpush.bf16.xpose.msra.mxu0 0
  %303 = vmatpush.bf16.xpose.msra.mxu0 0
  %304 = vmatpush.bf16.xpose.msra.mxu0 0
  %305 = vmatpush.bf16.xpose.msra.mxu0 0
  %306 = vmatpush.bf16.xpose.msra.mxu0 %v298
  %307 = vmatpush.bf16.xpose.msra.mxu0 %v295
  %308 = vmatmul.bf16.gmra.mxu0 %v289
  %v309 = vpop.f32.mrf.mxu0
  %v310 = vadd.f32 0.0, %v309
  %v311 = vpop.f32.mrf.mxu0
  %v312 = vadd.f32 0.0, %v311
  %313 = vmatmul.bf16.gmra.mxu0 %v292
  %v314 = vpop.f32.mrf.mxu0
  %v315 = vadd.f32 0.0, %v314
  %v316 = vpop.f32.mrf.mxu0
  %v317 = vadd.f32 0.0, %v316
  %318 = vdwg.mxu0
  %v323 = vunpack.c.l.b16 %v207
  %v324 = vunpack.c.l.b16 %v208
  %v325 = vunpack.c.l.b16 %v209
  %v326 = vunpack.c.l.b16 %v210
  %v327 = vpack.c.b16 %v324, %v323
  %v328 = vpack.c.b16 %v326, %v325
  %v333 = vunpack.c.l.b16 %v239
  %v334 = vunpack.c.l.b16 %v240
  %v335 = vunpack.c.l.b16 %v241
  %v336 = vunpack.c.l.b16 %v242
  %v337 = vpack.c.b16 %v334, %v333
  %v338 = vpack.c.b16 %v336, %v335
  %v340 = vsel %vm287, %v327, 0
  %v343 = vsel %vm287, %v328, 0
  %v346 = vsel %vm287, %v337, 0
  %v349 = vsel %vm287, %v338, 0
  %351 = vmatpush.bf16.xpose.msra.mxu0 0
  %352 = vmatpush.bf16.xpose.msra.mxu0 0
  %353 = vmatpush.bf16.xpose.msra.mxu0 0
  %354 = vmatpush.bf16.xpose.msra.mxu0 0
  %355 = vmatpush.bf16.xpose.msra.mxu0 0
  %356 = vmatpush.bf16.xpose.msra.mxu0 0
  %357 = vmatpush.bf16.xpose.msra.mxu0 %v349
  %358 = vmatpush.bf16.xpose.msra.mxu0 %v346
  %359 = vmatmul.bf16.gmra.mxu0 %v340
  %v360 = vpop.f32.mrf.mxu0
  %v361 = vadd.f32 0.0, %v360
  %v362 = vpop.f32.mrf.mxu0
  %v363 = vadd.f32 0.0, %v362
  %364 = vmatmul.bf16.gmra.mxu0 %v343
  %v365 = vpop.f32.mrf.mxu0
  %v366 = vadd.f32 0.0, %v365
  %v367 = vpop.f32.mrf.mxu0
  %v368 = vadd.f32 0.0, %v367
  %369 = vdwg.mxu0
  %v374 = vunpack.c.l.b16 %v211
  %v375 = vunpack.c.l.b16 %v212
  %v376 = vunpack.c.l.b16 %v213
  %v377 = vunpack.c.l.b16 %v214
  %v378 = vpack.c.b16 %v375, %v374
  %v379 = vpack.c.b16 %v377, %v376
  %v384 = vunpack.c.l.b16 %v243
  %v385 = vunpack.c.l.b16 %v244
  %v386 = vunpack.c.l.b16 %v245
  %v387 = vunpack.c.l.b16 %v246
  %v388 = vpack.c.b16 %v385, %v384
  %v389 = vpack.c.b16 %v387, %v386
  %v391 = vsel %vm287, %v378, 0
  %v394 = vsel %vm287, %v379, 0
  %v397 = vsel %vm287, %v388, 0
  %v400 = vsel %vm287, %v389, 0
  %402 = vmatpush.bf16.xpose.msra.mxu0 0
  %403 = vmatpush.bf16.xpose.msra.mxu0 0
  %404 = vmatpush.bf16.xpose.msra.mxu0 0
  %405 = vmatpush.bf16.xpose.msra.mxu0 0
  %406 = vmatpush.bf16.xpose.msra.mxu0 0
  %407 = vmatpush.bf16.xpose.msra.mxu0 0
  %408 = vmatpush.bf16.xpose.msra.mxu0 %v400
  %409 = vmatpush.bf16.xpose.msra.mxu0 %v397
  %410 = vmatmul.bf16.gmra.mxu0 %v391
  %v411 = vpop.f32.mrf.mxu0
  %v412 = vadd.f32 0.0, %v411
  %v413 = vpop.f32.mrf.mxu0
  %v414 = vadd.f32 0.0, %v413
  %415 = vmatmul.bf16.gmra.mxu0 %v394
  %v416 = vpop.f32.mrf.mxu0
  %v417 = vadd.f32 0.0, %v416
  %v418 = vpop.f32.mrf.mxu0
  %v419 = vadd.f32 0.0, %v418
  %420 = vdwg.mxu0
  %v425 = vunpack.c.l.b16 %v215
  %v426 = vunpack.c.l.b16 %v216
  %v427 = vunpack.c.l.b16 %v217
  %v428 = vunpack.c.l.b16 %v218
  %v429 = vpack.c.b16 %v426, %v425
  %v430 = vpack.c.b16 %v428, %v427
  %v435 = vunpack.c.l.b16 %v247
  %v436 = vunpack.c.l.b16 %v248
  %v437 = vunpack.c.l.b16 %v249
  %v438 = vunpack.c.l.b16 %v250
  %v439 = vpack.c.b16 %v436, %v435
  %v440 = vpack.c.b16 %v438, %v437
  %v442 = vsel %vm287, %v429, 0
  %v445 = vsel %vm287, %v430, 0
  %v448 = vsel %vm287, %v439, 0
  %v451 = vsel %vm287, %v440, 0
  %453 = vmatpush.bf16.xpose.msra.mxu0 0
  %454 = vmatpush.bf16.xpose.msra.mxu0 0
  %455 = vmatpush.bf16.xpose.msra.mxu0 0
  %456 = vmatpush.bf16.xpose.msra.mxu0 0
  %457 = vmatpush.bf16.xpose.msra.mxu0 0
  %458 = vmatpush.bf16.xpose.msra.mxu0 0
  %459 = vmatpush.bf16.xpose.msra.mxu0 %v451
  %460 = vmatpush.bf16.xpose.msra.mxu0 %v448
  %461 = vmatmul.bf16.gmra.mxu0 %v442
  %v462 = vpop.f32.mrf.mxu0
  %v463 = vadd.f32 0.0, %v462
  %v464 = vpop.f32.mrf.mxu0
  %v465 = vadd.f32 0.0, %v464
  %466 = vmatmul.bf16.gmra.mxu0 %v445
  %v467 = vpop.f32.mrf.mxu0
  %v468 = vadd.f32 0.0, %v467
  %v469 = vpop.f32.mrf.mxu0
  %v470 = vadd.f32 0.0, %v469
  %471 = vdwg.mxu0
  %v476 = vunpack.c.l.b16 %v219
  %v477 = vunpack.c.l.b16 %v220
  %v478 = vunpack.c.l.b16 %v221
  %v479 = vunpack.c.l.b16 %v222
  %v480 = vpack.c.b16 %v477, %v476
  %v481 = vpack.c.b16 %v479, %v478
  %v486 = vunpack.c.l.b16 %v251
  %v487 = vunpack.c.l.b16 %v252
  %v488 = vunpack.c.l.b16 %v253
  %v489 = vunpack.c.l.b16 %v254
  %v490 = vpack.c.b16 %v487, %v486
  %v491 = vpack.c.b16 %v489, %v488
  %v493 = vsel %vm287, %v480, 0
  %v496 = vsel %vm287, %v481, 0
  %v499 = vsel %vm287, %v490, 0
  %v502 = vsel %vm287, %v491, 0
  %504 = vmatpush.bf16.xpose.msra.mxu0 0
  %505 = vmatpush.bf16.xpose.msra.mxu0 0
  %506 = vmatpush.bf16.xpose.msra.mxu0 0
  %507 = vmatpush.bf16.xpose.msra.mxu0 0
  %508 = vmatpush.bf16.xpose.msra.mxu0 0
  %509 = vmatpush.bf16.xpose.msra.mxu0 0
  %510 = vmatpush.bf16.xpose.msra.mxu0 %v502
  %511 = vmatpush.bf16.xpose.msra.mxu0 %v499
  %512 = vmatmul.bf16.gmra.mxu0 %v493
  %v513 = vpop.f32.mrf.mxu0
  %v514 = vadd.f32 0.0, %v513
  %v515 = vpop.f32.mrf.mxu0
  %v516 = vadd.f32 0.0, %v515
  %517 = vmatmul.bf16.gmra.mxu0 %v496
  %v518 = vpop.f32.mrf.mxu0
  %v519 = vadd.f32 0.0, %v518
  %v520 = vpop.f32.mrf.mxu0
  %v521 = vadd.f32 0.0, %v520
  %522 = vdwg.mxu0
  %v527 = vunpack.c.l.b16 %v223
  %v528 = vunpack.c.l.b16 %v224
  %v529 = vunpack.c.l.b16 %v225
  %v530 = vunpack.c.l.b16 %v226
  %v531 = vpack.c.b16 %v528, %v527
  %v532 = vpack.c.b16 %v530, %v529
  %v537 = vunpack.c.l.b16 %v255
  %v538 = vunpack.c.l.b16 %v256
  %v539 = vunpack.c.l.b16 %v257
  %v540 = vunpack.c.l.b16 %v258
  %v541 = vpack.c.b16 %v538, %v537
  %v542 = vpack.c.b16 %v540, %v539
  %v544 = vsel %vm287, %v531, 0
  %v547 = vsel %vm287, %v532, 0
  %v550 = vsel %vm287, %v541, 0
  %v553 = vsel %vm287, %v542, 0
  %555 = vmatpush.bf16.xpose.msra.mxu0 0
  %556 = vmatpush.bf16.xpose.msra.mxu0 0
  %557 = vmatpush.bf16.xpose.msra.mxu0 0
  %558 = vmatpush.bf16.xpose.msra.mxu0 0
  %559 = vmatpush.bf16.xpose.msra.mxu0 0
  %560 = vmatpush.bf16.xpose.msra.mxu0 0
  %561 = vmatpush.bf16.xpose.msra.mxu0 %v553
  %562 = vmatpush.bf16.xpose.msra.mxu0 %v550
  %563 = vmatmul.bf16.gmra.mxu0 %v544
  %v564 = vpop.f32.mrf.mxu0
  %v565 = vadd.f32 0.0, %v564
  %v566 = vpop.f32.mrf.mxu0
  %v567 = vadd.f32 0.0, %v566
  %568 = vmatmul.bf16.gmra.mxu0 %v547
  %v569 = vpop.f32.mrf.mxu0
  %v570 = vadd.f32 0.0, %v569
  %v571 = vpop.f32.mrf.mxu0
  %v572 = vadd.f32 0.0, %v571
  %573 = vdwg.mxu0
  %v578 = vunpack.c.l.b16 %v227
  %v579 = vunpack.c.l.b16 %v228
  %v580 = vunpack.c.l.b16 %v229
  %v581 = vunpack.c.l.b16 %v230
  %v582 = vpack.c.b16 %v579, %v578
  %v583 = vpack.c.b16 %v581, %v580
  %v588 = vunpack.c.l.b16 %v259
  %v589 = vunpack.c.l.b16 %v260
  %v590 = vunpack.c.l.b16 %v261
  %v591 = vunpack.c.l.b16 %v262
  %v592 = vpack.c.b16 %v589, %v588
  %v593 = vpack.c.b16 %v591, %v590
  %v595 = vsel %vm287, %v582, 0
  %v598 = vsel %vm287, %v583, 0
  %v601 = vsel %vm287, %v592, 0
  %v604 = vsel %vm287, %v593, 0
  %606 = vmatpush.bf16.xpose.msra.mxu0 0
  %607 = vmatpush.bf16.xpose.msra.mxu0 0
  %608 = vmatpush.bf16.xpose.msra.mxu0 0
  %609 = vmatpush.bf16.xpose.msra.mxu0 0
  %610 = vmatpush.bf16.xpose.msra.mxu0 0
  %611 = vmatpush.bf16.xpose.msra.mxu0 0
  %612 = vmatpush.bf16.xpose.msra.mxu0 %v604
  %613 = vmatpush.bf16.xpose.msra.mxu0 %v601
  %614 = vmatmul.bf16.gmra.mxu0 %v595
  %v615 = vpop.f32.mrf.mxu0
  %v616 = vadd.f32 0.0, %v615
  %v617 = vpop.f32.mrf.mxu0
  %v618 = vadd.f32 0.0, %v617
  %619 = vmatmul.bf16.gmra.mxu0 %v598
  %v620 = vpop.f32.mrf.mxu0
  %v621 = vadd.f32 0.0, %v620
  %v622 = vpop.f32.mrf.mxu0
  %v623 = vadd.f32 0.0, %v622
  %624 = vdwg.mxu0
  %v629 = vunpack.c.l.b16 %v231
  %v630 = vunpack.c.l.b16 %v232
  %v631 = vunpack.c.l.b16 %v233
  %v632 = vunpack.c.l.b16 %v234
  %v633 = vpack.c.b16 %v630, %v629
  %v634 = vpack.c.b16 %v632, %v631
  %v639 = vunpack.c.l.b16 %v263
  %v640 = vunpack.c.l.b16 %v264
  %v641 = vunpack.c.l.b16 %v265
  %v642 = vunpack.c.l.b16 %v266
  %v643 = vpack.c.b16 %v640, %v639
  %v644 = vpack.c.b16 %v642, %v641
  %v646 = vsel %vm287, %v633, 0
  %v649 = vsel %vm287, %v634, 0
  %v652 = vsel %vm287, %v643, 0
  %v655 = vsel %vm287, %v644, 0
  %657 = vmatpush.bf16.xpose.msra.mxu0 0
  %658 = vmatpush.bf16.xpose.msra.mxu0 0
  %659 = vmatpush.bf16.xpose.msra.mxu0 0
  %660 = vmatpush.bf16.xpose.msra.mxu0 0
  %661 = vmatpush.bf16.xpose.msra.mxu0 0
  %662 = vmatpush.bf16.xpose.msra.mxu0 0
  %663 = vmatpush.bf16.xpose.msra.mxu0 %v655
  %664 = vmatpush.bf16.xpose.msra.mxu0 %v652
  %665 = vmatmul.bf16.gmra.mxu0 %v646
  %v666 = vpop.f32.mrf.mxu0
  %v667 = vadd.f32 0.0, %v666
  %v668 = vpop.f32.mrf.mxu0
  %v669 = vadd.f32 0.0, %v668
  %670 = vmatmul.bf16.gmra.mxu0 %v649
  %v671 = vpop.f32.mrf.mxu0
  %v672 = vadd.f32 0.0, %v671
  %v673 = vpop.f32.mrf.mxu0
  %v674 = vadd.f32 0.0, %v673
  %675 = vdwg.mxu0
  %v676 = vmul.f32 %v310, 0.17677669
  %v677 = vmul.f32 %v312, 0.17677669
  %v678 = vmul.f32 %v315, 0.17677669
  %v679 = vmul.f32 %v317, 0.17677669
  %v680 = vmul.f32 %v361, 0.17677669
  %v681 = vmul.f32 %v363, 0.17677669
  %v682 = vmul.f32 %v366, 0.17677669
  %v683 = vmul.f32 %v368, 0.17677669
  %v684 = vmul.f32 %v412, 0.17677669
  %v685 = vmul.f32 %v414, 0.17677669
  %v686 = vmul.f32 %v417, 0.17677669
  %v687 = vmul.f32 %v419, 0.17677669
  %v688 = vmul.f32 %v463, 0.17677669
  %v689 = vmul.f32 %v465, 0.17677669
  %v690 = vmul.f32 %v468, 0.17677669
  %v691 = vmul.f32 %v470, 0.17677669
  %v692 = vmul.f32 %v514, 0.17677669
  %v693 = vmul.f32 %v516, 0.17677669
  %v694 = vmul.f32 %v519, 0.17677669
  %v695 = vmul.f32 %v521, 0.17677669
  %v696 = vmul.f32 %v565, 0.17677669
  %v697 = vmul.f32 %v567, 0.17677669
  %v698 = vmul.f32 %v570, 0.17677669
  %v699 = vmul.f32 %v572, 0.17677669
  %v700 = vmul.f32 %v616, 0.17677669
  %v701 = vmul.f32 %v618, 0.17677669
  %v702 = vmul.f32 %v621, 0.17677669
  %v703 = vmul.f32 %v623, 0.17677669
  %v704 = vmul.f32 %v667, 0.17677669
  %v705 = vmul.f32 %v669, 0.17677669
  %v706 = vmul.f32 %v672, 0.17677669
  %v707 = vmul.f32 %v674, 0.17677669
  %s708 = smul.u32 %s99, 32
  %v709 = vlaneseq
  %v710 = vshrl.u32 %v709, 7
  %v711 = vadd.s32 %v710, 8
  %v712 = vadd.s32 %v710, 16
  %v713 = vadd.s32 %v710, 24
  %v714 = vstv %s708
  %v715 = vadd.s32 %v714, %v710
  %v716 = vadd.s32 %v714, %v711
  %v717 = vadd.s32 %v714, %v712
  %v718 = vadd.s32 %v714, %v713
  %s719 = smul.u32 %s100, 32
  %v720 = vlaneseq
  %v721 = vand.u32 %v720, 127
  %v722 = vstv %s719
  %v723 = vadd.s32 %v722, %v721
  %vm724 = vcmp.le.s32.totalorder %v723, %v715
  %vm725 = vcmp.le.s32.totalorder %v723, %v716
  %vm726 = vcmp.le.s32.totalorder %v723, %v717
  %vm727 = vcmp.le.s32.totalorder %v723, %v718
  %v728 = vsel %vm724, %v676, -inf
  %v729 = vsel %vm725, %v677, -inf
  %v730 = vsel %vm726, %v678, -inf
  %v731 = vsel %vm727, %v679, -inf
  %v732 = vsel %vm724, %v680, -inf
  %v733 = vsel %vm725, %v681, -inf
  %v734 = vsel %vm726, %v682, -inf
  %v735 = vsel %vm727, %v683, -inf
  %v736 = vsel %vm724, %v684, -inf
  %v737 = vsel %vm725, %v685, -inf
  %v738 = vsel %vm726, %v686, -inf
  %v739 = vsel %vm727, %v687, -inf
  %v740 = vsel %vm724, %v688, -inf
  %v741 = vsel %vm725, %v689, -inf
  %v742 = vsel %vm726, %v690, -inf
  %v743 = vsel %vm727, %v691, -inf
  %v744 = vsel %vm724, %v692, -inf
  %v745 = vsel %vm725, %v693, -inf
  %v746 = vsel %vm726, %v694, -inf
  %v747 = vsel %vm727, %v695, -inf
  %v748 = vsel %vm724, %v696, -inf
  %v749 = vsel %vm725, %v697, -inf
  %v750 = vsel %vm726, %v698, -inf
  %v751 = vsel %vm727, %v699, -inf
  %v752 = vsel %vm724, %v700, -inf
  %v753 = vsel %vm725, %v701, -inf
  %v754 = vsel %vm726, %v702, -inf
  %v755 = vsel %vm727, %v703, -inf
  %v756 = vsel %vm724, %v704, -inf
  %v757 = vsel %vm725, %v705, -inf
  %v758 = vsel %vm726, %v706, -inf
  %v759 = vsel %vm727, %v707, -inf
  %v760 = vld [vmem:[#allocation2] sm:$0xff]
  %v761 = vld [vmem:[#allocation2 + $0x8] sm:$0xff]
  %v762 = vld [vmem:[#allocation2 + $0x10] sm:$0xff]
  %v763 = vld [vmem:[#allocation2 + $0x18] sm:$0xff]
  %v764 = vld [vmem:[#allocation2 + $0x20] sm:$0xff]
  %v765 = vld [vmem:[#allocation2 + $0x28] sm:$0xff]
  %v766 = vld [vmem:[#allocation2 + $0x30] sm:$0xff]
  %v767 = vld [vmem:[#allocation2 + $0x38] sm:$0xff]
  %v768 = vld [vmem:[#allocation2 + $0x40] sm:$0xff]
  %v769 = vld [vmem:[#allocation2 + $0x48] sm:$0xff]
  %v770 = vld [vmem:[#allocation2 + $0x50] sm:$0xff]
  %v771 = vld [vmem:[#allocation2 + $0x58] sm:$0xff]
  %v772 = vld [vmem:[#allocation2 + $0x60] sm:$0xff]
  %v773 = vld [vmem:[#allocation2 + $0x68] sm:$0xff]
  %v774 = vld [vmem:[#allocation2 + $0x70] sm:$0xff]
  %v775 = vld [vmem:[#allocation2 + $0x78] sm:$0xff]
  %v776 = vld [vmem:[#allocation2 + $0x80] sm:$0xff]
  %v777 = vld [vmem:[#allocation2 + $0x88] sm:$0xff]
  %v778 = vld [vmem:[#allocation2 + $0x90] sm:$0xff]
  %v779 = vld [vmem:[#allocation2 + $0x98] sm:$0xff]
  %v780 = vld [vmem:[#allocation2 + $0xa0] sm:$0xff]
  %v781 = vld [vmem:[#allocation2 + $0xa8] sm:$0xff]
  %v782 = vld [vmem:[#allocation2 + $0xb0] sm:$0xff]
  %v783 = vld [vmem:[#allocation2 + $0xb8] sm:$0xff]
  %v784 = vld [vmem:[#allocation2 + $0xc0] sm:$0xff]
  %v785 = vld [vmem:[#allocation2 + $0xc8] sm:$0xff]
  %v786 = vld [vmem:[#allocation2 + $0xd0] sm:$0xff]
  %v787 = vld [vmem:[#allocation2 + $0xd8] sm:$0xff]
  %v788 = vld [vmem:[#allocation2 + $0xe0] sm:$0xff]
  %v789 = vld [vmem:[#allocation2 + $0xe8] sm:$0xff]
  %v790 = vld [vmem:[#allocation2 + $0xf0] sm:$0xff]
  %v791 = vld [vmem:[#allocation2 + $0xf8] sm:$0xff]
  %v792 = vsel %vm287, %v728, -inf
  %793 = vmax.xlane.f32.xlu0 %v792
  %v794 = vpop.xlane.xlu0 %793
  %v795 = vsel %vm287, %v729, -inf
  %796 = vmax.xlane.f32.xlu0 %v795
  %v797 = vpop.xlane.xlu0 %796
  %v798 = vsel %vm287, %v730, -inf
  %799 = vmax.xlane.f32.xlu0 %v798
  %v800 = vpop.xlane.xlu0 %799
  %v801 = vsel %vm287, %v731, -inf
  %802 = vmax.xlane.f32.xlu0 %v801
  %v803 = vpop.xlane.xlu0 %802
  %v804 = vsel %vm287, %v732, -inf
  %805 = vmax.xlane.f32.xlu0 %v804
  %v806 = vpop.xlane.xlu0 %805
  %v807 = vsel %vm287, %v733, -inf
  %808 = vmax.xlane.f32.xlu0 %v807
  %v809 = vpop.xlane.xlu0 %808
  %v810 = vsel %vm287, %v734, -inf
  %811 = vmax.xlane.f32.xlu0 %v810
  %v812 = vpop.xlane.xlu0 %811
  %v813 = vsel %vm287, %v735, -inf
  %814 = vmax.xlane.f32.xlu0 %v813
  %v815 = vpop.xlane.xlu0 %814
  %v816 = vsel %vm287, %v736, -inf
  %817 = vmax.xlane.f32.xlu0 %v816
  %v818 = vpop.xlane.xlu0 %817
  %v819 = vsel %vm287, %v737, -inf
  %820 = vmax.xlane.f32.xlu0 %v819
  %v821 = vpop.xlane.xlu0 %820
  %v822 = vsel %vm287, %v738, -inf
  %823 = vmax.xlane.f32.xlu0 %v822
  %v824 = vpop.xlane.xlu0 %823
  %v825 = vsel %vm287, %v739, -inf
  %826 = vmax.xlane.f32.xlu0 %v825
  %v827 = vpop.xlane.xlu0 %826
  %v828 = vsel %vm287, %v740, -inf
  %829 = vmax.xlane.f32.xlu0 %v828
  %v830 = vpop.xlane.xlu0 %829
  %v831 = vsel %vm287, %v741, -inf
  %832 = vmax.xlane.f32.xlu0 %v831
  %v833 = vpop.xlane.xlu0 %832
  %v834 = vsel %vm287, %v742, -inf
  %835 = vmax.xlane.f32.xlu0 %v834
  %v836 = vpop.xlane.xlu0 %835
  %v837 = vsel %vm287, %v743, -inf
  %838 = vmax.xlane.f32.xlu0 %v837
  %v839 = vpop.xlane.xlu0 %838
  %v840 = vsel %vm287, %v744, -inf
  %841 = vmax.xlane.f32.xlu0 %v840
  %v842 = vpop.xlane.xlu0 %841
  %v843 = vsel %vm287, %v745, -inf
  %844 = vmax.xlane.f32.xlu0 %v843
  %v845 = vpop.xlane.xlu0 %844
  %v846 = vsel %vm287, %v746, -inf
  %847 = vmax.xlane.f32.xlu0 %v846
  %v848 = vpop.xlane.xlu0 %847
  %v849 = vsel %vm287, %v747, -inf
  %850 = vmax.xlane.f32.xlu0 %v849
  %v851 = vpop.xlane.xlu0 %850
  %v852 = vsel %vm287, %v748, -inf
  %853 = vmax.xlane.f32.xlu0 %v852
  %v854 = vpop.xlane.xlu0 %853
  %v855 = vsel %vm287, %v749, -inf
  %856 = vmax.xlane.f32.xlu0 %v855
  %v857 = vpop.xlane.xlu0 %856
  %v858 = vsel %vm287, %v750, -inf
  %859 = vmax.xlane.f32.xlu0 %v858
  %v860 = vpop.xlane.xlu0 %859
  %v861 = vsel %vm287, %v751, -inf
  %862 = vmax.xlane.f32.xlu0 %v861
  %v863 = vpop.xlane.xlu0 %862
  %v864 = vsel %vm287, %v752, -inf
  %865 = vmax.xlane.f32.xlu0 %v864
  %v866 = vpop.xlane.xlu0 %865
  %v867 = vsel %vm287, %v753, -inf
  %868 = vmax.xlane.f32.xlu0 %v867
  %v869 = vpop.xlane.xlu0 %868
  %v870 = vsel %vm287, %v754, -inf
  %871 = vmax.xlane.f32.xlu0 %v870
  %v872 = vpop.xlane.xlu0 %871
  %v873 = vsel %vm287, %v755, -inf
  %874 = vmax.xlane.f32.xlu0 %v873
  %v875 = vpop.xlane.xlu0 %874
  %v876 = vsel %vm287, %v756, -inf
  %877 = vmax.xlane.f32.xlu0 %v876
  %v878 = vpop.xlane.xlu0 %877
  %v879 = vsel %vm287, %v757, -inf
  %880 = vmax.xlane.f32.xlu0 %v879
  %v881 = vpop.xlane.xlu0 %880
  %v882 = vsel %vm287, %v758, -inf
  %883 = vmax.xlane.f32.xlu0 %v882
  %v884 = vpop.xlane.xlu0 %883
  %v885 = vsel %vm287, %v759, -inf
  %886 = vmax.xlane.f32.xlu0 %v885
  %v887 = vpop.xlane.xlu0 %886
  %v888 = vmax.f32 %v760, %v794
  %v889 = vmax.f32 %v761, %v797
  %v890 = vmax.f32 %v762, %v800
  %v891 = vmax.f32 %v763, %v803
  %v892 = vmax.f32 %v764, %v806
  %v893 = vmax.f32 %v765, %v809
  %v894 = vmax.f32 %v766, %v812
  %v895 = vmax.f32 %v767, %v815
  %v896 = vmax.f32 %v768, %v818
  %v897 = vmax.f32 %v769, %v821
  %v898 = vmax.f32 %v770, %v824
  %v899 = vmax.f32 %v771, %v827
  %v900 = vmax.f32 %v772, %v830
  %v901 = vmax.f32 %v773, %v833
  %v902 = vmax.f32 %v774, %v836
  %v903 = vmax.f32 %v775, %v839
  %v904 = vmax.f32 %v776, %v842
  %v905 = vmax.f32 %v777, %v845
  %v906 = vmax.f32 %v778, %v848
  %v907 = vmax.f32 %v779, %v851
  %v908 = vmax.f32 %v780, %v854
  %v909 = vmax.f32 %v781, %v857
  %v910 = vmax.f32 %v782, %v860
  %v911 = vmax.f32 %v783, %v863
  %v912 = vmax.f32 %v784, %v866
  %v913 = vmax.f32 %v785, %v869
  %v914 = vmax.f32 %v786, %v872
  %v915 = vmax.f32 %v787, %v875
  %v916 = vmax.f32 %v788, %v878
  %v917 = vmax.f32 %v789, %v881
  %v918 = vmax.f32 %v790, %v884
  %v919 = vmax.f32 %v791, %v887
  %v920 = vsub.f32 %v760, %v888
  %v921 = vsub.f32 %v761, %v889
  %v922 = vsub.f32 %v762, %v890
  %v923 = vsub.f32 %v763, %v891
  %v924 = vsub.f32 %v764, %v892
  %v925 = vsub.f32 %v765, %v893
  %v926 = vsub.f32 %v766, %v894
  %v927 = vsub.f32 %v767, %v895
  %v928 = vsub.f32 %v768, %v896
  %v929 = vsub.f32 %v769, %v897
  %v930 = vsub.f32 %v770, %v898
  %v931 = vsub.f32 %v771, %v899
  %v932 = vsub.f32 %v772, %v900
  %v933 = vsub.f32 %v773, %v901
  %v934 = vsub.f32 %v774, %v902
  %v935 = vsub.f32 %v775, %v903
  %v936 = vsub.f32 %v776, %v904
  %v937 = vsub.f32 %v777, %v905
  %v938 = vsub.f32 %v778, %v906
  %v939 = vsub.f32 %v779, %v907
  %v940 = vsub.f32 %v780, %v908
  %v941 = vsub.f32 %v781, %v909
  %v942 = vsub.f32 %v782, %v910
  %v943 = vsub.f32 %v783, %v911
  %v944 = vsub.f32 %v784, %v912
  %v945 = vsub.f32 %v785, %v913
  %v946 = vsub.f32 %v786, %v914
  %v947 = vsub.f32 %v787, %v915
  %v948 = vsub.f32 %v788, %v916
  %v949 = vsub.f32 %v789, %v917
  %v950 = vsub.f32 %v790, %v918
  %v951 = vsub.f32 %v791, %v919
  %v952 = vmul.f32 %v920, 1.442695
  %v953 = vpow.pop %v952
  %v954 = vmul.f32 %v921, 1.442695
  %v955 = vpow.pop %v954
  %v956 = vmul.f32 %v922, 1.442695
  %v957 = vpow.pop %v956
  %v958 = vmul.f32 %v923, 1.442695
  %v959 = vpow.pop %v958
  %v960 = vmul.f32 %v924, 1.442695
  %v961 = vpow.pop %v960
  %v962 = vmul.f32 %v925, 1.442695
  %v963 = vpow.pop %v962
  %v964 = vmul.f32 %v926, 1.442695
  %v965 = vpow.pop %v964
  %v966 = vmul.f32 %v927, 1.442695
  %v967 = vpow.pop %v966
  %v968 = vmul.f32 %v928, 1.442695
  %v969 = vpow.pop %v968
  %v970 = vmul.f32 %v929, 1.442695
  %v971 = vpow.pop %v970
  %v972 = vmul.f32 %v930, 1.442695
  %v973 = vpow.pop %v972
  %v974 = vmul.f32 %v931, 1.442695
  %v975 = vpow.pop %v974
  %v976 = vmul.f32 %v932, 1.442695
  %v977 = vpow.pop %v976
  %v978 = vmul.f32 %v933, 1.442695
  %v979 = vpow.pop %v978
  %v980 = vmul.f32 %v934, 1.442695
  %v981 = vpow.pop %v980
  %v982 = vmul.f32 %v935, 1.442695
  %v983 = vpow.pop %v982
  %v984 = vmul.f32 %v936, 1.442695
  %v985 = vpow.pop %v984
  %v986 = vmul.f32 %v937, 1.442695
  %v987 = vpow.pop %v986
  %v988 = vmul.f32 %v938, 1.442695
  %v989 = vpow.pop %v988
  %v990 = vmul.f32 %v939, 1.442695
  %v991 = vpow.pop %v990
  %v992 = vmul.f32 %v940, 1.442695
  %v993 = vpow.pop %v992
  %v994 = vmul.f32 %v941, 1.442695
  %v995 = vpow.pop %v994
  %v996 = vmul.f32 %v942, 1.442695
  %v997 = vpow.pop %v996
  %v998 = vmul.f32 %v943, 1.442695
  %v999 = vpow.pop %v998
  %v1000 = vmul.f32 %v944, 1.442695
  %v1001 = vpow.pop %v1000
  %v1002 = vmul.f32 %v945, 1.442695
  %v1003 = vpow.pop %v1002
  %v1004 = vmul.f32 %v946, 1.442695
  %v1005 = vpow.pop %v1004
  %v1006 = vmul.f32 %v947, 1.442695
  %v1007 = vpow.pop %v1006
  %v1008 = vmul.f32 %v948, 1.442695
  %v1009 = vpow.pop %v1008
  %v1010 = vmul.f32 %v949, 1.442695
  %v1011 = vpow.pop %v1010
  %v1012 = vmul.f32 %v950, 1.442695
  %v1013 = vpow.pop %v1012
  %v1014 = vmul.f32 %v951, 1.442695
  %v1015 = vpow.pop %v1014
  %1017 = vset.pattern.permute.xlu0 0
  %1018 = vperm.xlu0 %1017, %v888
  %v1019 = vpop.permute.xlu0 %1018
  %1022 = vset.pattern.permute.xlu0 0
  %1023 = vperm.xlu0 %1022, %v889
  %v1024 = vpop.permute.xlu0 %1023
  %1027 = vset.pattern.permute.xlu0 0
  %1028 = vperm.xlu0 %1027, %v890
  %v1029 = vpop.permute.xlu0 %1028
  %1032 = vset.pattern.permute.xlu0 0
  %1033 = vperm.xlu0 %1032, %v891
  %v1034 = vpop.permute.xlu0 %1033
  %1037 = vset.pattern.permute.xlu0 0
  %1038 = vperm.xlu0 %1037, %v892
  %v1039 = vpop.permute.xlu0 %1038
  %1042 = vset.pattern.permute.xlu0 0
  %1043 = vperm.xlu0 %1042, %v893
  %v1044 = vpop.permute.xlu0 %1043
  %1047 = vset.pattern.permute.xlu0 0
  %1048 = vperm.xlu0 %1047, %v894
  %v1049 = vpop.permute.xlu0 %1048
  %1052 = vset.pattern.permute.xlu0 0
  %1053 = vperm.xlu0 %1052, %v895
  %v1054 = vpop.permute.xlu0 %1053
  %1057 = vset.pattern.permute.xlu0 0
  %1058 = vperm.xlu0 %1057, %v896
  %v1059 = vpop.permute.xlu0 %1058
  %1062 = vset.pattern.permute.xlu0 0
  %1063 = vperm.xlu0 %1062, %v897
  %v1064 = vpop.permute.xlu0 %1063
  %1067 = vset.pattern.permute.xlu0 0
  %1068 = vperm.xlu0 %1067, %v898
  %v1069 = vpop.permute.xlu0 %1068
  %1072 = vset.pattern.permute.xlu0 0
  %1073 = vperm.xlu0 %1072, %v899
  %v1074 = vpop.permute.xlu0 %1073
  %1077 = vset.pattern.permute.xlu0 0
  %1078 = vperm.xlu0 %1077, %v900
  %v1079 = vpop.permute.xlu0 %1078
  %1082 = vset.pattern.permute.xlu0 0
  %1083 = vperm.xlu0 %1082, %v901
  %v1084 = vpop.permute.xlu0 %1083
  %1087 = vset.pattern.permute.xlu0 0
  %1088 = vperm.xlu0 %1087, %v902
  %v1089 = vpop.permute.xlu0 %1088
  %1092 = vset.pattern.permute.xlu0 0
  %1093 = vperm.xlu0 %1092, %v903
  %v1094 = vpop.permute.xlu0 %1093
  %1097 = vset.pattern.permute.xlu0 0
  %1098 = vperm.xlu0 %1097, %v904
  %v1099 = vpop.permute.xlu0 %1098
  %1102 = vset.pattern.permute.xlu0 0
  %1103 = vperm.xlu0 %1102, %v905
  %v1104 = vpop.permute.xlu0 %1103
  %1107 = vset.pattern.permute.xlu0 0
  %1108 = vperm.xlu0 %1107, %v906
  %v1109 = vpop.permute.xlu0 %1108
  %1112 = vset.pattern.permute.xlu0 0
  %1113 = vperm.xlu0 %1112, %v907
  %v1114 = vpop.permute.xlu0 %1113
  %1117 = vset.pattern.permute.xlu0 0
  %1118 = vperm.xlu0 %1117, %v908
  %v1119 = vpop.permute.xlu0 %1118
  %1122 = vset.pattern.permute.xlu0 0
  %1123 = vperm.xlu0 %1122, %v909
  %v1124 = vpop.permute.xlu0 %1123
  %1127 = vset.pattern.permute.xlu0 0
  %1128 = vperm.xlu0 %1127, %v910
  %v1129 = vpop.permute.xlu0 %1128
  %1132 = vset.pattern.permute.xlu0 0
  %1133 = vperm.xlu0 %1132, %v911
  %v1134 = vpop.permute.xlu0 %1133
  %1137 = vset.pattern.permute.xlu0 0
  %1138 = vperm.xlu0 %1137, %v912
  %v1139 = vpop.permute.xlu0 %1138
  %1142 = vset.pattern.permute.xlu0 0
  %1143 = vperm.xlu0 %1142, %v913
  %v1144 = vpop.permute.xlu0 %1143
  %1147 = vset.pattern.permute.xlu0 0
  %1148 = vperm.xlu0 %1147, %v914
  %v1149 = vpop.permute.xlu0 %1148
  %1152 = vset.pattern.permute.xlu0 0
  %1153 = vperm.xlu0 %1152, %v915
  %v1154 = vpop.permute.xlu0 %1153
  %1157 = vset.pattern.permute.xlu0 0
  %1158 = vperm.xlu0 %1157, %v916
  %v1159 = vpop.permute.xlu0 %1158
  %1162 = vset.pattern.permute.xlu0 0
  %1163 = vperm.xlu0 %1162, %v917
  %v1164 = vpop.permute.xlu0 %1163
  %1167 = vset.pattern.permute.xlu0 0
  %1168 = vperm.xlu0 %1167, %v918
  %v1169 = vpop.permute.xlu0 %1168
  %1172 = vset.pattern.permute.xlu0 0
  %1173 = vperm.xlu0 %1172, %v919
  %v1174 = vpop.permute.xlu0 %1173
  %v1176 = vsub.f32 %v728, %v1019
  %v1177 = vsub.f32 %v729, %v1024
  %v1178 = vsub.f32 %v730, %v1029
  %v1179 = vsub.f32 %v731, %v1034
  %v1180 = vsub.f32 %v732, %v1039
  %v1181 = vsub.f32 %v733, %v1044
  %v1182 = vsub.f32 %v734, %v1049
  %v1183 = vsub.f32 %v735, %v1054
  %v1184 = vsub.f32 %v736, %v1059
  %v1185 = vsub.f32 %v737, %v1064
  %v1186 = vsub.f32 %v738, %v1069
  %v1187 = vsub.f32 %v739, %v1074
  %v1188 = vsub.f32 %v740, %v1079
  %v1189 = vsub.f32 %v741, %v1084
  %v1190 = vsub.f32 %v742, %v1089
  %v1191 = vsub.f32 %v743, %v1094
  %v1192 = vsub.f32 %v744, %v1099
  %v1193 = vsub.f32 %v745, %v1104
  %v1194 = vsub.f32 %v746, %v1109
  %v1195 = vsub.f32 %v747, %v1114
  %v1196 = vsub.f32 %v748, %v1119
  %v1197 = vsub.f32 %v749, %v1124
  %v1198 = vsub.f32 %v750, %v1129
  %v1199 = vsub.f32 %v751, %v1134
  %v1200 = vsub.f32 %v752, %v1139
  %v1201 = vsub.f32 %v753, %v1144
  %v1202 = vsub.f32 %v754, %v1149
  %v1203 = vsub.f32 %v755, %v1154
  %v1204 = vsub.f32 %v756, %v1159
  %v1205 = vsub.f32 %v757, %v1164
  %v1206 = vsub.f32 %v758, %v1169
  %v1207 = vsub.f32 %v759, %v1174
  %v1208 = vmul.f32 %v1176, 1.442695
  %v1209 = vpow.pop %v1208
  %v1210 = vmul.f32 %v1177, 1.442695
  %v1211 = vpow.pop %v1210
  %v1212 = vmul.f32 %v1178, 1.442695
  %v1213 = vpow.pop %v1212
  %v1214 = vmul.f32 %v1179, 1.442695
  %v1215 = vpow.pop %v1214
  %v1216 = vmul.f32 %v1180, 1.442695
  %v1217 = vpow.pop %v1216
  %v1218 = vmul.f32 %v1181, 1.442695
  %v1219 = vpow.pop %v1218
  %v1220 = vmul.f32 %v1182, 1.442695
  %v1221 = vpow.pop %v1220
  %v1222 = vmul.f32 %v1183, 1.442695
  %v1223 = vpow.pop %v1222
  %v1224 = vmul.f32 %v1184, 1.442695
  %v1225 = vpow.pop %v1224
  %v1226 = vmul.f32 %v1185, 1.442695
  %v1227 = vpow.pop %v1226
  %v1228 = vmul.f32 %v1186, 1.442695
  %v1229 = vpow.pop %v1228
  %v1230 = vmul.f32 %v1187, 1.442695
  %v1231 = vpow.pop %v1230
  %v1232 = vmul.f32 %v1188, 1.442695
  %v1233 = vpow.pop %v1232
  %v1234 = vmul.f32 %v1189, 1.442695
  %v1235 = vpow.pop %v1234
  %v1236 = vmul.f32 %v1190, 1.442695
  %v1237 = vpow.pop %v1236
  %v1238 = vmul.f32 %v1191, 1.442695
  %v1239 = vpow.pop %v1238
  %v1240 = vmul.f32 %v1192, 1.442695
  %v1241 = vpow.pop %v1240
  %v1242 = vmul.f32 %v1193, 1.442695
  %v1243 = vpow.pop %v1242
  %v1244 = vmul.f32 %v1194, 1.442695
  %v1245 = vpow.pop %v1244
  %v1246 = vmul.f32 %v1195, 1.442695
  %v1247 = vpow.pop %v1246
  %v1248 = vmul.f32 %v1196, 1.442695
  %v1249 = vpow.pop %v1248
  %v1250 = vmul.f32 %v1197, 1.442695
  %v1251 = vpow.pop %v1250
  %v1252 = vmul.f32 %v1198, 1.442695
  %v1253 = vpow.pop %v1252
  %v1254 = vmul.f32 %v1199, 1.442695
  %v1255 = vpow.pop %v1254
  %v1256 = vmul.f32 %v1200, 1.442695
  %v1257 = vpow.pop %v1256
  %v1258 = vmul.f32 %v1201, 1.442695
  %v1259 = vpow.pop %v1258
  %v1260 = vmul.f32 %v1202, 1.442695
  %v1261 = vpow.pop %v1260
  %v1262 = vmul.f32 %v1203, 1.442695
  %v1263 = vpow.pop %v1262
  %v1264 = vmul.f32 %v1204, 1.442695
  %v1265 = vpow.pop %v1264
  %v1266 = vmul.f32 %v1205, 1.442695
  %v1267 = vpow.pop %v1266
  %v1268 = vmul.f32 %v1206, 1.442695
  %v1269 = vpow.pop %v1268
  %v1270 = vmul.f32 %v1207, 1.442695
  %v1271 = vpow.pop %v1270
  %v1272 = vld [vmem:[#allocation3] sm:$0xff]
  %v1273 = vld [vmem:[#allocation3 + $0x8] sm:$0xff]
  %v1274 = vld [vmem:[#allocation3 + $0x10] sm:$0xff]
  %v1275 = vld [vmem:[#allocation3 + $0x18] sm:$0xff]
  %v1276 = vld [vmem:[#allocation3 + $0x20] sm:$0xff]
  %v1277 = vld [vmem:[#allocation3 + $0x28] sm:$0xff]
  %v1278 = vld [vmem:[#allocation3 + $0x30] sm:$0xff]
  %v1279 = vld [vmem:[#allocation3 + $0x38] sm:$0xff]
  %v1280 = vld [vmem:[#allocation3 + $0x40] sm:$0xff]
  %v1281 = vld [vmem:[#allocation3 + $0x48] sm:$0xff]
  %v1282 = vld [vmem:[#allocation3 + $0x50] sm:$0xff]
  %v1283 = vld [vmem:[#allocation3 + $0x58] sm:$0xff]
  %v1284 = vld [vmem:[#allocation3 + $0x60] sm:$0xff]
  %v1285 = vld [vmem:[#allocation3 + $0x68] sm:$0xff]
  %v1286 = vld [vmem:[#allocation3 + $0x70] sm:$0xff]
  %v1287 = vld [vmem:[#allocation3 + $0x78] sm:$0xff]
  %v1288 = vld [vmem:[#allocation3 + $0x80] sm:$0xff]
  %v1289 = vld [vmem:[#allocation3 + $0x88] sm:$0xff]
  %v1290 = vld [vmem:[#allocation3 + $0x90] sm:$0xff]
  %v1291 = vld [vmem:[#allocation3 + $0x98] sm:$0xff]
  %v1292 = vld [vmem:[#allocation3 + $0xa0] sm:$0xff]
  %v1293 = vld [vmem:[#allocation3 + $0xa8] sm:$0xff]
  %v1294 = vld [vmem:[#allocation3 + $0xb0] sm:$0xff]
  %v1295 = vld [vmem:[#allocation3 + $0xb8] sm:$0xff]
  %v1296 = vld [vmem:[#allocation3 + $0xc0] sm:$0xff]
  %v1297 = vld [vmem:[#allocation3 + $0xc8] sm:$0xff]
  %v1298 = vld [vmem:[#allocation3 + $0xd0] sm:$0xff]
  %v1299 = vld [vmem:[#allocation3 + $0xd8] sm:$0xff]
  %v1300 = vld [vmem:[#allocation3 + $0xe0] sm:$0xff]
  %v1301 = vld [vmem:[#allocation3 + $0xe8] sm:$0xff]
  %v1302 = vld [vmem:[#allocation3 + $0xf0] sm:$0xff]
  %v1303 = vld [vmem:[#allocation3 + $0xf8] sm:$0xff]
  %v1304 = vmul.f32 %v953, %v1272
  %v1305 = vmul.f32 %v955, %v1273
  %v1306 = vmul.f32 %v957, %v1274
  %v1307 = vmul.f32 %v959, %v1275
  %v1308 = vmul.f32 %v961, %v1276
  %v1309 = vmul.f32 %v963, %v1277
  %v1310 = vmul.f32 %v965, %v1278
  %v1311 = vmul.f32 %v967, %v1279
  %v1312 = vmul.f32 %v969, %v1280
  %v1313 = vmul.f32 %v971, %v1281
  %v1314 = vmul.f32 %v973, %v1282
  %v1315 = vmul.f32 %v975, %v1283
  %v1316 = vmul.f32 %v977, %v1284
  %v1317 = vmul.f32 %v979, %v1285
  %v1318 = vmul.f32 %v981, %v1286
  %v1319 = vmul.f32 %v983, %v1287
  %v1320 = vmul.f32 %v985, %v1288
  %v1321 = vmul.f32 %v987, %v1289
  %v1322 = vmul.f32 %v989, %v1290
  %v1323 = vmul.f32 %v991, %v1291
  %v1324 = vmul.f32 %v993, %v1292
  %v1325 = vmul.f32 %v995, %v1293
  %v1326 = vmul.f32 %v997, %v1294
  %v1327 = vmul.f32 %v999, %v1295
  %v1328 = vmul.f32 %v1001, %v1296
  %v1329 = vmul.f32 %v1003, %v1297
  %v1330 = vmul.f32 %v1005, %v1298
  %v1331 = vmul.f32 %v1007, %v1299
  %v1332 = vmul.f32 %v1009, %v1300
  %v1333 = vmul.f32 %v1011, %v1301
  %v1334 = vmul.f32 %v1013, %v1302
  %v1335 = vmul.f32 %v1015, %v1303
  %v1336 = vsel %vm287, %v1209, 0.0
  %1337 = vadd.xlane.f32.xlu0 %v1336
  %v1338 = vpop.xlane.xlu0 %1337
  %v1339 = vsel %vm287, %v1211, 0.0
  %1340 = vadd.xlane.f32.xlu0 %v1339
  %v1341 = vpop.xlane.xlu0 %1340
  %v1342 = vsel %vm287, %v1213, 0.0
  %1343 = vadd.xlane.f32.xlu0 %v1342
  %v1344 = vpop.xlane.xlu0 %1343
  %v1345 = vsel %vm287, %v1215, 0.0
  %1346 = vadd.xlane.f32.xlu0 %v1345
  %v1347 = vpop.xlane.xlu0 %1346
  %v1348 = vsel %vm287, %v1217, 0.0
  %1349 = vadd.xlane.f32.xlu0 %v1348
  %v1350 = vpop.xlane.xlu0 %1349
  %v1351 = vsel %vm287, %v1219, 0.0
  %1352 = vadd.xlane.f32.xlu0 %v1351
  %v1353 = vpop.xlane.xlu0 %1352
  %v1354 = vsel %vm287, %v1221, 0.0
  %1355 = vadd.xlane.f32.xlu0 %v1354
  %v1356 = vpop.xlane.xlu0 %1355
  %v1357 = vsel %vm287, %v1223, 0.0
  %1358 = vadd.xlane.f32.xlu0 %v1357
  %v1359 = vpop.xlane.xlu0 %1358
  %v1360 = vsel %vm287, %v1225, 0.0
  %1361 = vadd.xlane.f32.xlu0 %v1360
  %v1362 = vpop.xlane.xlu0 %1361
  %v1363 = vsel %vm287, %v1227, 0.0
  %1364 = vadd.xlane.f32.xlu0 %v1363
  %v1365 = vpop.xlane.xlu0 %1364
  %v1366 = vsel %vm287, %v1229, 0.0
  %1367 = vadd.xlane.f32.xlu0 %v1366
  %v1368 = vpop.xlane.xlu0 %1367
  %v1369 = vsel %vm287, %v1231, 0.0
  %1370 = vadd.xlane.f32.xlu0 %v1369
  %v1371 = vpop.xlane.xlu0 %1370
  %v1372 = vsel %vm287, %v1233, 0.0
  %1373 = vadd.xlane.f32.xlu0 %v1372
  %v1374 = vpop.xlane.xlu0 %1373
  %v1375 = vsel %vm287, %v1235, 0.0
  %1376 = vadd.xlane.f32.xlu0 %v1375
  %v1377 = vpop.xlane.xlu0 %1376
  %v1378 = vsel %vm287, %v1237, 0.0
  %1379 = vadd.xlane.f32.xlu0 %v1378
  %v1380 = vpop.xlane.xlu0 %1379
  %v1381 = vsel %vm287, %v1239, 0.0
  %1382 = vadd.xlane.f32.xlu0 %v1381
  %v1383 = vpop.xlane.xlu0 %1382
  %v1384 = vsel %vm287, %v1241, 0.0
  %1385 = vadd.xlane.f32.xlu0 %v1384
  %v1386 = vpop.xlane.xlu0 %1385
  %v1387 = vsel %vm287, %v1243, 0.0
  %1388 = vadd.xlane.f32.xlu0 %v1387
  %v1389 = vpop.xlane.xlu0 %1388
  %v1390 = vsel %vm287, %v1245, 0.0
  %1391 = vadd.xlane.f32.xlu0 %v1390
  %v1392 = vpop.xlane.xlu0 %1391
  %v1393 = vsel %vm287, %v1247, 0.0
  %1394 = vadd.xlane.f32.xlu0 %v1393
  %v1395 = vpop.xlane.xlu0 %1394
  %v1396 = vsel %vm287, %v1249, 0.0
  %1397 = vadd.xlane.f32.xlu0 %v1396
  %v1398 = vpop.xlane.xlu0 %1397
  %v1399 = vsel %vm287, %v1251, 0.0
  %1400 = vadd.xlane.f32.xlu0 %v1399
  %v1401 = vpop.xlane.xlu0 %1400
  %v1402 = vsel %vm287, %v1253, 0.0
  %1403 = vadd.xlane.f32.xlu0 %v1402
  %v1404 = vpop.xlane.xlu0 %1403
  %v1405 = vsel %vm287, %v1255, 0.0
  %1406 = vadd.xlane.f32.xlu0 %v1405
  %v1407 = vpop.xlane.xlu0 %1406
  %v1408 = vsel %vm287, %v1257, 0.0
  %1409 = vadd.xlane.f32.xlu0 %v1408
  %v1410 = vpop.xlane.xlu0 %1409
  %v1411 = vsel %vm287, %v1259, 0.0
  %1412 = vadd.xlane.f32.xlu0 %v1411
  %v1413 = vpop.xlane.xlu0 %1412
  %v1414 = vsel %vm287, %v1261, 0.0
  %1415 = vadd.xlane.f32.xlu0 %v1414
  %v1416 = vpop.xlane.xlu0 %1415
  %v1417 = vsel %vm287, %v1263, 0.0
  %1418 = vadd.xlane.f32.xlu0 %v1417
  %v1419 = vpop.xlane.xlu0 %1418
  %v1420 = vsel %vm287, %v1265, 0.0
  %1421 = vadd.xlane.f32.xlu0 %v1420
  %v1422 = vpop.xlane.xlu0 %1421
  %v1423 = vsel %vm287, %v1267, 0.0
  %1424 = vadd.xlane.f32.xlu0 %v1423
  %v1425 = vpop.xlane.xlu0 %1424
  %v1426 = vsel %vm287, %v1269, 0.0
  %1427 = vadd.xlane.f32.xlu0 %v1426
  %v1428 = vpop.xlane.xlu0 %1427
  %v1429 = vsel %vm287, %v1271, 0.0
  %1430 = vadd.xlane.f32.xlu0 %v1429
  %v1431 = vpop.xlane.xlu0 %1430
  %v1432 = vadd.f32 %v1304, %v1338
  %v1433 = vadd.f32 %v1305, %v1341
  %v1434 = vadd.f32 %v1306, %v1344
  %v1435 = vadd.f32 %v1307, %v1347
  %v1436 = vadd.f32 %v1308, %v1350
  %v1437 = vadd.f32 %v1309, %v1353
  %v1438 = vadd.f32 %v1310, %v1356
  %v1439 = vadd.f32 %v1311, %v1359
  %v1440 = vadd.f32 %v1312, %v1362
  %v1441 = vadd.f32 %v1313, %v1365
  %v1442 = vadd.f32 %v1314, %v1368
  %v1443 = vadd.f32 %v1315, %v1371
  %v1444 = vadd.f32 %v1316, %v1374
  %v1445 = vadd.f32 %v1317, %v1377
  %v1446 = vadd.f32 %v1318, %v1380
  %v1447 = vadd.f32 %v1319, %v1383
  %v1448 = vadd.f32 %v1320, %v1386
  %v1449 = vadd.f32 %v1321, %v1389
  %v1450 = vadd.f32 %v1322, %v1392
  %v1451 = vadd.f32 %v1323, %v1395
  %v1452 = vadd.f32 %v1324, %v1398
  %v1453 = vadd.f32 %v1325, %v1401
  %v1454 = vadd.f32 %v1326, %v1404
  %v1455 = vadd.f32 %v1327, %v1407
  %v1456 = vadd.f32 %v1328, %v1410
  %v1457 = vadd.f32 %v1329, %v1413
  %v1458 = vadd.f32 %v1330, %v1416
  %v1459 = vadd.f32 %v1331, %v1419
  %v1460 = vadd.f32 %v1332, %v1422
  %v1461 = vadd.f32 %v1333, %v1425
  %v1462 = vadd.f32 %v1334, %v1428
  %v1463 = vadd.f32 %v1335, %v1431
  %vm1464 = vcmask 7168
  %1465 = vst.msk [vmem:[#allocation3] sm:$0xff] %vm1464, %v1432
  %1466 = vst.msk [vmem:[#allocation3 + $0x8] sm:$0xff] %vm1464, %v1433
  %1467 = vst.msk [vmem:[#allocation3 + $0x10] sm:$0xff] %vm1464, %v1434
  %1468 = vst.msk [vmem:[#allocation3 + $0x18] sm:$0xff] %vm1464, %v1435
  %1469 = vst.msk [vmem:[#allocation3 + $0x20] sm:$0xff] %vm1464, %v1436
  %1470 = vst.msk [vmem:[#allocation3 + $0x28] sm:$0xff] %vm1464, %v1437
  %1471 = vst.msk [vmem:[#allocation3 + $0x30] sm:$0xff] %vm1464, %v1438
  %1472 = vst.msk [vmem:[#allocation3 + $0x38] sm:$0xff] %vm1464, %v1439
  %1473 = vst.msk [vmem:[#allocation3 + $0x40] sm:$0xff] %vm1464, %v1440
  %1474 = vst.msk [vmem:[#allocation3 + $0x48] sm:$0xff] %vm1464, %v1441
  %1475 = vst.msk [vmem:[#allocation3 + $0x50] sm:$0xff] %vm1464, %v1442
  %1476 = vst.msk [vmem:[#allocation3 + $0x58] sm:$0xff] %vm1464, %v1443
  %1477 = vst.msk [vmem:[#allocation3 + $0x60] sm:$0xff] %vm1464, %v1444
  %1478 = vst.msk [vmem:[#allocation3 + $0x68] sm:$0xff] %vm1464, %v1445
  %1479 = vst.msk [vmem:[#allocation3 + $0x70] sm:$0xff] %vm1464, %v1446
  %1480 = vst.msk [vmem:[#allocation3 + $0x78] sm:$0xff] %vm1464, %v1447
  %1481 = vst.msk [vmem:[#allocation3 + $0x80] sm:$0xff] %vm1464, %v1448
  %1482 = vst.msk [vmem:[#allocation3 + $0x88] sm:$0xff] %vm1464, %v1449
  %1483 = vst.msk [vmem:[#allocation3 + $0x90] sm:$0xff] %vm1464, %v1450
  %1484 = vst.msk [vmem:[#allocation3 + $0x98] sm:$0xff] %vm1464, %v1451
  %1485 = vst.msk [vmem:[#allocation3 + $0xa0] sm:$0xff] %vm1464, %v1452
  %1486 = vst.msk [vmem:[#allocation3 + $0xa8] sm:$0xff] %vm1464, %v1453
  %1487 = vst.msk [vmem:[#allocation3 + $0xb0] sm:$0xff] %vm1464, %v1454
  %1488 = vst.msk [vmem:[#allocation3 + $0xb8] sm:$0xff] %vm1464, %v1455
  %1489 = vst.msk [vmem:[#allocation3 + $0xc0] sm:$0xff] %vm1464, %v1456
  %1490 = vst.msk [vmem:[#allocation3 + $0xc8] sm:$0xff] %vm1464, %v1457
  %1491 = vst.msk [vmem:[#allocation3 + $0xd0] sm:$0xff] %vm1464, %v1458
  %1492 = vst.msk [vmem:[#allocation3 + $0xd8] sm:$0xff] %vm1464, %v1459
  %1493 = vst.msk [vmem:[#allocation3 + $0xe0] sm:$0xff] %vm1464, %v1460
  %1494 = vst.msk [vmem:[#allocation3 + $0xe8] sm:$0xff] %vm1464, %v1461
  %1495 = vst.msk [vmem:[#allocation3 + $0xf0] sm:$0xff] %vm1464, %v1462
  %1496 = vst.msk [vmem:[#allocation3 + $0xf8] sm:$0xff] %vm1464, %v1463
  %v1497 = vld [vmem:[#allocation4] sm:$0xff]
  %v1498 = vld [vmem:[#allocation4 + $0x8] sm:$0xff]
  %v1499 = vld [vmem:[#allocation4 + $0x10] sm:$0xff]
  %v1500 = vld [vmem:[#allocation4 + $0x18] sm:$0xff]
  %v1501 = vld [vmem:[#allocation4 + $0x20] sm:$0xff]
  %v1502 = vld [vmem:[#allocation4 + $0x28] sm:$0xff]
  %v1503 = vld [vmem:[#allocation4 + $0x30] sm:$0xff]
  %v1504 = vld [vmem:[#allocation4 + $0x38] sm:$0xff]
  %v1505 = vld [vmem:[#allocation4 + $0x40] sm:$0xff]
  %v1506 = vld [vmem:[#allocation4 + $0x48] sm:$0xff]
  %v1507 = vld [vmem:[#allocation4 + $0x50] sm:$0xff]
  %v1508 = vld [vmem:[#allocation4 + $0x58] sm:$0xff]
  %v1509 = vld [vmem:[#allocation4 + $0x60] sm:$0xff]
  %v1510 = vld [vmem:[#allocation4 + $0x68] sm:$0xff]
  %v1511 = vld [vmem:[#allocation4 + $0x70] sm:$0xff]
  %v1512 = vld [vmem:[#allocation4 + $0x78] sm:$0xff]
  %v1513 = vld [vmem:[#allocation4 + $0x80] sm:$0xff]
  %v1514 = vld [vmem:[#allocation4 + $0x88] sm:$0xff]
  %v1515 = vld [vmem:[#allocation4 + $0x90] sm:$0xff]
  %v1516 = vld [vmem:[#allocation4 + $0x98] sm:$0xff]
  %v1517 = vld [vmem:[#allocation4 + $0xa0] sm:$0xff]
  %v1518 = vld [vmem:[#allocation4 + $0xa8] sm:$0xff]
  %v1519 = vld [vmem:[#allocation4 + $0xb0] sm:$0xff]
  %v1520 = vld [vmem:[#allocation4 + $0xb8] sm:$0xff]
  %v1521 = vld [vmem:[#allocation4 + $0xc0] sm:$0xff]
  %v1522 = vld [vmem:[#allocation4 + $0xc8] sm:$0xff]
  %v1523 = vld [vmem:[#allocation4 + $0xd0] sm:$0xff]
  %v1524 = vld [vmem:[#allocation4 + $0xd8] sm:$0xff]
  %v1525 = vld [vmem:[#allocation4 + $0xe0] sm:$0xff]
  %v1526 = vld [vmem:[#allocation4 + $0xe8] sm:$0xff]
  %v1527 = vld [vmem:[#allocation4 + $0xf0] sm:$0xff]
  %v1528 = vld [vmem:[#allocation4 + $0xf8] sm:$0xff]
  %1530 = vset.pattern.permute.xlu0 0
  %1531 = vperm.xlu0 %1530, %v953
  %v1532 = vpop.permute.xlu0 %1531
  %1535 = vset.pattern.permute.xlu0 0
  %1536 = vperm.xlu0 %1535, %v955
  %v1537 = vpop.permute.xlu0 %1536
  %1540 = vset.pattern.permute.xlu0 0
  %1541 = vperm.xlu0 %1540, %v957
  %v1542 = vpop.permute.xlu0 %1541
  %1545 = vset.pattern.permute.xlu0 0
  %1546 = vperm.xlu0 %1545, %v959
  %v1547 = vpop.permute.xlu0 %1546
  %1550 = vset.pattern.permute.xlu0 0
  %1551 = vperm.xlu0 %1550, %v961
  %v1552 = vpop.permute.xlu0 %1551
  %1555 = vset.pattern.permute.xlu0 0
  %1556 = vperm.xlu0 %1555, %v963
  %v1557 = vpop.permute.xlu0 %1556
  %1560 = vset.pattern.permute.xlu0 0
  %1561 = vperm.xlu0 %1560, %v965
  %v1562 = vpop.permute.xlu0 %1561
  %1565 = vset.pattern.permute.xlu0 0
  %1566 = vperm.xlu0 %1565, %v967
  %v1567 = vpop.permute.xlu0 %1566
  %1570 = vset.pattern.permute.xlu0 0
  %1571 = vperm.xlu0 %1570, %v969
  %v1572 = vpop.permute.xlu0 %1571
  %1575 = vset.pattern.permute.xlu0 0
  %1576 = vperm.xlu0 %1575, %v971
  %v1577 = vpop.permute.xlu0 %1576
  %1580 = vset.pattern.permute.xlu0 0
  %1581 = vperm.xlu0 %1580, %v973
  %v1582 = vpop.permute.xlu0 %1581
  %1585 = vset.pattern.permute.xlu0 0
  %1586 = vperm.xlu0 %1585, %v975
  %v1587 = vpop.permute.xlu0 %1586
  %1590 = vset.pattern.permute.xlu0 0
  %1591 = vperm.xlu0 %1590, %v977
  %v1592 = vpop.permute.xlu0 %1591
  %1595 = vset.pattern.permute.xlu0 0
  %1596 = vperm.xlu0 %1595, %v979
  %v1597 = vpop.permute.xlu0 %1596
  %1600 = vset.pattern.permute.xlu0 0
  %1601 = vperm.xlu0 %1600, %v981
  %v1602 = vpop.permute.xlu0 %1601
  %1605 = vset.pattern.permute.xlu0 0
  %1606 = vperm.xlu0 %1605, %v983
  %v1607 = vpop.permute.xlu0 %1606
  %1610 = vset.pattern.permute.xlu0 0
  %1611 = vperm.xlu0 %1610, %v985
  %v1612 = vpop.permute.xlu0 %1611
  %1615 = vset.pattern.permute.xlu0 0
  %1616 = vperm.xlu0 %1615, %v987
  %v1617 = vpop.permute.xlu0 %1616
  %1620 = vset.pattern.permute.xlu0 0
  %1621 = vperm.xlu0 %1620, %v989
  %v1622 = vpop.permute.xlu0 %1621
  %1625 = vset.pattern.permute.xlu0 0
  %1626 = vperm.xlu0 %1625, %v991
  %v1627 = vpop.permute.xlu0 %1626
  %1630 = vset.pattern.permute.xlu0 0
  %1631 = vperm.xlu0 %1630, %v993
  %v1632 = vpop.permute.xlu0 %1631
  %1635 = vset.pattern.permute.xlu0 0
  %1636 = vperm.xlu0 %1635, %v995
  %v1637 = vpop.permute.xlu0 %1636
  %1640 = vset.pattern.permute.xlu0 0
  %1641 = vperm.xlu0 %1640, %v997
  %v1642 = vpop.permute.xlu0 %1641
  %1645 = vset.pattern.permute.xlu0 0
  %1646 = vperm.xlu0 %1645, %v999
  %v1647 = vpop.permute.xlu0 %1646
  %1650 = vset.pattern.permute.xlu0 0
  %1651 = vperm.xlu0 %1650, %v1001
  %v1652 = vpop.permute.xlu0 %1651
  %1655 = vset.pattern.permute.xlu0 0
  %1656 = vperm.xlu0 %1655, %v1003
  %v1657 = vpop.permute.xlu0 %1656
  %1660 = vset.pattern.permute.xlu0 0
  %1661 = vperm.xlu0 %1660, %v1005
  %v1662 = vpop.permute.xlu0 %1661
  %1665 = vset.pattern.permute.xlu0 0
  %1666 = vperm.xlu0 %1665, %v1007
  %v1667 = vpop.permute.xlu0 %1666
  %1670 = vset.pattern.permute.xlu0 0
  %1671 = vperm.xlu0 %1670, %v1009
  %v1672 = vpop.permute.xlu0 %1671
  %1675 = vset.pattern.permute.xlu0 0
  %1676 = vperm.xlu0 %1675, %v1011
  %v1677 = vpop.permute.xlu0 %1676
  %1680 = vset.pattern.permute.xlu0 0
  %1681 = vperm.xlu0 %1680, %v1013
  %v1682 = vpop.permute.xlu0 %1681
  %1685 = vset.pattern.permute.xlu0 0
  %1686 = vperm.xlu0 %1685, %v1015
  %v1687 = vpop.permute.xlu0 %1686
  %v1689 = vmul.f32 %v1532, %v1497
  %v1690 = vmul.f32 %v1537, %v1498
  %v1691 = vmul.f32 %v1542, %v1499
  %v1692 = vmul.f32 %v1547, %v1500
  %v1693 = vmul.f32 %v1552, %v1501
  %v1694 = vmul.f32 %v1557, %v1502
  %v1695 = vmul.f32 %v1562, %v1503
  %v1696 = vmul.f32 %v1567, %v1504
  %v1697 = vmul.f32 %v1572, %v1505
  %v1698 = vmul.f32 %v1577, %v1506
  %v1699 = vmul.f32 %v1582, %v1507
  %v1700 = vmul.f32 %v1587, %v1508
  %v1701 = vmul.f32 %v1592, %v1509
  %v1702 = vmul.f32 %v1597, %v1510
  %v1703 = vmul.f32 %v1602, %v1511
  %v1704 = vmul.f32 %v1607, %v1512
  %v1705 = vmul.f32 %v1612, %v1513
  %v1706 = vmul.f32 %v1617, %v1514
  %v1707 = vmul.f32 %v1622, %v1515
  %v1708 = vmul.f32 %v1627, %v1516
  %v1709 = vmul.f32 %v1632, %v1517
  %v1710 = vmul.f32 %v1637, %v1518
  %v1711 = vmul.f32 %v1642, %v1519
  %v1712 = vmul.f32 %v1647, %v1520
  %v1713 = vmul.f32 %v1652, %v1521
  %v1714 = vmul.f32 %v1657, %v1522
  %v1715 = vmul.f32 %v1662, %v1523
  %v1716 = vmul.f32 %v1667, %v1524
  %v1717 = vmul.f32 %v1672, %v1525
  %v1718 = vmul.f32 %v1677, %v1526
  %v1719 = vmul.f32 %v1682, %v1527
  %v1720 = vmul.f32 %v1687, %v1528
  %v1721 = vpack.c.bf16 %v1209, %v1209
  %v1722 = vpack.c.bf16 %v1211, %v1211
  %v1723 = vpack.c.bf16 %v1213, %v1213
  %v1724 = vpack.c.bf16 %v1215, %v1215
  %v1725 = vpack.c.bf16 %v1217, %v1217
  %v1726 = vpack.c.bf16 %v1219, %v1219
  %v1727 = vpack.c.bf16 %v1221, %v1221
  %v1728 = vpack.c.bf16 %v1223, %v1223
  %v1729 = vpack.c.bf16 %v1225, %v1225
  %v1730 = vpack.c.bf16 %v1227, %v1227
  %v1731 = vpack.c.bf16 %v1229, %v1229
  %v1732 = vpack.c.bf16 %v1231, %v1231
  %v1733 = vpack.c.bf16 %v1233, %v1233
  %v1734 = vpack.c.bf16 %v1235, %v1235
  %v1735 = vpack.c.bf16 %v1237, %v1237
  %v1736 = vpack.c.bf16 %v1239, %v1239
  %v1737 = vpack.c.bf16 %v1241, %v1241
  %v1738 = vpack.c.bf16 %v1243, %v1243
  %v1739 = vpack.c.bf16 %v1245, %v1245
  %v1740 = vpack.c.bf16 %v1247, %v1247
  %v1741 = vpack.c.bf16 %v1249, %v1249
  %v1742 = vpack.c.bf16 %v1251, %v1251
  %v1743 = vpack.c.bf16 %v1253, %v1253
  %v1744 = vpack.c.bf16 %v1255, %v1255
  %v1745 = vpack.c.bf16 %v1257, %v1257
  %v1746 = vpack.c.bf16 %v1259, %v1259
  %v1747 = vpack.c.bf16 %v1261, %v1261
  %v1748 = vpack.c.bf16 %v1263, %v1263
  %v1749 = vpack.c.bf16 %v1265, %v1265
  %v1750 = vpack.c.bf16 %v1267, %v1267
  %v1751 = vpack.c.bf16 %v1269, %v1269
  %v1752 = vpack.c.bf16 %v1271, %v1271
  %v1753 = vld [vmem:[%s87] sm:$0xf]
  %v1754 = vld [vmem:[%s87 + $0x4] sm:$0xf]
  %v1755 = vld [vmem:[%s87 + $0x8] sm:$0xf]
  %v1756 = vld [vmem:[%s87 + $0xc] sm:$0xf]
  %v1757 = vld [vmem:[%s87 + $0x10] sm:$0xf]
  %v1758 = vld [vmem:[%s87 + $0x14] sm:$0xf]
  %v1759 = vld [vmem:[%s87 + $0x18] sm:$0xf]
  %v1760 = vld [vmem:[%s87 + $0x1c] sm:$0xf]
  %v1761 = vld [vmem:[%s87 + $0x20] sm:$0xf]
  %v1762 = vld [vmem:[%s87 + $0x24] sm:$0xf]
  %v1763 = vld [vmem:[%s87 + $0x28] sm:$0xf]
  %v1764 = vld [vmem:[%s87 + $0x2c] sm:$0xf]
  %v1765 = vld [vmem:[%s87 + $0x30] sm:$0xf]
  %v1766 = vld [vmem:[%s87 + $0x34] sm:$0xf]
  %v1767 = vld [vmem:[%s87 + $0x38] sm:$0xf]
  %v1768 = vld [vmem:[%s87 + $0x3c] sm:$0xf]
  %v1769 = vld [vmem:[%s87 + $0x40] sm:$0xf]
  %v1770 = vld [vmem:[%s87 + $0x44] sm:$0xf]
  %v1771 = vld [vmem:[%s87 + $0x48] sm:$0xf]
  %v1772 = vld [vmem:[%s87 + $0x4c] sm:$0xf]
  %v1773 = vld [vmem:[%s87 + $0x50] sm:$0xf]
  %v1774 = vld [vmem:[%s87 + $0x54] sm:$0xf]
  %v1775 = vld [vmem:[%s87 + $0x58] sm:$0xf]
  %v1776 = vld [vmem:[%s87 + $0x5c] sm:$0xf]
  %v1777 = vld [vmem:[%s87 + $0x60] sm:$0xf]
  %v1778 = vld [vmem:[%s87 + $0x64] sm:$0xf]
  %v1779 = vld [vmem:[%s87 + $0x68] sm:$0xf]
  %v1780 = vld [vmem:[%s87 + $0x6c] sm:$0xf]
  %v1781 = vld [vmem:[%s87 + $0x70] sm:$0xf]
  %v1782 = vld [vmem:[%s87 + $0x74] sm:$0xf]
  %v1783 = vld [vmem:[%s87 + $0x78] sm:$0xf]
  %v1784 = vld [vmem:[%s87 + $0x7c] sm:$0xf]
  %v1789 = vunpack.c.l.b16 %v1721
  %v1790 = vunpack.c.l.b16 %v1722
  %v1791 = vunpack.c.l.b16 %v1723
  %v1792 = vunpack.c.l.b16 %v1724
  %v1793 = vpack.c.b16 %v1790, %v1789
  %v1794 = vpack.c.b16 %v1792, %v1791
  %v1799 = vunpack.c.l.b16 %v1753
  %v1800 = vunpack.c.l.b16 %v1754
  %v1801 = vunpack.c.l.b16 %v1755
  %v1802 = vunpack.c.l.b16 %v1756
  %v1803 = vpack.c.b16 %v1800, %v1799
  %v1804 = vpack.c.b16 %v1802, %v1801
  %v1808 = vsel %vm287, %v1793, 0
  %v1811 = vsel %vm287, %v1794, 0
  %1813 = vmatpush.bf16.msra.mxu0 0
  %1814 = vmatpush.bf16.msra.mxu0 0
  %1815 = vmatpush.bf16.msra.mxu0 0
  %1816 = vmatpush.bf16.msra.mxu0 0
  %1817 = vmatpush.bf16.msra.mxu0 0
  %1818 = vmatpush.bf16.msra.mxu0 0
  %1819 = vmatpush.bf16.msra.mxu0 %v1804
  %1820 = vmatpush.bf16.msra.mxu0 %v1803
  %1821 = vmatmul.bf16.gmra.mxu0 %v1808
  %v1822 = vpop.f32.mrf.mxu0
  %v1823 = vadd.f32 0.0, %v1822
  %v1824 = vpop.f32.mrf.mxu0
  %v1825 = vadd.f32 0.0, %v1824
  %1826 = vmatmul.bf16.gmra.mxu0 %v1811
  %v1827 = vpop.f32.mrf.mxu0
  %v1828 = vadd.f32 0.0, %v1827
  %v1829 = vpop.f32.mrf.mxu0
  %v1830 = vadd.f32 0.0, %v1829
  %1831 = vdwg.mxu0
  %v1836 = vunpack.c.l.b16 %v1725
  %v1837 = vunpack.c.l.b16 %v1726
  %v1838 = vunpack.c.l.b16 %v1727
  %v1839 = vunpack.c.l.b16 %v1728
  %v1840 = vpack.c.b16 %v1837, %v1836
  %v1841 = vpack.c.b16 %v1839, %v1838
  %v1846 = vunpack.c.l.b16 %v1757
  %v1847 = vunpack.c.l.b16 %v1758
  %v1848 = vunpack.c.l.b16 %v1759
  %v1849 = vunpack.c.l.b16 %v1760
  %v1850 = vpack.c.b16 %v1847, %v1846
  %v1851 = vpack.c.b16 %v1849, %v1848
  %v1855 = vsel %vm287, %v1840, 0
  %v1858 = vsel %vm287, %v1841, 0
  %1860 = vmatpush.bf16.msra.mxu0 0
  %1861 = vmatpush.bf16.msra.mxu0 0
  %1862 = vmatpush.bf16.msra.mxu0 0
  %1863 = vmatpush.bf16.msra.mxu0 0
  %1864 = vmatpush.bf16.msra.mxu0 0
  %1865 = vmatpush.bf16.msra.mxu0 0
  %1866 = vmatpush.bf16.msra.mxu0 %v1851
  %1867 = vmatpush.bf16.msra.mxu0 %v1850
  %1868 = vmatmul.bf16.gmra.mxu0 %v1855
  %v1869 = vpop.f32.mrf.mxu0
  %v1870 = vadd.f32 0.0, %v1869
  %v1871 = vpop.f32.mrf.mxu0
  %v1872 = vadd.f32 0.0, %v1871
  %1873 = vmatmul.bf16.gmra.mxu0 %v1858
  %v1874 = vpop.f32.mrf.mxu0
  %v1875 = vadd.f32 0.0, %v1874
  %v1876 = vpop.f32.mrf.mxu0
  %v1877 = vadd.f32 0.0, %v1876
  %1878 = vdwg.mxu0
  %v1883 = vunpack.c.l.b16 %v1729
  %v1884 = vunpack.c.l.b16 %v1730
  %v1885 = vunpack.c.l.b16 %v1731
  %v1886 = vunpack.c.l.b16 %v1732
  %v1887 = vpack.c.b16 %v1884, %v1883
  %v1888 = vpack.c.b16 %v1886, %v1885
  %v1893 = vunpack.c.l.b16 %v1761
  %v1894 = vunpack.c.l.b16 %v1762
  %v1895 = vunpack.c.l.b16 %v1763
  %v1896 = vunpack.c.l.b16 %v1764
  %v1897 = vpack.c.b16 %v1894, %v1893
  %v1898 = vpack.c.b16 %v1896, %v1895
  %v1902 = vsel %vm287, %v1887, 0
  %v1905 = vsel %vm287, %v1888, 0
  %1907 = vmatpush.bf16.msra.mxu0 0
  %1908 = vmatpush.bf16.msra.mxu0 0
  %1909 = vmatpush.bf16.msra.mxu0 0
  %1910 = vmatpush.bf16.msra.mxu0 0
  %1911 = vmatpush.bf16.msra.mxu0 0
  %1912 = vmatpush.bf16.msra.mxu0 0
  %1913 = vmatpush.bf16.msra.mxu0 %v1898
  %1914 = vmatpush.bf16.msra.mxu0 %v1897
  %1915 = vmatmul.bf16.gmra.mxu0 %v1902
  %v1916 = vpop.f32.mrf.mxu0
  %v1917 = vadd.f32 0.0, %v1916
  %v1918 = vpop.f32.mrf.mxu0
  %v1919 = vadd.f32 0.0, %v1918
  %1920 = vmatmul.bf16.gmra.mxu0 %v1905
  %v1921 = vpop.f32.mrf.mxu0
  %v1922 = vadd.f32 0.0, %v1921
  %v1923 = vpop.f32.mrf.mxu0
  %v1924 = vadd.f32 0.0, %v1923
  %1925 = vdwg.mxu0
  %v1930 = vunpack.c.l.b16 %v1733
  %v1931 = vunpack.c.l.b16 %v1734
  %v1932 = vunpack.c.l.b16 %v1735
  %v1933 = vunpack.c.l.b16 %v1736
  %v1934 = vpack.c.b16 %v1931, %v1930
  %v1935 = vpack.c.b16 %v1933, %v1932
  %v1940 = vunpack.c.l.b16 %v1765
  %v1941 = vunpack.c.l.b16 %v1766
  %v1942 = vunpack.c.l.b16 %v1767
  %v1943 = vunpack.c.l.b16 %v1768
  %v1944 = vpack.c.b16 %v1941, %v1940
  %v1945 = vpack.c.b16 %v1943, %v1942
  %v1949 = vsel %vm287, %v1934, 0
  %v1952 = vsel %vm287, %v1935, 0
  %1954 = vmatpush.bf16.msra.mxu0 0
  %1955 = vmatpush.bf16.msra.mxu0 0
  %1956 = vmatpush.bf16.msra.mxu0 0
  %1957 = vmatpush.bf16.msra.mxu0 0
  %1958 = vmatpush.bf16.msra.mxu0 0
  %1959 = vmatpush.bf16.msra.mxu0 0
  %1960 = vmatpush.bf16.msra.mxu0 %v1945
  %1961 = vmatpush.bf16.msra.mxu0 %v1944
  %1962 = vmatmul.bf16.gmra.mxu0 %v1949
  %v1963 = vpop.f32.mrf.mxu0
  %v1964 = vadd.f32 0.0, %v1963
  %v1965 = vpop.f32.mrf.mxu0
  %v1966 = vadd.f32 0.0, %v1965
  %1967 = vmatmul.bf16.gmra.mxu0 %v1952
  %v1968 = vpop.f32.mrf.mxu0
  %v1969 = vadd.f32 0.0, %v1968
  %v1970 = vpop.f32.mrf.mxu0
  %v1971 = vadd.f32 0.0, %v1970
  %1972 = vdwg.mxu0
  %v1977 = vunpack.c.l.b16 %v1737
  %v1978 = vunpack.c.l.b16 %v1738
  %v1979 = vunpack.c.l.b16 %v1739
  %v1980 = vunpack.c.l.b16 %v1740
  %v1981 = vpack.c.b16 %v1978, %v1977
  %v1982 = vpack.c.b16 %v1980, %v1979
  %v1987 = vunpack.c.l.b16 %v1769
  %v1988 = vunpack.c.l.b16 %v1770
  %v1989 = vunpack.c.l.b16 %v1771
  %v1990 = vunpack.c.l.b16 %v1772
  %v1991 = vpack.c.b16 %v1988, %v1987
  %v1992 = vpack.c.b16 %v1990, %v1989
  %v1996 = vsel %vm287, %v1981, 0
  %v1999 = vsel %vm287, %v1982, 0
  %2001 = vmatpush.bf16.msra.mxu0 0
  %2002 = vmatpush.bf16.msra.mxu0 0
  %2003 = vmatpush.bf16.msra.mxu0 0
  %2004 = vmatpush.bf16.msra.mxu0 0
  %2005 = vmatpush.bf16.msra.mxu0 0
  %2006 = vmatpush.bf16.msra.mxu0 0
  %2007 = vmatpush.bf16.msra.mxu0 %v1992
  %2008 = vmatpush.bf16.msra.mxu0 %v1991
  %2009 = vmatmul.bf16.gmra.mxu0 %v1996
  %v2010 = vpop.f32.mrf.mxu0
  %v2011 = vadd.f32 0.0, %v2010
  %v2012 = vpop.f32.mrf.mxu0
  %v2013 = vadd.f32 0.0, %v2012
  %2014 = vmatmul.bf16.gmra.mxu0 %v1999
  %v2015 = vpop.f32.mrf.mxu0
  %v2016 = vadd.f32 0.0, %v2015
  %v2017 = vpop.f32.mrf.mxu0
  %v2018 = vadd.f32 0.0, %v2017
  %2019 = vdwg.mxu0
  %v2024 = vunpack.c.l.b16 %v1741
  %v2025 = vunpack.c.l.b16 %v1742
  %v2026 = vunpack.c.l.b16 %v1743
  %v2027 = vunpack.c.l.b16 %v1744
  %v2028 = vpack.c.b16 %v2025, %v2024
  %v2029 = vpack.c.b16 %v2027, %v2026
  %v2034 = vunpack.c.l.b16 %v1773
  %v2035 = vunpack.c.l.b16 %v1774
  %v2036 = vunpack.c.l.b16 %v1775
  %v2037 = vunpack.c.l.b16 %v1776
  %v2038 = vpack.c.b16 %v2035, %v2034
  %v2039 = vpack.c.b16 %v2037, %v2036
  %v2043 = vsel %vm287, %v2028, 0
  %v2046 = vsel %vm287, %v2029, 0
  %2048 = vmatpush.bf16.msra.mxu0 0
  %2049 = vmatpush.bf16.msra.mxu0 0
  %2050 = vmatpush.bf16.msra.mxu0 0
  %2051 = vmatpush.bf16.msra.mxu0 0
  %2052 = vmatpush.bf16.msra.mxu0 0
  %2053 = vmatpush.bf16.msra.mxu0 0
  %2054 = vmatpush.bf16.msra.mxu0 %v2039
  %2055 = vmatpush.bf16.msra.mxu0 %v2038
  %2056 = vmatmul.bf16.gmra.mxu0 %v2043
  %v2057 = vpop.f32.mrf.mxu0
  %v2058 = vadd.f32 0.0, %v2057
  %v2059 = vpop.f32.mrf.mxu0
  %v2060 = vadd.f32 0.0, %v2059
  %2061 = vmatmul.bf16.gmra.mxu0 %v2046
  %v2062 = vpop.f32.mrf.mxu0
  %v2063 = vadd.f32 0.0, %v2062
  %v2064 = vpop.f32.mrf.mxu0
  %v2065 = vadd.f32 0.0, %v2064
  %2066 = vdwg.mxu0
  %v2071 = vunpack.c.l.b16 %v1745
  %v2072 = vunpack.c.l.b16 %v1746
  %v2073 = vunpack.c.l.b16 %v1747
  %v2074 = vunpack.c.l.b16 %v1748
  %v2075 = vpack.c.b16 %v2072, %v2071
  %v2076 = vpack.c.b16 %v2074, %v2073
  %v2081 = vunpack.c.l.b16 %v1777
  %v2082 = vunpack.c.l.b16 %v1778
  %v2083 = vunpack.c.l.b16 %v1779
  %v2084 = vunpack.c.l.b16 %v1780
  %v2085 = vpack.c.b16 %v2082, %v2081
  %v2086 = vpack.c.b16 %v2084, %v2083
  %v2090 = vsel %vm287, %v2075, 0
  %v2093 = vsel %vm287, %v2076, 0
  %2095 = vmatpush.bf16.msra.mxu0 0
  %2096 = vmatpush.bf16.msra.mxu0 0
  %2097 = vmatpush.bf16.msra.mxu0 0
  %2098 = vmatpush.bf16.msra.mxu0 0
  %2099 = vmatpush.bf16.msra.mxu0 0
  %2100 = vmatpush.bf16.msra.mxu0 0
  %2101 = vmatpush.bf16.msra.mxu0 %v2086
  %2102 = vmatpush.bf16.msra.mxu0 %v2085
  %2103 = vmatmul.bf16.gmra.mxu0 %v2090
  %v2104 = vpop.f32.mrf.mxu0
  %v2105 = vadd.f32 0.0, %v2104
  %v2106 = vpop.f32.mrf.mxu0
  %v2107 = vadd.f32 0.0, %v2106
  %2108 = vmatmul.bf16.gmra.mxu0 %v2093
  %v2109 = vpop.f32.mrf.mxu0
  %v2110 = vadd.f32 0.0, %v2109
  %v2111 = vpop.f32.mrf.mxu0
  %v2112 = vadd.f32 0.0, %v2111
  %2113 = vdwg.mxu0
  %v2118 = vunpack.c.l.b16 %v1749
  %v2119 = vunpack.c.l.b16 %v1750
  %v2120 = vunpack.c.l.b16 %v1751
  %v2121 = vunpack.c.l.b16 %v1752
  %v2122 = vpack.c.b16 %v2119, %v2118
  %v2123 = vpack.c.b16 %v2121, %v2120
  %v2128 = vunpack.c.l.b16 %v1781
  %v2129 = vunpack.c.l.b16 %v1782
  %v2130 = vunpack.c.l.b16 %v1783
  %v2131 = vunpack.c.l.b16 %v1784
  %v2132 = vpack.c.b16 %v2129, %v2128
  %v2133 = vpack.c.b16 %v2131, %v2130
  %v2137 = vsel %vm287, %v2122, 0
  %v2140 = vsel %vm287, %v2123, 0
  %2142 = vmatpush.bf16.msra.mxu0 0
  %2143 = vmatpush.bf16.msra.mxu0 0
  %2144 = vmatpush.bf16.msra.mxu0 0
  %2145 = vmatpush.bf16.msra.mxu0 0
  %2146 = vmatpush.bf16.msra.mxu0 0
  %2147 = vmatpush.bf16.msra.mxu0 0
  %2148 = vmatpush.bf16.msra.mxu0 %v2133
  %2149 = vmatpush.bf16.msra.mxu0 %v2132
  %2150 = vmatmul.bf16.gmra.mxu0 %v2137
  %v2151 = vpop.f32.mrf.mxu0
  %v2152 = vadd.f32 0.0, %v2151
  %v2153 = vpop.f32.mrf.mxu0
  %v2154 = vadd.f32 0.0, %v2153
  %2155 = vmatmul.bf16.gmra.mxu0 %v2140
  %v2156 = vpop.f32.mrf.mxu0
  %v2157 = vadd.f32 0.0, %v2156
  %v2158 = vpop.f32.mrf.mxu0
  %v2159 = vadd.f32 0.0, %v2158
  %2160 = vdwg.mxu0
  %v2161 = vadd.f32 %v1689, %v1823
  %v2162 = vadd.f32 %v1690, %v1825
  %v2163 = vadd.f32 %v1691, %v1828
  %v2164 = vadd.f32 %v1692, %v1830
  %v2165 = vadd.f32 %v1693, %v1870
  %v2166 = vadd.f32 %v1694, %v1872
  %v2167 = vadd.f32 %v1695, %v1875
  %v2168 = vadd.f32 %v1696, %v1877
  %v2169 = vadd.f32 %v1697, %v1917
  %v2170 = vadd.f32 %v1698, %v1919
  %v2171 = vadd.f32 %v1699, %v1922
  %v2172 = vadd.f32 %v1700, %v1924
  %v2173 = vadd.f32 %v1701, %v1964
  %v2174 = vadd.f32 %v1702, %v1966
  %v2175 = vadd.f32 %v1703, %v1969
  %v2176 = vadd.f32 %v1704, %v1971
  %v2177 = vadd.f32 %v1705, %v2011
  %v2178 = vadd.f32 %v1706, %v2013
  %v2179 = vadd.f32 %v1707, %v2016
  %v2180 = vadd.f32 %v1708, %v2018
  %v2181 = vadd.f32 %v1709, %v2058
  %v2182 = vadd.f32 %v1710, %v2060
  %v2183 = vadd.f32 %v1711, %v2063
  %v2184 = vadd.f32 %v1712, %v2065
  %v2185 = vadd.f32 %v1713, %v2105
  %v2186 = vadd.f32 %v1714, %v2107
  %v2187 = vadd.f32 %v1715, %v2110
  %v2188 = vadd.f32 %v1716, %v2112
  %v2189 = vadd.f32 %v1717, %v2152
  %v2190 = vadd.f32 %v1718, %v2154
  %v2191 = vadd.f32 %v1719, %v2157
  %v2192 = vadd.f32 %v1720, %v2159
  %2193 = vst.msk [vmem:[#allocation4] sm:$0xff] %vm287, %v2161
  %2194 = vst.msk [vmem:[#allocation4 + $0x8] sm:$0xff] %vm287, %v2162
  %2195 = vst.msk [vmem:[#allocation4 + $0x10] sm:$0xff] %vm287, %v2163
  %2196 = vst.msk [vmem:[#allocation4 + $0x18] sm:$0xff] %vm287, %v2164
  %2197 = vst.msk [vmem:[#allocation4 + $0x20] sm:$0xff] %vm287, %v2165
  %2198 = vst.msk [vmem:[#allocation4 + $0x28] sm:$0xff] %vm287, %v2166
  %2199 = vst.msk [vmem:[#allocation4 + $0x30] sm:$0xff] %vm287, %v2167
  %2200 = vst.msk [vmem:[#allocation4 + $0x38] sm:$0xff] %vm287, %v2168
  %2201 = vst.msk [vmem:[#allocation4 + $0x40] sm:$0xff] %vm287, %v2169
  %2202 = vst.msk [vmem:[#allocation4 + $0x48] sm:$0xff] %vm287, %v2170
  %2203 = vst.msk [vmem:[#allocation4 + $0x50] sm:$0xff] %vm287, %v2171
  %2204 = vst.msk [vmem:[#allocation4 + $0x58] sm:$0xff] %vm287, %v2172
  %2205 = vst.msk [vmem:[#allocation4 + $0x60] sm:$0xff] %vm287, %v2173
  %2206 = vst.msk [vmem:[#allocation4 + $0x68] sm:$0xff] %vm287, %v2174
  %2207 = vst.msk [vmem:[#allocation4 + $0x70] sm:$0xff] %vm287, %v2175
  %2208 = vst.msk [vmem:[#allocation4 + $0x78] sm:$0xff] %vm287, %v2176
  %2209 = vst.msk [vmem:[#allocation4 + $0x80] sm:$0xff] %vm287, %v2177
  %2210 = vst.msk [vmem:[#allocation4 + $0x88] sm:$0xff] %vm287, %v2178
  %2211 = vst.msk [vmem:[#allocation4 + $0x90] sm:$0xff] %vm287, %v2179
  %2212 = vst.msk [vmem:[#allocation4 + $0x98] sm:$0xff] %vm287, %v2180
  %2213 = vst.msk [vmem:[#allocation4 + $0xa0] sm:$0xff] %vm287, %v2181
  %2214 = vst.msk [vmem:[#allocation4 + $0xa8] sm:$0xff] %vm287, %v2182
  %2215 = vst.msk [vmem:[#allocation4 + $0xb0] sm:$0xff] %vm287, %v2183
  %2216 = vst.msk [vmem:[#allocation4 + $0xb8] sm:$0xff] %vm287, %v2184
  %2217 = vst.msk [vmem:[#allocation4 + $0xc0] sm:$0xff] %vm287, %v2185
  %2218 = vst.msk [vmem:[#allocation4 + $0xc8] sm:$0xff] %vm287, %v2186
  %2219 = vst.msk [vmem:[#allocation4 + $0xd0] sm:$0xff] %vm287, %v2187
  %2220 = vst.msk [vmem:[#allocation4 + $0xd8] sm:$0xff] %vm287, %v2188
  %2221 = vst.msk [vmem:[#allocation4 + $0xe0] sm:$0xff] %vm287, %v2189
  %2222 = vst.msk [vmem:[#allocation4 + $0xe8] sm:$0xff] %vm287, %v2190
  %2223 = vst.msk [vmem:[#allocation4 + $0xf0] sm:$0xff] %vm287, %v2191
  %2224 = vst.msk [vmem:[#allocation4 + $0xf8] sm:$0xff] %vm287, %v2192
  %2225 = vst.msk [vmem:[#allocation2] sm:$0xff] %vm1464, %v888
  %2226 = vst.msk [vmem:[#allocation2 + $0x8] sm:$0xff] %vm1464, %v889
  %2227 = vst.msk [vmem:[#allocation2 + $0x10] sm:$0xff] %vm1464, %v890
  %2228 = vst.msk [vmem:[#allocation2 + $0x18] sm:$0xff] %vm1464, %v891
  %2229 = vst.msk [vmem:[#allocation2 + $0x20] sm:$0xff] %vm1464, %v892
  %2230 = vst.msk [vmem:[#allocation2 + $0x28] sm:$0xff] %vm1464, %v893
  %2231 = vst.msk [vmem:[#allocation2 + $0x30] sm:$0xff] %vm1464, %v894
  %2232 = vst.msk [vmem:[#allocation2 + $0x38] sm:$0xff] %vm1464, %v895
  %2233 = vst.msk [vmem:[#allocation2 + $0x40] sm:$0xff] %vm1464, %v896
  %2234 = vst.msk [vmem:[#allocation2 + $0x48] sm:$0xff] %vm1464, %v897
  %2235 = vst.msk [vmem:[#allocation2 + $0x50] sm:$0xff] %vm1464, %v898
  %2236 = vst.msk [vmem:[#allocation2 + $0x58] sm:$0xff] %vm1464, %v899
  %2237 = vst.msk [vmem:[#allocation2 + $0x60] sm:$0xff] %vm1464, %v900
  %2238 = vst.msk [vmem:[#allocation2 + $0x68] sm:$0xff] %vm1464, %v901
  %2239 = vst.msk [vmem:[#allocation2 + $0x70] sm:$0xff] %vm1464, %v902
  %2240 = vst.msk [vmem:[#allocation2 + $0x78] sm:$0xff] %vm1464, %v903
  %2241 = vst.msk [vmem:[#allocation2 + $0x80] sm:$0xff] %vm1464, %v904
  %2242 = vst.msk [vmem:[#allocation2 + $0x88] sm:$0xff] %vm1464, %v905
  %2243 = vst.msk [vmem:[#allocation2 + $0x90] sm:$0xff] %vm1464, %v906
  %2244 = vst.msk [vmem:[#allocation2 + $0x98] sm:$0xff] %vm1464, %v907
  %2245 = vst.msk [vmem:[#allocation2 + $0xa0] sm:$0xff] %vm1464, %v908
  %2246 = vst.msk [vmem:[#allocation2 + $0xa8] sm:$0xff] %vm1464, %v909
  %2247 = vst.msk [vmem:[#allocation2 + $0xb0] sm:$0xff] %vm1464, %v910
  %2248 = vst.msk [vmem:[#allocation2 + $0xb8] sm:$0xff] %vm1464, %v911
  %2249 = vst.msk [vmem:[#allocation2 + $0xc0] sm:$0xff] %vm1464, %v912
  %2250 = vst.msk [vmem:[#allocation2 + $0xc8] sm:$0xff] %vm1464, %v913
  %2251 = vst.msk [vmem:[#allocation2 + $0xd0] sm:$0xff] %vm1464, %v914
  %2252 = vst.msk [vmem:[#allocation2 + $0xd8] sm:$0xff] %vm1464, %v915
  %2253 = vst.msk [vmem:[#allocation2 + $0xe0] sm:$0xff] %vm1464, %v916
  %2254 = vst.msk [vmem:[#allocation2 + $0xe8] sm:$0xff] %vm1464, %v917
  %2255 = vst.msk [vmem:[#allocation2 + $0xf0] sm:$0xff] %vm1464, %v918
  %2256 = vst.msk [vmem:[#allocation2 + $0xf8] sm:$0xff] %vm1464, %v919
  %p2257 = scmp.eq.s32.totalorder %s100, %s99
  // Predicated region
  $region18: #{gpt_forward.10} parent=0 // pred_check
    %p2258 = pneg %p2257
  $region19: #{gpt_forward.10} parent=0 // pred_check_branch
    %2260 = sbr.rel (%p2258) target = $region21
  $region20: #{gpt_forward.10} parent=0 // pred_region
    %v2261 = vld [vmem:[#allocation3] sm:$0xff]
    %v2262 = vld [vmem:[#allocation3 + $0x8] sm:$0xff]
    %v2263 = vld [vmem:[#allocation3 + $0x10] sm:$0xff]
    %v2264 = vld [vmem:[#allocation3 + $0x18] sm:$0xff]
    %v2265 = vld [vmem:[#allocation3 + $0x20] sm:$0xff]
    %v2266 = vld [vmem:[#allocation3 + $0x28] sm:$0xff]
    %v2267 = vld [vmem:[#allocation3 + $0x30] sm:$0xff]
    %v2268 = vld [vmem:[#allocation3 + $0x38] sm:$0xff]
    %v2269 = vld [vmem:[#allocation3 + $0x40] sm:$0xff]
    %v2270 = vld [vmem:[#allocation3 + $0x48] sm:$0xff]
    %v2271 = vld [vmem:[#allocation3 + $0x50] sm:$0xff]
    %v2272 = vld [vmem:[#allocation3 + $0x58] sm:$0xff]
    %v2273 = vld [vmem:[#allocation3 + $0x60] sm:$0xff]
    %v2274 = vld [vmem:[#allocation3 + $0x68] sm:$0xff]
    %v2275 = vld [vmem:[#allocation3 + $0x70] sm:$0xff]
    %v2276 = vld [vmem:[#allocation3 + $0x78] sm:$0xff]
    %v2277 = vld [vmem:[#allocation3 + $0x80] sm:$0xff]
    %v2278 = vld [vmem:[#allocation3 + $0x88] sm:$0xff]
    %v2279 = vld [vmem:[#allocation3 + $0x90] sm:$0xff]
    %v2280 = vld [vmem:[#allocation3 + $0x98] sm:$0xff]
    %v2281 = vld [vmem:[#allocation3 + $0xa0] sm:$0xff]
    %v2282 = vld [vmem:[#allocation3 + $0xa8] sm:$0xff]
    %v2283 = vld [vmem:[#allocation3 + $0xb0] sm:$0xff]
    %v2284 = vld [vmem:[#allocation3 + $0xb8] sm:$0xff]
    %v2285 = vld [vmem:[#allocation3 + $0xc0] sm:$0xff]
    %v2286 = vld [vmem:[#allocation3 + $0xc8] sm:$0xff]
    %v2287 = vld [vmem:[#allocation3 + $0xd0] sm:$0xff]
    %v2288 = vld [vmem:[#allocation3 + $0xd8] sm:$0xff]
    %v2289 = vld [vmem:[#allocation3 + $0xe0] sm:$0xff]
    %v2290 = vld [vmem:[#allocation3 + $0xe8] sm:$0xff]
    %v2291 = vld [vmem:[#allocation3 + $0xf0] sm:$0xff]
    %v2292 = vld [vmem:[#allocation3 + $0xf8] sm:$0xff]
    %v2293 = vrcp.pop %v2261
    %v2294 = vrcp.pop %v2262
    %v2295 = vrcp.pop %v2263
    %v2296 = vrcp.pop %v2264
    %v2297 = vrcp.pop %v2265
    %v2298 = vrcp.pop %v2266
    %v2299 = vrcp.pop %v2267
    %v2300 = vrcp.pop %v2268
    %v2301 = vrcp.pop %v2269
    %v2302 = vrcp.pop %v2270
    %v2303 = vrcp.pop %v2271
    %v2304 = vrcp.pop %v2272
    %v2305 = vrcp.pop %v2273
    %v2306 = vrcp.pop %v2274
    %v2307 = vrcp.pop %v2275
    %v2308 = vrcp.pop %v2276
    %v2309 = vrcp.pop %v2277
    %v2310 = vrcp.pop %v2278
    %v2311 = vrcp.pop %v2279
    %v2312 = vrcp.pop %v2280
    %v2313 = vrcp.pop %v2281
    %v2314 = vrcp.pop %v2282
    %v2315 = vrcp.pop %v2283
    %v2316 = vrcp.pop %v2284
    %v2317 = vrcp.pop %v2285
    %v2318 = vrcp.pop %v2286
    %v2319 = vrcp.pop %v2287
    %v2320 = vrcp.pop %v2288
    %v2321 = vrcp.pop %v2289
    %v2322 = vrcp.pop %v2290
    %v2323 = vrcp.pop %v2291
    %v2324 = vrcp.pop %v2292
    %v2325 = vld [vmem:[#allocation4] sm:$0xff]
    %v2326 = vld [vmem:[#allocation4 + $0x8] sm:$0xff]
    %v2327 = vld [vmem:[#allocation4 + $0x10] sm:$0xff]
    %v2328 = vld [vmem:[#allocation4 + $0x18] sm:$0xff]
    %v2329 = vld [vmem:[#allocation4 + $0x20] sm:$0xff]
    %v2330 = vld [vmem:[#allocation4 + $0x28] sm:$0xff]
    %v2331 = vld [vmem:[#allocation4 + $0x30] sm:$0xff]
    %v2332 = vld [vmem:[#allocation4 + $0x38] sm:$0xff]
    %v2333 = vld [vmem:[#allocation4 + $0x40] sm:$0xff]
    %v2334 = vld [vmem:[#allocation4 + $0x48] sm:$0xff]
    %v2335 = vld [vmem:[#allocation4 + $0x50] sm:$0xff]
    %v2336 = vld [vmem:[#allocation4 + $0x58] sm:$0xff]
    %v2337 = vld [vmem:[#allocation4 + $0x60] sm:$0xff]
    %v2338 = vld [vmem:[#allocation4 + $0x68] sm:$0xff]
    %v2339 = vld [vmem:[#allocation4 + $0x70] sm:$0xff]
    %v2340 = vld [vmem:[#allocation4 + $0x78] sm:$0xff]
    %v2341 = vld [vmem:[#allocation4 + $0x80] sm:$0xff]
    %v2342 = vld [vmem:[#allocation4 + $0x88] sm:$0xff]
    %v2343 = vld [vmem:[#allocation4 + $0x90] sm:$0xff]
    %v2344 = vld [vmem:[#allocation4 + $0x98] sm:$0xff]
    %v2345 = vld [vmem:[#allocation4 + $0xa0] sm:$0xff]
    %v2346 = vld [vmem:[#allocation4 + $0xa8] sm:$0xff]
    %v2347 = vld [vmem:[#allocation4 + $0xb0] sm:$0xff]
    %v2348 = vld [vmem:[#allocation4 + $0xb8] sm:$0xff]
    %v2349 = vld [vmem:[#allocation4 + $0xc0] sm:$0xff]
    %v2350 = vld [vmem:[#allocation4 + $0xc8] sm:$0xff]
    %v2351 = vld [vmem:[#allocation4 + $0xd0] sm:$0xff]
    %v2352 = vld [vmem:[#allocation4 + $0xd8] sm:$0xff]
    %v2353 = vld [vmem:[#allocation4 + $0xe0] sm:$0xff]
    %v2354 = vld [vmem:[#allocation4 + $0xe8] sm:$0xff]
    %v2355 = vld [vmem:[#allocation4 + $0xf0] sm:$0xff]
    %v2356 = vld [vmem:[#allocation4 + $0xf8] sm:$0xff]
    %2358 = vset.pattern.permute.xlu0 0
    %2359 = vperm.xlu0 %2358, %v2293
    %v2360 = vpop.permute.xlu0 %2359
    %2363 = vset.pattern.permute.xlu0 0
    %2364 = vperm.xlu0 %2363, %v2294
    %v2365 = vpop.permute.xlu0 %2364
    %2368 = vset.pattern.permute.xlu0 0
    %2369 = vperm.xlu0 %2368, %v2295
    %v2370 = vpop.permute.xlu0 %2369
    %2373 = vset.pattern.permute.xlu0 0
    %2374 = vperm.xlu0 %2373, %v2296
    %v2375 = vpop.permute.xlu0 %2374
    %2378 = vset.pattern.permute.xlu0 0
    %2379 = vperm.xlu0 %2378, %v2297
    %v2380 = vpop.permute.xlu0 %2379
    %2383 = vset.pattern.permute.xlu0 0
    %2384 = vperm.xlu0 %2383, %v2298
    %v2385 = vpop.permute.xlu0 %2384
    %2388 = vset.pattern.permute.xlu0 0
    %2389 = vperm.xlu0 %2388, %v2299
    %v2390 = vpop.permute.xlu0 %2389
    %2393 = vset.pattern.permute.xlu0 0
    %2394 = vperm.xlu0 %2393, %v2300
    %v2395 = vpop.permute.xlu0 %2394
    %2398 = vset.pattern.permute.xlu0 0
    %2399 = vperm.xlu0 %2398, %v2301
    %v2400 = vpop.permute.xlu0 %2399
    %2403 = vset.pattern.permute.xlu0 0
    %2404 = vperm.xlu0 %2403, %v2302
    %v2405 = vpop.permute.xlu0 %2404
    %2408 = vset.pattern.permute.xlu0 0
    %2409 = vperm.xlu0 %2408, %v2303
    %v2410 = vpop.permute.xlu0 %2409
    %2413 = vset.pattern.permute.xlu0 0
    %2414 = vperm.xlu0 %2413, %v2304
    %v2415 = vpop.permute.xlu0 %2414
    %2418 = vset.pattern.permute.xlu0 0
    %2419 = vperm.xlu0 %2418, %v2305
    %v2420 = vpop.permute.xlu0 %2419
    %2423 = vset.pattern.permute.xlu0 0
    %2424 = vperm.xlu0 %2423, %v2306
    %v2425 = vpop.permute.xlu0 %2424
    %2428 = vset.pattern.permute.xlu0 0
    %2429 = vperm.xlu0 %2428, %v2307
    %v2430 = vpop.permute.xlu0 %2429
    %2433 = vset.pattern.permute.xlu0 0
    %2434 = vperm.xlu0 %2433, %v2308
    %v2435 = vpop.permute.xlu0 %2434
    %2438 = vset.pattern.permute.xlu0 0
    %2439 = vperm.xlu0 %2438, %v2309
    %v2440 = vpop.permute.xlu0 %2439
    %2443 = vset.pattern.permute.xlu0 0
    %2444 = vperm.xlu0 %2443, %v2310
    %v2445 = vpop.permute.xlu0 %2444
    %2448 = vset.pattern.permute.xlu0 0
    %2449 = vperm.xlu0 %2448, %v2311
    %v2450 = vpop.permute.xlu0 %2449
    %2453 = vset.pattern.permute.xlu0 0
    %2454 = vperm.xlu0 %2453, %v2312
    %v2455 = vpop.permute.xlu0 %2454
    %2458 = vset.pattern.permute.xlu0 0
    %2459 = vperm.xlu0 %2458, %v2313
    %v2460 = vpop.permute.xlu0 %2459
    %2463 = vset.pattern.permute.xlu0 0
    %2464 = vperm.xlu0 %2463, %v2314
    %v2465 = vpop.permute.xlu0 %2464
    %2468 = vset.pattern.permute.xlu0 0
    %2469 = vperm.xlu0 %2468, %v2315
    %v2470 = vpop.permute.xlu0 %2469
    %2473 = vset.pattern.permute.xlu0 0
    %2474 = vperm.xlu0 %2473, %v2316
    %v2475 = vpop.permute.xlu0 %2474
    %2478 = vset.pattern.permute.xlu0 0
    %2479 = vperm.xlu0 %2478, %v2317
    %v2480 = vpop.permute.xlu0 %2479
    %2483 = vset.pattern.permute.xlu0 0
    %2484 = vperm.xlu0 %2483, %v2318
    %v2485 = vpop.permute.xlu0 %2484
    %2488 = vset.pattern.permute.xlu0 0
    %2489 = vperm.xlu0 %2488, %v2319
    %v2490 = vpop.permute.xlu0 %2489
    %2493 = vset.pattern.permute.xlu0 0
    %2494 = vperm.xlu0 %2493, %v2320
    %v2495 = vpop.permute.xlu0 %2494
    %2498 = vset.pattern.permute.xlu0 0
    %2499 = vperm.xlu0 %2498, %v2321
    %v2500 = vpop.permute.xlu0 %2499
    %2503 = vset.pattern.permute.xlu0 0
    %2504 = vperm.xlu0 %2503, %v2322
    %v2505 = vpop.permute.xlu0 %2504
    %2508 = vset.pattern.permute.xlu0 0
    %2509 = vperm.xlu0 %2508, %v2323
    %v2510 = vpop.permute.xlu0 %2509
    %2513 = vset.pattern.permute.xlu0 0
    %2514 = vperm.xlu0 %2513, %v2324
    %v2515 = vpop.permute.xlu0 %2514
    %v2517 = vmul.f32 %v2325, %v2360
    %v2518 = vmul.f32 %v2326, %v2365
    %v2519 = vmul.f32 %v2327, %v2370
    %v2520 = vmul.f32 %v2328, %v2375
    %v2521 = vmul.f32 %v2329, %v2380
    %v2522 = vmul.f32 %v2330, %v2385
    %v2523 = vmul.f32 %v2331, %v2390
    %v2524 = vmul.f32 %v2332, %v2395
    %v2525 = vmul.f32 %v2333, %v2400
    %v2526 = vmul.f32 %v2334, %v2405
    %v2527 = vmul.f32 %v2335, %v2410
    %v2528 = vmul.f32 %v2336, %v2415
    %v2529 = vmul.f32 %v2337, %v2420
    %v2530 = vmul.f32 %v2338, %v2425
    %v2531 = vmul.f32 %v2339, %v2430
    %v2532 = vmul.f32 %v2340, %v2435
    %v2533 = vmul.f32 %v2341, %v2440
    %v2534 = vmul.f32 %v2342, %v2445
    %v2535 = vmul.f32 %v2343, %v2450
    %v2536 = vmul.f32 %v2344, %v2455
    %v2537 = vmul.f32 %v2345, %v2460
    %v2538 = vmul.f32 %v2346, %v2465
    %v2539 = vmul.f32 %v2347, %v2470
    %v2540 = vmul.f32 %v2348, %v2475
    %v2541 = vmul.f32 %v2349, %v2480
    %v2542 = vmul.f32 %v2350, %v2485
    %v2543 = vmul.f32 %v2351, %v2490
    %v2544 = vmul.f32 %v2352, %v2495
    %v2545 = vmul.f32 %v2353, %v2500
    %v2546 = vmul.f32 %v2354, %v2505
    %v2547 = vmul.f32 %v2355, %v2510
    %v2548 = vmul.f32 %v2356, %v2515
    %v2549 = vpack.c.bf16 %v2517, %v2517
    %v2550 = vpack.c.bf16 %v2518, %v2518
    %v2551 = vpack.c.bf16 %v2519, %v2519
    %v2552 = vpack.c.bf16 %v2520, %v2520
    %v2553 = vpack.c.bf16 %v2521, %v2521
    %v2554 = vpack.c.bf16 %v2522, %v2522
    %v2555 = vpack.c.bf16 %v2523, %v2523
    %v2556 = vpack.c.bf16 %v2524, %v2524
    %v2557 = vpack.c.bf16 %v2525, %v2525
    %v2558 = vpack.c.bf16 %v2526, %v2526
    %v2559 = vpack.c.bf16 %v2527, %v2527
    %v2560 = vpack.c.bf16 %v2528, %v2528
    %v2561 = vpack.c.bf16 %v2529, %v2529
    %v2562 = vpack.c.bf16 %v2530, %v2530
    %v2563 = vpack.c.bf16 %v2531, %v2531
    %v2564 = vpack.c.bf16 %v2532, %v2532
    %v2565 = vpack.c.bf16 %v2533, %v2533
    %v2566 = vpack.c.bf16 %v2534, %v2534
    %v2567 = vpack.c.bf16 %v2535, %v2535
    %v2568 = vpack.c.bf16 %v2536, %v2536
    %v2569 = vpack.c.bf16 %v2537, %v2537
    %v2570 = vpack.c.bf16 %v2538, %v2538
    %v2571 = vpack.c.bf16 %v2539, %v2539
    %v2572 = vpack.c.bf16 %v2540, %v2540
    %v2573 = vpack.c.bf16 %v2541, %v2541
    %v2574 = vpack.c.bf16 %v2542, %v2542
    %v2575 = vpack.c.bf16 %v2543, %v2543
    %v2576 = vpack.c.bf16 %v2544, %v2544
    %v2577 = vpack.c.bf16 %v2545, %v2545
    %v2578 = vpack.c.bf16 %v2546, %v2546
    %v2579 = vpack.c.bf16 %v2547, %v2547
    %v2580 = vpack.c.bf16 %v2548, %v2548
    %vm2581 = vcmask 257024
    %2582 = vst.msk [vmem:[%s95] sm:$0xf] %vm2581, %v2549
    %2583 = vst.msk [vmem:[%s95 + $0x4] sm:$0xf] %vm2581, %v2550
    %2584 = vst.msk [vmem:[%s95 + $0x8] sm:$0xf] %vm2581, %v2551
    %2585 = vst.msk [vmem:[%s95 + $0xc] sm:$0xf] %vm2581, %v2552
    %2586 = vst.msk [vmem:[%s95 + $0x10] sm:$0xf] %vm2581, %v2553
    %2587 = vst.msk [vmem:[%s95 + $0x14] sm:$0xf] %vm2581, %v2554
    %2588 = vst.msk [vmem:[%s95 + $0x18] sm:$0xf] %vm2581, %v2555
    %2589 = vst.msk [vmem:[%s95 + $0x1c] sm:$0xf] %vm2581, %v2556
    %2590 = vst.msk [vmem:[%s95 + $0x20] sm:$0xf] %vm2581, %v2557
    %2591 = vst.msk [vmem:[%s95 + $0x24] sm:$0xf] %vm2581, %v2558
    %2592 = vst.msk [vmem:[%s95 + $0x28] sm:$0xf] %vm2581, %v2559
    %2593 = vst.msk [vmem:[%s95 + $0x2c] sm:$0xf] %vm2581, %v2560
    %2594 = vst.msk [vmem:[%s95 + $0x30] sm:$0xf] %vm2581, %v2561
    %2595 = vst.msk [vmem:[%s95 + $0x34] sm:$0xf] %vm2581, %v2562
    %2596 = vst.msk [vmem:[%s95 + $0x38] sm:$0xf] %vm2581, %v2563
    %2597 = vst.msk [vmem:[%s95 + $0x3c] sm:$0xf] %vm2581, %v2564
    %2598 = vst.msk [vmem:[%s95 + $0x40] sm:$0xf] %vm2581, %v2565
    %2599 = vst.msk [vmem:[%s95 + $0x44] sm:$0xf] %vm2581, %v2566
    %2600 = vst.msk [vmem:[%s95 + $0x48] sm:$0xf] %vm2581, %v2567
    %2601 = vst.msk [vmem:[%s95 + $0x4c] sm:$0xf] %vm2581, %v2568
    %2602 = vst.msk [vmem:[%s95 + $0x50] sm:$0xf] %vm2581, %v2569
    %2603 = vst.msk [vmem:[%s95 + $0x54] sm:$0xf] %vm2581, %v2570
    %2604 = vst.msk [vmem:[%s95 + $0x58] sm:$0xf] %vm2581, %v2571
    %2605 = vst.msk [vmem:[%s95 + $0x5c] sm:$0xf] %vm2581, %v2572
    %2606 = vst.msk [vmem:[%s95 + $0x60] sm:$0xf] %vm2581, %v2573
    %2607 = vst.msk [vmem:[%s95 + $0x64] sm:$0xf] %vm2581, %v2574
    %2608 = vst.msk [vmem:[%s95 + $0x68] sm:$0xf] %vm2581, %v2575
    %2609 = vst.msk [vmem:[%s95 + $0x6c] sm:$0xf] %vm2581, %v2576
    %2610 = vst.msk [vmem:[%s95 + $0x70] sm:$0xf] %vm2581, %v2577
    %2611 = vst.msk [vmem:[%s95 + $0x74] sm:$0xf] %vm2581, %v2578
    %2612 = vst.msk [vmem:[%s95 + $0x78] sm:$0xf] %vm2581, %v2579
    %2613 = vst.msk [vmem:[%s95 + $0x7c] sm:$0xf] %vm2581, %v2580
  $region21: #{gpt_forward.10} parent=0 // pred_fallthru
    _
  %s2614 = sld [smem:[#allocation6]]
  %s2615 = smul.u32 4, %s2614
  %p2616 = scmp.lt.s32.totalorder %s2615, 3
  %s2617 = scalar_select %p2616, %s2615, 3
  %s2618 = smul.addr %s2617, 4
  %s2619 = scalar_lea.vmem %s5, %s2618
  // Predicated region
  $region22: #{gpt_forward.10} parent=0 // pred_check
    _
  $region23: #{gpt_forward.10} parent=0 // pred_check_branch
    %2621 = sbr.rel (0) target = $region25
  $region24: #{gpt_forward.10} parent=0 // pred_region
    %s2622 = sld [smem:[#allocation6]]
    %s2623 = smul.u32 4, %s2622
  $region25: #{gpt_forward.10} parent=0 // pred_fallthru
    _
  // Predicated region
  $region26: #{gpt_forward.10} parent=0 // pred_check
    _
  $region27: #{gpt_forward.10} parent=0 // pred_check_branch
    %2625 = sbr.rel (0) target = $region29
  $region28: #{gpt_forward.10} parent=0 // pred_region
    %s2626 = sld [smem:[#allocation6]]
    %s2627 = smul.u32 4, %s2626
    %p2628 = scmp.lt.s32.totalorder %s2627, 3
    %s2629 = scalar_select %p2628, %s2627, 3
    %s2630 = smul.addr %s2629, 4
    %s2631 = scalar_lea.vmem %s5, %s2630
  $region29: #{gpt_forward.10} parent=0 // pred_fallthru
    _

</llo_original>
